<compile_context>
chip_gen: v6e
topology: v6e:2x2x1
jax: 0.10.0
libtpu: 0.0.40
codegen_flags: <defaults>
</compile_context>

<pallas_src>
import functools
import math

import jax
import jax.numpy as jnp
from jax.experimental import pallas as pl
from jax.experimental.pallas import tpu as pltpu


# Column indices inside the f32 aux slab (per-channel params), then the group matrix.
_CI_B, _R1_B, _R2_B, _CO_B = 0, 1, 2, 3
_GN1_G, _GN1_B, _GN2_G, _GN2_B, _GNO_G, _GNO_B = 4, 5, 6, 7, 8, 9
_NCOL = 16            # number of param columns (padded)
_P_OFF = _NCOL        # group-averaging matrix starts at this column


# ---------------------------------------------------------------------------
# Fused Pallas kernel (one grid step == one batch element)
# ---------------------------------------------------------------------------

def fused_unet_kernel(x_ref, vec_ref, w_ref, aux_ref, mask_ref, o_ref,
                      *, H, W, CH, OUT_PAD):
    HW = H * W
    f32 = jnp.float32
    hi = jax.lax.Precision.HIGHEST

    def col(j):
        return aux_ref[:, j:j + 1]                       # (CH, 1) f32 param column

    # Group-averaging matrix: P[c,c'] = 1/(HW*C_per_group) if same group else 0.
    p_mat = aux_ref[:, _P_OFF:_P_OFF + CH]               # (CH, CH) f32

    def conv3x3(h, row0, cout):
        # 3x3 "same" conv as ONE wide-K MXU dot.  The 9 shifted copies of h are built
        # with XLU lane rotations + precomputed boundary masks (no halo buffer, no
        # misaligned sublane slices), stacked along the contraction axis (cheap vreg
        # stacking since each piece is CH=32 rows), then contracted against the
        # (cout, 9*CH) bf16 weight slice in a single K=288 matmul.
        pieces = []
        for dh in range(3):
            for dw in range(3):
                s = (dh - 1) * W + (dw - 1)              # flattened source offset
                if s == 0:
                    t = h                                # center tap: no shift, no mask
                else:
                    t = pltpu.roll(h, shift=(-s) % HW, axis=1)   # t[:, p] = h[:, p+s]
                    tap = dh * 3 + dw
                    t = t * mask_ref[tap:tap + 1, :]     # zero out-of-image taps
                pieces.append(t)
        stacked = jnp.concatenate(pieces, axis=0).astype(jnp.bfloat16)   # (9*CH, HW)
        wm = w_ref[row0:row0 + cout, :]                                  # (cout, 9*CH)
        return jnp.dot(wm, stacked, preferred_element_type=f32)          # (cout, HW)

    def gn_silu(h, gamma, beta):
        # GroupNorm (two-pass, centered) + SiLU, fully lane-dense in (CH, HW) layout.
        # Group averaging goes through a tiny f32 matmul at HIGHEST precision; the
        # HW reductions are exact f32 lane reductions.
        ga = jnp.dot(p_mat, h, precision=hi, preferred_element_type=f32)
        mean = jnp.sum(ga, axis=1, keepdims=True)                         # (CH, 1)
        hc = h - mean
        gv = jnp.dot(p_mat, hc * hc, precision=hi, preferred_element_type=f32)
        var = jnp.sum(gv, axis=1, keepdims=True)                          # (CH, 1)
        y = hc * jax.lax.rsqrt(var + 1e-5) * gamma + beta
        return y * jax.nn.sigmoid(y)                                      # SiLU

    x = x_ref[0]                          # (CH, HW) f32, channels on sublanes
    v = vec_ref[0]                        # (CH, 2) f32
    temb_col = v[:, 0:1]                  # per-channel time-embedding projection
    attn_col = v[:, 1:2]                  # single-token cross-attention output

    # ---- conv_in ----
    h = conv3x3(x, 0, CH) + col(_CI_B)
    res = h

    # ---- resnet block with time-embedding injection ----
    h = gn_silu(h, col(_GN1_G), col(_GN1_B))
    h = conv3x3(h, CH, CH) + col(_R1_B) + temb_col
    h = gn_silu(h, col(_GN2_G), col(_GN2_B))
    h = conv3x3(h, 2 * CH, CH) + col(_R2_B)
    h = h + res

    # ---- cross-attention against the single conditioning token ----
    # softmax over one key == 1, so attention == broadcast(cond_emb @ Wv @ Wo); that
    # projection is computed in the wrapper and arrives as attn_col (identical maths).
    h = h + attn_col

    # ---- conv_norm_out + SiLU + conv_out (out channels padded to the sublane tile) --
    h = gn_silu(h, col(_GNO_G), col(_GNO_B))
    out = conv3x3(h, 3 * CH, OUT_PAD) + aux_ref[0:OUT_PAD, _CO_B:_CO_B + 1]
    o_ref[0] = out.astype(o_ref.dtype)


# ---------------------------------------------------------------------------
# Wrapper: embedding chains (XLA), slab packing, pallas_call
# ---------------------------------------------------------------------------

def timestep_embedding(t, dim):
    half = dim // 2
    freqs = jnp.exp(-math.log(10000.0) * jnp.arange(half, dtype=jnp.float32) / half)
    args = t.astype(jnp.float32)[:, None] * freqs[None, :]
    return jnp.concatenate([jnp.sin(args), jnp.cos(args)], axis=-1)


def _conv_to_mat(w, cin_pad, cout_pad):
    # (3,3,cin,cout) conv weight -> (cout_pad, 9*cin_pad) matrix; column = tap*cin + ci.
    kh, kw, cin, cout = w.shape
    w = jnp.pad(w, ((0, 0), (0, 0), (0, cin_pad - cin), (0, cout_pad - cout)))
    w = w.reshape(kh * kw, cin_pad, cout_pad)
    return jnp.transpose(w, (2, 0, 1)).reshape(cout_pad, kh * kw * cin_pad)


def custom_conditioned_unet_forward(params, sample_nchw, timestep, cond_vector,
                                    *, ch=32, groups=8, out_pad=8):
    B, C_in, H, W = sample_nchw.shape
    HW = H * W
    f32, bf16 = jnp.float32, jnp.bfloat16
    silu = jax.nn.silu

    # ---------------- embedding chains in plain XLA (per perf review) ----------------
    # cond_embed: Linear -> SiLU -> Linear  (exact module head).
    ce = silu(cond_vector @ params["ce_w1"] + params["ce_b1"])
    cond_emb = ce @ params["ce_w2"] + params["ce_b2"]                        # (B, E)
    # Single-token cross-attention: softmax over one key == 1, so the output is just
    # cond_emb @ Wv @ Wo broadcast over space (wq/wk algebraically dead).  Only valid
    # while the encoder sequence length is exactly 1.
    attn_add = (cond_emb @ params["wv"]) @ params["wo"]                      # (B, ch)

    # timestep embedding: sinusoid -> Linear -> SiLU -> Linear, then SiLU again before
    # the per-channel projection (matches diffusers ResnetBlock2D's nonlinearity(temb)).
    t = jnp.broadcast_to(jnp.asarray(timestep, f32).reshape(-1), (B,))
    sin = timestep_embedding(t, ch)
    temb = silu(sin @ params["t_w1"] + params["t_b1"]) @ params["t_w2"] + params["t_b2"]
    temb_proj = silu(temb) @ params["tp_w"] + params["tp_b"]                 # (B, ch)

    vec = jnp.stack([temb_proj, attn_add], axis=-1).astype(f32)              # (B, ch, 2)

    # ---------------- per-batch image slab: channels-major, HW on the lane axis ------
    x = sample_nchw.reshape(B, C_in, HW)
    x = jnp.pad(x, ((0, 0), (0, ch - C_in), (0, 0))).astype(f32)             # (B, ch, HW)

    # ---------------- packed broadcast slabs (3 total) -------------------------------
    wslab = jnp.concatenate([
        _conv_to_mat(params["ci_w"], ch, ch),
        _conv_to_mat(params["r1_w"], ch, ch),
        _conv_to_mat(params["r2_w"], ch, ch),
        _conv_to_mat(params["co_w"], ch, out_pad),
    ], axis=0).astype(bf16)                                   # (3*ch + out_pad, 9*ch)

    co_b = jnp.pad(params["co_b"].reshape(-1), (0, ch - params["co_b"].size))
    cols = [params["ci_b"].reshape(-1), params["r1_b"].reshape(-1),
            params["r2_b"].reshape(-1), co_b,
            params["gn1_g"].reshape(-1), params["gn1_b"].reshape(-1),
            params["gn2_g"].reshape(-1), params["gn2_b"].reshape(-1),
            params["gno_g"].reshape(-1), params["gno_b"].reshape(-1)]
    cols += [jnp.zeros((ch,), f32)] * (_NCOL - len(cols))
    colmat = jnp.stack(cols, axis=1)                                          # (ch, 16)
    gidx = jnp.arange(ch) // (ch // groups)
    p_mat = (gidx[:, None] == gidx[None, :]).astype(f32) / float(HW * (ch // groups))
    aux = jnp.concatenate([colmat, p_mat], axis=1)                            # (ch, 16+ch)

    hh = jnp.arange(HW) // W
    ww = jnp.arange(HW) % W
    mask_rows = []
    for da in (-1, 0, 1):
        for db in (-1, 0, 1):
            mask_rows.append(((hh + da >= 0) & (hh + da < H) &
                              (ww + db >= 0) & (ww + db < W)).astype(f32))
    masks = jnp.stack(mask_rows, axis=0)                                      # (9, HW)

    # ---------------- fused kernel ----------------------------------------------------
    kern = functools.partial(fused_unet_kernel, H=H, W=W, CH=ch, OUT_PAD=out_pad)
    out = pl.pallas_call(
        kern,
        out_shape=jax.ShapeDtypeStruct((B, out_pad, HW), f32),
        grid=(B,),
        in_specs=[
            pl.BlockSpec((1, ch, HW), lambda b: (b, 0, 0)),     # per-batch image
            pl.BlockSpec((1, ch, 2), lambda b: (b, 0, 0)),      # per-batch temb/attn cols
            pl.BlockSpec(wslab.shape, lambda b: (0, 0)),        # conv weight slab (bf16)
            pl.BlockSpec(aux.shape, lambda b: (0, 0)),          # biases/GN params/P (f32)
            pl.BlockSpec(masks.shape, lambda b: (0, 0)),        # conv tap masks (f32)
        ],
        out_specs=pl.BlockSpec((1, out_pad, HW), lambda b: (b, 0, 0)),
        compiler_params=pltpu.CompilerParams(dimension_semantics=("parallel",)),
    )(x, vec, wslab, aux, masks)

    return out[:, :C_in, :].reshape(B, C_in, H, W)              # back to NCHW


# ---------------------------------------------------------------------------
# Parameters (deterministic synthetic init)
# ---------------------------------------------------------------------------

def init_params(key, *, cond_dim, embedding_dim, in_ch, ch, ted):
    def nrm(k, shape, scale=0.05):
        return scale * jax.random.normal(k, shape, jnp.float32)

    ks = iter(jax.random.split(key, 32))
    p = {}
    # cond_embed: Linear(cond_dim, E) -> SiLU -> Linear(E, E)   (exact module params)
    p["ce_w1"] = nrm(next(ks), (cond_dim, embedding_dim))
    p["ce_b1"] = jnp.zeros((1, embedding_dim), jnp.float32)
    p["ce_w2"] = nrm(next(ks), (embedding_dim, embedding_dim))
    p["ce_b2"] = jnp.zeros((1, embedding_dim), jnp.float32)
    # time embedding MLP: Linear(ch, ted) -> SiLU -> Linear(ted, ted)
    p["t_w1"] = nrm(next(ks), (ch, ted))
    p["t_b1"] = jnp.zeros((1, ted), jnp.float32)
    p["t_w2"] = nrm(next(ks), (ted, ted))
    p["t_b2"] = jnp.zeros((1, ted), jnp.float32)
    # conv_in
    p["ci_w"] = nrm(next(ks), (3, 3, in_ch, ch))
    p["ci_b"] = jnp.zeros((1, ch), jnp.float32)
    # resnet block
    p["gn1_g"] = jnp.ones((1, ch), jnp.float32)
    p["gn1_b"] = jnp.zeros((1, ch), jnp.float32)
    p["r1_w"] = nrm(next(ks), (3, 3, ch, ch))
    p["r1_b"] = jnp.zeros((1, ch), jnp.float32)
    p["tp_w"] = nrm(next(ks), (ted, ch))
    p["tp_b"] = jnp.zeros((1, ch), jnp.float32)
    p["gn2_g"] = jnp.ones((1, ch), jnp.float32)
    p["gn2_b"] = jnp.zeros((1, ch), jnp.float32)
    p["r2_w"] = nrm(next(ks), (3, 3, ch, ch))
    p["r2_b"] = jnp.zeros((1, ch), jnp.float32)
    # cross-attention (wq/wk kept for parity; dead compute for a single-key softmax)
    p["wq"] = nrm(next(ks), (ch, ch))
    p["wk"] = nrm(next(ks), (embedding_dim, ch))
    p["wv"] = nrm(next(ks), (embedding_dim, ch))
    p["wo"] = nrm(next(ks), (ch, ch))
    # output head
    p["gno_g"] = jnp.ones((1, ch), jnp.float32)
    p["gno_b"] = jnp.zeros((1, ch), jnp.float32)
    p["co_w"] = nrm(next(ks), (3, 3, ch, in_ch))
    p["co_b"] = jnp.zeros((1, in_ch), jnp.float32)
    return p


# ---------------------------------------------------------------------------
# Driver
# ---------------------------------------------------------------------------

if __name__ == "__main__":
    B, C_in, H, W = 2, 4, 16, 16
    cond_dim, embedding_dim = 8, 32
    ch, ted, groups = 32, 128, 8

    key = jax.random.PRNGKey(0)
    k_x, k_c, k_p = jax.random.split(key, 3)
    sample = jax.random.normal(k_x, (B, C_in, H, W), jnp.float32)
    cond_vector = jax.random.normal(k_c, (B, cond_dim), jnp.float32)
    timestep = jnp.array([10.0, 500.0], dtype=jnp.float32)

    params = init_params(k_p, cond_dim=cond_dim, embedding_dim=embedding_dim,
                         in_ch=C_in, ch=ch, ted=ted)

    fwd = jax.jit(functools.partial(custom_conditioned_unet_forward,
                                    ch=ch, groups=groups))
    out = fwd(params, sample, timestep, cond_vector)
    out = jax.block_until_ready(out)

    assert out.shape == (B, C_in, H, W), out.shape
    assert bool(jnp.all(jnp.isfinite(out)))
    print("KERNEL_OK")
</pallas_src>

<mosaic_0001>
module attributes {stable_mosaic.version = 11 : i64} {
  func.func @fused_unet_kernel(%arg0: i32, %arg1: memref<1x32x256xf32, #tpu.memory_space<vmem>>, %arg2: memref<1x32x2xf32, #tpu.memory_space<vmem>>, %arg3: memref<104x288xbf16, #tpu.memory_space<vmem>>, %arg4: memref<32x48xf32, #tpu.memory_space<vmem>>, %arg5: memref<9x256xf32, #tpu.memory_space<vmem>>, %arg6: memref<1x8x256xf32, #tpu.memory_space<vmem>>) attributes {dimension_semantics = [#tpu.dimension_semantics<parallel>], iteration_bounds = array<i64: 2>, scalar_prefetch = 0 : i64, scratch_operands = 0 : i64, tpu.core_type = #tpu.core_type<tc>, window_params = [{transform_indices = @transform_0, window_bounds = array<i64: 1, 32, 256>}, {transform_indices = @transform_1, window_bounds = array<i64: 1, 32, 2>}, {pipeline_mode = #tpu.pipeline_mode<synchronous>, transform_indices = @transform_2, window_bounds = array<i64: 104, 288>}, {pipeline_mode = #tpu.pipeline_mode<synchronous>, transform_indices = @transform_3, window_bounds = array<i64: 32, 48>}, {pipeline_mode = #tpu.pipeline_mode<synchronous>, transform_indices = @transform_4, window_bounds = array<i64: 9, 256>}, {transform_indices = @transform_5, window_bounds = array<i64: 1, 8, 256>}]} {
    %c0 = arith.constant 0 : index
    %c16 = arith.constant 16 : index
    %0 = vector.load %arg4[%c0, %c16] : memref<32x48xf32, #tpu.memory_space<vmem>>, vector<32x32xf32>
    %c0_0 = arith.constant 0 : index
    %c0_1 = arith.constant 0 : index
    %c0_2 = arith.constant 0 : index
    %1 = vector.load %arg1[%c0_0, %c0_1, %c0_2] : memref<1x32x256xf32, #tpu.memory_space<vmem>>, vector<1x32x256xf32>
    %2 = vector.shape_cast %1 : vector<1x32x256xf32> to vector<32x256xf32>
    %c0_3 = arith.constant 0 : index
    %c0_4 = arith.constant 0 : index
    %c0_5 = arith.constant 0 : index
    %3 = vector.load %arg2[%c0_3, %c0_4, %c0_5] : memref<1x32x2xf32, #tpu.memory_space<vmem>>, vector<1x32x2xf32>
    %4 = vector.shape_cast %3 : vector<1x32x2xf32> to vector<32x2xf32>
    %5 = vector.extract_strided_slice %4 {offsets = [0, 0], sizes = [32, 1], strides = [1, 1]} : vector<32x2xf32> to vector<32x1xf32>
    %6 = vector.extract_strided_slice %4 {offsets = [0, 1], sizes = [32, 1], strides = [1, 1]} : vector<32x2xf32> to vector<32x1xf32>
    %c17_i32 = arith.constant 17 : i32
    %7 = tpu.dynamic_rotate %2 by %c17_i32 dim 1 : vector<32x256xf32>, i32 -> vector<32x256xf32>
    %c0_6 = arith.constant 0 : index
    %c0_7 = arith.constant 0 : index
    %8 = vector.load %arg5[%c0_6, %c0_7] : memref<9x256xf32, #tpu.memory_space<vmem>>, vector<1x256xf32>
    %9 = vector.broadcast %8 : vector<1x256xf32> to vector<32x256xf32>
    %10 = arith.mulf %7, %9 : vector<32x256xf32>
    %c16_i32 = arith.constant 16 : i32
    %11 = tpu.dynamic_rotate %2 by %c16_i32 dim 1 : vector<32x256xf32>, i32 -> vector<32x256xf32>
    %c1 = arith.constant 1 : index
    %c0_8 = arith.constant 0 : index
    %12 = vector.load %arg5[%c1, %c0_8] : memref<9x256xf32, #tpu.memory_space<vmem>>, vector<1x256xf32>
    %13 = vector.broadcast %12 : vector<1x256xf32> to vector<32x256xf32>
    %14 = arith.mulf %11, %13 : vector<32x256xf32>
    %c15_i32 = arith.constant 15 : i32
    %15 = tpu.dynamic_rotate %2 by %c15_i32 dim 1 : vector<32x256xf32>, i32 -> vector<32x256xf32>
    %c2 = arith.constant 2 : index
    %c0_9 = arith.constant 0 : index
    %16 = vector.load %arg5[%c2, %c0_9] : memref<9x256xf32, #tpu.memory_space<vmem>>, vector<1x256xf32>
    %17 = vector.broadcast %16 : vector<1x256xf32> to vector<32x256xf32>
    %18 = arith.mulf %15, %17 : vector<32x256xf32>
    %c1_i32 = arith.constant 1 : i32
    %19 = tpu.dynamic_rotate %2 by %c1_i32 dim 1 : vector<32x256xf32>, i32 -> vector<32x256xf32>
    %c3 = arith.constant 3 : index
    %c0_10 = arith.constant 0 : index
    %20 = vector.load %arg5[%c3, %c0_10] : memref<9x256xf32, #tpu.memory_space<vmem>>, vector<1x256xf32>
    %21 = vector.broadcast %20 : vector<1x256xf32> to vector<32x256xf32>
    %22 = arith.mulf %19, %21 : vector<32x256xf32>
    %c255_i32 = arith.constant 255 : i32
    %23 = tpu.dynamic_rotate %2 by %c255_i32 dim 1 : vector<32x256xf32>, i32 -> vector<32x256xf32>
    %c5 = arith.constant 5 : index
    %c0_11 = arith.constant 0 : index
    %24 = vector.load %arg5[%c5, %c0_11] : memref<9x256xf32, #tpu.memory_space<vmem>>, vector<1x256xf32>
    %25 = vector.broadcast %24 : vector<1x256xf32> to vector<32x256xf32>
    %26 = arith.mulf %23, %25 : vector<32x256xf32>
    %c241_i32 = arith.constant 241 : i32
    %27 = tpu.dynamic_rotate %2 by %c241_i32 dim 1 : vector<32x256xf32>, i32 -> vector<32x256xf32>
    %c6 = arith.constant 6 : index
    %c0_12 = arith.constant 0 : index
    %28 = vector.load %arg5[%c6, %c0_12] : memref<9x256xf32, #tpu.memory_space<vmem>>, vector<1x256xf32>
    %29 = vector.broadcast %28 : vector<1x256xf32> to vector<32x256xf32>
    %30 = arith.mulf %27, %29 : vector<32x256xf32>
    %c240_i32 = arith.constant 240 : i32
    %31 = tpu.dynamic_rotate %2 by %c240_i32 dim 1 : vector<32x256xf32>, i32 -> vector<32x256xf32>
    %c7 = arith.constant 7 : index
    %c0_13 = arith.constant 0 : index
    %32 = vector.load %arg5[%c7, %c0_13] : memref<9x256xf32, #tpu.memory_space<vmem>>, vector<1x256xf32>
    %33 = vector.broadcast %32 : vector<1x256xf32> to vector<32x256xf32>
    %34 = arith.mulf %31, %33 : vector<32x256xf32>
    %c239_i32 = arith.constant 239 : i32
    %35 = tpu.dynamic_rotate %2 by %c239_i32 dim 1 : vector<32x256xf32>, i32 -> vector<32x256xf32>
    %c8 = arith.constant 8 : index
    %c0_14 = arith.constant 0 : index
    %36 = vector.load %arg5[%c8, %c0_14] : memref<9x256xf32, #tpu.memory_space<vmem>>, vector<1x256xf32>
    %37 = vector.broadcast %36 : vector<1x256xf32> to vector<32x256xf32>
    %38 = arith.mulf %35, %37 : vector<32x256xf32>
    %39 = tpu.concatenate %10, %14, %18, %22, %2, %26, %30, %34, %38 in 0 : vector<32x256xf32>, vector<32x256xf32>, vector<32x256xf32>, vector<32x256xf32>, vector<32x256xf32>, vector<32x256xf32>, vector<32x256xf32>, vector<32x256xf32>, vector<32x256xf32> -> vector<288x256xf32>
    %40 = arith.truncf %39 : vector<288x256xf32> to vector<288x256xbf16>
    %c0_15 = arith.constant 0 : index
    %c0_16 = arith.constant 0 : index
    %41 = vector.load %arg3[%c0_15, %c0_16] : memref<104x288xbf16, #tpu.memory_space<vmem>>, vector<32x288xbf16>
    %cst = arith.constant dense<0.000000e+00> : vector<32x256xf32>
    %42 = tpu.matmul %41, %40, %cst {dimension_numbers = #tpu.dot_dimension_numbers<[1], [0], [0], [1], [0, 0, 1, 1], [], []>} : vector<32x288xbf16>, vector<288x256xbf16>, vector<32x256xf32> -> vector<32x256xf32>
    %c0_17 = arith.constant 0 : index
    %c0_18 = arith.constant 0 : index
    %43 = vector.load %arg4[%c0_17, %c0_18] : memref<32x48xf32, #tpu.memory_space<vmem>>, vector<32x1xf32>
    %44 = vector.broadcast %43 : vector<32x1xf32> to vector<32x256xf32>
    %45 = arith.addf %42, %44 : vector<32x256xf32>
    %c0_19 = arith.constant 0 : index
    %c4 = arith.constant 4 : index
    %46 = vector.load %arg4[%c0_19, %c4] : memref<32x48xf32, #tpu.memory_space<vmem>>, vector<32x1xf32>
    %c0_20 = arith.constant 0 : index
    %c5_21 = arith.constant 5 : index
    %47 = vector.load %arg4[%c0_20, %c5_21] : memref<32x48xf32, #tpu.memory_space<vmem>>, vector<32x1xf32>
    %cst_22 = arith.constant dense<0.000000e+00> : vector<32x256xf32>
    %48 = tpu.matmul %0, %45, %cst_22 {dimension_numbers = #tpu.dot_dimension_numbers<[1], [0], [0], [1], [0, 0, 1, 1], [], []>, precision = #tpu.contract_precision<fp32>} : vector<32x32xf32>, vector<32x256xf32>, vector<32x256xf32> -> vector<32x256xf32>
    %cst_23 = arith.constant dense<0.000000e+00> : vector<32xf32>
    %49 = vector.multi_reduction <add>, %48, %cst_23 [1] : vector<32x256xf32> to vector<32xf32>
    %50 = vector.shape_cast %49 : vector<32xf32> to vector<32x1xf32>
    %51 = vector.broadcast %50 : vector<32x1xf32> to vector<32x256xf32>
    %52 = arith.subf %45, %51 : vector<32x256xf32>
    %53 = arith.mulf %52, %52 : vector<32x256xf32>
    %cst_24 = arith.constant dense<0.000000e+00> : vector<32x256xf32>
    %54 = tpu.matmul %0, %53, %cst_24 {dimension_numbers = #tpu.dot_dimension_numbers<[1], [0], [0], [1], [0, 0, 1, 1], [], []>, precision = #tpu.contract_precision<fp32>} : vector<32x32xf32>, vector<32x256xf32>, vector<32x256xf32> -> vector<32x256xf32>
    %cst_25 = arith.constant dense<0.000000e+00> : vector<32xf32>
    %55 = vector.multi_reduction <add>, %54, %cst_25 [1] : vector<32x256xf32> to vector<32xf32>
    %56 = vector.shape_cast %55 : vector<32xf32> to vector<32x1xf32>
    %cst_26 = arith.constant 9.99999974E-6 : f32
    %57 = vector.broadcast %cst_26 : f32 to vector<32x1xf32>
    %58 = arith.addf %56, %57 : vector<32x1xf32>
    %59 = math.rsqrt %58 : vector<32x1xf32>
    %60 = vector.broadcast %59 : vector<32x1xf32> to vector<32x256xf32>
    %61 = arith.mulf %52, %60 : vector<32x256xf32>
    %62 = vector.broadcast %46 : vector<32x1xf32> to vector<32x256xf32>
    %63 = arith.mulf %61, %62 : vector<32x256xf32>
    %64 = vector.broadcast %47 : vector<32x1xf32> to vector<32x256xf32>
    %65 = arith.addf %63, %64 : vector<32x256xf32>
    %66 = arith.negf %65 : vector<32x256xf32>
    %67 = math.exp %66 : vector<32x256xf32>
    %cst_27 = arith.constant 1.000000e+00 : f32
    %68 = vector.broadcast %cst_27 : f32 to vector<32x256xf32>
    %69 = arith.addf %68, %67 : vector<32x256xf32>
    %70 = arith.divf %68, %69 : vector<32x256xf32>
    %71 = arith.mulf %65, %70 : vector<32x256xf32>
    %c17_i32_28 = arith.constant 17 : i32
    %72 = tpu.dynamic_rotate %71 by %c17_i32_28 dim 1 : vector<32x256xf32>, i32 -> vector<32x256xf32>
    %c0_29 = arith.constant 0 : index
    %c0_30 = arith.constant 0 : index
    %73 = vector.load %arg5[%c0_29, %c0_30] : memref<9x256xf32, #tpu.memory_space<vmem>>, vector<1x256xf32>
    %74 = vector.broadcast %73 : vector<1x256xf32> to vector<32x256xf32>
    %75 = arith.mulf %72, %74 : vector<32x256xf32>
    %c16_i32_31 = arith.constant 16 : i32
    %76 = tpu.dynamic_rotate %71 by %c16_i32_31 dim 1 : vector<32x256xf32>, i32 -> vector<32x256xf32>
    %c1_32 = arith.constant 1 : index
    %c0_33 = arith.constant 0 : index
    %77 = vector.load %arg5[%c1_32, %c0_33] : memref<9x256xf32, #tpu.memory_space<vmem>>, vector<1x256xf32>
    %78 = vector.broadcast %77 : vector<1x256xf32> to vector<32x256xf32>
    %79 = arith.mulf %76, %78 : vector<32x256xf32>
    %c15_i32_34 = arith.constant 15 : i32
    %80 = tpu.dynamic_rotate %71 by %c15_i32_34 dim 1 : vector<32x256xf32>, i32 -> vector<32x256xf32>
    %c2_35 = arith.constant 2 : index
    %c0_36 = arith.constant 0 : index
    %81 = vector.load %arg5[%c2_35, %c0_36] : memref<9x256xf32, #tpu.memory_space<vmem>>, vector<1x256xf32>
    %82 = vector.broadcast %81 : vector<1x256xf32> to vector<32x256xf32>
    %83 = arith.mulf %80, %82 : vector<32x256xf32>
    %c1_i32_37 = arith.constant 1 : i32
    %84 = tpu.dynamic_rotate %71 by %c1_i32_37 dim 1 : vector<32x256xf32>, i32 -> vector<32x256xf32>
    %c3_38 = arith.constant 3 : index
    %c0_39 = arith.constant 0 : index
    %85 = vector.load %arg5[%c3_38, %c0_39] : memref<9x256xf32, #tpu.memory_space<vmem>>, vector<1x256xf32>
    %86 = vector.broadcast %85 : vector<1x256xf32> to vector<32x256xf32>
    %87 = arith.mulf %84, %86 : vector<32x256xf32>
    %c255_i32_40 = arith.constant 255 : i32
    %88 = tpu.dynamic_rotate %71 by %c255_i32_40 dim 1 : vector<32x256xf32>, i32 -> vector<32x256xf32>
    %c5_41 = arith.constant 5 : index
    %c0_42 = arith.constant 0 : index
    %89 = vector.load %arg5[%c5_41, %c0_42] : memref<9x256xf32, #tpu.memory_space<vmem>>, vector<1x256xf32>
    %90 = vector.broadcast %89 : vector<1x256xf32> to vector<32x256xf32>
    %91 = arith.mulf %88, %90 : vector<32x256xf32>
    %c241_i32_43 = arith.constant 241 : i32
    %92 = tpu.dynamic_rotate %71 by %c241_i32_43 dim 1 : vector<32x256xf32>, i32 -> vector<32x256xf32>
    %c6_44 = arith.constant 6 : index
    %c0_45 = arith.constant 0 : index
    %93 = vector.load %arg5[%c6_44, %c0_45] : memref<9x256xf32, #tpu.memory_space<vmem>>, vector<1x256xf32>
    %94 = vector.broadcast %93 : vector<1x256xf32> to vector<32x256xf32>
    %95 = arith.mulf %92, %94 : vector<32x256xf32>
    %c240_i32_46 = arith.constant 240 : i32
    %96 = tpu.dynamic_rotate %71 by %c240_i32_46 dim 1 : vector<32x256xf32>, i32 -> vector<32x256xf32>
    %c7_47 = arith.constant 7 : index
    %c0_48 = arith.constant 0 : index
    %97 = vector.load %arg5[%c7_47, %c0_48] : memref<9x256xf32, #tpu.memory_space<vmem>>, vector<1x256xf32>
    %98 = vector.broadcast %97 : vector<1x256xf32> to vector<32x256xf32>
    %99 = arith.mulf %96, %98 : vector<32x256xf32>
    %c239_i32_49 = arith.constant 239 : i32
    %100 = tpu.dynamic_rotate %71 by %c239_i32_49 dim 1 : vector<32x256xf32>, i32 -> vector<32x256xf32>
    %c8_50 = arith.constant 8 : index
    %c0_51 = arith.constant 0 : index
    %101 = vector.load %arg5[%c8_50, %c0_51] : memref<9x256xf32, #tpu.memory_space<vmem>>, vector<1x256xf32>
    %102 = vector.broadcast %101 : vector<1x256xf32> to vector<32x256xf32>
    %103 = arith.mulf %100, %102 : vector<32x256xf32>
    %104 = tpu.concatenate %75, %79, %83, %87, %71, %91, %95, %99, %103 in 0 : vector<32x256xf32>, vector<32x256xf32>, vector<32x256xf32>, vector<32x256xf32>, vector<32x256xf32>, vector<32x256xf32>, vector<32x256xf32>, vector<32x256xf32>, vector<32x256xf32> -> vector<288x256xf32>
    %105 = arith.truncf %104 : vector<288x256xf32> to vector<288x256xbf16>
    %c32 = arith.constant 32 : index
    %c0_52 = arith.constant 0 : index
    %106 = vector.load %arg3[%c32, %c0_52] : memref<104x288xbf16, #tpu.memory_space<vmem>>, vector<32x288xbf16>
    %cst_53 = arith.constant dense<0.000000e+00> : vector<32x256xf32>
    %107 = tpu.matmul %106, %105, %cst_53 {dimension_numbers = #tpu.dot_dimension_numbers<[1], [0], [0], [1], [0, 0, 1, 1], [], []>} : vector<32x288xbf16>, vector<288x256xbf16>, vector<32x256xf32> -> vector<32x256xf32>
    %c0_54 = arith.constant 0 : index
    %c1_55 = arith.constant 1 : index
    %108 = vector.load %arg4[%c0_54, %c1_55] : memref<32x48xf32, #tpu.memory_space<vmem>>, vector<32x1xf32>
    %109 = vector.broadcast %108 : vector<32x1xf32> to vector<32x256xf32>
    %110 = arith.addf %107, %109 : vector<32x256xf32>
    %111 = vector.broadcast %5 : vector<32x1xf32> to vector<32x256xf32>
    %112 = arith.addf %110, %111 : vector<32x256xf32>
    %c0_56 = arith.constant 0 : index
    %c6_57 = arith.constant 6 : index
    %113 = vector.load %arg4[%c0_56, %c6_57] : memref<32x48xf32, #tpu.memory_space<vmem>>, vector<32x1xf32>
    %c0_58 = arith.constant 0 : index
    %c7_59 = arith.constant 7 : index
    %114 = vector.load %arg4[%c0_58, %c7_59] : memref<32x48xf32, #tpu.memory_space<vmem>>, vector<32x1xf32>
    %cst_60 = arith.constant dense<0.000000e+00> : vector<32x256xf32>
    %115 = tpu.matmul %0, %112, %cst_60 {dimension_numbers = #tpu.dot_dimension_numbers<[1], [0], [0], [1], [0, 0, 1, 1], [], []>, precision = #tpu.contract_precision<fp32>} : vector<32x32xf32>, vector<32x256xf32>, vector<32x256xf32> -> vector<32x256xf32>
    %cst_61 = arith.constant dense<0.000000e+00> : vector<32xf32>
    %116 = vector.multi_reduction <add>, %115, %cst_61 [1] : vector<32x256xf32> to vector<32xf32>
    %117 = vector.shape_cast %116 : vector<32xf32> to vector<32x1xf32>
    %118 = vector.broadcast %117 : vector<32x1xf32> to vector<32x256xf32>
    %119 = arith.subf %112, %118 : vector<32x256xf32>
    %120 = arith.mulf %119, %119 : vector<32x256xf32>
    %cst_62 = arith.constant dense<0.000000e+00> : vector<32x256xf32>
    %121 = tpu.matmul %0, %120, %cst_62 {dimension_numbers = #tpu.dot_dimension_numbers<[1], [0], [0], [1], [0, 0, 1, 1], [], []>, precision = #tpu.contract_precision<fp32>} : vector<32x32xf32>, vector<32x256xf32>, vector<32x256xf32> -> vector<32x256xf32>
    %cst_63 = arith.constant dense<0.000000e+00> : vector<32xf32>
    %122 = vector.multi_reduction <add>, %121, %cst_63 [1] : vector<32x256xf32> to vector<32xf32>
    %123 = vector.shape_cast %122 : vector<32xf32> to vector<32x1xf32>
    %cst_64 = arith.constant 9.99999974E-6 : f32
    %124 = vector.broadcast %cst_64 : f32 to vector<32x1xf32>
    %125 = arith.addf %123, %124 : vector<32x1xf32>
    %126 = math.rsqrt %125 : vector<32x1xf32>
    %127 = vector.broadcast %126 : vector<32x1xf32> to vector<32x256xf32>
    %128 = arith.mulf %119, %127 : vector<32x256xf32>
    %129 = vector.broadcast %113 : vector<32x1xf32> to vector<32x256xf32>
    %130 = arith.mulf %128, %129 : vector<32x256xf32>
    %131 = vector.broadcast %114 : vector<32x1xf32> to vector<32x256xf32>
    %132 = arith.addf %130, %131 : vector<32x256xf32>
    %133 = arith.negf %132 : vector<32x256xf32>
    %134 = math.exp %133 : vector<32x256xf32>
    %cst_65 = arith.constant 1.000000e+00 : f32
    %135 = vector.broadcast %cst_65 : f32 to vector<32x256xf32>
    %136 = arith.addf %135, %134 : vector<32x256xf32>
    %137 = arith.divf %135, %136 : vector<32x256xf32>
    %138 = arith.mulf %132, %137 : vector<32x256xf32>
    %c17_i32_66 = arith.constant 17 : i32
    %139 = tpu.dynamic_rotate %138 by %c17_i32_66 dim 1 : vector<32x256xf32>, i32 -> vector<32x256xf32>
    %c0_67 = arith.constant 0 : index
    %c0_68 = arith.constant 0 : index
    %140 = vector.load %arg5[%c0_67, %c0_68] : memref<9x256xf32, #tpu.memory_space<vmem>>, vector<1x256xf32>
    %141 = vector.broadcast %140 : vector<1x256xf32> to vector<32x256xf32>
    %142 = arith.mulf %139, %141 : vector<32x256xf32>
    %c16_i32_69 = arith.constant 16 : i32
    %143 = tpu.dynamic_rotate %138 by %c16_i32_69 dim 1 : vector<32x256xf32>, i32 -> vector<32x256xf32>
    %c1_70 = arith.constant 1 : index
    %c0_71 = arith.constant 0 : index
    %144 = vector.load %arg5[%c1_70, %c0_71] : memref<9x256xf32, #tpu.memory_space<vmem>>, vector<1x256xf32>
    %145 = vector.broadcast %144 : vector<1x256xf32> to vector<32x256xf32>
    %146 = arith.mulf %143, %145 : vector<32x256xf32>
    %c15_i32_72 = arith.constant 15 : i32
    %147 = tpu.dynamic_rotate %138 by %c15_i32_72 dim 1 : vector<32x256xf32>, i32 -> vector<32x256xf32>
    %c2_73 = arith.constant 2 : index
    %c0_74 = arith.constant 0 : index
    %148 = vector.load %arg5[%c2_73, %c0_74] : memref<9x256xf32, #tpu.memory_space<vmem>>, vector<1x256xf32>
    %149 = vector.broadcast %148 : vector<1x256xf32> to vector<32x256xf32>
    %150 = arith.mulf %147, %149 : vector<32x256xf32>
    %c1_i32_75 = arith.constant 1 : i32
    %151 = tpu.dynamic_rotate %138 by %c1_i32_75 dim 1 : vector<32x256xf32>, i32 -> vector<32x256xf32>
    %c3_76 = arith.constant 3 : index
    %c0_77 = arith.constant 0 : index
    %152 = vector.load %arg5[%c3_76, %c0_77] : memref<9x256xf32, #tpu.memory_space<vmem>>, vector<1x256xf32>
    %153 = vector.broadcast %152 : vector<1x256xf32> to vector<32x256xf32>
    %154 = arith.mulf %151, %153 : vector<32x256xf32>
    %c255_i32_78 = arith.constant 255 : i32
    %155 = tpu.dynamic_rotate %138 by %c255_i32_78 dim 1 : vector<32x256xf32>, i32 -> vector<32x256xf32>
    %c5_79 = arith.constant 5 : index
    %c0_80 = arith.constant 0 : index
    %156 = vector.load %arg5[%c5_79, %c0_80] : memref<9x256xf32, #tpu.memory_space<vmem>>, vector<1x256xf32>
    %157 = vector.broadcast %156 : vector<1x256xf32> to vector<32x256xf32>
    %158 = arith.mulf %155, %157 : vector<32x256xf32>
    %c241_i32_81 = arith.constant 241 : i32
    %159 = tpu.dynamic_rotate %138 by %c241_i32_81 dim 1 : vector<32x256xf32>, i32 -> vector<32x256xf32>
    %c6_82 = arith.constant 6 : index
    %c0_83 = arith.constant 0 : index
    %160 = vector.load %arg5[%c6_82, %c0_83] : memref<9x256xf32, #tpu.memory_space<vmem>>, vector<1x256xf32>
    %161 = vector.broadcast %160 : vector<1x256xf32> to vector<32x256xf32>
    %162 = arith.mulf %159, %161 : vector<32x256xf32>
    %c240_i32_84 = arith.constant 240 : i32
    %163 = tpu.dynamic_rotate %138 by %c240_i32_84 dim 1 : vector<32x256xf32>, i32 -> vector<32x256xf32>
    %c7_85 = arith.constant 7 : index
    %c0_86 = arith.constant 0 : index
    %164 = vector.load %arg5[%c7_85, %c0_86] : memref<9x256xf32, #tpu.memory_space<vmem>>, vector<1x256xf32>
    %165 = vector.broadcast %164 : vector<1x256xf32> to vector<32x256xf32>
    %166 = arith.mulf %163, %165 : vector<32x256xf32>
    %c239_i32_87 = arith.constant 239 : i32
    %167 = tpu.dynamic_rotate %138 by %c239_i32_87 dim 1 : vector<32x256xf32>, i32 -> vector<32x256xf32>
    %c8_88 = arith.constant 8 : index
    %c0_89 = arith.constant 0 : index
    %168 = vector.load %arg5[%c8_88, %c0_89] : memref<9x256xf32, #tpu.memory_space<vmem>>, vector<1x256xf32>
    %169 = vector.broadcast %168 : vector<1x256xf32> to vector<32x256xf32>
    %170 = arith.mulf %167, %169 : vector<32x256xf32>
    %171 = tpu.concatenate %142, %146, %150, %154, %138, %158, %162, %166, %170 in 0 : vector<32x256xf32>, vector<32x256xf32>, vector<32x256xf32>, vector<32x256xf32>, vector<32x256xf32>, vector<32x256xf32>, vector<32x256xf32>, vector<32x256xf32>, vector<32x256xf32> -> vector<288x256xf32>
    %172 = arith.truncf %171 : vector<288x256xf32> to vector<288x256xbf16>
    %c64 = arith.constant 64 : index
    %c0_90 = arith.constant 0 : index
    %173 = vector.load %arg3[%c64, %c0_90] : memref<104x288xbf16, #tpu.memory_space<vmem>>, vector<32x288xbf16>
    %cst_91 = arith.constant dense<0.000000e+00> : vector<32x256xf32>
    %174 = tpu.matmul %173, %172, %cst_91 {dimension_numbers = #tpu.dot_dimension_numbers<[1], [0], [0], [1], [0, 0, 1, 1], [], []>} : vector<32x288xbf16>, vector<288x256xbf16>, vector<32x256xf32> -> vector<32x256xf32>
    %c0_92 = arith.constant 0 : index
    %c2_93 = arith.constant 2 : index
    %175 = vector.load %arg4[%c0_92, %c2_93] : memref<32x48xf32, #tpu.memory_space<vmem>>, vector<32x1xf32>
    %176 = vector.broadcast %175 : vector<32x1xf32> to vector<32x256xf32>
    %177 = arith.addf %174, %176 : vector<32x256xf32>
    %178 = arith.addf %177, %45 : vector<32x256xf32>
    %179 = vector.broadcast %6 : vector<32x1xf32> to vector<32x256xf32>
    %180 = arith.addf %178, %179 : vector<32x256xf32>
    %c0_94 = arith.constant 0 : index
    %c8_95 = arith.constant 8 : index
    %181 = vector.load %arg4[%c0_94, %c8_95] : memref<32x48xf32, #tpu.memory_space<vmem>>, vector<32x1xf32>
    %c0_96 = arith.constant 0 : index
    %c9 = arith.constant 9 : index
    %182 = vector.load %arg4[%c0_96, %c9] : memref<32x48xf32, #tpu.memory_space<vmem>>, vector<32x1xf32>
    %cst_97 = arith.constant dense<0.000000e+00> : vector<32x256xf32>
    %183 = tpu.matmul %0, %180, %cst_97 {dimension_numbers = #tpu.dot_dimension_numbers<[1], [0], [0], [1], [0, 0, 1, 1], [], []>, precision = #tpu.contract_precision<fp32>} : vector<32x32xf32>, vector<32x256xf32>, vector<32x256xf32> -> vector<32x256xf32>
    %cst_98 = arith.constant dense<0.000000e+00> : vector<32xf32>
    %184 = vector.multi_reduction <add>, %183, %cst_98 [1] : vector<32x256xf32> to vector<32xf32>
    %185 = vector.shape_cast %184 : vector<32xf32> to vector<32x1xf32>
    %186 = vector.broadcast %185 : vector<32x1xf32> to vector<32x256xf32>
    %187 = arith.subf %180, %186 : vector<32x256xf32>
    %188 = arith.mulf %187, %187 : vector<32x256xf32>
    %cst_99 = arith.constant dense<0.000000e+00> : vector<32x256xf32>
    %189 = tpu.matmul %0, %188, %cst_99 {dimension_numbers = #tpu.dot_dimension_numbers<[1], [0], [0], [1], [0, 0, 1, 1], [], []>, precision = #tpu.contract_precision<fp32>} : vector<32x32xf32>, vector<32x256xf32>, vector<32x256xf32> -> vector<32x256xf32>
    %cst_100 = arith.constant dense<0.000000e+00> : vector<32xf32>
    %190 = vector.multi_reduction <add>, %189, %cst_100 [1] : vector<32x256xf32> to vector<32xf32>
    %191 = vector.shape_cast %190 : vector<32xf32> to vector<32x1xf32>
    %cst_101 = arith.constant 9.99999974E-6 : f32
    %192 = vector.broadcast %cst_101 : f32 to vector<32x1xf32>
    %193 = arith.addf %191, %192 : vector<32x1xf32>
    %194 = math.rsqrt %193 : vector<32x1xf32>
    %195 = vector.broadcast %194 : vector<32x1xf32> to vector<32x256xf32>
    %196 = arith.mulf %187, %195 : vector<32x256xf32>
    %197 = vector.broadcast %181 : vector<32x1xf32> to vector<32x256xf32>
    %198 = arith.mulf %196, %197 : vector<32x256xf32>
    %199 = vector.broadcast %182 : vector<32x1xf32> to vector<32x256xf32>
    %200 = arith.addf %198, %199 : vector<32x256xf32>
    %201 = arith.negf %200 : vector<32x256xf32>
    %202 = math.exp %201 : vector<32x256xf32>
    %cst_102 = arith.constant 1.000000e+00 : f32
    %203 = vector.broadcast %cst_102 : f32 to vector<32x256xf32>
    %204 = arith.addf %203, %202 : vector<32x256xf32>
    %205 = arith.divf %203, %204 : vector<32x256xf32>
    %206 = arith.mulf %200, %205 : vector<32x256xf32>
    %c17_i32_103 = arith.constant 17 : i32
    %207 = tpu.dynamic_rotate %206 by %c17_i32_103 dim 1 : vector<32x256xf32>, i32 -> vector<32x256xf32>
    %c0_104 = arith.constant 0 : index
    %c0_105 = arith.constant 0 : index
    %208 = vector.load %arg5[%c0_104, %c0_105] : memref<9x256xf32, #tpu.memory_space<vmem>>, vector<1x256xf32>
    %209 = vector.broadcast %208 : vector<1x256xf32> to vector<32x256xf32>
    %210 = arith.mulf %207, %209 : vector<32x256xf32>
    %c16_i32_106 = arith.constant 16 : i32
    %211 = tpu.dynamic_rotate %206 by %c16_i32_106 dim 1 : vector<32x256xf32>, i32 -> vector<32x256xf32>
    %c1_107 = arith.constant 1 : index
    %c0_108 = arith.constant 0 : index
    %212 = vector.load %arg5[%c1_107, %c0_108] : memref<9x256xf32, #tpu.memory_space<vmem>>, vector<1x256xf32>
    %213 = vector.broadcast %212 : vector<1x256xf32> to vector<32x256xf32>
    %214 = arith.mulf %211, %213 : vector<32x256xf32>
    %c15_i32_109 = arith.constant 15 : i32
    %215 = tpu.dynamic_rotate %206 by %c15_i32_109 dim 1 : vector<32x256xf32>, i32 -> vector<32x256xf32>
    %c2_110 = arith.constant 2 : index
    %c0_111 = arith.constant 0 : index
    %216 = vector.load %arg5[%c2_110, %c0_111] : memref<9x256xf32, #tpu.memory_space<vmem>>, vector<1x256xf32>
    %217 = vector.broadcast %216 : vector<1x256xf32> to vector<32x256xf32>
    %218 = arith.mulf %215, %217 : vector<32x256xf32>
    %c1_i32_112 = arith.constant 1 : i32
    %219 = tpu.dynamic_rotate %206 by %c1_i32_112 dim 1 : vector<32x256xf32>, i32 -> vector<32x256xf32>
    %c3_113 = arith.constant 3 : index
    %c0_114 = arith.constant 0 : index
    %220 = vector.load %arg5[%c3_113, %c0_114] : memref<9x256xf32, #tpu.memory_space<vmem>>, vector<1x256xf32>
    %221 = vector.broadcast %220 : vector<1x256xf32> to vector<32x256xf32>
    %222 = arith.mulf %219, %221 : vector<32x256xf32>
    %c255_i32_115 = arith.constant 255 : i32
    %223 = tpu.dynamic_rotate %206 by %c255_i32_115 dim 1 : vector<32x256xf32>, i32 -> vector<32x256xf32>
    %c5_116 = arith.constant 5 : index
    %c0_117 = arith.constant 0 : index
    %224 = vector.load %arg5[%c5_116, %c0_117] : memref<9x256xf32, #tpu.memory_space<vmem>>, vector<1x256xf32>
    %225 = vector.broadcast %224 : vector<1x256xf32> to vector<32x256xf32>
    %226 = arith.mulf %223, %225 : vector<32x256xf32>
    %c241_i32_118 = arith.constant 241 : i32
    %227 = tpu.dynamic_rotate %206 by %c241_i32_118 dim 1 : vector<32x256xf32>, i32 -> vector<32x256xf32>
    %c6_119 = arith.constant 6 : index
    %c0_120 = arith.constant 0 : index
    %228 = vector.load %arg5[%c6_119, %c0_120] : memref<9x256xf32, #tpu.memory_space<vmem>>, vector<1x256xf32>
    %229 = vector.broadcast %228 : vector<1x256xf32> to vector<32x256xf32>
    %230 = arith.mulf %227, %229 : vector<32x256xf32>
    %c240_i32_121 = arith.constant 240 : i32
    %231 = tpu.dynamic_rotate %206 by %c240_i32_121 dim 1 : vector<32x256xf32>, i32 -> vector<32x256xf32>
    %c7_122 = arith.constant 7 : index
    %c0_123 = arith.constant 0 : index
    %232 = vector.load %arg5[%c7_122, %c0_123] : memref<9x256xf32, #tpu.memory_space<vmem>>, vector<1x256xf32>
    %233 = vector.broadcast %232 : vector<1x256xf32> to vector<32x256xf32>
    %234 = arith.mulf %231, %233 : vector<32x256xf32>
    %c239_i32_124 = arith.constant 239 : i32
    %235 = tpu.dynamic_rotate %206 by %c239_i32_124 dim 1 : vector<32x256xf32>, i32 -> vector<32x256xf32>
    %c8_125 = arith.constant 8 : index
    %c0_126 = arith.constant 0 : index
    %236 = vector.load %arg5[%c8_125, %c0_126] : memref<9x256xf32, #tpu.memory_space<vmem>>, vector<1x256xf32>
    %237 = vector.broadcast %236 : vector<1x256xf32> to vector<32x256xf32>
    %238 = arith.mulf %235, %237 : vector<32x256xf32>
    %239 = tpu.concatenate %210, %214, %218, %222, %206, %226, %230, %234, %238 in 0 : vector<32x256xf32>, vector<32x256xf32>, vector<32x256xf32>, vector<32x256xf32>, vector<32x256xf32>, vector<32x256xf32>, vector<32x256xf32>, vector<32x256xf32>, vector<32x256xf32> -> vector<288x256xf32>
    %240 = arith.truncf %239 : vector<288x256xf32> to vector<288x256xbf16>
    %c96 = arith.constant 96 : index
    %c0_127 = arith.constant 0 : index
    %241 = vector.load %arg3[%c96, %c0_127] : memref<104x288xbf16, #tpu.memory_space<vmem>>, vector<8x288xbf16>
    %cst_128 = arith.constant dense<0.000000e+00> : vector<8x256xf32>
    %242 = tpu.matmul %241, %240, %cst_128 {dimension_numbers = #tpu.dot_dimension_numbers<[1], [0], [0], [1], [0, 0, 1, 1], [], []>} : vector<8x288xbf16>, vector<288x256xbf16>, vector<8x256xf32> -> vector<8x256xf32>
    %c0_129 = arith.constant 0 : index
    %c3_130 = arith.constant 3 : index
    %243 = vector.load %arg4[%c0_129, %c3_130] : memref<32x48xf32, #tpu.memory_space<vmem>>, vector<8x1xf32>
    %244 = vector.broadcast %243 : vector<8x1xf32> to vector<8x256xf32>
    %245 = arith.addf %242, %244 : vector<8x256xf32>
    %c0_131 = arith.constant 0 : index
    %c0_132 = arith.constant 0 : index
    %c0_133 = arith.constant 0 : index
    %246 = vector.load %arg6[%c0_131, %c0_132, %c0_133] : memref<1x8x256xf32, #tpu.memory_space<vmem>>, vector<1x8x256xf32>
    %247 = vector.shape_cast %246 : vector<1x8x256xf32> to vector<8x256xf32>
    %248 = vector.shape_cast %245 : vector<8x256xf32> to vector<1x8x256xf32>
    tpu.vector_store %arg6[%c0_131, %c0_132, %c0_133], %248 {strides = array<i32>} : memref<1x8x256xf32, #tpu.memory_space<vmem>>, vector<1x8x256xf32>,
    return
  }
  func.func @transform_0(%arg0: i32) -> (i32, i32, i32) {
    %c0_i32 = arith.constant 0 : i32
    %c0_i32_0 = arith.constant 0 : i32
    %c0_i32_1 = arith.constant 0 : i32
    return %arg0, %c0_i32, %c0_i32_0 : i32, i32, i32
  }
  func.func @transform_1(%arg0: i32) -> (i32, i32, i32) {
    %c0_i32 = arith.constant 0 : i32
    %c0_i32_0 = arith.constant 0 : i32
    %c0_i32_1 = arith.constant 0 : i32
    return %arg0, %c0_i32, %c0_i32_0 : i32, i32, i32
  }
  func.func @transform_2(%arg0: i32) -> (i32, i32) {
    %c0_i32 = arith.constant 0 : i32
    %c0_i32_0 = arith.constant 0 : i32
    %c0_i32_1 = arith.constant 0 : i32
    return %c0_i32, %c0_i32_0 : i32, i32
  }
  func.func @transform_3(%arg0: i32) -> (i32, i32) {
    %c0_i32 = arith.constant 0 : i32
    %c0_i32_0 = arith.constant 0 : i32
    %c0_i32_1 = arith.constant 0 : i32
    return %c0_i32, %c0_i32_0 : i32, i32
  }
  func.func @transform_4(%arg0: i32) -> (i32, i32) {
    %c0_i32 = arith.constant 0 : i32
    %c0_i32_0 = arith.constant 0 : i32
    %c0_i32_1 = arith.constant 0 : i32
    return %c0_i32, %c0_i32_0 : i32, i32
  }
  func.func @transform_5(%arg0: i32) -> (i32, i32, i32) {
    %c0_i32 = arith.constant 0 : i32
    %c0_i32_0 = arith.constant 0 : i32
    %c0_i32_1 = arith.constant 0 : i32
    return %arg0, %c0_i32, %c0_i32_0 : i32, i32, i32
  }
}

</mosaic_0001>

<llo_original>
// kernel: custom_conditioned_unet_forward.1
$region0: #{custom_conditioned_unet_forward.1}
  #allocation0 [shape = 'u32[]', space=smem, size = 0x4, offset = 0x4, fixed_abs, tag = 'smem constant byte address 0x4 - core index']
  #allocation1 [shape = 'u32[144,128]{1,0:T(1,128)}', space=vmem, size = 0x12000, scoped, tag = 'internal scratch']
  %s0 = inlined_call_operand.vmem [shape: f32[2,32,256], index: 0, kind: input, shape index: {}]
  %s1 = inlined_call_operand.vmem [shape: f32[2,32,2], index: 1, kind: input, shape index: {}]
  %s2 = inlined_call_operand.vmem [shape: bf16[104,288], index: 2, kind: input, shape index: {}]
  %s3 = inlined_call_operand.vmem [shape: f32[32,48], index: 3, kind: input, shape index: {}]
  %s4 = inlined_call_operand.vmem [shape: f32[9,256], index: 4, kind: input, shape index: {}]
  %s5 = inlined_call_operand.vmem [shape: f32[2,8,256], index: 5, kind: output, shape index: {}]
  %s6 = sld [smem:[#allocation0]]
  $region53: #{custom_conditioned_unet_forward.1} parent=0
    _
  %s8 = ssub.s32 1, %s6
  %s9 = scalar_select 0, %s8, %s6
  loop: start=0, step=1, limit=4
  $region2: #{custom_conditioned_unet_forward.1} parent=0 // loop_pre_header
    _
  $region3: #{custom_conditioned_unet_forward.1} parent=0 // loop_header
    %s11 = sphi 0, %s15
    %p12 = scmp.ge.s32.totalorder %s11, 4
    %s21 = sphi 0, %s23
    %s24 = sphi 0, %s21
    %s25 = sphi 0, %s24
    %s41 = sphi 0, %s25
    %s47 = sphi 0, %s49
    %s50 = sphi 0, %s47
    %s51 = sphi 0, %s50
    %s67 = sphi 0, %s51
    %s71 = sphi 0, %s71
    %s73 = sphi 0, %s71
    %s74 = sphi 0, %s73
    %s88 = sphi 0, %s74
    %s92 = sphi 0, %s92
    %s94 = sphi 0, %s92
    %s95 = sphi 0, %s94
    %s109 = sphi 0, %s95
    %s113 = sphi 0, %s113
    %s115 = sphi 0, %s113
    %s116 = sphi 0, %s115
    %s130 = sphi 0, %s116
    %s136 = sphi 0, %s138
    %s139 = sphi 0, %s136
    %s140 = sphi 0, %s139
    %s156 = sphi 0, %s140
  $region4: #{custom_conditioned_unet_forward.1} parent=0 // loop_header_branch
    %14 = sbr.rel (%p12) target = $region8
  $region5: #{custom_conditioned_unet_forward.1} parent=0 // loop_body
    %s16 = ssub.s32 %s11, 1
    %s17 = ssub.s32 %s11, 2
    %s18 = sadd.s32 %s11, 1
    %s19 = ssub.s32 %s11, %s18
    %p20 = scmp.eq.s32.totalorder %s19, 0
    %s22 = sadd.s32 %s21, 1
    %s23 = scalar_select %p20, %s21, %s22
    %p26 = pneg %p20
    %p27 = scmp.eq.s32.totalorder %s11, 1
    %p28 = por %p26, %p27
    %p29 = scmp.ne.s32.totalorder %s21, %s24
    %p30 = scmp.eq.s32.totalorder %s11, 0
    %p31 = por %p29, %p30
    %p32 = scmp.ne.s32.totalorder %s21, %s24
    %p33 = scmp.eq.s32.totalorder %s16, 1
    %p34 = por %p32, %p33
    %p35 = scmp.ne.s32.totalorder %s24, %s25
    %p36 = scmp.eq.s32.totalorder %s16, 0
    %p37 = por %p35, %p36
    %p38 = scmp.ne.s32.totalorder %s24, %s25
    %p39 = scmp.eq.s32.totalorder %s17, 1
    %p40 = por %p38, %p39
    %p42 = scmp.ne.s32.totalorder %s25, %s41
    %p43 = scmp.eq.s32.totalorder %s17, 0
    %p44 = por %p42, %p43
    %s45 = ssub.s32 %s11, %s18
    %p46 = scmp.eq.s32.totalorder %s45, 0
    %s48 = sadd.s32 %s47, 1
    %s49 = scalar_select %p46, %s47, %s48
    %p52 = pneg %p46
    %p53 = scmp.eq.s32.totalorder %s11, 1
    %p54 = por %p52, %p53
    %p55 = scmp.ne.s32.totalorder %s47, %s50
    %p56 = scmp.eq.s32.totalorder %s11, 0
    %p57 = por %p55, %p56
    %p58 = scmp.ne.s32.totalorder %s47, %s50
    %p59 = scmp.eq.s32.totalorder %s16, 1
    %p60 = por %p58, %p59
    %p61 = scmp.ne.s32.totalorder %s50, %s51
    %p62 = scmp.eq.s32.totalorder %s16, 0
    %p63 = por %p61, %p62
    %p64 = scmp.ne.s32.totalorder %s50, %s51
    %p65 = scmp.eq.s32.totalorder %s17, 1
    %p66 = por %p64, %p65
    %p68 = scmp.ne.s32.totalorder %s51, %s67
    %p69 = scmp.eq.s32.totalorder %s17, 0
    %p70 = por %p68, %p69
    %s72 = sadd.s32 %s71, 1
    %p75 = scmp.eq.s32.totalorder %s11, 1
    %p76 = scmp.ne.s32.totalorder %s71, %s73
    %p77 = scmp.eq.s32.totalorder %s11, 0
    %p78 = por %p76, %p77
    %p79 = scmp.ne.s32.totalorder %s71, %s73
    %p80 = scmp.eq.s32.totalorder %s16, 1
    %p81 = por %p79, %p80
    %p82 = scmp.ne.s32.totalorder %s73, %s74
    %p83 = scmp.eq.s32.totalorder %s16, 0
    %p84 = por %p82, %p83
    %p85 = scmp.ne.s32.totalorder %s73, %s74
    %p86 = scmp.eq.s32.totalorder %s17, 1
    %p87 = por %p85, %p86
    %p89 = scmp.ne.s32.totalorder %s74, %s88
    %p90 = scmp.eq.s32.totalorder %s17, 0
    %p91 = por %p89, %p90
    %s93 = sadd.s32 %s92, 1
    %p96 = scmp.eq.s32.totalorder %s11, 1
    %p97 = scmp.ne.s32.totalorder %s92, %s94
    %p98 = scmp.eq.s32.totalorder %s11, 0
    %p99 = por %p97, %p98
    %p100 = scmp.ne.s32.totalorder %s92, %s94
    %p101 = scmp.eq.s32.totalorder %s16, 1
    %p102 = por %p100, %p101
    %p103 = scmp.ne.s32.totalorder %s94, %s95
    %p104 = scmp.eq.s32.totalorder %s16, 0
    %p105 = por %p103, %p104
    %p106 = scmp.ne.s32.totalorder %s94, %s95
    %p107 = scmp.eq.s32.totalorder %s17, 1
    %p108 = por %p106, %p107
    %p110 = scmp.ne.s32.totalorder %s95, %s109
    %p111 = scmp.eq.s32.totalorder %s17, 0
    %p112 = por %p110, %p111
    %s114 = sadd.s32 %s113, 1
    %p117 = scmp.eq.s32.totalorder %s11, 1
    %p118 = scmp.ne.s32.totalorder %s113, %s115
    %p119 = scmp.eq.s32.totalorder %s11, 0
    %p120 = por %p118, %p119
    %p121 = scmp.ne.s32.totalorder %s113, %s115
    %p122 = scmp.eq.s32.totalorder %s16, 1
    %p123 = por %p121, %p122
    %p124 = scmp.ne.s32.totalorder %s115, %s116
    %p125 = scmp.eq.s32.totalorder %s16, 0
    %p126 = por %p124, %p125
    %p127 = scmp.ne.s32.totalorder %s115, %s116
    %p128 = scmp.eq.s32.totalorder %s17, 1
    %p129 = por %p127, %p128
    %p131 = scmp.ne.s32.totalorder %s116, %s130
    %p132 = scmp.eq.s32.totalorder %s17, 0
    %p133 = por %p131, %p132
    %s134 = ssub.s32 %s11, %s18
    %p135 = scmp.eq.s32.totalorder %s134, 0
    %s137 = sadd.s32 %s136, 1
    %s138 = scalar_select %p135, %s136, %s137
    %p141 = pneg %p135
    %p142 = scmp.eq.s32.totalorder %s11, 1
    %p143 = por %p141, %p142
    %p144 = scmp.ne.s32.totalorder %s136, %s139
    %p145 = scmp.eq.s32.totalorder %s11, 0
    %p146 = por %p144, %p145
    %p147 = scmp.ne.s32.totalorder %s136, %s139
    %p148 = scmp.eq.s32.totalorder %s16, 1
    %p149 = por %p147, %p148
    %p150 = scmp.ne.s32.totalorder %s139, %s140
    %p151 = scmp.eq.s32.totalorder %s16, 0
    %p152 = por %p150, %p151
    %p153 = scmp.ne.s32.totalorder %s139, %s140
    %p154 = scmp.eq.s32.totalorder %s17, 1
    %p155 = por %p153, %p154
    %p157 = scmp.ne.s32.totalorder %s140, %s156
    %p158 = scmp.eq.s32.totalorder %s17, 0
    %p159 = por %p157, %p158
    %p160 = scmp.le.s32.totalorder 1, %s11
    %p161 = scmp.lt.s32.totalorder %s11, 3
    %p162 = pnand %p160, %p161
    %p163 = pneg %p162
    // Predicated region
    $region9: #{custom_conditioned_unet_forward.1} parent=5 // pred_check
      _
    $region10: #{custom_conditioned_unet_forward.1} parent=5 // pred_check_branch
      %165 = sbr.rel (%p162) target = $region12
    $region11: #{custom_conditioned_unet_forward.1} parent=5 // pred_region
      %s166 = ssub.s32 %s11, 1
      // Predicated region
      $region13: #{custom_conditioned_unet_forward.1} parent=11 // pred_check
        %p167 = pneg %p84
      $region14: #{custom_conditioned_unet_forward.1} parent=11 // pred_check_branch
        %169 = sbr.rel (%p167) target = $region16
      $region15: #{custom_conditioned_unet_forward.1} parent=11 // pred_region
        _
      $region16: #{custom_conditioned_unet_forward.1} parent=11 // pred_fallthru
        _
      // Predicated region
      $region17: #{custom_conditioned_unet_forward.1} parent=11 // pred_check
        %p170 = pneg %p105
      $region18: #{custom_conditioned_unet_forward.1} parent=11 // pred_check_branch
        %172 = sbr.rel (%p170) target = $region20
      $region19: #{custom_conditioned_unet_forward.1} parent=11 // pred_region
        _
      $region20: #{custom_conditioned_unet_forward.1} parent=11 // pred_fallthru
        _
      // Predicated region
      $region21: #{custom_conditioned_unet_forward.1} parent=11 // pred_check
        %p173 = pneg %p126
      $region22: #{custom_conditioned_unet_forward.1} parent=11 // pred_check_branch
        %175 = sbr.rel (%p173) target = $region24
      $region23: #{custom_conditioned_unet_forward.1} parent=11 // pred_region
        _
      $region24: #{custom_conditioned_unet_forward.1} parent=11 // pred_fallthru
        _
    $region12: #{custom_conditioned_unet_forward.1} parent=5 // pred_fallthru
      _
    %p176 = scmp.lt.s32.totalorder %s11, 2
    // Predicated region
    $region25: #{custom_conditioned_unet_forward.1} parent=5 // pred_check
      %p177 = pneg %p176
    $region26: #{custom_conditioned_unet_forward.1} parent=5 // pred_check_branch
      %179 = sbr.rel (%p177) target = $region28
    $region27: #{custom_conditioned_unet_forward.1} parent=5 // pred_region
      // Predicated region
      $region29: #{custom_conditioned_unet_forward.1} parent=27 // pred_check
        %p180 = pneg %p31
      $region30: #{custom_conditioned_unet_forward.1} parent=27 // pred_check_branch
        %182 = sbr.rel (%p180) target = $region32
      $region31: #{custom_conditioned_unet_forward.1} parent=27 // pred_region
        %p183 = scmp.lt.s32.totalorder %s11, 1
        %s184 = scalar_select %p183, %s11, 1
        %s185 = smul.addr %s184, 8
        %s186 = smul.addr %s185, 8
        %s187 = scalar_lea.vmem %s0, %s186
      $region32: #{custom_conditioned_unet_forward.1} parent=27 // pred_fallthru
        _
      // Predicated region
      $region33: #{custom_conditioned_unet_forward.1} parent=27 // pred_check
        %p188 = pneg %p57
      $region34: #{custom_conditioned_unet_forward.1} parent=27 // pred_check_branch
        %190 = sbr.rel (%p188) target = $region36
      $region35: #{custom_conditioned_unet_forward.1} parent=27 // pred_region
        %p191 = scmp.lt.s32.totalorder %s11, 1
        %s192 = scalar_select %p191, %s11, 1
        %s193 = smul.addr %s192, 4
        %s194 = smul.addr %s193, 8
        %s195 = scalar_lea.vmem %s1, %s194
      $region36: #{custom_conditioned_unet_forward.1} parent=27 // pred_fallthru
        _
    $region28: #{custom_conditioned_unet_forward.1} parent=5 // pred_fallthru
      _
    %p196 = scmp.le.s32.totalorder 1, %s11
    %p197 = scmp.lt.s32.totalorder %s11, 3
    %p198 = pnand %p196, %p197
    %p199 = pneg %p198
    // Predicated region
    $region37: #{custom_conditioned_unet_forward.1} parent=5 // pred_check
      _
    $region38: #{custom_conditioned_unet_forward.1} parent=5 // pred_check_branch
      %201 = sbr.rel (%p198) target = $region40
    $region39: #{custom_conditioned_unet_forward.1} parent=5 // pred_region
      %s202 = ssub.s32 %s11, 1
      %p203 = scmp.lt.s32.totalorder %s16, 1
      %s204 = scalar_select %p203, %s16, 1
      %s205 = smul.addr %s204, 8
      %s206 = smul.addr %s205, 8
      %s207 = scalar_lea.vmem %s0, %s206
      %p208 = pneg %p37
      %p209 = pneg %p34
      %p210 = scmp.lt.s32.totalorder %s16, 1
      %s211 = scalar_select %p210, %s16, 1
      %s212 = smul.addr %s211, 4
      %s213 = smul.addr %s212, 8
      %s214 = scalar_lea.vmem %s1, %s213
      %p215 = pneg %p63
      %p216 = pneg %p60
      %p217 = pneg %p84
      %p218 = pneg %p81
      %p219 = pneg %p105
      %p220 = pneg %p102
      %p221 = pneg %p126
      %p222 = pneg %p123
      %p223 = pneg %p152
      %p224 = pneg %p149
      %p225 = scmp.lt.s32.totalorder %s16, 1
      %s226 = scalar_select %p225, %s16, 1
      %s227 = smul.addr %s226, 2
      %s228 = smul.addr %s227, 8
      %s229 = scalar_lea.vmem %s5, %s228
      %p230 = scmp.lt.s32.totalorder %s16, 1
      %s231 = scalar_select %p230, %s16, 1
      %s232 = smul.addr %s231, 8
      %s233 = smul.addr %s232, 8
      %s234 = scalar_lea.vmem %s0, %s233
      %p235 = scmp.lt.s32.totalorder %s16, 1
      %s236 = scalar_select %p235, %s16, 1
      %s237 = smul.addr %s236, 4
      %s238 = smul.addr %s237, 8
      %s239 = scalar_lea.vmem %s1, %s238
      %p240 = scmp.lt.s32.totalorder %s16, 1
      %s241 = scalar_select %p240, %s16, 1
      %s242 = smul.addr %s241, 2
      %s243 = smul.addr %s242, 8
      %s244 = scalar_lea.vmem %s5, %s243
      %v246 = vld [vmem:[%s3] sm:$0xff]
      %v247 = vld [vmem:[%s3 + $0x8] sm:$0xff]
      %v248 = vld [vmem:[%s3 + $0x10] sm:$0xff]
      %v249 = vld [vmem:[%s3 + $0x18] sm:$0xff]
      %v250 = vld [vmem:[%s234] sm:$0xff]
      %v251 = vld [vmem:[%s234 + $0x8] sm:$0xff]
      %v252 = vld [vmem:[%s234 + $0x10] sm:$0xff]
      %v253 = vld [vmem:[%s234 + $0x18] sm:$0xff]
      %v254 = vld [vmem:[%s234 + $0x20] sm:$0xff]
      %v255 = vld [vmem:[%s234 + $0x28] sm:$0xff]
      %v256 = vld [vmem:[%s234 + $0x30] sm:$0xff]
      %v257 = vld [vmem:[%s234 + $0x38] sm:$0xff]
      %v258 = vld [vmem:[%s239] sm:$0xff]
      %v259 = vld [vmem:[%s239 + $0x8] sm:$0xff]
      %v260 = vld [vmem:[%s239 + $0x10] sm:$0xff]
      %v261 = vld [vmem:[%s239 + $0x18] sm:$0xff]
      %262 = vrot.lane.b32.xlu0 %v250, 17
      %v263 = vpop.permute.xlu0 %262
      %264 = vrot.lane.b32.xlu0 %v252, 17
      %v265 = vpop.permute.xlu0 %264
      %266 = vrot.lane.b32.xlu0 %v254, 17
      %v267 = vpop.permute.xlu0 %266
      %268 = vrot.lane.b32.xlu0 %v256, 17
      %v269 = vpop.permute.xlu0 %268
      %270 = vrot.lane.b32.xlu0 %v251, 17
      %v271 = vpop.permute.xlu0 %270
      %272 = vrot.lane.b32.xlu0 %v253, 17
      %v273 = vpop.permute.xlu0 %272
      %274 = vrot.lane.b32.xlu0 %v255, 17
      %v275 = vpop.permute.xlu0 %274
      %276 = vrot.lane.b32.xlu0 %v257, 17
      %v277 = vpop.permute.xlu0 %276
      %v278 = vlaneseq
      %v279 = vand.u32 %v278, 127
      %vm280 = vcmp.lt.s32.totalorder %v279, 17
      %v281 = vsel %vm280, %v263, %v271
      %v282 = vsel %vm280, %v265, %v273
      %v283 = vsel %vm280, %v267, %v275
      %v284 = vsel %vm280, %v269, %v277
      %v285 = vsel %vm280, %v271, %v263
      %v286 = vsel %vm280, %v273, %v265
      %v287 = vsel %vm280, %v275, %v267
      %v288 = vsel %vm280, %v277, %v269
      %v289 = vld [vmem:[%s4] ss:$8 sm:$0x3]
      %v291 = vlaneseq
      %v292 = vshrl.u32 %v291, 7
      %v293 = vsub.s32 0, %v292
      %v294 = vrot.slane %v289, %v293
      %v295 = vlaneseq
      %v296 = vshrl.u32 %v295, 7
      %v297 = vsub.s32 1, %v296
      %v298 = vrot.slane %v289, %v297
      %v301 = vmul.f32 %v285, %v294
      %v302 = vmul.f32 %v281, %v298
      %v303 = vmul.f32 %v286, %v294
      %v304 = vmul.f32 %v282, %v298
      %v305 = vmul.f32 %v287, %v294
      %v306 = vmul.f32 %v283, %v298
      %v307 = vmul.f32 %v288, %v294
      %v308 = vmul.f32 %v284, %v298
      %309 = vrot.lane.b32.xlu0 %v250, 16
      %v310 = vpop.permute.xlu0 %309
      %311 = vrot.lane.b32.xlu0 %v252, 16
      %v312 = vpop.permute.xlu0 %311
      %313 = vrot.lane.b32.xlu0 %v254, 16
      %v314 = vpop.permute.xlu0 %313
      %315 = vrot.lane.b32.xlu0 %v256, 16
      %v316 = vpop.permute.xlu0 %315
      %317 = vrot.lane.b32.xlu0 %v251, 16
      %v318 = vpop.permute.xlu0 %317
      %319 = vrot.lane.b32.xlu0 %v253, 16
      %v320 = vpop.permute.xlu0 %319
      %321 = vrot.lane.b32.xlu0 %v255, 16
      %v322 = vpop.permute.xlu0 %321
      %323 = vrot.lane.b32.xlu0 %v257, 16
      %v324 = vpop.permute.xlu0 %323
      %vm325 = vcmp.lt.s32.totalorder %v279, 16
      %v326 = vsel %vm325, %v310, %v318
      %v327 = vsel %vm325, %v312, %v320
      %v328 = vsel %vm325, %v314, %v322
      %v329 = vsel %vm325, %v316, %v324
      %v330 = vsel %vm325, %v318, %v310
      %v331 = vsel %vm325, %v320, %v312
      %v332 = vsel %vm325, %v322, %v314
      %v333 = vsel %vm325, %v324, %v316
      %s334 = scalar_lea.vmem %s4, 1
      %v335 = vld [vmem:[%s334] ss:$8 sm:$0x3]
      %v337 = vlaneseq
      %v338 = vshrl.u32 %v337, 7
      %v339 = vsub.s32 0, %v338
      %v340 = vrot.slane %v335, %v339
      %v341 = vlaneseq
      %v342 = vshrl.u32 %v341, 7
      %v343 = vsub.s32 1, %v342
      %v344 = vrot.slane %v335, %v343
      %v347 = vmul.f32 %v330, %v340
      %v348 = vmul.f32 %v326, %v344
      %v349 = vmul.f32 %v331, %v340
      %v350 = vmul.f32 %v327, %v344
      %v351 = vmul.f32 %v332, %v340
      %v352 = vmul.f32 %v328, %v344
      %v353 = vmul.f32 %v333, %v340
      %v354 = vmul.f32 %v329, %v344
      %355 = vrot.lane.b32.xlu0 %v250, 15
      %v356 = vpop.permute.xlu0 %355
      %357 = vrot.lane.b32.xlu0 %v252, 15
      %v358 = vpop.permute.xlu0 %357
      %359 = vrot.lane.b32.xlu0 %v254, 15
      %v360 = vpop.permute.xlu0 %359
      %361 = vrot.lane.b32.xlu0 %v256, 15
      %v362 = vpop.permute.xlu0 %361
      %363 = vrot.lane.b32.xlu0 %v251, 15
      %v364 = vpop.permute.xlu0 %363
      %365 = vrot.lane.b32.xlu0 %v253, 15
      %v366 = vpop.permute.xlu0 %365
      %367 = vrot.lane.b32.xlu0 %v255, 15
      %v368 = vpop.permute.xlu0 %367
      %369 = vrot.lane.b32.xlu0 %v257, 15
      %v370 = vpop.permute.xlu0 %369
      %vm371 = vcmp.lt.s32.totalorder %v279, 15
      %v372 = vsel %vm371, %v356, %v364
      %v373 = vsel %vm371, %v358, %v366
      %v374 = vsel %vm371, %v360, %v368
      %v375 = vsel %vm371, %v362, %v370
      %v376 = vsel %vm371, %v364, %v356
      %v377 = vsel %vm371, %v366, %v358
      %v378 = vsel %vm371, %v368, %v360
      %v379 = vsel %vm371, %v370, %v362
      %s380 = scalar_lea.vmem %s4, 2
      %v381 = vld [vmem:[%s380] ss:$8 sm:$0x3]
      %v383 = vlaneseq
      %v384 = vshrl.u32 %v383, 7
      %v385 = vsub.s32 0, %v384
      %v386 = vrot.slane %v381, %v385
      %v387 = vlaneseq
      %v388 = vshrl.u32 %v387, 7
      %v389 = vsub.s32 1, %v388
      %v390 = vrot.slane %v381, %v389
      %v393 = vmul.f32 %v376, %v386
      %v394 = vmul.f32 %v372, %v390
      %v395 = vmul.f32 %v377, %v386
      %v396 = vmul.f32 %v373, %v390
      %v397 = vmul.f32 %v378, %v386
      %v398 = vmul.f32 %v374, %v390
      %v399 = vmul.f32 %v379, %v386
      %v400 = vmul.f32 %v375, %v390
      %401 = vrot.lane.b32.xlu0 %v250, 1
      %v402 = vpop.permute.xlu0 %401
      %403 = vrot.lane.b32.xlu0 %v252, 1
      %v404 = vpop.permute.xlu0 %403
      %405 = vrot.lane.b32.xlu0 %v254, 1
      %v406 = vpop.permute.xlu0 %405
      %407 = vrot.lane.b32.xlu0 %v256, 1
      %v408 = vpop.permute.xlu0 %407
      %409 = vrot.lane.b32.xlu0 %v251, 1
      %v410 = vpop.permute.xlu0 %409
      %411 = vrot.lane.b32.xlu0 %v253, 1
      %v412 = vpop.permute.xlu0 %411
      %413 = vrot.lane.b32.xlu0 %v255, 1
      %v414 = vpop.permute.xlu0 %413
      %415 = vrot.lane.b32.xlu0 %v257, 1
      %v416 = vpop.permute.xlu0 %415
      %vm417 = vcmp.lt.s32.totalorder %v279, 1
      %v418 = vsel %vm417, %v402, %v410
      %v419 = vsel %vm417, %v404, %v412
      %v420 = vsel %vm417, %v406, %v414
      %v421 = vsel %vm417, %v408, %v416
      %v422 = vsel %vm417, %v410, %v402
      %v423 = vsel %vm417, %v412, %v404
      %v424 = vsel %vm417, %v414, %v406
      %v425 = vsel %vm417, %v416, %v408
      %s426 = scalar_lea.vmem %s4, 3
      %v427 = vld [vmem:[%s426] ss:$8 sm:$0x3]
      %v429 = vlaneseq
      %v430 = vshrl.u32 %v429, 7
      %v431 = vsub.s32 0, %v430
      %v432 = vrot.slane %v427, %v431
      %v433 = vlaneseq
      %v434 = vshrl.u32 %v433, 7
      %v435 = vsub.s32 1, %v434
      %v436 = vrot.slane %v427, %v435
      %v439 = vmul.f32 %v422, %v432
      %v440 = vmul.f32 %v418, %v436
      %v441 = vmul.f32 %v423, %v432
      %v442 = vmul.f32 %v419, %v436
      %v443 = vmul.f32 %v424, %v432
      %v444 = vmul.f32 %v420, %v436
      %v445 = vmul.f32 %v425, %v432
      %v446 = vmul.f32 %v421, %v436
      %447 = vrot.lane.b32.xlu0 %v250, 127
      %v448 = vpop.permute.xlu0 %447
      %449 = vrot.lane.b32.xlu0 %v252, 127
      %v450 = vpop.permute.xlu0 %449
      %451 = vrot.lane.b32.xlu0 %v254, 127
      %v452 = vpop.permute.xlu0 %451
      %453 = vrot.lane.b32.xlu0 %v256, 127
      %v454 = vpop.permute.xlu0 %453
      %455 = vrot.lane.b32.xlu0 %v251, 127
      %v456 = vpop.permute.xlu0 %455
      %457 = vrot.lane.b32.xlu0 %v253, 127
      %v458 = vpop.permute.xlu0 %457
      %459 = vrot.lane.b32.xlu0 %v255, 127
      %v460 = vpop.permute.xlu0 %459
      %461 = vrot.lane.b32.xlu0 %v257, 127
      %v462 = vpop.permute.xlu0 %461
      %vm463 = vcmp.lt.s32.totalorder %v279, 127
      %v464 = vsel %vm463, %v448, %v456
      %v465 = vsel %vm463, %v450, %v458
      %v466 = vsel %vm463, %v452, %v460
      %v467 = vsel %vm463, %v454, %v462
      %v468 = vsel %vm463, %v456, %v448
      %v469 = vsel %vm463, %v458, %v450
      %v470 = vsel %vm463, %v460, %v452
      %v471 = vsel %vm463, %v462, %v454
      %s472 = scalar_lea.vmem %s4, 5
      %v473 = vld [vmem:[%s472] ss:$8 sm:$0x3]
      %v475 = vlaneseq
      %v476 = vshrl.u32 %v475, 7
      %v477 = vsub.s32 0, %v476
      %v478 = vrot.slane %v473, %v477
      %v479 = vlaneseq
      %v480 = vshrl.u32 %v479, 7
      %v481 = vsub.s32 1, %v480
      %v482 = vrot.slane %v473, %v481
      %v485 = vmul.f32 %v464, %v478
      %v486 = vmul.f32 %v468, %v482
      %v487 = vmul.f32 %v465, %v478
      %v488 = vmul.f32 %v469, %v482
      %v489 = vmul.f32 %v466, %v478
      %v490 = vmul.f32 %v470, %v482
      %v491 = vmul.f32 %v467, %v478
      %v492 = vmul.f32 %v471, %v482
      %493 = vrot.lane.b32.xlu0 %v250, 113
      %v494 = vpop.permute.xlu0 %493
      %495 = vrot.lane.b32.xlu0 %v252, 113
      %v496 = vpop.permute.xlu0 %495
      %497 = vrot.lane.b32.xlu0 %v254, 113
      %v498 = vpop.permute.xlu0 %497
      %499 = vrot.lane.b32.xlu0 %v256, 113
      %v500 = vpop.permute.xlu0 %499
      %501 = vrot.lane.b32.xlu0 %v251, 113
      %v502 = vpop.permute.xlu0 %501
      %503 = vrot.lane.b32.xlu0 %v253, 113
      %v504 = vpop.permute.xlu0 %503
      %505 = vrot.lane.b32.xlu0 %v255, 113
      %v506 = vpop.permute.xlu0 %505
      %507 = vrot.lane.b32.xlu0 %v257, 113
      %v508 = vpop.permute.xlu0 %507
      %vm509 = vcmp.lt.s32.totalorder %v279, 113
      %v510 = vsel %vm509, %v494, %v502
      %v511 = vsel %vm509, %v496, %v504
      %v512 = vsel %vm509, %v498, %v506
      %v513 = vsel %vm509, %v500, %v508
      %v514 = vsel %vm509, %v502, %v494
      %v515 = vsel %vm509, %v504, %v496
      %v516 = vsel %vm509, %v506, %v498
      %v517 = vsel %vm509, %v508, %v500
      %s518 = scalar_lea.vmem %s4, 6
      %v519 = vld [vmem:[%s518] ss:$8 sm:$0x3]
      %v521 = vlaneseq
      %v522 = vshrl.u32 %v521, 7
      %v523 = vsub.s32 0, %v522
      %v524 = vrot.slane %v519, %v523
      %v525 = vlaneseq
      %v526 = vshrl.u32 %v525, 7
      %v527 = vsub.s32 1, %v526
      %v528 = vrot.slane %v519, %v527
      %v531 = vmul.f32 %v510, %v524
      %v532 = vmul.f32 %v514, %v528
      %v533 = vmul.f32 %v511, %v524
      %v534 = vmul.f32 %v515, %v528
      %v535 = vmul.f32 %v512, %v524
      %v536 = vmul.f32 %v516, %v528
      %v537 = vmul.f32 %v513, %v524
      %v538 = vmul.f32 %v517, %v528
      %539 = vrot.lane.b32.xlu0 %v250, 112
      %v540 = vpop.permute.xlu0 %539
      %541 = vrot.lane.b32.xlu0 %v252, 112
      %v542 = vpop.permute.xlu0 %541
      %543 = vrot.lane.b32.xlu0 %v254, 112
      %v544 = vpop.permute.xlu0 %543
      %545 = vrot.lane.b32.xlu0 %v256, 112
      %v546 = vpop.permute.xlu0 %545
      %547 = vrot.lane.b32.xlu0 %v251, 112
      %v548 = vpop.permute.xlu0 %547
      %549 = vrot.lane.b32.xlu0 %v253, 112
      %v550 = vpop.permute.xlu0 %549
      %551 = vrot.lane.b32.xlu0 %v255, 112
      %v552 = vpop.permute.xlu0 %551
      %553 = vrot.lane.b32.xlu0 %v257, 112
      %v554 = vpop.permute.xlu0 %553
      %vm555 = vcmp.lt.s32.totalorder %v279, 112
      %v556 = vsel %vm555, %v540, %v548
      %v557 = vsel %vm555, %v542, %v550
      %v558 = vsel %vm555, %v544, %v552
      %v559 = vsel %vm555, %v546, %v554
      %v560 = vsel %vm555, %v548, %v540
      %v561 = vsel %vm555, %v550, %v542
      %v562 = vsel %vm555, %v552, %v544
      %v563 = vsel %vm555, %v554, %v546
      %s564 = scalar_lea.vmem %s4, 7
      %v565 = vld [vmem:[%s564] ss:$8 sm:$0x3]
      %v567 = vlaneseq
      %v568 = vshrl.u32 %v567, 7
      %v569 = vsub.s32 0, %v568
      %v570 = vrot.slane %v565, %v569
      %v571 = vlaneseq
      %v572 = vshrl.u32 %v571, 7
      %v573 = vsub.s32 1, %v572
      %v574 = vrot.slane %v565, %v573
      %v577 = vmul.f32 %v556, %v570
      %v578 = vmul.f32 %v560, %v574
      %v579 = vmul.f32 %v557, %v570
      %v580 = vmul.f32 %v561, %v574
      %v581 = vmul.f32 %v558, %v570
      %v582 = vmul.f32 %v562, %v574
      %v583 = vmul.f32 %v559, %v570
      %v584 = vmul.f32 %v563, %v574
      %585 = vrot.lane.b32.xlu0 %v250, 111
      %v586 = vpop.permute.xlu0 %585
      %587 = vrot.lane.b32.xlu0 %v252, 111
      %v588 = vpop.permute.xlu0 %587
      %589 = vrot.lane.b32.xlu0 %v254, 111
      %v590 = vpop.permute.xlu0 %589
      %591 = vrot.lane.b32.xlu0 %v256, 111
      %v592 = vpop.permute.xlu0 %591
      %593 = vrot.lane.b32.xlu0 %v251, 111
      %v594 = vpop.permute.xlu0 %593
      %595 = vrot.lane.b32.xlu0 %v253, 111
      %v596 = vpop.permute.xlu0 %595
      %597 = vrot.lane.b32.xlu0 %v255, 111
      %v598 = vpop.permute.xlu0 %597
      %599 = vrot.lane.b32.xlu0 %v257, 111
      %v600 = vpop.permute.xlu0 %599
      %vm601 = vcmp.lt.s32.totalorder %v279, 111
      %v602 = vsel %vm601, %v586, %v594
      %v603 = vsel %vm601, %v588, %v596
      %v604 = vsel %vm601, %v590, %v598
      %v605 = vsel %vm601, %v592, %v600
      %v606 = vsel %vm601, %v594, %v586
      %v607 = vsel %vm601, %v596, %v588
      %v608 = vsel %vm601, %v598, %v590
      %v609 = vsel %vm601, %v600, %v592
      %s610 = scalar_lea.vmem %s4, 16
      %v611 = vld [vmem:[%s610] ss:$8 sm:$0x3]
      %v613 = vlaneseq
      %v614 = vshrl.u32 %v613, 7
      %v615 = vsub.s32 0, %v614
      %v616 = vrot.slane %v611, %v615
      %v617 = vlaneseq
      %v618 = vshrl.u32 %v617, 7
      %v619 = vsub.s32 1, %v618
      %v620 = vrot.slane %v611, %v619
      %v623 = vmul.f32 %v602, %v616
      %v624 = vmul.f32 %v606, %v620
      %v625 = vmul.f32 %v603, %v616
      %v626 = vmul.f32 %v607, %v620
      %v627 = vmul.f32 %v604, %v616
      %v628 = vmul.f32 %v608, %v620
      %v629 = vmul.f32 %v605, %v616
      %v630 = vmul.f32 %v609, %v620
      %v631 = vpack.c.bf16 %v303, %v301
      %v632 = vpack.c.bf16 %v304, %v302
      %v633 = vpack.c.bf16 %v307, %v305
      %v634 = vpack.c.bf16 %v308, %v306
      %v635 = vpack.c.bf16 %v349, %v347
      %v636 = vpack.c.bf16 %v350, %v348
      %v637 = vpack.c.bf16 %v353, %v351
      %v638 = vpack.c.bf16 %v354, %v352
      %v639 = vpack.c.bf16 %v395, %v393
      %v640 = vpack.c.bf16 %v396, %v394
      %v641 = vpack.c.bf16 %v399, %v397
      %v642 = vpack.c.bf16 %v400, %v398
      %v643 = vpack.c.bf16 %v441, %v439
      %v644 = vpack.c.bf16 %v442, %v440
      %v645 = vpack.c.bf16 %v445, %v443
      %v646 = vpack.c.bf16 %v446, %v444
      %v647 = vpack.c.bf16 %v252, %v250
      %v648 = vpack.c.bf16 %v253, %v251
      %v649 = vpack.c.bf16 %v256, %v254
      %v650 = vpack.c.bf16 %v257, %v255
      %v651 = vpack.c.bf16 %v487, %v485
      %v652 = vpack.c.bf16 %v488, %v486
      %v653 = vpack.c.bf16 %v491, %v489
      %v654 = vpack.c.bf16 %v492, %v490
      %v655 = vpack.c.bf16 %v533, %v531
      %v656 = vpack.c.bf16 %v534, %v532
      %v657 = vpack.c.bf16 %v537, %v535
      %v658 = vpack.c.bf16 %v538, %v536
      %v659 = vpack.c.bf16 %v579, %v577
      %v660 = vpack.c.bf16 %v580, %v578
      %v661 = vpack.c.bf16 %v583, %v581
      %v662 = vpack.c.bf16 %v584, %v582
      %v663 = vpack.c.bf16 %v625, %v623
      %v664 = vpack.c.bf16 %v626, %v624
      %v665 = vpack.c.bf16 %v629, %v627
      %v666 = vpack.c.bf16 %v630, %v628
      %v667 = vld [vmem:[%s2] sm:$0xff]
      %v668 = vld [vmem:[%s2 + $0x8] sm:$0xf]
      %v669 = vld [vmem:[%s2 + $0xc] sm:$0xff]
      %v670 = vld [vmem:[%s2 + $0x14] sm:$0xf]
      %v671 = vld [vmem:[%s2 + $0x18] sm:$0xff]
      %v672 = vld [vmem:[%s2 + $0x20] sm:$0xf]
      %v673 = vld [vmem:[%s2 + $0x24] sm:$0xff]
      %v674 = vld [vmem:[%s2 + $0x2c] sm:$0xf]
      %676 = vset.pattern.permute.xlu0 0
      %677 = vperm.xlu0 %676, %v246
      %v678 = vpop.permute.xlu0 %677
      %681 = vset.pattern.permute.xlu0 0
      %682 = vperm.xlu0 %681, %v247
      %v683 = vpop.permute.xlu0 %682
      %686 = vset.pattern.permute.xlu0 0
      %687 = vperm.xlu0 %686, %v248
      %v688 = vpop.permute.xlu0 %687
      %691 = vset.pattern.permute.xlu0 0
      %692 = vperm.xlu0 %691, %v249
      %v693 = vpop.permute.xlu0 %692
      %v703 = vunpack.c.l.b16 %v667
      %v704 = vunpack.c.h.b16 %v667
      %v705 = vunpack.c.l.b16 %v668
      %v706 = vunpack.c.l.b16 %v669
      %v707 = vunpack.c.h.b16 %v669
      %v708 = vunpack.c.l.b16 %v670
      %v709 = vunpack.c.l.b16 %v671
      %v710 = vunpack.c.h.b16 %v671
      %v711 = vunpack.c.l.b16 %v672
      %v712 = vunpack.c.l.b16 %v673
      %v713 = vunpack.c.h.b16 %v673
      %v714 = vunpack.c.l.b16 %v674
      %v715 = vpack.c.b16 %v706, %v703
      %v716 = vpack.c.b16 %v707, %v704
      %v717 = vpack.c.b16 %v708, %v705
      %v718 = vpack.c.b16 %v712, %v709
      %v719 = vpack.c.b16 %v713, %v710
      %v720 = vpack.c.b16 %v714, %v711
      %vm725 = vcmask 261120
      %v727 = vsel %vm725, %v717, 0
      %v730 = vsel %vm725, %v720, 0
      %732 = vmatprep.subr.bf16.mxu0 %v646
      %733 = vmatpush1.bf16.msra.mxu0 %v645
      %734 = vmatprep.subr.bf16.mxu0 %v644
      %735 = vmatpush1.bf16.msra.mxu0 %v643
      %736 = vmatprep.subr.bf16.mxu0 %v642
      %737 = vmatpush1.bf16.msra.mxu0 %v641
      %738 = vmatprep.subr.bf16.mxu0 %v640
      %739 = vmatpush1.bf16.msra.mxu0 %v639
      %740 = vmatprep.subr.bf16.mxu0 %v638
      %741 = vmatpush1.bf16.msra.mxu0 %v637
      %742 = vmatprep.subr.bf16.mxu0 %v636
      %743 = vmatpush1.bf16.msra.mxu0 %v635
      %744 = vmatprep.subr.bf16.mxu0 %v634
      %745 = vmatpush1.bf16.msra.mxu0 %v633
      %746 = vmatprep.subr.bf16.mxu0 %v632
      %747 = vmatpush1.bf16.msra.mxu0 %v631
      %748 = vmatprep.subr.bf16.mxu0 %v662
      %749 = vmatpush2.bf16.msra.mxu0 %v661
      %750 = vmatprep.subr.bf16.mxu0 %v660
      %751 = vmatpush2.bf16.msra.mxu0 %v659
      %752 = vmatprep.subr.bf16.mxu0 %v658
      %753 = vmatpush2.bf16.msra.mxu0 %v657
      %754 = vmatprep.subr.bf16.mxu0 %v656
      %755 = vmatpush2.bf16.msra.mxu0 %v655
      %756 = vmatprep.subr.bf16.mxu0 %v654
      %757 = vmatpush2.bf16.msra.mxu0 %v653
      %758 = vmatprep.subr.bf16.mxu0 %v652
      %759 = vmatpush2.bf16.msra.mxu0 %v651
      %760 = vmatprep.subr.bf16.mxu0 %v650
      %761 = vmatpush2.bf16.msra.mxu0 %v649
      %762 = vmatprep.subr.bf16.mxu0 %v648
      %763 = vmatpush2.bf16.msra.mxu0 %v647
      %764 = vmatprep.mubr.bf16.mxu0 %v716
      %765 = vmatmul.mubr.bf16.gmra.mxu0 %v715
      %v766 = vpop.f32.mrf.mxu0
      %v767 = vadd.f32 %v678, %v766
      %v768 = vpop.f32.mrf.mxu0
      %v769 = vadd.f32 %v678, %v768
      %v770 = vpop.f32.mrf.mxu0
      %v771 = vadd.f32 %v683, %v770
      %v772 = vpop.f32.mrf.mxu0
      %v773 = vadd.f32 %v683, %v772
      %774 = vmatprep.mubr.bf16.mxu0 %v719
      %775 = vmatmul.mubr.bf16.gmra.mxu0 %v718
      %v776 = vpop.f32.mrf.mxu0
      %v777 = vadd.f32 %v688, %v776
      %v778 = vpop.f32.mrf.mxu0
      %v779 = vadd.f32 %v688, %v778
      %v780 = vpop.f32.mrf.mxu0
      %v781 = vadd.f32 %v693, %v780
      %v782 = vpop.f32.mrf.mxu0
      %v783 = vadd.f32 %v693, %v782
      %784 = vdwg.mxu0
      %785 = vmatprep.subr.bf16.mxu0 0
      %786 = vmatpush1.bf16.msra.mxu0 0
      %787 = vmatprep.subr.bf16.mxu0 0
      %788 = vmatpush1.bf16.msra.mxu0 0
      %789 = vmatprep.subr.bf16.mxu0 0
      %790 = vmatpush1.bf16.msra.mxu0 0
      %791 = vmatprep.subr.bf16.mxu0 0
      %792 = vmatpush1.bf16.msra.mxu0 0
      %793 = vmatprep.subr.bf16.mxu0 0
      %794 = vmatpush1.bf16.msra.mxu0 0
      %795 = vmatprep.subr.bf16.mxu0 0
      %796 = vmatpush1.bf16.msra.mxu0 0
      %797 = vmatprep.subr.bf16.mxu0 %v666
      %798 = vmatpush1.bf16.msra.mxu0 %v665
      %799 = vmatprep.subr.bf16.mxu0 %v664
      %800 = vmatpush1.bf16.msra.mxu0 %v663
      %801 = vmatprep.subr.bf16.mxu0 0
      %802 = vmatpush2.bf16.msra.mxu0 0
      %803 = vmatprep.subr.bf16.mxu0 0
      %804 = vmatpush2.bf16.msra.mxu0 0
      %805 = vmatprep.subr.bf16.mxu0 0
      %806 = vmatpush2.bf16.msra.mxu0 0
      %807 = vmatprep.subr.bf16.mxu0 0
      %808 = vmatpush2.bf16.msra.mxu0 0
      %809 = vmatprep.subr.bf16.mxu0 0
      %810 = vmatpush2.bf16.msra.mxu0 0
      %811 = vmatprep.subr.bf16.mxu0 0
      %812 = vmatpush2.bf16.msra.mxu0 0
      %813 = vmatprep.subr.bf16.mxu0 0
      %814 = vmatpush2.bf16.msra.mxu0 0
      %815 = vmatprep.subr.bf16.mxu0 0
      %816 = vmatpush2.bf16.msra.mxu0 0
      %817 = vmatprep.mubr.bf16.mxu0 0
      %818 = vmatmul.mubr.bf16.gmra.mxu0 %v727
      %v819 = vpop.f32.mrf.mxu0
      %v820 = vadd.f32 %v767, %v819
      %v821 = vpop.f32.mrf.mxu0
      %v822 = vadd.f32 %v769, %v821
      %v823 = vpop.f32.mrf.mxu0
      %v824 = vadd.f32 %v771, %v823
      %v825 = vpop.f32.mrf.mxu0
      %v826 = vadd.f32 %v773, %v825
      %827 = vmatprep.mubr.bf16.mxu0 0
      %828 = vmatmul.mubr.bf16.gmra.mxu0 %v730
      %v829 = vpop.f32.mrf.mxu0
      %v830 = vadd.f32 %v777, %v829
      %v831 = vpop.f32.mrf.mxu0
      %v832 = vadd.f32 %v779, %v831
      %v833 = vpop.f32.mrf.mxu0
      %v834 = vadd.f32 %v781, %v833
      %v835 = vpop.f32.mrf.mxu0
      %v836 = vadd.f32 %v783, %v835
      %837 = vdwg.mxu0
      %838 = vrot.lane.b32.xlu0 %v246, 112
      %v839 = vpop.permute.xlu0 %838
      %840 = vrot.lane.b32.xlu0 %v247, 112
      %v841 = vpop.permute.xlu0 %840
      %842 = vrot.lane.b32.xlu0 %v248, 112
      %v843 = vpop.permute.xlu0 %842
      %844 = vrot.lane.b32.xlu0 %v249, 112
      %v845 = vpop.permute.xlu0 %844
      %v846 = vsel %vm725, %v839, 0
      %v848 = vsel %vm725, %v841, 0
      %v850 = vsel %vm725, %v843, 0
      %v852 = vsel %vm725, %v845, 0
      %854 = vmatprep.subr.mxu0 0.0
      %855 = vmatpush1.msra.mxu0 0.0
      %856 = vmatprep.subr.mxu0 0.0
      %857 = vmatpush1.msra.mxu0 0.0
      %858 = vmatprep.subr.mxu0 0.0
      %859 = vmatpush1.msra.mxu0 0.0
      %860 = vmatprep.subr.mxu0 0.0
      %861 = vmatpush1.msra.mxu0 0.0
      %862 = vmatprep.subr.mxu0 0.0
      %863 = vmatpush1.msra.mxu0 0.0
      %864 = vmatprep.subr.mxu0 0.0
      %865 = vmatpush1.msra.mxu0 0.0
      %866 = vmatprep.subr.mxu0 0.0
      %867 = vmatpush1.msra.mxu0 0.0
      %868 = vmatprep.subr.mxu0 0.0
      %869 = vmatpush1.msra.mxu0 0.0
      %870 = vmatprep.subr.mxu0 0.0
      %871 = vmatpush1.msra.mxu0 0.0
      %872 = vmatprep.subr.mxu0 0.0
      %873 = vmatpush1.msra.mxu0 0.0
      %874 = vmatprep.subr.mxu0 0.0
      %875 = vmatpush1.msra.mxu0 0.0
      %876 = vmatprep.subr.mxu0 0.0
      %877 = vmatpush1.msra.mxu0 0.0
      %v878 = vand.u32 %v836, 4294901760
      %879 = vmatprep.subr.mxu0 %v878
      %v880 = vand.u32 %v834, 4294901760
      %881 = vmatpush1.msra.mxu0 %v880
      %v882 = vand.u32 %v832, 4294901760
      %883 = vmatprep.subr.mxu0 %v882
      %v884 = vand.u32 %v830, 4294901760
      %885 = vmatpush1.msra.mxu0 %v884
      %v886 = vand.u32 %v826, 4294901760
      %887 = vmatprep.subr.mxu0 %v886
      %v888 = vand.u32 %v824, 4294901760
      %889 = vmatpush1.msra.mxu0 %v888
      %v890 = vand.u32 %v822, 4294901760
      %891 = vmatprep.subr.mxu0 %v890
      %v892 = vand.u32 %v820, 4294901760
      %893 = vmatpush1.msra.mxu0 %v892
      %894 = vmatprep.subr.mxu0 0.0
      %895 = vmatpush2.msra.mxu0 0.0
      %896 = vmatprep.subr.mxu0 0.0
      %897 = vmatpush2.msra.mxu0 0.0
      %898 = vmatprep.subr.mxu0 0.0
      %899 = vmatpush2.msra.mxu0 0.0
      %900 = vmatprep.subr.mxu0 0.0
      %901 = vmatpush2.msra.mxu0 0.0
      %902 = vmatprep.subr.mxu0 0.0
      %903 = vmatpush2.msra.mxu0 0.0
      %904 = vmatprep.subr.mxu0 0.0
      %905 = vmatpush2.msra.mxu0 0.0
      %906 = vmatprep.subr.mxu0 0.0
      %907 = vmatpush2.msra.mxu0 0.0
      %908 = vmatprep.subr.mxu0 0.0
      %909 = vmatpush2.msra.mxu0 0.0
      %910 = vmatprep.subr.mxu0 0.0
      %911 = vmatpush2.msra.mxu0 0.0
      %912 = vmatprep.subr.mxu0 0.0
      %913 = vmatpush2.msra.mxu0 0.0
      %914 = vmatprep.subr.mxu0 0.0
      %915 = vmatpush2.msra.mxu0 0.0
      %916 = vmatprep.subr.mxu0 0.0
      %917 = vmatpush2.msra.mxu0 0.0
      %918 = vmatprep.subr.mxu0 0.0
      %919 = vmatpush2.msra.mxu0 0.0
      %920 = vmatprep.subr.mxu0 0.0
      %921 = vmatpush2.msra.mxu0 0.0
      %922 = vmatprep.subr.mxu0 0.0
      %923 = vmatpush2.msra.mxu0 0.0
      %924 = vmatprep.subr.mxu0 0.0
      %925 = vmatpush2.msra.mxu0 0.0
      %926 = vmatprep.mubr.f32.mxu0 0.0
      %v927 = vand.u32 %v846, 4294901760
      %v928 = vsub.f32 %v846, %v927
      %v929 = vand.u32 %v928, 4294901760
      %v930 = vsub.f32 %v928, %v929
      %v931 = vand.u32 %v930, 4294901760
      %932 = vmatmul.mubr.f32.gmra.mxu0 %v931
      %v933 = vpop.f32.mrf.mxu0
      %v934 = vadd.f32 0.0, %v933
      %v935 = vpop.f32.mrf.mxu0
      %v936 = vadd.f32 0.0, %v935
      %937 = vmatprep.mubr.f32.mxu0 0.0
      %v938 = vand.u32 %v848, 4294901760
      %v939 = vsub.f32 %v848, %v938
      %v940 = vand.u32 %v939, 4294901760
      %v941 = vsub.f32 %v939, %v940
      %v942 = vand.u32 %v941, 4294901760
      %943 = vmatmul.mubr.f32.gmra.mxu0 %v942
      %v944 = vpop.f32.mrf.mxu0
      %v945 = vadd.f32 0.0, %v944
      %v946 = vpop.f32.mrf.mxu0
      %v947 = vadd.f32 0.0, %v946
      %948 = vmatprep.mubr.f32.mxu0 0.0
      %v949 = vand.u32 %v850, 4294901760
      %v950 = vsub.f32 %v850, %v949
      %v951 = vand.u32 %v950, 4294901760
      %v952 = vsub.f32 %v950, %v951
      %v953 = vand.u32 %v952, 4294901760
      %954 = vmatmul.mubr.f32.gmra.mxu0 %v953
      %v955 = vpop.f32.mrf.mxu0
      %v956 = vadd.f32 0.0, %v955
      %v957 = vpop.f32.mrf.mxu0
      %v958 = vadd.f32 0.0, %v957
      %959 = vmatprep.mubr.f32.mxu0 0.0
      %v960 = vand.u32 %v852, 4294901760
      %v961 = vsub.f32 %v852, %v960
      %v962 = vand.u32 %v961, 4294901760
      %v963 = vsub.f32 %v961, %v962
      %v964 = vand.u32 %v963, 4294901760
      %965 = vmatmul.mubr.f32.gmra.mxu0 %v964
      %v966 = vpop.f32.mrf.mxu0
      %v967 = vadd.f32 0.0, %v966
      %v968 = vpop.f32.mrf.mxu0
      %v969 = vadd.f32 0.0, %v968
      %970 = vdwg.mxu0
      %971 = vmatprep.subr.mxu0 0.0
      %972 = vmatpush1.msra.mxu0 0.0
      %973 = vmatprep.subr.mxu0 0.0
      %974 = vmatpush1.msra.mxu0 0.0
      %975 = vmatprep.subr.mxu0 0.0
      %976 = vmatpush1.msra.mxu0 0.0
      %977 = vmatprep.subr.mxu0 0.0
      %978 = vmatpush1.msra.mxu0 0.0
      %979 = vmatprep.subr.mxu0 0.0
      %980 = vmatpush1.msra.mxu0 0.0
      %981 = vmatprep.subr.mxu0 0.0
      %982 = vmatpush1.msra.mxu0 0.0
      %983 = vmatprep.subr.mxu0 0.0
      %984 = vmatpush1.msra.mxu0 0.0
      %985 = vmatprep.subr.mxu0 0.0
      %986 = vmatpush1.msra.mxu0 0.0
      %987 = vmatprep.subr.mxu0 0.0
      %988 = vmatpush1.msra.mxu0 0.0
      %989 = vmatprep.subr.mxu0 0.0
      %990 = vmatpush1.msra.mxu0 0.0
      %991 = vmatprep.subr.mxu0 0.0
      %992 = vmatpush1.msra.mxu0 0.0
      %993 = vmatprep.subr.mxu0 0.0
      %994 = vmatpush1.msra.mxu0 0.0
      %v995 = vand.u32 %v836, 4294901760
      %v996 = vsub.f32 %v836, %v995
      %v997 = vand.u32 %v996, 4294901760
      %v998 = vsub.f32 %v996, %v997
      %v999 = vand.u32 %v998, 4294901760
      %1000 = vmatprep.subr.mxu0 %v999
      %v1001 = vand.u32 %v834, 4294901760
      %v1002 = vsub.f32 %v834, %v1001
      %v1003 = vand.u32 %v1002, 4294901760
      %v1004 = vsub.f32 %v1002, %v1003
      %v1005 = vand.u32 %v1004, 4294901760
      %1006 = vmatpush1.msra.mxu0 %v1005
      %v1007 = vand.u32 %v832, 4294901760
      %v1008 = vsub.f32 %v832, %v1007
      %v1009 = vand.u32 %v1008, 4294901760
      %v1010 = vsub.f32 %v1008, %v1009
      %v1011 = vand.u32 %v1010, 4294901760
      %1012 = vmatprep.subr.mxu0 %v1011
      %v1013 = vand.u32 %v830, 4294901760
      %v1014 = vsub.f32 %v830, %v1013
      %v1015 = vand.u32 %v1014, 4294901760
      %v1016 = vsub.f32 %v1014, %v1015
      %v1017 = vand.u32 %v1016, 4294901760
      %1018 = vmatpush1.msra.mxu0 %v1017
      %v1019 = vand.u32 %v826, 4294901760
      %v1020 = vsub.f32 %v826, %v1019
      %v1021 = vand.u32 %v1020, 4294901760
      %v1022 = vsub.f32 %v1020, %v1021
      %v1023 = vand.u32 %v1022, 4294901760
      %1024 = vmatprep.subr.mxu0 %v1023
      %v1025 = vand.u32 %v824, 4294901760
      %v1026 = vsub.f32 %v824, %v1025
      %v1027 = vand.u32 %v1026, 4294901760
      %v1028 = vsub.f32 %v1026, %v1027
      %v1029 = vand.u32 %v1028, 4294901760
      %1030 = vmatpush1.msra.mxu0 %v1029
      %v1031 = vand.u32 %v822, 4294901760
      %v1032 = vsub.f32 %v822, %v1031
      %v1033 = vand.u32 %v1032, 4294901760
      %v1034 = vsub.f32 %v1032, %v1033
      %v1035 = vand.u32 %v1034, 4294901760
      %1036 = vmatprep.subr.mxu0 %v1035
      %v1037 = vand.u32 %v820, 4294901760
      %v1038 = vsub.f32 %v820, %v1037
      %v1039 = vand.u32 %v1038, 4294901760
      %v1040 = vsub.f32 %v1038, %v1039
      %v1041 = vand.u32 %v1040, 4294901760
      %1042 = vmatpush1.msra.mxu0 %v1041
      %1043 = vmatprep.subr.mxu0 0.0
      %1044 = vmatpush2.msra.mxu0 0.0
      %1045 = vmatprep.subr.mxu0 0.0
      %1046 = vmatpush2.msra.mxu0 0.0
      %1047 = vmatprep.subr.mxu0 0.0
      %1048 = vmatpush2.msra.mxu0 0.0
      %1049 = vmatprep.subr.mxu0 0.0
      %1050 = vmatpush2.msra.mxu0 0.0
      %1051 = vmatprep.subr.mxu0 0.0
      %1052 = vmatpush2.msra.mxu0 0.0
      %1053 = vmatprep.subr.mxu0 0.0
      %1054 = vmatpush2.msra.mxu0 0.0
      %1055 = vmatprep.subr.mxu0 0.0
      %1056 = vmatpush2.msra.mxu0 0.0
      %1057 = vmatprep.subr.mxu0 0.0
      %1058 = vmatpush2.msra.mxu0 0.0
      %1059 = vmatprep.subr.mxu0 0.0
      %1060 = vmatpush2.msra.mxu0 0.0
      %1061 = vmatprep.subr.mxu0 0.0
      %1062 = vmatpush2.msra.mxu0 0.0
      %1063 = vmatprep.subr.mxu0 0.0
      %1064 = vmatpush2.msra.mxu0 0.0
      %1065 = vmatprep.subr.mxu0 0.0
      %1066 = vmatpush2.msra.mxu0 0.0
      %1067 = vmatprep.subr.mxu0 0.0
      %1068 = vmatpush2.msra.mxu0 0.0
      %1069 = vmatprep.subr.mxu0 0.0
      %1070 = vmatpush2.msra.mxu0 0.0
      %1071 = vmatprep.subr.mxu0 0.0
      %1072 = vmatpush2.msra.mxu0 0.0
      %1073 = vmatprep.subr.mxu0 0.0
      %1074 = vmatpush2.msra.mxu0 0.0
      %1075 = vmatprep.mubr.f32.mxu0 0.0
      %v1076 = vand.u32 %v846, 4294901760
      %1077 = vmatmul.mubr.f32.gmra.mxu0 %v1076
      %v1078 = vpop.f32.mrf.mxu0
      %v1079 = vadd.f32 %v934, %v1078
      %v1080 = vpop.f32.mrf.mxu0
      %v1081 = vadd.f32 %v936, %v1080
      %1082 = vmatprep.mubr.f32.mxu0 0.0
      %v1083 = vand.u32 %v848, 4294901760
      %1084 = vmatmul.mubr.f32.gmra.mxu0 %v1083
      %v1085 = vpop.f32.mrf.mxu0
      %v1086 = vadd.f32 %v945, %v1085
      %v1087 = vpop.f32.mrf.mxu0
      %v1088 = vadd.f32 %v947, %v1087
      %1089 = vmatprep.mubr.f32.mxu0 0.0
      %v1090 = vand.u32 %v850, 4294901760
      %1091 = vmatmul.mubr.f32.gmra.mxu0 %v1090
      %v1092 = vpop.f32.mrf.mxu0
      %v1093 = vadd.f32 %v956, %v1092
      %v1094 = vpop.f32.mrf.mxu0
      %v1095 = vadd.f32 %v958, %v1094
      %1096 = vmatprep.mubr.f32.mxu0 0.0
      %v1097 = vand.u32 %v852, 4294901760
      %1098 = vmatmul.mubr.f32.gmra.mxu0 %v1097
      %v1099 = vpop.f32.mrf.mxu0
      %v1100 = vadd.f32 %v967, %v1099
      %v1101 = vpop.f32.mrf.mxu0
      %v1102 = vadd.f32 %v969, %v1101
      %1103 = vdwg.mxu0
      %1104 = vmatprep.subr.mxu0 0.0
      %1105 = vmatpush1.msra.mxu0 0.0
      %1106 = vmatprep.subr.mxu0 0.0
      %1107 = vmatpush1.msra.mxu0 0.0
      %1108 = vmatprep.subr.mxu0 0.0
      %1109 = vmatpush1.msra.mxu0 0.0
      %1110 = vmatprep.subr.mxu0 0.0
      %1111 = vmatpush1.msra.mxu0 0.0
      %1112 = vmatprep.subr.mxu0 0.0
      %1113 = vmatpush1.msra.mxu0 0.0
      %1114 = vmatprep.subr.mxu0 0.0
      %1115 = vmatpush1.msra.mxu0 0.0
      %1116 = vmatprep.subr.mxu0 0.0
      %1117 = vmatpush1.msra.mxu0 0.0
      %1118 = vmatprep.subr.mxu0 0.0
      %1119 = vmatpush1.msra.mxu0 0.0
      %1120 = vmatprep.subr.mxu0 0.0
      %1121 = vmatpush1.msra.mxu0 0.0
      %1122 = vmatprep.subr.mxu0 0.0
      %1123 = vmatpush1.msra.mxu0 0.0
      %1124 = vmatprep.subr.mxu0 0.0
      %1125 = vmatpush1.msra.mxu0 0.0
      %1126 = vmatprep.subr.mxu0 0.0
      %1127 = vmatpush1.msra.mxu0 0.0
      %v1128 = vand.u32 %v836, 4294901760
      %v1129 = vsub.f32 %v836, %v1128
      %1130 = vmatprep.subr.mxu0 %v1129
      %v1131 = vand.u32 %v834, 4294901760
      %v1132 = vsub.f32 %v834, %v1131
      %1133 = vmatpush1.msra.mxu0 %v1132
      %v1134 = vand.u32 %v832, 4294901760
      %v1135 = vsub.f32 %v832, %v1134
      %1136 = vmatprep.subr.mxu0 %v1135
      %v1137 = vand.u32 %v830, 4294901760
      %v1138 = vsub.f32 %v830, %v1137
      %1139 = vmatpush1.msra.mxu0 %v1138
      %v1140 = vand.u32 %v826, 4294901760
      %v1141 = vsub.f32 %v826, %v1140
      %1142 = vmatprep.subr.mxu0 %v1141
      %v1143 = vand.u32 %v824, 4294901760
      %v1144 = vsub.f32 %v824, %v1143
      %1145 = vmatpush1.msra.mxu0 %v1144
      %v1146 = vand.u32 %v822, 4294901760
      %v1147 = vsub.f32 %v822, %v1146
      %1148 = vmatprep.subr.mxu0 %v1147
      %v1149 = vand.u32 %v820, 4294901760
      %v1150 = vsub.f32 %v820, %v1149
      %1151 = vmatpush1.msra.mxu0 %v1150
      %1152 = vmatprep.subr.mxu0 0.0
      %1153 = vmatpush2.msra.mxu0 0.0
      %1154 = vmatprep.subr.mxu0 0.0
      %1155 = vmatpush2.msra.mxu0 0.0
      %1156 = vmatprep.subr.mxu0 0.0
      %1157 = vmatpush2.msra.mxu0 0.0
      %1158 = vmatprep.subr.mxu0 0.0
      %1159 = vmatpush2.msra.mxu0 0.0
      %1160 = vmatprep.subr.mxu0 0.0
      %1161 = vmatpush2.msra.mxu0 0.0
      %1162 = vmatprep.subr.mxu0 0.0
      %1163 = vmatpush2.msra.mxu0 0.0
      %1164 = vmatprep.subr.mxu0 0.0
      %1165 = vmatpush2.msra.mxu0 0.0
      %1166 = vmatprep.subr.mxu0 0.0
      %1167 = vmatpush2.msra.mxu0 0.0
      %1168 = vmatprep.subr.mxu0 0.0
      %1169 = vmatpush2.msra.mxu0 0.0
      %1170 = vmatprep.subr.mxu0 0.0
      %1171 = vmatpush2.msra.mxu0 0.0
      %1172 = vmatprep.subr.mxu0 0.0
      %1173 = vmatpush2.msra.mxu0 0.0
      %1174 = vmatprep.subr.mxu0 0.0
      %1175 = vmatpush2.msra.mxu0 0.0
      %1176 = vmatprep.subr.mxu0 0.0
      %1177 = vmatpush2.msra.mxu0 0.0
      %1178 = vmatprep.subr.mxu0 0.0
      %1179 = vmatpush2.msra.mxu0 0.0
      %1180 = vmatprep.subr.mxu0 0.0
      %1181 = vmatpush2.msra.mxu0 0.0
      %1182 = vmatprep.subr.mxu0 0.0
      %1183 = vmatpush2.msra.mxu0 0.0
      %1184 = vmatprep.mubr.f32.mxu0 0.0
      %v1185 = vand.u32 %v846, 4294901760
      %v1186 = vsub.f32 %v846, %v1185
      %1187 = vmatmul.mubr.f32.gmra.mxu0 %v1186
      %v1188 = vpop.f32.mrf.mxu0
      %v1189 = vadd.f32 %v1079, %v1188
      %v1190 = vpop.f32.mrf.mxu0
      %v1191 = vadd.f32 %v1081, %v1190
      %1192 = vmatprep.mubr.f32.mxu0 0.0
      %v1193 = vand.u32 %v848, 4294901760
      %v1194 = vsub.f32 %v848, %v1193
      %1195 = vmatmul.mubr.f32.gmra.mxu0 %v1194
      %v1196 = vpop.f32.mrf.mxu0
      %v1197 = vadd.f32 %v1086, %v1196
      %v1198 = vpop.f32.mrf.mxu0
      %v1199 = vadd.f32 %v1088, %v1198
      %1200 = vmatprep.mubr.f32.mxu0 0.0
      %v1201 = vand.u32 %v850, 4294901760
      %v1202 = vsub.f32 %v850, %v1201
      %1203 = vmatmul.mubr.f32.gmra.mxu0 %v1202
      %v1204 = vpop.f32.mrf.mxu0
      %v1205 = vadd.f32 %v1093, %v1204
      %v1206 = vpop.f32.mrf.mxu0
      %v1207 = vadd.f32 %v1095, %v1206
      %1208 = vmatprep.mubr.f32.mxu0 0.0
      %v1209 = vand.u32 %v852, 4294901760
      %v1210 = vsub.f32 %v852, %v1209
      %1211 = vmatmul.mubr.f32.gmra.mxu0 %v1210
      %v1212 = vpop.f32.mrf.mxu0
      %v1213 = vadd.f32 %v1100, %v1212
      %v1214 = vpop.f32.mrf.mxu0
      %v1215 = vadd.f32 %v1102, %v1214
      %1216 = vdwg.mxu0
      %1217 = vmatprep.subr.mxu0 0.0
      %1218 = vmatpush1.msra.mxu0 0.0
      %1219 = vmatprep.subr.mxu0 0.0
      %1220 = vmatpush1.msra.mxu0 0.0
      %1221 = vmatprep.subr.mxu0 0.0
      %1222 = vmatpush1.msra.mxu0 0.0
      %1223 = vmatprep.subr.mxu0 0.0
      %1224 = vmatpush1.msra.mxu0 0.0
      %1225 = vmatprep.subr.mxu0 0.0
      %1226 = vmatpush1.msra.mxu0 0.0
      %1227 = vmatprep.subr.mxu0 0.0
      %1228 = vmatpush1.msra.mxu0 0.0
      %1229 = vmatprep.subr.mxu0 0.0
      %1230 = vmatpush1.msra.mxu0 0.0
      %1231 = vmatprep.subr.mxu0 0.0
      %1232 = vmatpush1.msra.mxu0 0.0
      %1233 = vmatprep.subr.mxu0 0.0
      %1234 = vmatpush1.msra.mxu0 0.0
      %1235 = vmatprep.subr.mxu0 0.0
      %1236 = vmatpush1.msra.mxu0 0.0
      %1237 = vmatprep.subr.mxu0 0.0
      %1238 = vmatpush1.msra.mxu0 0.0
      %1239 = vmatprep.subr.mxu0 0.0
      %1240 = vmatpush1.msra.mxu0 0.0
      %v1241 = vand.u32 %v836, 4294901760
      %1242 = vmatprep.subr.mxu0 %v1241
      %v1243 = vand.u32 %v834, 4294901760
      %1244 = vmatpush1.msra.mxu0 %v1243
      %v1245 = vand.u32 %v832, 4294901760
      %1246 = vmatprep.subr.mxu0 %v1245
      %v1247 = vand.u32 %v830, 4294901760
      %1248 = vmatpush1.msra.mxu0 %v1247
      %v1249 = vand.u32 %v826, 4294901760
      %1250 = vmatprep.subr.mxu0 %v1249
      %v1251 = vand.u32 %v824, 4294901760
      %1252 = vmatpush1.msra.mxu0 %v1251
      %v1253 = vand.u32 %v822, 4294901760
      %1254 = vmatprep.subr.mxu0 %v1253
      %v1255 = vand.u32 %v820, 4294901760
      %1256 = vmatpush1.msra.mxu0 %v1255
      %1257 = vmatprep.subr.mxu0 0.0
      %1258 = vmatpush2.msra.mxu0 0.0
      %1259 = vmatprep.subr.mxu0 0.0
      %1260 = vmatpush2.msra.mxu0 0.0
      %1261 = vmatprep.subr.mxu0 0.0
      %1262 = vmatpush2.msra.mxu0 0.0
      %1263 = vmatprep.subr.mxu0 0.0
      %1264 = vmatpush2.msra.mxu0 0.0
      %1265 = vmatprep.subr.mxu0 0.0
      %1266 = vmatpush2.msra.mxu0 0.0
      %1267 = vmatprep.subr.mxu0 0.0
      %1268 = vmatpush2.msra.mxu0 0.0
      %1269 = vmatprep.subr.mxu0 0.0
      %1270 = vmatpush2.msra.mxu0 0.0
      %1271 = vmatprep.subr.mxu0 0.0
      %1272 = vmatpush2.msra.mxu0 0.0
      %1273 = vmatprep.subr.mxu0 0.0
      %1274 = vmatpush2.msra.mxu0 0.0
      %1275 = vmatprep.subr.mxu0 0.0
      %1276 = vmatpush2.msra.mxu0 0.0
      %1277 = vmatprep.subr.mxu0 0.0
      %1278 = vmatpush2.msra.mxu0 0.0
      %1279 = vmatprep.subr.mxu0 0.0
      %1280 = vmatpush2.msra.mxu0 0.0
      %1281 = vmatprep.subr.mxu0 0.0
      %1282 = vmatpush2.msra.mxu0 0.0
      %1283 = vmatprep.subr.mxu0 0.0
      %1284 = vmatpush2.msra.mxu0 0.0
      %1285 = vmatprep.subr.mxu0 0.0
      %1286 = vmatpush2.msra.mxu0 0.0
      %1287 = vmatprep.subr.mxu0 0.0
      %1288 = vmatpush2.msra.mxu0 0.0
      %1289 = vmatprep.mubr.f32.mxu0 0.0
      %v1290 = vand.u32 %v846, 4294901760
      %v1291 = vsub.f32 %v846, %v1290
      %v1292 = vand.u32 %v1291, 4294901760
      %1293 = vmatmul.mubr.f32.gmra.mxu0 %v1292
      %v1294 = vpop.f32.mrf.mxu0
      %v1295 = vadd.f32 %v1189, %v1294
      %v1296 = vpop.f32.mrf.mxu0
      %v1297 = vadd.f32 %v1191, %v1296
      %1298 = vmatprep.mubr.f32.mxu0 0.0
      %v1299 = vand.u32 %v848, 4294901760
      %v1300 = vsub.f32 %v848, %v1299
      %v1301 = vand.u32 %v1300, 4294901760
      %1302 = vmatmul.mubr.f32.gmra.mxu0 %v1301
      %v1303 = vpop.f32.mrf.mxu0
      %v1304 = vadd.f32 %v1197, %v1303
      %v1305 = vpop.f32.mrf.mxu0
      %v1306 = vadd.f32 %v1199, %v1305
      %1307 = vmatprep.mubr.f32.mxu0 0.0
      %v1308 = vand.u32 %v850, 4294901760
      %v1309 = vsub.f32 %v850, %v1308
      %v1310 = vand.u32 %v1309, 4294901760
      %1311 = vmatmul.mubr.f32.gmra.mxu0 %v1310
      %v1312 = vpop.f32.mrf.mxu0
      %v1313 = vadd.f32 %v1205, %v1312
      %v1314 = vpop.f32.mrf.mxu0
      %v1315 = vadd.f32 %v1207, %v1314
      %1316 = vmatprep.mubr.f32.mxu0 0.0
      %v1317 = vand.u32 %v852, 4294901760
      %v1318 = vsub.f32 %v852, %v1317
      %v1319 = vand.u32 %v1318, 4294901760
      %1320 = vmatmul.mubr.f32.gmra.mxu0 %v1319
      %v1321 = vpop.f32.mrf.mxu0
      %v1322 = vadd.f32 %v1213, %v1321
      %v1323 = vpop.f32.mrf.mxu0
      %v1324 = vadd.f32 %v1215, %v1323
      %1325 = vdwg.mxu0
      %1326 = vmatprep.subr.mxu0 0.0
      %1327 = vmatpush1.msra.mxu0 0.0
      %1328 = vmatprep.subr.mxu0 0.0
      %1329 = vmatpush1.msra.mxu0 0.0
      %1330 = vmatprep.subr.mxu0 0.0
      %1331 = vmatpush1.msra.mxu0 0.0
      %1332 = vmatprep.subr.mxu0 0.0
      %1333 = vmatpush1.msra.mxu0 0.0
      %1334 = vmatprep.subr.mxu0 0.0
      %1335 = vmatpush1.msra.mxu0 0.0
      %1336 = vmatprep.subr.mxu0 0.0
      %1337 = vmatpush1.msra.mxu0 0.0
      %1338 = vmatprep.subr.mxu0 0.0
      %1339 = vmatpush1.msra.mxu0 0.0
      %1340 = vmatprep.subr.mxu0 0.0
      %1341 = vmatpush1.msra.mxu0 0.0
      %1342 = vmatprep.subr.mxu0 0.0
      %1343 = vmatpush1.msra.mxu0 0.0
      %1344 = vmatprep.subr.mxu0 0.0
      %1345 = vmatpush1.msra.mxu0 0.0
      %1346 = vmatprep.subr.mxu0 0.0
      %1347 = vmatpush1.msra.mxu0 0.0
      %1348 = vmatprep.subr.mxu0 0.0
      %1349 = vmatpush1.msra.mxu0 0.0
      %v1350 = vand.u32 %v836, 4294901760
      %v1351 = vsub.f32 %v836, %v1350
      %v1352 = vand.u32 %v1351, 4294901760
      %1353 = vmatprep.subr.mxu0 %v1352
      %v1354 = vand.u32 %v834, 4294901760
      %v1355 = vsub.f32 %v834, %v1354
      %v1356 = vand.u32 %v1355, 4294901760
      %1357 = vmatpush1.msra.mxu0 %v1356
      %v1358 = vand.u32 %v832, 4294901760
      %v1359 = vsub.f32 %v832, %v1358
      %v1360 = vand.u32 %v1359, 4294901760
      %1361 = vmatprep.subr.mxu0 %v1360
      %v1362 = vand.u32 %v830, 4294901760
      %v1363 = vsub.f32 %v830, %v1362
      %v1364 = vand.u32 %v1363, 4294901760
      %1365 = vmatpush1.msra.mxu0 %v1364
      %v1366 = vand.u32 %v826, 4294901760
      %v1367 = vsub.f32 %v826, %v1366
      %v1368 = vand.u32 %v1367, 4294901760
      %1369 = vmatprep.subr.mxu0 %v1368
      %v1370 = vand.u32 %v824, 4294901760
      %v1371 = vsub.f32 %v824, %v1370
      %v1372 = vand.u32 %v1371, 4294901760
      %1373 = vmatpush1.msra.mxu0 %v1372
      %v1374 = vand.u32 %v822, 4294901760
      %v1375 = vsub.f32 %v822, %v1374
      %v1376 = vand.u32 %v1375, 4294901760
      %1377 = vmatprep.subr.mxu0 %v1376
      %v1378 = vand.u32 %v820, 4294901760
      %v1379 = vsub.f32 %v820, %v1378
      %v1380 = vand.u32 %v1379, 4294901760
      %1381 = vmatpush1.msra.mxu0 %v1380
      %1382 = vmatprep.subr.mxu0 0.0
      %1383 = vmatpush2.msra.mxu0 0.0
      %1384 = vmatprep.subr.mxu0 0.0
      %1385 = vmatpush2.msra.mxu0 0.0
      %1386 = vmatprep.subr.mxu0 0.0
      %1387 = vmatpush2.msra.mxu0 0.0
      %1388 = vmatprep.subr.mxu0 0.0
      %1389 = vmatpush2.msra.mxu0 0.0
      %1390 = vmatprep.subr.mxu0 0.0
      %1391 = vmatpush2.msra.mxu0 0.0
      %1392 = vmatprep.subr.mxu0 0.0
      %1393 = vmatpush2.msra.mxu0 0.0
      %1394 = vmatprep.subr.mxu0 0.0
      %1395 = vmatpush2.msra.mxu0 0.0
      %1396 = vmatprep.subr.mxu0 0.0
      %1397 = vmatpush2.msra.mxu0 0.0
      %1398 = vmatprep.subr.mxu0 0.0
      %1399 = vmatpush2.msra.mxu0 0.0
      %1400 = vmatprep.subr.mxu0 0.0
      %1401 = vmatpush2.msra.mxu0 0.0
      %1402 = vmatprep.subr.mxu0 0.0
      %1403 = vmatpush2.msra.mxu0 0.0
      %1404 = vmatprep.subr.mxu0 0.0
      %1405 = vmatpush2.msra.mxu0 0.0
      %1406 = vmatprep.subr.mxu0 0.0
      %1407 = vmatpush2.msra.mxu0 0.0
      %1408 = vmatprep.subr.mxu0 0.0
      %1409 = vmatpush2.msra.mxu0 0.0
      %1410 = vmatprep.subr.mxu0 0.0
      %1411 = vmatpush2.msra.mxu0 0.0
      %1412 = vmatprep.subr.mxu0 0.0
      %1413 = vmatpush2.msra.mxu0 0.0
      %1414 = vmatprep.mubr.f32.mxu0 0.0
      %v1415 = vand.u32 %v846, 4294901760
      %1416 = vmatmul.mubr.f32.gmra.mxu0 %v1415
      %v1417 = vpop.f32.mrf.mxu0
      %v1418 = vadd.f32 %v1295, %v1417
      %v1419 = vpop.f32.mrf.mxu0
      %v1420 = vadd.f32 %v1297, %v1419
      %1421 = vmatprep.mubr.f32.mxu0 0.0
      %v1422 = vand.u32 %v848, 4294901760
      %1423 = vmatmul.mubr.f32.gmra.mxu0 %v1422
      %v1424 = vpop.f32.mrf.mxu0
      %v1425 = vadd.f32 %v1304, %v1424
      %v1426 = vpop.f32.mrf.mxu0
      %v1427 = vadd.f32 %v1306, %v1426
      %1428 = vmatprep.mubr.f32.mxu0 0.0
      %v1429 = vand.u32 %v850, 4294901760
      %1430 = vmatmul.mubr.f32.gmra.mxu0 %v1429
      %v1431 = vpop.f32.mrf.mxu0
      %v1432 = vadd.f32 %v1313, %v1431
      %v1433 = vpop.f32.mrf.mxu0
      %v1434 = vadd.f32 %v1315, %v1433
      %1435 = vmatprep.mubr.f32.mxu0 0.0
      %v1436 = vand.u32 %v852, 4294901760
      %1437 = vmatmul.mubr.f32.gmra.mxu0 %v1436
      %v1438 = vpop.f32.mrf.mxu0
      %v1439 = vadd.f32 %v1322, %v1438
      %v1440 = vpop.f32.mrf.mxu0
      %v1441 = vadd.f32 %v1324, %v1440
      %1442 = vdwg.mxu0
      %1443 = vmatprep.subr.mxu0 0.0
      %1444 = vmatpush1.msra.mxu0 0.0
      %1445 = vmatprep.subr.mxu0 0.0
      %1446 = vmatpush1.msra.mxu0 0.0
      %1447 = vmatprep.subr.mxu0 0.0
      %1448 = vmatpush1.msra.mxu0 0.0
      %1449 = vmatprep.subr.mxu0 0.0
      %1450 = vmatpush1.msra.mxu0 0.0
      %1451 = vmatprep.subr.mxu0 0.0
      %1452 = vmatpush1.msra.mxu0 0.0
      %1453 = vmatprep.subr.mxu0 0.0
      %1454 = vmatpush1.msra.mxu0 0.0
      %1455 = vmatprep.subr.mxu0 0.0
      %1456 = vmatpush1.msra.mxu0 0.0
      %1457 = vmatprep.subr.mxu0 0.0
      %1458 = vmatpush1.msra.mxu0 0.0
      %1459 = vmatprep.subr.mxu0 0.0
      %1460 = vmatpush1.msra.mxu0 0.0
      %1461 = vmatprep.subr.mxu0 0.0
      %1462 = vmatpush1.msra.mxu0 0.0
      %1463 = vmatprep.subr.mxu0 0.0
      %1464 = vmatpush1.msra.mxu0 0.0
      %1465 = vmatprep.subr.mxu0 0.0
      %1466 = vmatpush1.msra.mxu0 0.0
      %v1467 = vand.u32 %v836, 4294901760
      %1468 = vmatprep.subr.mxu0 %v1467
      %v1469 = vand.u32 %v834, 4294901760
      %1470 = vmatpush1.msra.mxu0 %v1469
      %v1471 = vand.u32 %v832, 4294901760
      %1472 = vmatprep.subr.mxu0 %v1471
      %v1473 = vand.u32 %v830, 4294901760
      %1474 = vmatpush1.msra.mxu0 %v1473
      %v1475 = vand.u32 %v826, 4294901760
      %1476 = vmatprep.subr.mxu0 %v1475
      %v1477 = vand.u32 %v824, 4294901760
      %1478 = vmatpush1.msra.mxu0 %v1477
      %v1479 = vand.u32 %v822, 4294901760
      %1480 = vmatprep.subr.mxu0 %v1479
      %v1481 = vand.u32 %v820, 4294901760
      %1482 = vmatpush1.msra.mxu0 %v1481
      %1483 = vmatprep.subr.mxu0 0.0
      %1484 = vmatpush2.msra.mxu0 0.0
      %1485 = vmatprep.subr.mxu0 0.0
      %1486 = vmatpush2.msra.mxu0 0.0
      %1487 = vmatprep.subr.mxu0 0.0
      %1488 = vmatpush2.msra.mxu0 0.0
      %1489 = vmatprep.subr.mxu0 0.0
      %1490 = vmatpush2.msra.mxu0 0.0
      %1491 = vmatprep.subr.mxu0 0.0
      %1492 = vmatpush2.msra.mxu0 0.0
      %1493 = vmatprep.subr.mxu0 0.0
      %1494 = vmatpush2.msra.mxu0 0.0
      %1495 = vmatprep.subr.mxu0 0.0
      %1496 = vmatpush2.msra.mxu0 0.0
      %1497 = vmatprep.subr.mxu0 0.0
      %1498 = vmatpush2.msra.mxu0 0.0
      %1499 = vmatprep.subr.mxu0 0.0
      %1500 = vmatpush2.msra.mxu0 0.0
      %1501 = vmatprep.subr.mxu0 0.0
      %1502 = vmatpush2.msra.mxu0 0.0
      %1503 = vmatprep.subr.mxu0 0.0
      %1504 = vmatpush2.msra.mxu0 0.0
      %1505 = vmatprep.subr.mxu0 0.0
      %1506 = vmatpush2.msra.mxu0 0.0
      %1507 = vmatprep.subr.mxu0 0.0
      %1508 = vmatpush2.msra.mxu0 0.0
      %1509 = vmatprep.subr.mxu0 0.0
      %1510 = vmatpush2.msra.mxu0 0.0
      %1511 = vmatprep.subr.mxu0 0.0
      %1512 = vmatpush2.msra.mxu0 0.0
      %1513 = vmatprep.subr.mxu0 0.0
      %1514 = vmatpush2.msra.mxu0 0.0
      %1515 = vmatprep.mubr.f32.mxu0 0.0
      %v1516 = vand.u32 %v846, 4294901760
      %1517 = vmatmul.mubr.f32.gmra.mxu0 %v1516
      %v1518 = vpop.f32.mrf.mxu0
      %v1519 = vadd.f32 %v1418, %v1518
      %v1520 = vpop.f32.mrf.mxu0
      %v1521 = vadd.f32 %v1420, %v1520
      %1522 = vmatprep.mubr.f32.mxu0 0.0
      %v1523 = vand.u32 %v848, 4294901760
      %1524 = vmatmul.mubr.f32.gmra.mxu0 %v1523
      %v1525 = vpop.f32.mrf.mxu0
      %v1526 = vadd.f32 %v1425, %v1525
      %v1527 = vpop.f32.mrf.mxu0
      %v1528 = vadd.f32 %v1427, %v1527
      %1529 = vmatprep.mubr.f32.mxu0 0.0
      %v1530 = vand.u32 %v850, 4294901760
      %1531 = vmatmul.mubr.f32.gmra.mxu0 %v1530
      %v1532 = vpop.f32.mrf.mxu0
      %v1533 = vadd.f32 %v1432, %v1532
      %v1534 = vpop.f32.mrf.mxu0
      %v1535 = vadd.f32 %v1434, %v1534
      %1536 = vmatprep.mubr.f32.mxu0 0.0
      %v1537 = vand.u32 %v852, 4294901760
      %1538 = vmatmul.mubr.f32.gmra.mxu0 %v1537
      %v1539 = vpop.f32.mrf.mxu0
      %v1540 = vadd.f32 %v1439, %v1539
      %v1541 = vpop.f32.mrf.mxu0
      %v1542 = vadd.f32 %v1441, %v1541
      %1543 = vdwg.mxu0
      %v1544 = vadd.f32 %v1519, %v1521
      %1545 = vadd.xlane.f32.xlu0 %v1544
      %v1546 = vpop.xlane.xlu0 %1545
      %v1547 = vadd.f32 %v1526, %v1528
      %1548 = vadd.xlane.f32.xlu0 %v1547
      %v1549 = vpop.xlane.xlu0 %1548
      %v1550 = vadd.f32 %v1533, %v1535
      %1551 = vadd.xlane.f32.xlu0 %v1550
      %v1552 = vpop.xlane.xlu0 %1551
      %v1553 = vadd.f32 %v1540, %v1542
      %1554 = vadd.xlane.f32.xlu0 %v1553
      %v1555 = vpop.xlane.xlu0 %1554
      %v1556 = vsub.f32 %v820, %v1546
      %v1557 = vsub.f32 %v822, %v1546
      %v1558 = vsub.f32 %v824, %v1549
      %v1559 = vsub.f32 %v826, %v1549
      %v1560 = vsub.f32 %v830, %v1552
      %v1561 = vsub.f32 %v832, %v1552
      %v1562 = vsub.f32 %v834, %v1555
      %v1563 = vsub.f32 %v836, %v1555
      %v1564 = vmul.f32 %v1556, %v1556
      %v1565 = vmul.f32 %v1557, %v1557
      %v1566 = vmul.f32 %v1558, %v1558
      %v1567 = vmul.f32 %v1559, %v1559
      %v1568 = vmul.f32 %v1560, %v1560
      %v1569 = vmul.f32 %v1561, %v1561
      %v1570 = vmul.f32 %v1562, %v1562
      %v1571 = vmul.f32 %v1563, %v1563
      %1572 = vmatprep.subr.mxu0 0.0
      %1573 = vmatpush1.msra.mxu0 0.0
      %1574 = vmatprep.subr.mxu0 0.0
      %1575 = vmatpush1.msra.mxu0 0.0
      %1576 = vmatprep.subr.mxu0 0.0
      %1577 = vmatpush1.msra.mxu0 0.0
      %1578 = vmatprep.subr.mxu0 0.0
      %1579 = vmatpush1.msra.mxu0 0.0
      %1580 = vmatprep.subr.mxu0 0.0
      %1581 = vmatpush1.msra.mxu0 0.0
      %1582 = vmatprep.subr.mxu0 0.0
      %1583 = vmatpush1.msra.mxu0 0.0
      %1584 = vmatprep.subr.mxu0 0.0
      %1585 = vmatpush1.msra.mxu0 0.0
      %1586 = vmatprep.subr.mxu0 0.0
      %1587 = vmatpush1.msra.mxu0 0.0
      %1588 = vmatprep.subr.mxu0 0.0
      %1589 = vmatpush1.msra.mxu0 0.0
      %1590 = vmatprep.subr.mxu0 0.0
      %1591 = vmatpush1.msra.mxu0 0.0
      %1592 = vmatprep.subr.mxu0 0.0
      %1593 = vmatpush1.msra.mxu0 0.0
      %1594 = vmatprep.subr.mxu0 0.0
      %1595 = vmatpush1.msra.mxu0 0.0
      %v1596 = vand.u32 %v1571, 4294901760
      %1597 = vmatprep.subr.mxu0 %v1596
      %v1598 = vand.u32 %v1570, 4294901760
      %1599 = vmatpush1.msra.mxu0 %v1598
      %v1600 = vand.u32 %v1569, 4294901760
      %1601 = vmatprep.subr.mxu0 %v1600
      %v1602 = vand.u32 %v1568, 4294901760
      %1603 = vmatpush1.msra.mxu0 %v1602
      %v1604 = vand.u32 %v1567, 4294901760
      %1605 = vmatprep.subr.mxu0 %v1604
      %v1606 = vand.u32 %v1566, 4294901760
      %1607 = vmatpush1.msra.mxu0 %v1606
      %v1608 = vand.u32 %v1565, 4294901760
      %1609 = vmatprep.subr.mxu0 %v1608
      %v1610 = vand.u32 %v1564, 4294901760
      %1611 = vmatpush1.msra.mxu0 %v1610
      %1612 = vmatprep.subr.mxu0 0.0
      %1613 = vmatpush2.msra.mxu0 0.0
      %1614 = vmatprep.subr.mxu0 0.0
      %1615 = vmatpush2.msra.mxu0 0.0
      %1616 = vmatprep.subr.mxu0 0.0
      %1617 = vmatpush2.msra.mxu0 0.0
      %1618 = vmatprep.subr.mxu0 0.0
      %1619 = vmatpush2.msra.mxu0 0.0
      %1620 = vmatprep.subr.mxu0 0.0
      %1621 = vmatpush2.msra.mxu0 0.0
      %1622 = vmatprep.subr.mxu0 0.0
      %1623 = vmatpush2.msra.mxu0 0.0
      %1624 = vmatprep.subr.mxu0 0.0
      %1625 = vmatpush2.msra.mxu0 0.0
      %1626 = vmatprep.subr.mxu0 0.0
      %1627 = vmatpush2.msra.mxu0 0.0
      %1628 = vmatprep.subr.mxu0 0.0
      %1629 = vmatpush2.msra.mxu0 0.0
      %1630 = vmatprep.subr.mxu0 0.0
      %1631 = vmatpush2.msra.mxu0 0.0
      %1632 = vmatprep.subr.mxu0 0.0
      %1633 = vmatpush2.msra.mxu0 0.0
      %1634 = vmatprep.subr.mxu0 0.0
      %1635 = vmatpush2.msra.mxu0 0.0
      %1636 = vmatprep.subr.mxu0 0.0
      %1637 = vmatpush2.msra.mxu0 0.0
      %1638 = vmatprep.subr.mxu0 0.0
      %1639 = vmatpush2.msra.mxu0 0.0
      %1640 = vmatprep.subr.mxu0 0.0
      %1641 = vmatpush2.msra.mxu0 0.0
      %1642 = vmatprep.subr.mxu0 0.0
      %1643 = vmatpush2.msra.mxu0 0.0
      %1644 = vmatprep.mubr.f32.mxu0 0.0
      %v1645 = vand.u32 %v846, 4294901760
      %v1646 = vsub.f32 %v846, %v1645
      %v1647 = vand.u32 %v1646, 4294901760
      %v1648 = vsub.f32 %v1646, %v1647
      %v1649 = vand.u32 %v1648, 4294901760
      %1650 = vmatmul.mubr.f32.gmra.mxu0 %v1649
      %v1651 = vpop.f32.mrf.mxu0
      %v1652 = vadd.f32 0.0, %v1651
      %v1653 = vpop.f32.mrf.mxu0
      %v1654 = vadd.f32 0.0, %v1653
      %1655 = vmatprep.mubr.f32.mxu0 0.0
      %v1656 = vand.u32 %v848, 4294901760
      %v1657 = vsub.f32 %v848, %v1656
      %v1658 = vand.u32 %v1657, 4294901760
      %v1659 = vsub.f32 %v1657, %v1658
      %v1660 = vand.u32 %v1659, 4294901760
      %1661 = vmatmul.mubr.f32.gmra.mxu0 %v1660
      %v1662 = vpop.f32.mrf.mxu0
      %v1663 = vadd.f32 0.0, %v1662
      %v1664 = vpop.f32.mrf.mxu0
      %v1665 = vadd.f32 0.0, %v1664
      %1666 = vmatprep.mubr.f32.mxu0 0.0
      %v1667 = vand.u32 %v850, 4294901760
      %v1668 = vsub.f32 %v850, %v1667
      %v1669 = vand.u32 %v1668, 4294901760
      %v1670 = vsub.f32 %v1668, %v1669
      %v1671 = vand.u32 %v1670, 4294901760
      %1672 = vmatmul.mubr.f32.gmra.mxu0 %v1671
      %v1673 = vpop.f32.mrf.mxu0
      %v1674 = vadd.f32 0.0, %v1673
      %v1675 = vpop.f32.mrf.mxu0
      %v1676 = vadd.f32 0.0, %v1675
      %1677 = vmatprep.mubr.f32.mxu0 0.0
      %v1678 = vand.u32 %v852, 4294901760
      %v1679 = vsub.f32 %v852, %v1678
      %v1680 = vand.u32 %v1679, 4294901760
      %v1681 = vsub.f32 %v1679, %v1680
      %v1682 = vand.u32 %v1681, 4294901760
      %1683 = vmatmul.mubr.f32.gmra.mxu0 %v1682
      %v1684 = vpop.f32.mrf.mxu0
      %v1685 = vadd.f32 0.0, %v1684
      %v1686 = vpop.f32.mrf.mxu0
      %v1687 = vadd.f32 0.0, %v1686
      %1688 = vdwg.mxu0
      %1689 = vmatprep.subr.mxu0 0.0
      %1690 = vmatpush1.msra.mxu0 0.0
      %1691 = vmatprep.subr.mxu0 0.0
      %1692 = vmatpush1.msra.mxu0 0.0
      %1693 = vmatprep.subr.mxu0 0.0
      %1694 = vmatpush1.msra.mxu0 0.0
      %1695 = vmatprep.subr.mxu0 0.0
      %1696 = vmatpush1.msra.mxu0 0.0
      %1697 = vmatprep.subr.mxu0 0.0
      %1698 = vmatpush1.msra.mxu0 0.0
      %1699 = vmatprep.subr.mxu0 0.0
      %1700 = vmatpush1.msra.mxu0 0.0
      %1701 = vmatprep.subr.mxu0 0.0
      %1702 = vmatpush1.msra.mxu0 0.0
      %1703 = vmatprep.subr.mxu0 0.0
      %1704 = vmatpush1.msra.mxu0 0.0
      %1705 = vmatprep.subr.mxu0 0.0
      %1706 = vmatpush1.msra.mxu0 0.0
      %1707 = vmatprep.subr.mxu0 0.0
      %1708 = vmatpush1.msra.mxu0 0.0
      %1709 = vmatprep.subr.mxu0 0.0
      %1710 = vmatpush1.msra.mxu0 0.0
      %1711 = vmatprep.subr.mxu0 0.0
      %1712 = vmatpush1.msra.mxu0 0.0
      %v1713 = vand.u32 %v1571, 4294901760
      %v1714 = vsub.f32 %v1571, %v1713
      %v1715 = vand.u32 %v1714, 4294901760
      %v1716 = vsub.f32 %v1714, %v1715
      %v1717 = vand.u32 %v1716, 4294901760
      %1718 = vmatprep.subr.mxu0 %v1717
      %v1719 = vand.u32 %v1570, 4294901760
      %v1720 = vsub.f32 %v1570, %v1719
      %v1721 = vand.u32 %v1720, 4294901760
      %v1722 = vsub.f32 %v1720, %v1721
      %v1723 = vand.u32 %v1722, 4294901760
      %1724 = vmatpush1.msra.mxu0 %v1723
      %v1725 = vand.u32 %v1569, 4294901760
      %v1726 = vsub.f32 %v1569, %v1725
      %v1727 = vand.u32 %v1726, 4294901760
      %v1728 = vsub.f32 %v1726, %v1727
      %v1729 = vand.u32 %v1728, 4294901760
      %1730 = vmatprep.subr.mxu0 %v1729
      %v1731 = vand.u32 %v1568, 4294901760
      %v1732 = vsub.f32 %v1568, %v1731
      %v1733 = vand.u32 %v1732, 4294901760
      %v1734 = vsub.f32 %v1732, %v1733
      %v1735 = vand.u32 %v1734, 4294901760
      %1736 = vmatpush1.msra.mxu0 %v1735
      %v1737 = vand.u32 %v1567, 4294901760
      %v1738 = vsub.f32 %v1567, %v1737
      %v1739 = vand.u32 %v1738, 4294901760
      %v1740 = vsub.f32 %v1738, %v1739
      %v1741 = vand.u32 %v1740, 4294901760
      %1742 = vmatprep.subr.mxu0 %v1741
      %v1743 = vand.u32 %v1566, 4294901760
      %v1744 = vsub.f32 %v1566, %v1743
      %v1745 = vand.u32 %v1744, 4294901760
      %v1746 = vsub.f32 %v1744, %v1745
      %v1747 = vand.u32 %v1746, 4294901760
      %1748 = vmatpush1.msra.mxu0 %v1747
      %v1749 = vand.u32 %v1565, 4294901760
      %v1750 = vsub.f32 %v1565, %v1749
      %v1751 = vand.u32 %v1750, 4294901760
      %v1752 = vsub.f32 %v1750, %v1751
      %v1753 = vand.u32 %v1752, 4294901760
      %1754 = vmatprep.subr.mxu0 %v1753
      %v1755 = vand.u32 %v1564, 4294901760
      %v1756 = vsub.f32 %v1564, %v1755
      %v1757 = vand.u32 %v1756, 4294901760
      %v1758 = vsub.f32 %v1756, %v1757
      %v1759 = vand.u32 %v1758, 4294901760
      %1760 = vmatpush1.msra.mxu0 %v1759
      %1761 = vmatprep.subr.mxu0 0.0
      %1762 = vmatpush2.msra.mxu0 0.0
      %1763 = vmatprep.subr.mxu0 0.0
      %1764 = vmatpush2.msra.mxu0 0.0
      %1765 = vmatprep.subr.mxu0 0.0
      %1766 = vmatpush2.msra.mxu0 0.0
      %1767 = vmatprep.subr.mxu0 0.0
      %1768 = vmatpush2.msra.mxu0 0.0
      %1769 = vmatprep.subr.mxu0 0.0
      %1770 = vmatpush2.msra.mxu0 0.0
      %1771 = vmatprep.subr.mxu0 0.0
      %1772 = vmatpush2.msra.mxu0 0.0
      %1773 = vmatprep.subr.mxu0 0.0
      %1774 = vmatpush2.msra.mxu0 0.0
      %1775 = vmatprep.subr.mxu0 0.0
      %1776 = vmatpush2.msra.mxu0 0.0
      %1777 = vmatprep.subr.mxu0 0.0
      %1778 = vmatpush2.msra.mxu0 0.0
      %1779 = vmatprep.subr.mxu0 0.0
      %1780 = vmatpush2.msra.mxu0 0.0
      %1781 = vmatprep.subr.mxu0 0.0
      %1782 = vmatpush2.msra.mxu0 0.0
      %1783 = vmatprep.subr.mxu0 0.0
      %1784 = vmatpush2.msra.mxu0 0.0
      %1785 = vmatprep.subr.mxu0 0.0
      %1786 = vmatpush2.msra.mxu0 0.0
      %1787 = vmatprep.subr.mxu0 0.0
      %1788 = vmatpush2.msra.mxu0 0.0
      %1789 = vmatprep.subr.mxu0 0.0
      %1790 = vmatpush2.msra.mxu0 0.0
      %1791 = vmatprep.subr.mxu0 0.0
      %1792 = vmatpush2.msra.mxu0 0.0
      %1793 = vmatprep.mubr.f32.mxu0 0.0
      %v1794 = vand.u32 %v846, 4294901760
      %1795 = vmatmul.mubr.f32.gmra.mxu0 %v1794
      %v1796 = vpop.f32.mrf.mxu0
      %v1797 = vadd.f32 %v1652, %v1796
      %v1798 = vpop.f32.mrf.mxu0
      %v1799 = vadd.f32 %v1654, %v1798
      %1800 = vmatprep.mubr.f32.mxu0 0.0
      %v1801 = vand.u32 %v848, 4294901760
      %1802 = vmatmul.mubr.f32.gmra.mxu0 %v1801
      %v1803 = vpop.f32.mrf.mxu0
      %v1804 = vadd.f32 %v1663, %v1803
      %v1805 = vpop.f32.mrf.mxu0
      %v1806 = vadd.f32 %v1665, %v1805
      %1807 = vmatprep.mubr.f32.mxu0 0.0
      %v1808 = vand.u32 %v850, 4294901760
      %1809 = vmatmul.mubr.f32.gmra.mxu0 %v1808
      %v1810 = vpop.f32.mrf.mxu0
      %v1811 = vadd.f32 %v1674, %v1810
      %v1812 = vpop.f32.mrf.mxu0
      %v1813 = vadd.f32 %v1676, %v1812
      %1814 = vmatprep.mubr.f32.mxu0 0.0
      %v1815 = vand.u32 %v852, 4294901760
      %1816 = vmatmul.mubr.f32.gmra.mxu0 %v1815
      %v1817 = vpop.f32.mrf.mxu0
      %v1818 = vadd.f32 %v1685, %v1817
      %v1819 = vpop.f32.mrf.mxu0
      %v1820 = vadd.f32 %v1687, %v1819
      %1821 = vdwg.mxu0
      %1822 = vmatprep.subr.mxu0 0.0
      %1823 = vmatpush1.msra.mxu0 0.0
      %1824 = vmatprep.subr.mxu0 0.0
      %1825 = vmatpush1.msra.mxu0 0.0
      %1826 = vmatprep.subr.mxu0 0.0
      %1827 = vmatpush1.msra.mxu0 0.0
      %1828 = vmatprep.subr.mxu0 0.0
      %1829 = vmatpush1.msra.mxu0 0.0
      %1830 = vmatprep.subr.mxu0 0.0
      %1831 = vmatpush1.msra.mxu0 0.0
      %1832 = vmatprep.subr.mxu0 0.0
      %1833 = vmatpush1.msra.mxu0 0.0
      %1834 = vmatprep.subr.mxu0 0.0
      %1835 = vmatpush1.msra.mxu0 0.0
      %1836 = vmatprep.subr.mxu0 0.0
      %1837 = vmatpush1.msra.mxu0 0.0
      %1838 = vmatprep.subr.mxu0 0.0
      %1839 = vmatpush1.msra.mxu0 0.0
      %1840 = vmatprep.subr.mxu0 0.0
      %1841 = vmatpush1.msra.mxu0 0.0
      %1842 = vmatprep.subr.mxu0 0.0
      %1843 = vmatpush1.msra.mxu0 0.0
      %1844 = vmatprep.subr.mxu0 0.0
      %1845 = vmatpush1.msra.mxu0 0.0
      %v1846 = vand.u32 %v1571, 4294901760
      %v1847 = vsub.f32 %v1571, %v1846
      %1848 = vmatprep.subr.mxu0 %v1847
      %v1849 = vand.u32 %v1570, 4294901760
      %v1850 = vsub.f32 %v1570, %v1849
      %1851 = vmatpush1.msra.mxu0 %v1850
      %v1852 = vand.u32 %v1569, 4294901760
      %v1853 = vsub.f32 %v1569, %v1852
      %1854 = vmatprep.subr.mxu0 %v1853
      %v1855 = vand.u32 %v1568, 4294901760
      %v1856 = vsub.f32 %v1568, %v1855
      %1857 = vmatpush1.msra.mxu0 %v1856
      %v1858 = vand.u32 %v1567, 4294901760
      %v1859 = vsub.f32 %v1567, %v1858
      %1860 = vmatprep.subr.mxu0 %v1859
      %v1861 = vand.u32 %v1566, 4294901760
      %v1862 = vsub.f32 %v1566, %v1861
      %1863 = vmatpush1.msra.mxu0 %v1862
      %v1864 = vand.u32 %v1565, 4294901760
      %v1865 = vsub.f32 %v1565, %v1864
      %1866 = vmatprep.subr.mxu0 %v1865
      %v1867 = vand.u32 %v1564, 4294901760
      %v1868 = vsub.f32 %v1564, %v1867
      %1869 = vmatpush1.msra.mxu0 %v1868
      %1870 = vmatprep.subr.mxu0 0.0
      %1871 = vmatpush2.msra.mxu0 0.0
      %1872 = vmatprep.subr.mxu0 0.0
      %1873 = vmatpush2.msra.mxu0 0.0
      %1874 = vmatprep.subr.mxu0 0.0
      %1875 = vmatpush2.msra.mxu0 0.0
      %1876 = vmatprep.subr.mxu0 0.0
      %1877 = vmatpush2.msra.mxu0 0.0
      %1878 = vmatprep.subr.mxu0 0.0
      %1879 = vmatpush2.msra.mxu0 0.0
      %1880 = vmatprep.subr.mxu0 0.0
      %1881 = vmatpush2.msra.mxu0 0.0
      %1882 = vmatprep.subr.mxu0 0.0
      %1883 = vmatpush2.msra.mxu0 0.0
      %1884 = vmatprep.subr.mxu0 0.0
      %1885 = vmatpush2.msra.mxu0 0.0
      %1886 = vmatprep.subr.mxu0 0.0
      %1887 = vmatpush2.msra.mxu0 0.0
      %1888 = vmatprep.subr.mxu0 0.0
      %1889 = vmatpush2.msra.mxu0 0.0
      %1890 = vmatprep.subr.mxu0 0.0
      %1891 = vmatpush2.msra.mxu0 0.0
      %1892 = vmatprep.subr.mxu0 0.0
      %1893 = vmatpush2.msra.mxu0 0.0
      %1894 = vmatprep.subr.mxu0 0.0
      %1895 = vmatpush2.msra.mxu0 0.0
      %1896 = vmatprep.subr.mxu0 0.0
      %1897 = vmatpush2.msra.mxu0 0.0
      %1898 = vmatprep.subr.mxu0 0.0
      %1899 = vmatpush2.msra.mxu0 0.0
      %1900 = vmatprep.subr.mxu0 0.0
      %1901 = vmatpush2.msra.mxu0 0.0
      %1902 = vmatprep.mubr.f32.mxu0 0.0
      %v1903 = vand.u32 %v846, 4294901760
      %v1904 = vsub.f32 %v846, %v1903
      %1905 = vmatmul.mubr.f32.gmra.mxu0 %v1904
      %v1906 = vpop.f32.mrf.mxu0
      %v1907 = vadd.f32 %v1797, %v1906
      %v1908 = vpop.f32.mrf.mxu0
      %v1909 = vadd.f32 %v1799, %v1908
      %1910 = vmatprep.mubr.f32.mxu0 0.0
      %v1911 = vand.u32 %v848, 4294901760
      %v1912 = vsub.f32 %v848, %v1911
      %1913 = vmatmul.mubr.f32.gmra.mxu0 %v1912
      %v1914 = vpop.f32.mrf.mxu0
      %v1915 = vadd.f32 %v1804, %v1914
      %v1916 = vpop.f32.mrf.mxu0
      %v1917 = vadd.f32 %v1806, %v1916
      %1918 = vmatprep.mubr.f32.mxu0 0.0
      %v1919 = vand.u32 %v850, 4294901760
      %v1920 = vsub.f32 %v850, %v1919
      %1921 = vmatmul.mubr.f32.gmra.mxu0 %v1920
      %v1922 = vpop.f32.mrf.mxu0
      %v1923 = vadd.f32 %v1811, %v1922
      %v1924 = vpop.f32.mrf.mxu0
      %v1925 = vadd.f32 %v1813, %v1924
      %1926 = vmatprep.mubr.f32.mxu0 0.0
      %v1927 = vand.u32 %v852, 4294901760
      %v1928 = vsub.f32 %v852, %v1927
      %1929 = vmatmul.mubr.f32.gmra.mxu0 %v1928
      %v1930 = vpop.f32.mrf.mxu0
      %v1931 = vadd.f32 %v1818, %v1930
      %v1932 = vpop.f32.mrf.mxu0
      %v1933 = vadd.f32 %v1820, %v1932
      %1934 = vdwg.mxu0
      %1935 = vmatprep.subr.mxu0 0.0
      %1936 = vmatpush1.msra.mxu0 0.0
      %1937 = vmatprep.subr.mxu0 0.0
      %1938 = vmatpush1.msra.mxu0 0.0
      %1939 = vmatprep.subr.mxu0 0.0
      %1940 = vmatpush1.msra.mxu0 0.0
      %1941 = vmatprep.subr.mxu0 0.0
      %1942 = vmatpush1.msra.mxu0 0.0
      %1943 = vmatprep.subr.mxu0 0.0
      %1944 = vmatpush1.msra.mxu0 0.0
      %1945 = vmatprep.subr.mxu0 0.0
      %1946 = vmatpush1.msra.mxu0 0.0
      %1947 = vmatprep.subr.mxu0 0.0
      %1948 = vmatpush1.msra.mxu0 0.0
      %1949 = vmatprep.subr.mxu0 0.0
      %1950 = vmatpush1.msra.mxu0 0.0
      %1951 = vmatprep.subr.mxu0 0.0
      %1952 = vmatpush1.msra.mxu0 0.0
      %1953 = vmatprep.subr.mxu0 0.0
      %1954 = vmatpush1.msra.mxu0 0.0
      %1955 = vmatprep.subr.mxu0 0.0
      %1956 = vmatpush1.msra.mxu0 0.0
      %1957 = vmatprep.subr.mxu0 0.0
      %1958 = vmatpush1.msra.mxu0 0.0
      %v1959 = vand.u32 %v1571, 4294901760
      %1960 = vmatprep.subr.mxu0 %v1959
      %v1961 = vand.u32 %v1570, 4294901760
      %1962 = vmatpush1.msra.mxu0 %v1961
      %v1963 = vand.u32 %v1569, 4294901760
      %1964 = vmatprep.subr.mxu0 %v1963
      %v1965 = vand.u32 %v1568, 4294901760
      %1966 = vmatpush1.msra.mxu0 %v1965
      %v1967 = vand.u32 %v1567, 4294901760
      %1968 = vmatprep.subr.mxu0 %v1967
      %v1969 = vand.u32 %v1566, 4294901760
      %1970 = vmatpush1.msra.mxu0 %v1969
      %v1971 = vand.u32 %v1565, 4294901760
      %1972 = vmatprep.subr.mxu0 %v1971
      %v1973 = vand.u32 %v1564, 4294901760
      %1974 = vmatpush1.msra.mxu0 %v1973
      %1975 = vmatprep.subr.mxu0 0.0
      %1976 = vmatpush2.msra.mxu0 0.0
      %1977 = vmatprep.subr.mxu0 0.0
      %1978 = vmatpush2.msra.mxu0 0.0
      %1979 = vmatprep.subr.mxu0 0.0
      %1980 = vmatpush2.msra.mxu0 0.0
      %1981 = vmatprep.subr.mxu0 0.0
      %1982 = vmatpush2.msra.mxu0 0.0
      %1983 = vmatprep.subr.mxu0 0.0
      %1984 = vmatpush2.msra.mxu0 0.0
      %1985 = vmatprep.subr.mxu0 0.0
      %1986 = vmatpush2.msra.mxu0 0.0
      %1987 = vmatprep.subr.mxu0 0.0
      %1988 = vmatpush2.msra.mxu0 0.0
      %1989 = vmatprep.subr.mxu0 0.0
      %1990 = vmatpush2.msra.mxu0 0.0
      %1991 = vmatprep.subr.mxu0 0.0
      %1992 = vmatpush2.msra.mxu0 0.0
      %1993 = vmatprep.subr.mxu0 0.0
      %1994 = vmatpush2.msra.mxu0 0.0
      %1995 = vmatprep.subr.mxu0 0.0
      %1996 = vmatpush2.msra.mxu0 0.0
      %1997 = vmatprep.subr.mxu0 0.0
      %1998 = vmatpush2.msra.mxu0 0.0
      %1999 = vmatprep.subr.mxu0 0.0
      %2000 = vmatpush2.msra.mxu0 0.0
      %2001 = vmatprep.subr.mxu0 0.0
      %2002 = vmatpush2.msra.mxu0 0.0
      %2003 = vmatprep.subr.mxu0 0.0
      %2004 = vmatpush2.msra.mxu0 0.0
      %2005 = vmatprep.subr.mxu0 0.0
      %2006 = vmatpush2.msra.mxu0 0.0
      %2007 = vmatprep.mubr.f32.mxu0 0.0
      %v2008 = vand.u32 %v846, 4294901760
      %v2009 = vsub.f32 %v846, %v2008
      %v2010 = vand.u32 %v2009, 4294901760
      %2011 = vmatmul.mubr.f32.gmra.mxu0 %v2010
      %v2012 = vpop.f32.mrf.mxu0
      %v2013 = vadd.f32 %v1907, %v2012
      %v2014 = vpop.f32.mrf.mxu0
      %v2015 = vadd.f32 %v1909, %v2014
      %2016 = vmatprep.mubr.f32.mxu0 0.0
      %v2017 = vand.u32 %v848, 4294901760
      %v2018 = vsub.f32 %v848, %v2017
      %v2019 = vand.u32 %v2018, 4294901760
      %2020 = vmatmul.mubr.f32.gmra.mxu0 %v2019
      %v2021 = vpop.f32.mrf.mxu0
      %v2022 = vadd.f32 %v1915, %v2021
      %v2023 = vpop.f32.mrf.mxu0
      %v2024 = vadd.f32 %v1917, %v2023
      %2025 = vmatprep.mubr.f32.mxu0 0.0
      %v2026 = vand.u32 %v850, 4294901760
      %v2027 = vsub.f32 %v850, %v2026
      %v2028 = vand.u32 %v2027, 4294901760
      %2029 = vmatmul.mubr.f32.gmra.mxu0 %v2028
      %v2030 = vpop.f32.mrf.mxu0
      %v2031 = vadd.f32 %v1923, %v2030
      %v2032 = vpop.f32.mrf.mxu0
      %v2033 = vadd.f32 %v1925, %v2032
      %2034 = vmatprep.mubr.f32.mxu0 0.0
      %v2035 = vand.u32 %v852, 4294901760
      %v2036 = vsub.f32 %v852, %v2035
      %v2037 = vand.u32 %v2036, 4294901760
      %2038 = vmatmul.mubr.f32.gmra.mxu0 %v2037
      %v2039 = vpop.f32.mrf.mxu0
      %v2040 = vadd.f32 %v1931, %v2039
      %v2041 = vpop.f32.mrf.mxu0
      %v2042 = vadd.f32 %v1933, %v2041
      %2043 = vdwg.mxu0
      %2044 = vmatprep.subr.mxu0 0.0
      %2045 = vmatpush1.msra.mxu0 0.0
      %2046 = vmatprep.subr.mxu0 0.0
      %2047 = vmatpush1.msra.mxu0 0.0
      %2048 = vmatprep.subr.mxu0 0.0
      %2049 = vmatpush1.msra.mxu0 0.0
      %2050 = vmatprep.subr.mxu0 0.0
      %2051 = vmatpush1.msra.mxu0 0.0
      %2052 = vmatprep.subr.mxu0 0.0
      %2053 = vmatpush1.msra.mxu0 0.0
      %2054 = vmatprep.subr.mxu0 0.0
      %2055 = vmatpush1.msra.mxu0 0.0
      %2056 = vmatprep.subr.mxu0 0.0
      %2057 = vmatpush1.msra.mxu0 0.0
      %2058 = vmatprep.subr.mxu0 0.0
      %2059 = vmatpush1.msra.mxu0 0.0
      %2060 = vmatprep.subr.mxu0 0.0
      %2061 = vmatpush1.msra.mxu0 0.0
      %2062 = vmatprep.subr.mxu0 0.0
      %2063 = vmatpush1.msra.mxu0 0.0
      %2064 = vmatprep.subr.mxu0 0.0
      %2065 = vmatpush1.msra.mxu0 0.0
      %2066 = vmatprep.subr.mxu0 0.0
      %2067 = vmatpush1.msra.mxu0 0.0
      %v2068 = vand.u32 %v1571, 4294901760
      %v2069 = vsub.f32 %v1571, %v2068
      %v2070 = vand.u32 %v2069, 4294901760
      %2071 = vmatprep.subr.mxu0 %v2070
      %v2072 = vand.u32 %v1570, 4294901760
      %v2073 = vsub.f32 %v1570, %v2072
      %v2074 = vand.u32 %v2073, 4294901760
      %2075 = vmatpush1.msra.mxu0 %v2074
      %v2076 = vand.u32 %v1569, 4294901760
      %v2077 = vsub.f32 %v1569, %v2076
      %v2078 = vand.u32 %v2077, 4294901760
      %2079 = vmatprep.subr.mxu0 %v2078
      %v2080 = vand.u32 %v1568, 4294901760
      %v2081 = vsub.f32 %v1568, %v2080
      %v2082 = vand.u32 %v2081, 4294901760
      %2083 = vmatpush1.msra.mxu0 %v2082
      %v2084 = vand.u32 %v1567, 4294901760
      %v2085 = vsub.f32 %v1567, %v2084
      %v2086 = vand.u32 %v2085, 4294901760
      %2087 = vmatprep.subr.mxu0 %v2086
      %v2088 = vand.u32 %v1566, 4294901760
      %v2089 = vsub.f32 %v1566, %v2088
      %v2090 = vand.u32 %v2089, 4294901760
      %2091 = vmatpush1.msra.mxu0 %v2090
      %v2092 = vand.u32 %v1565, 4294901760
      %v2093 = vsub.f32 %v1565, %v2092
      %v2094 = vand.u32 %v2093, 4294901760
      %2095 = vmatprep.subr.mxu0 %v2094
      %v2096 = vand.u32 %v1564, 4294901760
      %v2097 = vsub.f32 %v1564, %v2096
      %v2098 = vand.u32 %v2097, 4294901760
      %2099 = vmatpush1.msra.mxu0 %v2098
      %2100 = vmatprep.subr.mxu0 0.0
      %2101 = vmatpush2.msra.mxu0 0.0
      %2102 = vmatprep.subr.mxu0 0.0
      %2103 = vmatpush2.msra.mxu0 0.0
      %2104 = vmatprep.subr.mxu0 0.0
      %2105 = vmatpush2.msra.mxu0 0.0
      %2106 = vmatprep.subr.mxu0 0.0
      %2107 = vmatpush2.msra.mxu0 0.0
      %2108 = vmatprep.subr.mxu0 0.0
      %2109 = vmatpush2.msra.mxu0 0.0
      %2110 = vmatprep.subr.mxu0 0.0
      %2111 = vmatpush2.msra.mxu0 0.0
      %2112 = vmatprep.subr.mxu0 0.0
      %2113 = vmatpush2.msra.mxu0 0.0
      %2114 = vmatprep.subr.mxu0 0.0
      %2115 = vmatpush2.msra.mxu0 0.0
      %2116 = vmatprep.subr.mxu0 0.0
      %2117 = vmatpush2.msra.mxu0 0.0
      %2118 = vmatprep.subr.mxu0 0.0
      %2119 = vmatpush2.msra.mxu0 0.0
      %2120 = vmatprep.subr.mxu0 0.0
      %2121 = vmatpush2.msra.mxu0 0.0
      %2122 = vmatprep.subr.mxu0 0.0
      %2123 = vmatpush2.msra.mxu0 0.0
      %2124 = vmatprep.subr.mxu0 0.0
      %2125 = vmatpush2.msra.mxu0 0.0
      %2126 = vmatprep.subr.mxu0 0.0
      %2127 = vmatpush2.msra.mxu0 0.0
      %2128 = vmatprep.subr.mxu0 0.0
      %2129 = vmatpush2.msra.mxu0 0.0
      %2130 = vmatprep.subr.mxu0 0.0
      %2131 = vmatpush2.msra.mxu0 0.0
      %2132 = vmatprep.mubr.f32.mxu0 0.0
      %v2133 = vand.u32 %v846, 4294901760
      %2134 = vmatmul.mubr.f32.gmra.mxu0 %v2133
      %v2135 = vpop.f32.mrf.mxu0
      %v2136 = vadd.f32 %v2013, %v2135
      %v2137 = vpop.f32.mrf.mxu0
      %v2138 = vadd.f32 %v2015, %v2137
      %2139 = vmatprep.mubr.f32.mxu0 0.0
      %v2140 = vand.u32 %v848, 4294901760
      %2141 = vmatmul.mubr.f32.gmra.mxu0 %v2140
      %v2142 = vpop.f32.mrf.mxu0
      %v2143 = vadd.f32 %v2022, %v2142
      %v2144 = vpop.f32.mrf.mxu0
      %v2145 = vadd.f32 %v2024, %v2144
      %2146 = vmatprep.mubr.f32.mxu0 0.0
      %v2147 = vand.u32 %v850, 4294901760
      %2148 = vmatmul.mubr.f32.gmra.mxu0 %v2147
      %v2149 = vpop.f32.mrf.mxu0
      %v2150 = vadd.f32 %v2031, %v2149
      %v2151 = vpop.f32.mrf.mxu0
      %v2152 = vadd.f32 %v2033, %v2151
      %2153 = vmatprep.mubr.f32.mxu0 0.0
      %v2154 = vand.u32 %v852, 4294901760
      %2155 = vmatmul.mubr.f32.gmra.mxu0 %v2154
      %v2156 = vpop.f32.mrf.mxu0
      %v2157 = vadd.f32 %v2040, %v2156
      %v2158 = vpop.f32.mrf.mxu0
      %v2159 = vadd.f32 %v2042, %v2158
      %2160 = vdwg.mxu0
      %2161 = vmatprep.subr.mxu0 0.0
      %2162 = vmatpush1.msra.mxu0 0.0
      %2163 = vmatprep.subr.mxu0 0.0
      %2164 = vmatpush1.msra.mxu0 0.0
      %2165 = vmatprep.subr.mxu0 0.0
      %2166 = vmatpush1.msra.mxu0 0.0
      %2167 = vmatprep.subr.mxu0 0.0
      %2168 = vmatpush1.msra.mxu0 0.0
      %2169 = vmatprep.subr.mxu0 0.0
      %2170 = vmatpush1.msra.mxu0 0.0
      %2171 = vmatprep.subr.mxu0 0.0
      %2172 = vmatpush1.msra.mxu0 0.0
      %2173 = vmatprep.subr.mxu0 0.0
      %2174 = vmatpush1.msra.mxu0 0.0
      %2175 = vmatprep.subr.mxu0 0.0
      %2176 = vmatpush1.msra.mxu0 0.0
      %2177 = vmatprep.subr.mxu0 0.0
      %2178 = vmatpush1.msra.mxu0 0.0
      %2179 = vmatprep.subr.mxu0 0.0
      %2180 = vmatpush1.msra.mxu0 0.0
      %2181 = vmatprep.subr.mxu0 0.0
      %2182 = vmatpush1.msra.mxu0 0.0
      %2183 = vmatprep.subr.mxu0 0.0
      %2184 = vmatpush1.msra.mxu0 0.0
      %v2185 = vand.u32 %v1571, 4294901760
      %2186 = vmatprep.subr.mxu0 %v2185
      %v2187 = vand.u32 %v1570, 4294901760
      %2188 = vmatpush1.msra.mxu0 %v2187
      %v2189 = vand.u32 %v1569, 4294901760
      %2190 = vmatprep.subr.mxu0 %v2189
      %v2191 = vand.u32 %v1568, 4294901760
      %2192 = vmatpush1.msra.mxu0 %v2191
      %v2193 = vand.u32 %v1567, 4294901760
      %2194 = vmatprep.subr.mxu0 %v2193
      %v2195 = vand.u32 %v1566, 4294901760
      %2196 = vmatpush1.msra.mxu0 %v2195
      %v2197 = vand.u32 %v1565, 4294901760
      %2198 = vmatprep.subr.mxu0 %v2197
      %v2199 = vand.u32 %v1564, 4294901760
      %2200 = vmatpush1.msra.mxu0 %v2199
      %2201 = vmatprep.subr.mxu0 0.0
      %2202 = vmatpush2.msra.mxu0 0.0
      %2203 = vmatprep.subr.mxu0 0.0
      %2204 = vmatpush2.msra.mxu0 0.0
      %2205 = vmatprep.subr.mxu0 0.0
      %2206 = vmatpush2.msra.mxu0 0.0
      %2207 = vmatprep.subr.mxu0 0.0
      %2208 = vmatpush2.msra.mxu0 0.0
      %2209 = vmatprep.subr.mxu0 0.0
      %2210 = vmatpush2.msra.mxu0 0.0
      %2211 = vmatprep.subr.mxu0 0.0
      %2212 = vmatpush2.msra.mxu0 0.0
      %2213 = vmatprep.subr.mxu0 0.0
      %2214 = vmatpush2.msra.mxu0 0.0
      %2215 = vmatprep.subr.mxu0 0.0
      %2216 = vmatpush2.msra.mxu0 0.0
      %2217 = vmatprep.subr.mxu0 0.0
      %2218 = vmatpush2.msra.mxu0 0.0
      %2219 = vmatprep.subr.mxu0 0.0
      %2220 = vmatpush2.msra.mxu0 0.0
      %2221 = vmatprep.subr.mxu0 0.0
      %2222 = vmatpush2.msra.mxu0 0.0
      %2223 = vmatprep.subr.mxu0 0.0
      %2224 = vmatpush2.msra.mxu0 0.0
      %2225 = vmatprep.subr.mxu0 0.0
      %2226 = vmatpush2.msra.mxu0 0.0
      %2227 = vmatprep.subr.mxu0 0.0
      %2228 = vmatpush2.msra.mxu0 0.0
      %2229 = vmatprep.subr.mxu0 0.0
      %2230 = vmatpush2.msra.mxu0 0.0
      %2231 = vmatprep.subr.mxu0 0.0
      %2232 = vmatpush2.msra.mxu0 0.0
      %2233 = vmatprep.mubr.f32.mxu0 0.0
      %v2234 = vand.u32 %v846, 4294901760
      %2235 = vmatmul.mubr.f32.gmra.mxu0 %v2234
      %v2236 = vpop.f32.mrf.mxu0
      %v2237 = vadd.f32 %v2136, %v2236
      %v2238 = vpop.f32.mrf.mxu0
      %v2239 = vadd.f32 %v2138, %v2238
      %2240 = vmatprep.mubr.f32.mxu0 0.0
      %v2241 = vand.u32 %v848, 4294901760
      %2242 = vmatmul.mubr.f32.gmra.mxu0 %v2241
      %v2243 = vpop.f32.mrf.mxu0
      %v2244 = vadd.f32 %v2143, %v2243
      %v2245 = vpop.f32.mrf.mxu0
      %v2246 = vadd.f32 %v2145, %v2245
      %2247 = vmatprep.mubr.f32.mxu0 0.0
      %v2248 = vand.u32 %v850, 4294901760
      %2249 = vmatmul.mubr.f32.gmra.mxu0 %v2248
      %v2250 = vpop.f32.mrf.mxu0
      %v2251 = vadd.f32 %v2150, %v2250
      %v2252 = vpop.f32.mrf.mxu0
      %v2253 = vadd.f32 %v2152, %v2252
      %2254 = vmatprep.mubr.f32.mxu0 0.0
      %v2255 = vand.u32 %v852, 4294901760
      %2256 = vmatmul.mubr.f32.gmra.mxu0 %v2255
      %v2257 = vpop.f32.mrf.mxu0
      %v2258 = vadd.f32 %v2157, %v2257
      %v2259 = vpop.f32.mrf.mxu0
      %v2260 = vadd.f32 %v2159, %v2259
      %2261 = vdwg.mxu0
      %v2262 = vadd.f32 %v2237, %v2239
      %2263 = vadd.xlane.f32.xlu0 %v2262
      %v2264 = vpop.xlane.xlu0 %2263
      %v2265 = vadd.f32 %v2244, %v2246
      %2266 = vadd.xlane.f32.xlu0 %v2265
      %v2267 = vpop.xlane.xlu0 %2266
      %v2268 = vadd.f32 %v2251, %v2253
      %2269 = vadd.xlane.f32.xlu0 %v2268
      %v2270 = vpop.xlane.xlu0 %2269
      %v2271 = vadd.f32 %v2258, %v2260
      %2272 = vadd.xlane.f32.xlu0 %v2271
      %v2273 = vpop.xlane.xlu0 %2272
      %v2274 = vadd.f32 %v2264, 1e-05
      %v2275 = vadd.f32 %v2267, 1e-05
      %v2276 = vadd.f32 %v2270, 1e-05
      %v2277 = vadd.f32 %v2273, 1e-05
      %v2278 = vrsqrt.pop %v2274
      %v2279 = vrsqrt.pop %v2275
      %v2280 = vrsqrt.pop %v2276
      %v2281 = vrsqrt.pop %v2277
      %v2282 = vmul.f32 %v1556, %v2278
      %v2283 = vmul.f32 %v1557, %v2278
      %v2284 = vmul.f32 %v1558, %v2279
      %v2285 = vmul.f32 %v1559, %v2279
      %v2286 = vmul.f32 %v1560, %v2280
      %v2287 = vmul.f32 %v1561, %v2280
      %v2288 = vmul.f32 %v1562, %v2281
      %v2289 = vmul.f32 %v1563, %v2281
      %2290 = vset.pattern.permute.xlu0 4
      %2291 = vperm.xlu0 %2290, %v246
      %v2292 = vpop.permute.xlu0 %2291
      %2294 = vset.pattern.permute.xlu0 4
      %2295 = vperm.xlu0 %2294, %v247
      %v2296 = vpop.permute.xlu0 %2295
      %2298 = vset.pattern.permute.xlu0 4
      %2299 = vperm.xlu0 %2298, %v248
      %v2300 = vpop.permute.xlu0 %2299
      %2302 = vset.pattern.permute.xlu0 4
      %2303 = vperm.xlu0 %2302, %v249
      %v2304 = vpop.permute.xlu0 %2303
      %v2306 = vmul.f32 %v2282, %v2292
      %v2307 = vmul.f32 %v2283, %v2292
      %v2308 = vmul.f32 %v2284, %v2296
      %v2309 = vmul.f32 %v2285, %v2296
      %v2310 = vmul.f32 %v2286, %v2300
      %v2311 = vmul.f32 %v2287, %v2300
      %v2312 = vmul.f32 %v2288, %v2304
      %v2313 = vmul.f32 %v2289, %v2304
      %2314 = vset.pattern.permute.xlu0 5
      %2315 = vperm.xlu0 %2314, %v246
      %v2316 = vpop.permute.xlu0 %2315
      %2318 = vset.pattern.permute.xlu0 5
      %2319 = vperm.xlu0 %2318, %v247
      %v2320 = vpop.permute.xlu0 %2319
      %2322 = vset.pattern.permute.xlu0 5
      %2323 = vperm.xlu0 %2322, %v248
      %v2324 = vpop.permute.xlu0 %2323
      %2326 = vset.pattern.permute.xlu0 5
      %2327 = vperm.xlu0 %2326, %v249
      %v2328 = vpop.permute.xlu0 %2327
      %v2330 = vadd.f32 %v2306, %v2316
      %v2331 = vadd.f32 %v2307, %v2316
      %v2332 = vadd.f32 %v2308, %v2320
      %v2333 = vadd.f32 %v2309, %v2320
      %v2334 = vadd.f32 %v2310, %v2324
      %v2335 = vadd.f32 %v2311, %v2324
      %v2336 = vadd.f32 %v2312, %v2328
      %v2337 = vadd.f32 %v2313, %v2328
      %v2338 = vxor.u32 %v2330, 2147483648
      %v2339 = vxor.u32 %v2331, 2147483648
      %v2340 = vxor.u32 %v2332, 2147483648
      %v2341 = vxor.u32 %v2333, 2147483648
      %v2342 = vxor.u32 %v2334, 2147483648
      %v2343 = vxor.u32 %v2335, 2147483648
      %v2344 = vxor.u32 %v2336, 2147483648
      %v2345 = vxor.u32 %v2337, 2147483648
      %v2346 = vmul.f32 %v2338, 1.442695
      %v2347 = vpow.pop %v2346
      %v2348 = vmul.f32 %v2339, 1.442695
      %v2349 = vpow.pop %v2348
      %v2350 = vmul.f32 %v2340, 1.442695
      %v2351 = vpow.pop %v2350
      %v2352 = vmul.f32 %v2341, 1.442695
      %v2353 = vpow.pop %v2352
      %v2354 = vmul.f32 %v2342, 1.442695
      %v2355 = vpow.pop %v2354
      %v2356 = vmul.f32 %v2343, 1.442695
      %v2357 = vpow.pop %v2356
      %v2358 = vmul.f32 %v2344, 1.442695
      %v2359 = vpow.pop %v2358
      %v2360 = vmul.f32 %v2345, 1.442695
      %v2361 = vpow.pop %v2360
      %v2362 = vadd.f32 %v2347, 1.0
      %v2363 = vadd.f32 %v2349, 1.0
      %v2364 = vadd.f32 %v2351, 1.0
      %v2365 = vadd.f32 %v2353, 1.0
      %v2366 = vadd.f32 %v2355, 1.0
      %v2367 = vadd.f32 %v2357, 1.0
      %v2368 = vadd.f32 %v2359, 1.0
      %v2369 = vadd.f32 %v2361, 1.0
      %v2370 = vrcp.pop %v2362
      %v2371 = vmul.f32 1.0, %v2370
      %v2372 = vrcp.pop %v2363
      %v2373 = vmul.f32 1.0, %v2372
      %v2374 = vrcp.pop %v2364
      %v2375 = vmul.f32 1.0, %v2374
      %v2376 = vrcp.pop %v2365
      %v2377 = vmul.f32 1.0, %v2376
      %v2378 = vrcp.pop %v2366
      %v2379 = vmul.f32 1.0, %v2378
      %v2380 = vrcp.pop %v2367
      %v2381 = vmul.f32 1.0, %v2380
      %v2382 = vrcp.pop %v2368
      %v2383 = vmul.f32 1.0, %v2382
      %v2384 = vrcp.pop %v2369
      %v2385 = vmul.f32 1.0, %v2384
      %v2386 = vmul.f32 %v2330, %v2371
      %v2387 = vmul.f32 %v2331, %v2373
      %v2388 = vmul.f32 %v2332, %v2375
      %v2389 = vmul.f32 %v2333, %v2377
      %v2390 = vmul.f32 %v2334, %v2379
      %v2391 = vmul.f32 %v2335, %v2381
      %v2392 = vmul.f32 %v2336, %v2383
      %v2393 = vmul.f32 %v2337, %v2385
      %2394 = vrot.lane.b32.xlu0 %v2386, 17
      %v2395 = vpop.permute.xlu0 %2394
      %2396 = vrot.lane.b32.xlu0 %v2388, 17
      %v2397 = vpop.permute.xlu0 %2396
      %2398 = vrot.lane.b32.xlu0 %v2390, 17
      %v2399 = vpop.permute.xlu0 %2398
      %2400 = vrot.lane.b32.xlu0 %v2392, 17
      %v2401 = vpop.permute.xlu0 %2400
      %2402 = vrot.lane.b32.xlu0 %v2387, 17
      %v2403 = vpop.permute.xlu0 %2402
      %2404 = vrot.lane.b32.xlu0 %v2389, 17
      %v2405 = vpop.permute.xlu0 %2404
      %2406 = vrot.lane.b32.xlu0 %v2391, 17
      %v2407 = vpop.permute.xlu0 %2406
      %2408 = vrot.lane.b32.xlu0 %v2393, 17
      %v2409 = vpop.permute.xlu0 %2408
      %v2410 = vsel %vm280, %v2395, %v2403
      %v2411 = vsel %vm280, %v2397, %v2405
      %v2412 = vsel %vm280, %v2399, %v2407
      %v2413 = vsel %vm280, %v2401, %v2409
      %v2414 = vsel %vm280, %v2403, %v2395
      %v2415 = vsel %vm280, %v2405, %v2397
      %v2416 = vsel %vm280, %v2407, %v2399
      %v2417 = vsel %vm280, %v2409, %v2401
      %v2418 = vmul.f32 %v2414, %v294
      %v2419 = vmul.f32 %v2410, %v298
      %v2420 = vmul.f32 %v2415, %v294
      %v2421 = vmul.f32 %v2411, %v298
      %v2422 = vmul.f32 %v2416, %v294
      %v2423 = vmul.f32 %v2412, %v298
      %v2424 = vmul.f32 %v2417, %v294
      %v2425 = vmul.f32 %v2413, %v298
      %2426 = vrot.lane.b32.xlu0 %v2386, 16
      %v2427 = vpop.permute.xlu0 %2426
      %2428 = vrot.lane.b32.xlu0 %v2388, 16
      %v2429 = vpop.permute.xlu0 %2428
      %2430 = vrot.lane.b32.xlu0 %v2390, 16
      %v2431 = vpop.permute.xlu0 %2430
      %2432 = vrot.lane.b32.xlu0 %v2392, 16
      %v2433 = vpop.permute.xlu0 %2432
      %2434 = vrot.lane.b32.xlu0 %v2387, 16
      %v2435 = vpop.permute.xlu0 %2434
      %2436 = vrot.lane.b32.xlu0 %v2389, 16
      %v2437 = vpop.permute.xlu0 %2436
      %2438 = vrot.lane.b32.xlu0 %v2391, 16
      %v2439 = vpop.permute.xlu0 %2438
      %2440 = vrot.lane.b32.xlu0 %v2393, 16
      %v2441 = vpop.permute.xlu0 %2440
      %v2442 = vsel %vm325, %v2427, %v2435
      %v2443 = vsel %vm325, %v2429, %v2437
      %v2444 = vsel %vm325, %v2431, %v2439
      %v2445 = vsel %vm325, %v2433, %v2441
      %v2446 = vsel %vm325, %v2435, %v2427
      %v2447 = vsel %vm325, %v2437, %v2429
      %v2448 = vsel %vm325, %v2439, %v2431
      %v2449 = vsel %vm325, %v2441, %v2433
      %v2450 = vmul.f32 %v2446, %v340
      %v2451 = vmul.f32 %v2442, %v344
      %v2452 = vmul.f32 %v2447, %v340
      %v2453 = vmul.f32 %v2443, %v344
      %v2454 = vmul.f32 %v2448, %v340
      %v2455 = vmul.f32 %v2444, %v344
      %v2456 = vmul.f32 %v2449, %v340
      %v2457 = vmul.f32 %v2445, %v344
      %2458 = vrot.lane.b32.xlu0 %v2386, 15
      %v2459 = vpop.permute.xlu0 %2458
      %2460 = vrot.lane.b32.xlu0 %v2388, 15
      %v2461 = vpop.permute.xlu0 %2460
      %2462 = vrot.lane.b32.xlu0 %v2390, 15
      %v2463 = vpop.permute.xlu0 %2462
      %2464 = vrot.lane.b32.xlu0 %v2392, 15
      %v2465 = vpop.permute.xlu0 %2464
      %2466 = vrot.lane.b32.xlu0 %v2387, 15
      %v2467 = vpop.permute.xlu0 %2466
      %2468 = vrot.lane.b32.xlu0 %v2389, 15
      %v2469 = vpop.permute.xlu0 %2468
      %2470 = vrot.lane.b32.xlu0 %v2391, 15
      %v2471 = vpop.permute.xlu0 %2470
      %2472 = vrot.lane.b32.xlu0 %v2393, 15
      %v2473 = vpop.permute.xlu0 %2472
      %v2474 = vsel %vm371, %v2459, %v2467
      %v2475 = vsel %vm371, %v2461, %v2469
      %v2476 = vsel %vm371, %v2463, %v2471
      %v2477 = vsel %vm371, %v2465, %v2473
      %v2478 = vsel %vm371, %v2467, %v2459
      %v2479 = vsel %vm371, %v2469, %v2461
      %v2480 = vsel %vm371, %v2471, %v2463
      %v2481 = vsel %vm371, %v2473, %v2465
      %v2482 = vmul.f32 %v2478, %v386
      %v2483 = vmul.f32 %v2474, %v390
      %v2484 = vmul.f32 %v2479, %v386
      %v2485 = vmul.f32 %v2475, %v390
      %v2486 = vmul.f32 %v2480, %v386
      %v2487 = vmul.f32 %v2476, %v390
      %v2488 = vmul.f32 %v2481, %v386
      %v2489 = vmul.f32 %v2477, %v390
      %2490 = vrot.lane.b32.xlu0 %v2386, 1
      %v2491 = vpop.permute.xlu0 %2490
      %2492 = vrot.lane.b32.xlu0 %v2388, 1
      %v2493 = vpop.permute.xlu0 %2492
      %2494 = vrot.lane.b32.xlu0 %v2390, 1
      %v2495 = vpop.permute.xlu0 %2494
      %2496 = vrot.lane.b32.xlu0 %v2392, 1
      %v2497 = vpop.permute.xlu0 %2496
      %2498 = vrot.lane.b32.xlu0 %v2387, 1
      %v2499 = vpop.permute.xlu0 %2498
      %2500 = vrot.lane.b32.xlu0 %v2389, 1
      %v2501 = vpop.permute.xlu0 %2500
      %2502 = vrot.lane.b32.xlu0 %v2391, 1
      %v2503 = vpop.permute.xlu0 %2502
      %2504 = vrot.lane.b32.xlu0 %v2393, 1
      %v2505 = vpop.permute.xlu0 %2504
      %v2506 = vsel %vm417, %v2491, %v2499
      %v2507 = vsel %vm417, %v2493, %v2501
      %v2508 = vsel %vm417, %v2495, %v2503
      %v2509 = vsel %vm417, %v2497, %v2505
      %v2510 = vsel %vm417, %v2499, %v2491
      %v2511 = vsel %vm417, %v2501, %v2493
      %v2512 = vsel %vm417, %v2503, %v2495
      %v2513 = vsel %vm417, %v2505, %v2497
      %v2514 = vmul.f32 %v2510, %v432
      %v2515 = vmul.f32 %v2506, %v436
      %v2516 = vmul.f32 %v2511, %v432
      %v2517 = vmul.f32 %v2507, %v436
      %v2518 = vmul.f32 %v2512, %v432
      %v2519 = vmul.f32 %v2508, %v436
      %v2520 = vmul.f32 %v2513, %v432
      %v2521 = vmul.f32 %v2509, %v436
      %2522 = vrot.lane.b32.xlu0 %v2386, 127
      %v2523 = vpop.permute.xlu0 %2522
      %2524 = vrot.lane.b32.xlu0 %v2388, 127
      %v2525 = vpop.permute.xlu0 %2524
      %2526 = vrot.lane.b32.xlu0 %v2390, 127
      %v2527 = vpop.permute.xlu0 %2526
      %2528 = vrot.lane.b32.xlu0 %v2392, 127
      %v2529 = vpop.permute.xlu0 %2528
      %2530 = vrot.lane.b32.xlu0 %v2387, 127
      %v2531 = vpop.permute.xlu0 %2530
      %2532 = vrot.lane.b32.xlu0 %v2389, 127
      %v2533 = vpop.permute.xlu0 %2532
      %2534 = vrot.lane.b32.xlu0 %v2391, 127
      %v2535 = vpop.permute.xlu0 %2534
      %2536 = vrot.lane.b32.xlu0 %v2393, 127
      %v2537 = vpop.permute.xlu0 %2536
      %v2538 = vsel %vm463, %v2523, %v2531
      %v2539 = vsel %vm463, %v2525, %v2533
      %v2540 = vsel %vm463, %v2527, %v2535
      %v2541 = vsel %vm463, %v2529, %v2537
      %v2542 = vsel %vm463, %v2531, %v2523
      %v2543 = vsel %vm463, %v2533, %v2525
      %v2544 = vsel %vm463, %v2535, %v2527
      %v2545 = vsel %vm463, %v2537, %v2529
      %v2546 = vmul.f32 %v2538, %v478
      %v2547 = vmul.f32 %v2542, %v482
      %v2548 = vmul.f32 %v2539, %v478
      %v2549 = vmul.f32 %v2543, %v482
      %v2550 = vmul.f32 %v2540, %v478
      %v2551 = vmul.f32 %v2544, %v482
      %v2552 = vmul.f32 %v2541, %v478
      %v2553 = vmul.f32 %v2545, %v482
      %2554 = vrot.lane.b32.xlu0 %v2386, 113
      %v2555 = vpop.permute.xlu0 %2554
      %2556 = vrot.lane.b32.xlu0 %v2388, 113
      %v2557 = vpop.permute.xlu0 %2556
      %2558 = vrot.lane.b32.xlu0 %v2390, 113
      %v2559 = vpop.permute.xlu0 %2558
      %2560 = vrot.lane.b32.xlu0 %v2392, 113
      %v2561 = vpop.permute.xlu0 %2560
      %2562 = vrot.lane.b32.xlu0 %v2387, 113
      %v2563 = vpop.permute.xlu0 %2562
      %2564 = vrot.lane.b32.xlu0 %v2389, 113
      %v2565 = vpop.permute.xlu0 %2564
      %2566 = vrot.lane.b32.xlu0 %v2391, 113
      %v2567 = vpop.permute.xlu0 %2566
      %2568 = vrot.lane.b32.xlu0 %v2393, 113
      %v2569 = vpop.permute.xlu0 %2568
      %v2570 = vsel %vm509, %v2555, %v2563
      %v2571 = vsel %vm509, %v2557, %v2565
      %v2572 = vsel %vm509, %v2559, %v2567
      %v2573 = vsel %vm509, %v2561, %v2569
      %v2574 = vsel %vm509, %v2563, %v2555
      %v2575 = vsel %vm509, %v2565, %v2557
      %v2576 = vsel %vm509, %v2567, %v2559
      %v2577 = vsel %vm509, %v2569, %v2561
      %v2578 = vmul.f32 %v2570, %v524
      %v2579 = vmul.f32 %v2574, %v528
      %v2580 = vmul.f32 %v2571, %v524
      %v2581 = vmul.f32 %v2575, %v528
      %v2582 = vmul.f32 %v2572, %v524
      %v2583 = vmul.f32 %v2576, %v528
      %v2584 = vmul.f32 %v2573, %v524
      %v2585 = vmul.f32 %v2577, %v528
      %2586 = vrot.lane.b32.xlu0 %v2386, 112
      %v2587 = vpop.permute.xlu0 %2586
      %2588 = vrot.lane.b32.xlu0 %v2388, 112
      %v2589 = vpop.permute.xlu0 %2588
      %2590 = vrot.lane.b32.xlu0 %v2390, 112
      %v2591 = vpop.permute.xlu0 %2590
      %2592 = vrot.lane.b32.xlu0 %v2392, 112
      %v2593 = vpop.permute.xlu0 %2592
      %2594 = vrot.lane.b32.xlu0 %v2387, 112
      %v2595 = vpop.permute.xlu0 %2594
      %2596 = vrot.lane.b32.xlu0 %v2389, 112
      %v2597 = vpop.permute.xlu0 %2596
      %2598 = vrot.lane.b32.xlu0 %v2391, 112
      %v2599 = vpop.permute.xlu0 %2598
      %2600 = vrot.lane.b32.xlu0 %v2393, 112
      %v2601 = vpop.permute.xlu0 %2600
      %v2602 = vsel %vm555, %v2587, %v2595
      %v2603 = vsel %vm555, %v2589, %v2597
      %v2604 = vsel %vm555, %v2591, %v2599
      %v2605 = vsel %vm555, %v2593, %v2601
      %v2606 = vsel %vm555, %v2595, %v2587
      %v2607 = vsel %vm555, %v2597, %v2589
      %v2608 = vsel %vm555, %v2599, %v2591
      %v2609 = vsel %vm555, %v2601, %v2593
      %v2610 = vmul.f32 %v2602, %v570
      %v2611 = vmul.f32 %v2606, %v574
      %v2612 = vmul.f32 %v2603, %v570
      %v2613 = vmul.f32 %v2607, %v574
      %v2614 = vmul.f32 %v2604, %v570
      %v2615 = vmul.f32 %v2608, %v574
      %v2616 = vmul.f32 %v2605, %v570
      %v2617 = vmul.f32 %v2609, %v574
      %2618 = vrot.lane.b32.xlu0 %v2386, 111
      %v2619 = vpop.permute.xlu0 %2618
      %2620 = vrot.lane.b32.xlu0 %v2388, 111
      %v2621 = vpop.permute.xlu0 %2620
      %2622 = vrot.lane.b32.xlu0 %v2390, 111
      %v2623 = vpop.permute.xlu0 %2622
      %2624 = vrot.lane.b32.xlu0 %v2392, 111
      %v2625 = vpop.permute.xlu0 %2624
      %2626 = vrot.lane.b32.xlu0 %v2387, 111
      %v2627 = vpop.permute.xlu0 %2626
      %2628 = vrot.lane.b32.xlu0 %v2389, 111
      %v2629 = vpop.permute.xlu0 %2628
      %2630 = vrot.lane.b32.xlu0 %v2391, 111
      %v2631 = vpop.permute.xlu0 %2630
      %2632 = vrot.lane.b32.xlu0 %v2393, 111
      %v2633 = vpop.permute.xlu0 %2632
      %v2634 = vsel %vm601, %v2619, %v2627
      %v2635 = vsel %vm601, %v2621, %v2629
      %v2636 = vsel %vm601, %v2623, %v2631
      %v2637 = vsel %vm601, %v2625, %v2633
      %v2638 = vsel %vm601, %v2627, %v2619
      %v2639 = vsel %vm601, %v2629, %v2621
      %v2640 = vsel %vm601, %v2631, %v2623
      %v2641 = vsel %vm601, %v2633, %v2625
      %v2642 = vmul.f32 %v2634, %v616
      %v2643 = vmul.f32 %v2638, %v620
      %v2644 = vmul.f32 %v2635, %v616
      %v2645 = vmul.f32 %v2639, %v620
      %v2646 = vmul.f32 %v2636, %v616
      %v2647 = vmul.f32 %v2640, %v620
      %v2648 = vmul.f32 %v2637, %v616
      %v2649 = vmul.f32 %v2641, %v620
      %v2650 = vpack.c.bf16 %v2420, %v2418
      %v2651 = vpack.c.bf16 %v2421, %v2419
      %v2652 = vpack.c.bf16 %v2424, %v2422
      %v2653 = vpack.c.bf16 %v2425, %v2423
      %v2654 = vpack.c.bf16 %v2452, %v2450
      %v2655 = vpack.c.bf16 %v2453, %v2451
      %v2656 = vpack.c.bf16 %v2456, %v2454
      %v2657 = vpack.c.bf16 %v2457, %v2455
      %v2658 = vpack.c.bf16 %v2484, %v2482
      %v2659 = vpack.c.bf16 %v2485, %v2483
      %v2660 = vpack.c.bf16 %v2488, %v2486
      %v2661 = vpack.c.bf16 %v2489, %v2487
      %v2662 = vpack.c.bf16 %v2516, %v2514
      %v2663 = vpack.c.bf16 %v2517, %v2515
      %v2664 = vpack.c.bf16 %v2520, %v2518
      %v2665 = vpack.c.bf16 %v2521, %v2519
      %v2666 = vpack.c.bf16 %v2388, %v2386
      %v2667 = vpack.c.bf16 %v2389, %v2387
      %v2668 = vpack.c.bf16 %v2392, %v2390
      %v2669 = vpack.c.bf16 %v2393, %v2391
      %v2670 = vpack.c.bf16 %v2548, %v2546
      %v2671 = vpack.c.bf16 %v2549, %v2547
      %v2672 = vpack.c.bf16 %v2552, %v2550
      %v2673 = vpack.c.bf16 %v2553, %v2551
      %v2674 = vpack.c.bf16 %v2580, %v2578
      %v2675 = vpack.c.bf16 %v2581, %v2579
      %v2676 = vpack.c.bf16 %v2584, %v2582
      %v2677 = vpack.c.bf16 %v2585, %v2583
      %v2678 = vpack.c.bf16 %v2612, %v2610
      %v2679 = vpack.c.bf16 %v2613, %v2611
      %v2680 = vpack.c.bf16 %v2616, %v2614
      %v2681 = vpack.c.bf16 %v2617, %v2615
      %v2682 = vpack.c.bf16 %v2644, %v2642
      %v2683 = vpack.c.bf16 %v2645, %v2643
      %v2684 = vpack.c.bf16 %v2648, %v2646
      %v2685 = vpack.c.bf16 %v2649, %v2647
      %v2686 = vld [vmem:[%s2 + $0x30] sm:$0xff]
      %v2687 = vld [vmem:[%s2 + $0x38] sm:$0xf]
      %v2688 = vld [vmem:[%s2 + $0x3c] sm:$0xff]
      %v2689 = vld [vmem:[%s2 + $0x44] sm:$0xf]
      %v2690 = vld [vmem:[%s2 + $0x48] sm:$0xff]
      %v2691 = vld [vmem:[%s2 + $0x50] sm:$0xf]
      %v2692 = vld [vmem:[%s2 + $0x54] sm:$0xff]
      %v2693 = vld [vmem:[%s2 + $0x5c] sm:$0xf]
      %2694 = vset.pattern.permute.xlu0 1
      %2695 = vperm.xlu0 %2694, %v246
      %v2696 = vpop.permute.xlu0 %2695
      %2698 = vset.pattern.permute.xlu0 1
      %2699 = vperm.xlu0 %2698, %v247
      %v2700 = vpop.permute.xlu0 %2699
      %2702 = vset.pattern.permute.xlu0 1
      %2703 = vperm.xlu0 %2702, %v248
      %v2704 = vpop.permute.xlu0 %2703
      %2706 = vset.pattern.permute.xlu0 1
      %2707 = vperm.xlu0 %2706, %v249
      %v2708 = vpop.permute.xlu0 %2707
      %v2718 = vunpack.c.l.b16 %v2686
      %v2719 = vunpack.c.h.b16 %v2686
      %v2720 = vunpack.c.l.b16 %v2687
      %v2721 = vunpack.c.l.b16 %v2688
      %v2722 = vunpack.c.h.b16 %v2688
      %v2723 = vunpack.c.l.b16 %v2689
      %v2724 = vunpack.c.l.b16 %v2690
      %v2725 = vunpack.c.h.b16 %v2690
      %v2726 = vunpack.c.l.b16 %v2691
      %v2727 = vunpack.c.l.b16 %v2692
      %v2728 = vunpack.c.h.b16 %v2692
      %v2729 = vunpack.c.l.b16 %v2693
      %v2730 = vpack.c.b16 %v2721, %v2718
      %v2731 = vpack.c.b16 %v2722, %v2719
      %v2732 = vpack.c.b16 %v2723, %v2720
      %v2733 = vpack.c.b16 %v2727, %v2724
      %v2734 = vpack.c.b16 %v2728, %v2725
      %v2735 = vpack.c.b16 %v2729, %v2726
      %v2741 = vsel %vm725, %v2732, 0
      %v2744 = vsel %vm725, %v2735, 0
      %2746 = vmatprep.subr.bf16.mxu0 %v2665
      %2747 = vmatpush1.bf16.msra.mxu0 %v2664
      %2748 = vmatprep.subr.bf16.mxu0 %v2663
      %2749 = vmatpush1.bf16.msra.mxu0 %v2662
      %2750 = vmatprep.subr.bf16.mxu0 %v2661
      %2751 = vmatpush1.bf16.msra.mxu0 %v2660
      %2752 = vmatprep.subr.bf16.mxu0 %v2659
      %2753 = vmatpush1.bf16.msra.mxu0 %v2658
      %2754 = vmatprep.subr.bf16.mxu0 %v2657
      %2755 = vmatpush1.bf16.msra.mxu0 %v2656
      %2756 = vmatprep.subr.bf16.mxu0 %v2655
      %2757 = vmatpush1.bf16.msra.mxu0 %v2654
      %2758 = vmatprep.subr.bf16.mxu0 %v2653
      %2759 = vmatpush1.bf16.msra.mxu0 %v2652
      %2760 = vmatprep.subr.bf16.mxu0 %v2651
      %2761 = vmatpush1.bf16.msra.mxu0 %v2650
      %2762 = vmatprep.subr.bf16.mxu0 %v2681
      %2763 = vmatpush2.bf16.msra.mxu0 %v2680
      %2764 = vmatprep.subr.bf16.mxu0 %v2679
      %2765 = vmatpush2.bf16.msra.mxu0 %v2678
      %2766 = vmatprep.subr.bf16.mxu0 %v2677
      %2767 = vmatpush2.bf16.msra.mxu0 %v2676
      %2768 = vmatprep.subr.bf16.mxu0 %v2675
      %2769 = vmatpush2.bf16.msra.mxu0 %v2674
      %2770 = vmatprep.subr.bf16.mxu0 %v2673
      %2771 = vmatpush2.bf16.msra.mxu0 %v2672
      %2772 = vmatprep.subr.bf16.mxu0 %v2671
      %2773 = vmatpush2.bf16.msra.mxu0 %v2670
      %2774 = vmatprep.subr.bf16.mxu0 %v2669
      %2775 = vmatpush2.bf16.msra.mxu0 %v2668
      %2776 = vmatprep.subr.bf16.mxu0 %v2667
      %2777 = vmatpush2.bf16.msra.mxu0 %v2666
      %2778 = vmatprep.mubr.bf16.mxu0 %v2731
      %2779 = vmatmul.mubr.bf16.gmra.mxu0 %v2730
      %v2780 = vpop.f32.mrf.mxu0
      %v2781 = vadd.f32 %v2696, %v2780
      %v2782 = vpop.f32.mrf.mxu0
      %v2783 = vadd.f32 %v2696, %v2782
      %v2784 = vpop.f32.mrf.mxu0
      %v2785 = vadd.f32 %v2700, %v2784
      %v2786 = vpop.f32.mrf.mxu0
      %v2787 = vadd.f32 %v2700, %v2786
      %2788 = vmatprep.mubr.bf16.mxu0 %v2734
      %2789 = vmatmul.mubr.bf16.gmra.mxu0 %v2733
      %v2790 = vpop.f32.mrf.mxu0
      %v2791 = vadd.f32 %v2704, %v2790
      %v2792 = vpop.f32.mrf.mxu0
      %v2793 = vadd.f32 %v2704, %v2792
      %v2794 = vpop.f32.mrf.mxu0
      %v2795 = vadd.f32 %v2708, %v2794
      %v2796 = vpop.f32.mrf.mxu0
      %v2797 = vadd.f32 %v2708, %v2796
      %2798 = vdwg.mxu0
      %2799 = vmatprep.subr.bf16.mxu0 0
      %2800 = vmatpush1.bf16.msra.mxu0 0
      %2801 = vmatprep.subr.bf16.mxu0 0
      %2802 = vmatpush1.bf16.msra.mxu0 0
      %2803 = vmatprep.subr.bf16.mxu0 0
      %2804 = vmatpush1.bf16.msra.mxu0 0
      %2805 = vmatprep.subr.bf16.mxu0 0
      %2806 = vmatpush1.bf16.msra.mxu0 0
      %2807 = vmatprep.subr.bf16.mxu0 0
      %2808 = vmatpush1.bf16.msra.mxu0 0
      %2809 = vmatprep.subr.bf16.mxu0 0
      %2810 = vmatpush1.bf16.msra.mxu0 0
      %2811 = vmatprep.subr.bf16.mxu0 %v2685
      %2812 = vmatpush1.bf16.msra.mxu0 %v2684
      %2813 = vmatprep.subr.bf16.mxu0 %v2683
      %2814 = vmatpush1.bf16.msra.mxu0 %v2682
      %2815 = vmatprep.subr.bf16.mxu0 0
      %2816 = vmatpush2.bf16.msra.mxu0 0
      %2817 = vmatprep.subr.bf16.mxu0 0
      %2818 = vmatpush2.bf16.msra.mxu0 0
      %2819 = vmatprep.subr.bf16.mxu0 0
      %2820 = vmatpush2.bf16.msra.mxu0 0
      %2821 = vmatprep.subr.bf16.mxu0 0
      %2822 = vmatpush2.bf16.msra.mxu0 0
      %2823 = vmatprep.subr.bf16.mxu0 0
      %2824 = vmatpush2.bf16.msra.mxu0 0
      %2825 = vmatprep.subr.bf16.mxu0 0
      %2826 = vmatpush2.bf16.msra.mxu0 0
      %2827 = vmatprep.subr.bf16.mxu0 0
      %2828 = vmatpush2.bf16.msra.mxu0 0
      %2829 = vmatprep.subr.bf16.mxu0 0
      %2830 = vmatpush2.bf16.msra.mxu0 0
      %2831 = vmatprep.mubr.bf16.mxu0 0
      %2832 = vmatmul.mubr.bf16.gmra.mxu0 %v2741
      %v2833 = vpop.f32.mrf.mxu0
      %v2834 = vadd.f32 %v2781, %v2833
      %v2835 = vpop.f32.mrf.mxu0
      %v2836 = vadd.f32 %v2783, %v2835
      %v2837 = vpop.f32.mrf.mxu0
      %v2838 = vadd.f32 %v2785, %v2837
      %v2839 = vpop.f32.mrf.mxu0
      %v2840 = vadd.f32 %v2787, %v2839
      %2841 = vmatprep.mubr.bf16.mxu0 0
      %2842 = vmatmul.mubr.bf16.gmra.mxu0 %v2744
      %v2843 = vpop.f32.mrf.mxu0
      %v2844 = vadd.f32 %v2791, %v2843
      %v2845 = vpop.f32.mrf.mxu0
      %v2846 = vadd.f32 %v2793, %v2845
      %v2847 = vpop.f32.mrf.mxu0
      %v2848 = vadd.f32 %v2795, %v2847
      %v2849 = vpop.f32.mrf.mxu0
      %v2850 = vadd.f32 %v2797, %v2849
      %2851 = vdwg.mxu0
      %2853 = vset.pattern.permute.xlu0 0
      %2854 = vperm.xlu0 %2853, %v258
      %v2855 = vpop.permute.xlu0 %2854
      %2858 = vset.pattern.permute.xlu0 0
      %2859 = vperm.xlu0 %2858, %v259
      %v2860 = vpop.permute.xlu0 %2859
      %2863 = vset.pattern.permute.xlu0 0
      %2864 = vperm.xlu0 %2863, %v260
      %v2865 = vpop.permute.xlu0 %2864
      %2868 = vset.pattern.permute.xlu0 0
      %2869 = vperm.xlu0 %2868, %v261
      %v2870 = vpop.permute.xlu0 %2869
      %v2872 = vadd.f32 %v2834, %v2855
      %v2873 = vadd.f32 %v2836, %v2855
      %v2874 = vadd.f32 %v2838, %v2860
      %v2875 = vadd.f32 %v2840, %v2860
      %v2876 = vadd.f32 %v2844, %v2865
      %v2877 = vadd.f32 %v2846, %v2865
      %v2878 = vadd.f32 %v2848, %v2870
      %v2879 = vadd.f32 %v2850, %v2870
      %2880 = vmatprep.subr.mxu0 0.0
      %2881 = vmatpush1.msra.mxu0 0.0
      %2882 = vmatprep.subr.mxu0 0.0
      %2883 = vmatpush1.msra.mxu0 0.0
      %2884 = vmatprep.subr.mxu0 0.0
      %2885 = vmatpush1.msra.mxu0 0.0
      %2886 = vmatprep.subr.mxu0 0.0
      %2887 = vmatpush1.msra.mxu0 0.0
      %2888 = vmatprep.subr.mxu0 0.0
      %2889 = vmatpush1.msra.mxu0 0.0
      %2890 = vmatprep.subr.mxu0 0.0
      %2891 = vmatpush1.msra.mxu0 0.0
      %2892 = vmatprep.subr.mxu0 0.0
      %2893 = vmatpush1.msra.mxu0 0.0
      %2894 = vmatprep.subr.mxu0 0.0
      %2895 = vmatpush1.msra.mxu0 0.0
      %2896 = vmatprep.subr.mxu0 0.0
      %2897 = vmatpush1.msra.mxu0 0.0
      %2898 = vmatprep.subr.mxu0 0.0
      %2899 = vmatpush1.msra.mxu0 0.0
      %2900 = vmatprep.subr.mxu0 0.0
      %2901 = vmatpush1.msra.mxu0 0.0
      %2902 = vmatprep.subr.mxu0 0.0
      %2903 = vmatpush1.msra.mxu0 0.0
      %v2904 = vand.u32 %v2879, 4294901760
      %2905 = vmatprep.subr.mxu0 %v2904
      %v2906 = vand.u32 %v2878, 4294901760
      %2907 = vmatpush1.msra.mxu0 %v2906
      %v2908 = vand.u32 %v2877, 4294901760
      %2909 = vmatprep.subr.mxu0 %v2908
      %v2910 = vand.u32 %v2876, 4294901760
      %2911 = vmatpush1.msra.mxu0 %v2910
      %v2912 = vand.u32 %v2875, 4294901760
      %2913 = vmatprep.subr.mxu0 %v2912
      %v2914 = vand.u32 %v2874, 4294901760
      %2915 = vmatpush1.msra.mxu0 %v2914
      %v2916 = vand.u32 %v2873, 4294901760
      %2917 = vmatprep.subr.mxu0 %v2916
      %v2918 = vand.u32 %v2872, 4294901760
      %2919 = vmatpush1.msra.mxu0 %v2918
      %2920 = vmatprep.subr.mxu0 0.0
      %2921 = vmatpush2.msra.mxu0 0.0
      %2922 = vmatprep.subr.mxu0 0.0
      %2923 = vmatpush2.msra.mxu0 0.0
      %2924 = vmatprep.subr.mxu0 0.0
      %2925 = vmatpush2.msra.mxu0 0.0
      %2926 = vmatprep.subr.mxu0 0.0
      %2927 = vmatpush2.msra.mxu0 0.0
      %2928 = vmatprep.subr.mxu0 0.0
      %2929 = vmatpush2.msra.mxu0 0.0
      %2930 = vmatprep.subr.mxu0 0.0
      %2931 = vmatpush2.msra.mxu0 0.0
      %2932 = vmatprep.subr.mxu0 0.0
      %2933 = vmatpush2.msra.mxu0 0.0
      %2934 = vmatprep.subr.mxu0 0.0
      %2935 = vmatpush2.msra.mxu0 0.0
      %2936 = vmatprep.subr.mxu0 0.0
      %2937 = vmatpush2.msra.mxu0 0.0
      %2938 = vmatprep.subr.mxu0 0.0
      %2939 = vmatpush2.msra.mxu0 0.0
      %2940 = vmatprep.subr.mxu0 0.0
      %2941 = vmatpush2.msra.mxu0 0.0
      %2942 = vmatprep.subr.mxu0 0.0
      %2943 = vmatpush2.msra.mxu0 0.0
      %2944 = vmatprep.subr.mxu0 0.0
      %2945 = vmatpush2.msra.mxu0 0.0
      %2946 = vmatprep.subr.mxu0 0.0
      %2947 = vmatpush2.msra.mxu0 0.0
      %2948 = vmatprep.subr.mxu0 0.0
      %2949 = vmatpush2.msra.mxu0 0.0
      %2950 = vmatprep.subr.mxu0 0.0
      %2951 = vmatpush2.msra.mxu0 0.0
      %2952 = vmatprep.mubr.f32.mxu0 0.0
      %v2953 = vand.u32 %v846, 4294901760
      %v2954 = vsub.f32 %v846, %v2953
      %v2955 = vand.u32 %v2954, 4294901760
      %v2956 = vsub.f32 %v2954, %v2955
      %v2957 = vand.u32 %v2956, 4294901760
      %2958 = vmatmul.mubr.f32.gmra.mxu0 %v2957
      %v2959 = vpop.f32.mrf.mxu0
      %v2960 = vadd.f32 0.0, %v2959
      %v2961 = vpop.f32.mrf.mxu0
      %v2962 = vadd.f32 0.0, %v2961
      %2963 = vmatprep.mubr.f32.mxu0 0.0
      %v2964 = vand.u32 %v848, 4294901760
      %v2965 = vsub.f32 %v848, %v2964
      %v2966 = vand.u32 %v2965, 4294901760
      %v2967 = vsub.f32 %v2965, %v2966
      %v2968 = vand.u32 %v2967, 4294901760
      %2969 = vmatmul.mubr.f32.gmra.mxu0 %v2968
      %v2970 = vpop.f32.mrf.mxu0
      %v2971 = vadd.f32 0.0, %v2970
      %v2972 = vpop.f32.mrf.mxu0
      %v2973 = vadd.f32 0.0, %v2972
      %2974 = vmatprep.mubr.f32.mxu0 0.0
      %v2975 = vand.u32 %v850, 4294901760
      %v2976 = vsub.f32 %v850, %v2975
      %v2977 = vand.u32 %v2976, 4294901760
      %v2978 = vsub.f32 %v2976, %v2977
      %v2979 = vand.u32 %v2978, 4294901760
      %2980 = vmatmul.mubr.f32.gmra.mxu0 %v2979
      %v2981 = vpop.f32.mrf.mxu0
      %v2982 = vadd.f32 0.0, %v2981
      %v2983 = vpop.f32.mrf.mxu0
      %v2984 = vadd.f32 0.0, %v2983
      %2985 = vmatprep.mubr.f32.mxu0 0.0
      %v2986 = vand.u32 %v852, 4294901760
      %v2987 = vsub.f32 %v852, %v2986
      %v2988 = vand.u32 %v2987, 4294901760
      %v2989 = vsub.f32 %v2987, %v2988
      %v2990 = vand.u32 %v2989, 4294901760
      %2991 = vmatmul.mubr.f32.gmra.mxu0 %v2990
      %v2992 = vpop.f32.mrf.mxu0
      %v2993 = vadd.f32 0.0, %v2992
      %v2994 = vpop.f32.mrf.mxu0
      %v2995 = vadd.f32 0.0, %v2994
      %2996 = vdwg.mxu0
      %2997 = vmatprep.subr.mxu0 0.0
      %2998 = vmatpush1.msra.mxu0 0.0
      %2999 = vmatprep.subr.mxu0 0.0
      %3000 = vmatpush1.msra.mxu0 0.0
      %3001 = vmatprep.subr.mxu0 0.0
      %3002 = vmatpush1.msra.mxu0 0.0
      %3003 = vmatprep.subr.mxu0 0.0
      %3004 = vmatpush1.msra.mxu0 0.0
      %3005 = vmatprep.subr.mxu0 0.0
      %3006 = vmatpush1.msra.mxu0 0.0
      %3007 = vmatprep.subr.mxu0 0.0
      %3008 = vmatpush1.msra.mxu0 0.0
      %3009 = vmatprep.subr.mxu0 0.0
      %3010 = vmatpush1.msra.mxu0 0.0
      %3011 = vmatprep.subr.mxu0 0.0
      %3012 = vmatpush1.msra.mxu0 0.0
      %3013 = vmatprep.subr.mxu0 0.0
      %3014 = vmatpush1.msra.mxu0 0.0
      %3015 = vmatprep.subr.mxu0 0.0
      %3016 = vmatpush1.msra.mxu0 0.0
      %3017 = vmatprep.subr.mxu0 0.0
      %3018 = vmatpush1.msra.mxu0 0.0
      %3019 = vmatprep.subr.mxu0 0.0
      %3020 = vmatpush1.msra.mxu0 0.0
      %v3021 = vand.u32 %v2879, 4294901760
      %v3022 = vsub.f32 %v2879, %v3021
      %v3023 = vand.u32 %v3022, 4294901760
      %v3024 = vsub.f32 %v3022, %v3023
      %v3025 = vand.u32 %v3024, 4294901760
      %3026 = vmatprep.subr.mxu0 %v3025
      %v3027 = vand.u32 %v2878, 4294901760
      %v3028 = vsub.f32 %v2878, %v3027
      %v3029 = vand.u32 %v3028, 4294901760
      %v3030 = vsub.f32 %v3028, %v3029
      %v3031 = vand.u32 %v3030, 4294901760
      %3032 = vmatpush1.msra.mxu0 %v3031
      %v3033 = vand.u32 %v2877, 4294901760
      %v3034 = vsub.f32 %v2877, %v3033
      %v3035 = vand.u32 %v3034, 4294901760
      %v3036 = vsub.f32 %v3034, %v3035
      %v3037 = vand.u32 %v3036, 4294901760
      %3038 = vmatprep.subr.mxu0 %v3037
      %v3039 = vand.u32 %v2876, 4294901760
      %v3040 = vsub.f32 %v2876, %v3039
      %v3041 = vand.u32 %v3040, 4294901760
      %v3042 = vsub.f32 %v3040, %v3041
      %v3043 = vand.u32 %v3042, 4294901760
      %3044 = vmatpush1.msra.mxu0 %v3043
      %v3045 = vand.u32 %v2875, 4294901760
      %v3046 = vsub.f32 %v2875, %v3045
      %v3047 = vand.u32 %v3046, 4294901760
      %v3048 = vsub.f32 %v3046, %v3047
      %v3049 = vand.u32 %v3048, 4294901760
      %3050 = vmatprep.subr.mxu0 %v3049
      %v3051 = vand.u32 %v2874, 4294901760
      %v3052 = vsub.f32 %v2874, %v3051
      %v3053 = vand.u32 %v3052, 4294901760
      %v3054 = vsub.f32 %v3052, %v3053
      %v3055 = vand.u32 %v3054, 4294901760
      %3056 = vmatpush1.msra.mxu0 %v3055
      %v3057 = vand.u32 %v2873, 4294901760
      %v3058 = vsub.f32 %v2873, %v3057
      %v3059 = vand.u32 %v3058, 4294901760
      %v3060 = vsub.f32 %v3058, %v3059
      %v3061 = vand.u32 %v3060, 4294901760
      %3062 = vmatprep.subr.mxu0 %v3061
      %v3063 = vand.u32 %v2872, 4294901760
      %v3064 = vsub.f32 %v2872, %v3063
      %v3065 = vand.u32 %v3064, 4294901760
      %v3066 = vsub.f32 %v3064, %v3065
      %v3067 = vand.u32 %v3066, 4294901760
      %3068 = vmatpush1.msra.mxu0 %v3067
      %3069 = vmatprep.subr.mxu0 0.0
      %3070 = vmatpush2.msra.mxu0 0.0
      %3071 = vmatprep.subr.mxu0 0.0
      %3072 = vmatpush2.msra.mxu0 0.0
      %3073 = vmatprep.subr.mxu0 0.0
      %3074 = vmatpush2.msra.mxu0 0.0
      %3075 = vmatprep.subr.mxu0 0.0
      %3076 = vmatpush2.msra.mxu0 0.0
      %3077 = vmatprep.subr.mxu0 0.0
      %3078 = vmatpush2.msra.mxu0 0.0
      %3079 = vmatprep.subr.mxu0 0.0
      %3080 = vmatpush2.msra.mxu0 0.0
      %3081 = vmatprep.subr.mxu0 0.0
      %3082 = vmatpush2.msra.mxu0 0.0
      %3083 = vmatprep.subr.mxu0 0.0
      %3084 = vmatpush2.msra.mxu0 0.0
      %3085 = vmatprep.subr.mxu0 0.0
      %3086 = vmatpush2.msra.mxu0 0.0
      %3087 = vmatprep.subr.mxu0 0.0
      %3088 = vmatpush2.msra.mxu0 0.0
      %3089 = vmatprep.subr.mxu0 0.0
      %3090 = vmatpush2.msra.mxu0 0.0
      %3091 = vmatprep.subr.mxu0 0.0
      %3092 = vmatpush2.msra.mxu0 0.0
      %3093 = vmatprep.subr.mxu0 0.0
      %3094 = vmatpush2.msra.mxu0 0.0
      %3095 = vmatprep.subr.mxu0 0.0
      %3096 = vmatpush2.msra.mxu0 0.0
      %3097 = vmatprep.subr.mxu0 0.0
      %3098 = vmatpush2.msra.mxu0 0.0
      %3099 = vmatprep.subr.mxu0 0.0
      %3100 = vmatpush2.msra.mxu0 0.0
      %3101 = vmatprep.mubr.f32.mxu0 0.0
      %v3102 = vand.u32 %v846, 4294901760
      %3103 = vmatmul.mubr.f32.gmra.mxu0 %v3102
      %v3104 = vpop.f32.mrf.mxu0
      %v3105 = vadd.f32 %v2960, %v3104
      %v3106 = vpop.f32.mrf.mxu0
      %v3107 = vadd.f32 %v2962, %v3106
      %3108 = vmatprep.mubr.f32.mxu0 0.0
      %v3109 = vand.u32 %v848, 4294901760
      %3110 = vmatmul.mubr.f32.gmra.mxu0 %v3109
      %v3111 = vpop.f32.mrf.mxu0
      %v3112 = vadd.f32 %v2971, %v3111
      %v3113 = vpop.f32.mrf.mxu0
      %v3114 = vadd.f32 %v2973, %v3113
      %3115 = vmatprep.mubr.f32.mxu0 0.0
      %v3116 = vand.u32 %v850, 4294901760
      %3117 = vmatmul.mubr.f32.gmra.mxu0 %v3116
      %v3118 = vpop.f32.mrf.mxu0
      %v3119 = vadd.f32 %v2982, %v3118
      %v3120 = vpop.f32.mrf.mxu0
      %v3121 = vadd.f32 %v2984, %v3120
      %3122 = vmatprep.mubr.f32.mxu0 0.0
      %v3123 = vand.u32 %v852, 4294901760
      %3124 = vmatmul.mubr.f32.gmra.mxu0 %v3123
      %v3125 = vpop.f32.mrf.mxu0
      %v3126 = vadd.f32 %v2993, %v3125
      %v3127 = vpop.f32.mrf.mxu0
      %v3128 = vadd.f32 %v2995, %v3127
      %3129 = vdwg.mxu0
      %3130 = vmatprep.subr.mxu0 0.0
      %3131 = vmatpush1.msra.mxu0 0.0
      %3132 = vmatprep.subr.mxu0 0.0
      %3133 = vmatpush1.msra.mxu0 0.0
      %3134 = vmatprep.subr.mxu0 0.0
      %3135 = vmatpush1.msra.mxu0 0.0
      %3136 = vmatprep.subr.mxu0 0.0
      %3137 = vmatpush1.msra.mxu0 0.0
      %3138 = vmatprep.subr.mxu0 0.0
      %3139 = vmatpush1.msra.mxu0 0.0
      %3140 = vmatprep.subr.mxu0 0.0
      %3141 = vmatpush1.msra.mxu0 0.0
      %3142 = vmatprep.subr.mxu0 0.0
      %3143 = vmatpush1.msra.mxu0 0.0
      %3144 = vmatprep.subr.mxu0 0.0
      %3145 = vmatpush1.msra.mxu0 0.0
      %3146 = vmatprep.subr.mxu0 0.0
      %3147 = vmatpush1.msra.mxu0 0.0
      %3148 = vmatprep.subr.mxu0 0.0
      %3149 = vmatpush1.msra.mxu0 0.0
      %3150 = vmatprep.subr.mxu0 0.0
      %3151 = vmatpush1.msra.mxu0 0.0
      %3152 = vmatprep.subr.mxu0 0.0
      %3153 = vmatpush1.msra.mxu0 0.0
      %v3154 = vand.u32 %v2879, 4294901760
      %v3155 = vsub.f32 %v2879, %v3154
      %3156 = vmatprep.subr.mxu0 %v3155
      %v3157 = vand.u32 %v2878, 4294901760
      %v3158 = vsub.f32 %v2878, %v3157
      %3159 = vmatpush1.msra.mxu0 %v3158
      %v3160 = vand.u32 %v2877, 4294901760
      %v3161 = vsub.f32 %v2877, %v3160
      %3162 = vmatprep.subr.mxu0 %v3161
      %v3163 = vand.u32 %v2876, 4294901760
      %v3164 = vsub.f32 %v2876, %v3163
      %3165 = vmatpush1.msra.mxu0 %v3164
      %v3166 = vand.u32 %v2875, 4294901760
      %v3167 = vsub.f32 %v2875, %v3166
      %3168 = vmatprep.subr.mxu0 %v3167
      %v3169 = vand.u32 %v2874, 4294901760
      %v3170 = vsub.f32 %v2874, %v3169
      %3171 = vmatpush1.msra.mxu0 %v3170
      %v3172 = vand.u32 %v2873, 4294901760
      %v3173 = vsub.f32 %v2873, %v3172
      %3174 = vmatprep.subr.mxu0 %v3173
      %v3175 = vand.u32 %v2872, 4294901760
      %v3176 = vsub.f32 %v2872, %v3175
      %3177 = vmatpush1.msra.mxu0 %v3176
      %3178 = vmatprep.subr.mxu0 0.0
      %3179 = vmatpush2.msra.mxu0 0.0
      %3180 = vmatprep.subr.mxu0 0.0
      %3181 = vmatpush2.msra.mxu0 0.0
      %3182 = vmatprep.subr.mxu0 0.0
      %3183 = vmatpush2.msra.mxu0 0.0
      %3184 = vmatprep.subr.mxu0 0.0
      %3185 = vmatpush2.msra.mxu0 0.0
      %3186 = vmatprep.subr.mxu0 0.0
      %3187 = vmatpush2.msra.mxu0 0.0
      %3188 = vmatprep.subr.mxu0 0.0
      %3189 = vmatpush2.msra.mxu0 0.0
      %3190 = vmatprep.subr.mxu0 0.0
      %3191 = vmatpush2.msra.mxu0 0.0
      %3192 = vmatprep.subr.mxu0 0.0
      %3193 = vmatpush2.msra.mxu0 0.0
      %3194 = vmatprep.subr.mxu0 0.0
      %3195 = vmatpush2.msra.mxu0 0.0
      %3196 = vmatprep.subr.mxu0 0.0
      %3197 = vmatpush2.msra.mxu0 0.0
      %3198 = vmatprep.subr.mxu0 0.0
      %3199 = vmatpush2.msra.mxu0 0.0
      %3200 = vmatprep.subr.mxu0 0.0
      %3201 = vmatpush2.msra.mxu0 0.0
      %3202 = vmatprep.subr.mxu0 0.0
      %3203 = vmatpush2.msra.mxu0 0.0
      %3204 = vmatprep.subr.mxu0 0.0
      %3205 = vmatpush2.msra.mxu0 0.0
      %3206 = vmatprep.subr.mxu0 0.0
      %3207 = vmatpush2.msra.mxu0 0.0
      %3208 = vmatprep.subr.mxu0 0.0
      %3209 = vmatpush2.msra.mxu0 0.0
      %3210 = vmatprep.mubr.f32.mxu0 0.0
      %v3211 = vand.u32 %v846, 4294901760
      %v3212 = vsub.f32 %v846, %v3211
      %3213 = vmatmul.mubr.f32.gmra.mxu0 %v3212
      %v3214 = vpop.f32.mrf.mxu0
      %v3215 = vadd.f32 %v3105, %v3214
      %v3216 = vpop.f32.mrf.mxu0
      %v3217 = vadd.f32 %v3107, %v3216
      %3218 = vmatprep.mubr.f32.mxu0 0.0
      %v3219 = vand.u32 %v848, 4294901760
      %v3220 = vsub.f32 %v848, %v3219
      %3221 = vmatmul.mubr.f32.gmra.mxu0 %v3220
      %v3222 = vpop.f32.mrf.mxu0
      %v3223 = vadd.f32 %v3112, %v3222
      %v3224 = vpop.f32.mrf.mxu0
      %v3225 = vadd.f32 %v3114, %v3224
      %3226 = vmatprep.mubr.f32.mxu0 0.0
      %v3227 = vand.u32 %v850, 4294901760
      %v3228 = vsub.f32 %v850, %v3227
      %3229 = vmatmul.mubr.f32.gmra.mxu0 %v3228
      %v3230 = vpop.f32.mrf.mxu0
      %v3231 = vadd.f32 %v3119, %v3230
      %v3232 = vpop.f32.mrf.mxu0
      %v3233 = vadd.f32 %v3121, %v3232
      %3234 = vmatprep.mubr.f32.mxu0 0.0
      %v3235 = vand.u32 %v852, 4294901760
      %v3236 = vsub.f32 %v852, %v3235
      %3237 = vmatmul.mubr.f32.gmra.mxu0 %v3236
      %v3238 = vpop.f32.mrf.mxu0
      %v3239 = vadd.f32 %v3126, %v3238
      %v3240 = vpop.f32.mrf.mxu0
      %v3241 = vadd.f32 %v3128, %v3240
      %3242 = vdwg.mxu0
      %3243 = vmatprep.subr.mxu0 0.0
      %3244 = vmatpush1.msra.mxu0 0.0
      %3245 = vmatprep.subr.mxu0 0.0
      %3246 = vmatpush1.msra.mxu0 0.0
      %3247 = vmatprep.subr.mxu0 0.0
      %3248 = vmatpush1.msra.mxu0 0.0
      %3249 = vmatprep.subr.mxu0 0.0
      %3250 = vmatpush1.msra.mxu0 0.0
      %3251 = vmatprep.subr.mxu0 0.0
      %3252 = vmatpush1.msra.mxu0 0.0
      %3253 = vmatprep.subr.mxu0 0.0
      %3254 = vmatpush1.msra.mxu0 0.0
      %3255 = vmatprep.subr.mxu0 0.0
      %3256 = vmatpush1.msra.mxu0 0.0
      %3257 = vmatprep.subr.mxu0 0.0
      %3258 = vmatpush1.msra.mxu0 0.0
      %3259 = vmatprep.subr.mxu0 0.0
      %3260 = vmatpush1.msra.mxu0 0.0
      %3261 = vmatprep.subr.mxu0 0.0
      %3262 = vmatpush1.msra.mxu0 0.0
      %3263 = vmatprep.subr.mxu0 0.0
      %3264 = vmatpush1.msra.mxu0 0.0
      %3265 = vmatprep.subr.mxu0 0.0
      %3266 = vmatpush1.msra.mxu0 0.0
      %v3267 = vand.u32 %v2879, 4294901760
      %3268 = vmatprep.subr.mxu0 %v3267
      %v3269 = vand.u32 %v2878, 4294901760
      %3270 = vmatpush1.msra.mxu0 %v3269
      %v3271 = vand.u32 %v2877, 4294901760
      %3272 = vmatprep.subr.mxu0 %v3271
      %v3273 = vand.u32 %v2876, 4294901760
      %3274 = vmatpush1.msra.mxu0 %v3273
      %v3275 = vand.u32 %v2875, 4294901760
      %3276 = vmatprep.subr.mxu0 %v3275
      %v3277 = vand.u32 %v2874, 4294901760
      %3278 = vmatpush1.msra.mxu0 %v3277
      %v3279 = vand.u32 %v2873, 4294901760
      %3280 = vmatprep.subr.mxu0 %v3279
      %v3281 = vand.u32 %v2872, 4294901760
      %3282 = vmatpush1.msra.mxu0 %v3281
      %3283 = vmatprep.subr.mxu0 0.0
      %3284 = vmatpush2.msra.mxu0 0.0
      %3285 = vmatprep.subr.mxu0 0.0
      %3286 = vmatpush2.msra.mxu0 0.0
      %3287 = vmatprep.subr.mxu0 0.0
      %3288 = vmatpush2.msra.mxu0 0.0
      %3289 = vmatprep.subr.mxu0 0.0
      %3290 = vmatpush2.msra.mxu0 0.0
      %3291 = vmatprep.subr.mxu0 0.0
      %3292 = vmatpush2.msra.mxu0 0.0
      %3293 = vmatprep.subr.mxu0 0.0
      %3294 = vmatpush2.msra.mxu0 0.0
      %3295 = vmatprep.subr.mxu0 0.0
      %3296 = vmatpush2.msra.mxu0 0.0
      %3297 = vmatprep.subr.mxu0 0.0
      %3298 = vmatpush2.msra.mxu0 0.0
      %3299 = vmatprep.subr.mxu0 0.0
      %3300 = vmatpush2.msra.mxu0 0.0
      %3301 = vmatprep.subr.mxu0 0.0
      %3302 = vmatpush2.msra.mxu0 0.0
      %3303 = vmatprep.subr.mxu0 0.0
      %3304 = vmatpush2.msra.mxu0 0.0
      %3305 = vmatprep.subr.mxu0 0.0
      %3306 = vmatpush2.msra.mxu0 0.0
      %3307 = vmatprep.subr.mxu0 0.0
      %3308 = vmatpush2.msra.mxu0 0.0
      %3309 = vmatprep.subr.mxu0 0.0
      %3310 = vmatpush2.msra.mxu0 0.0
      %3311 = vmatprep.subr.mxu0 0.0
      %3312 = vmatpush2.msra.mxu0 0.0
      %3313 = vmatprep.subr.mxu0 0.0
      %3314 = vmatpush2.msra.mxu0 0.0
      %3315 = vmatprep.mubr.f32.mxu0 0.0
      %v3316 = vand.u32 %v846, 4294901760
      %v3317 = vsub.f32 %v846, %v3316
      %v3318 = vand.u32 %v3317, 4294901760
      %3319 = vmatmul.mubr.f32.gmra.mxu0 %v3318
      %v3320 = vpop.f32.mrf.mxu0
      %v3321 = vadd.f32 %v3215, %v3320
      %v3322 = vpop.f32.mrf.mxu0
      %v3323 = vadd.f32 %v3217, %v3322
      %3324 = vmatprep.mubr.f32.mxu0 0.0
      %v3325 = vand.u32 %v848, 4294901760
      %v3326 = vsub.f32 %v848, %v3325
      %v3327 = vand.u32 %v3326, 4294901760
      %3328 = vmatmul.mubr.f32.gmra.mxu0 %v3327
      %v3329 = vpop.f32.mrf.mxu0
      %v3330 = vadd.f32 %v3223, %v3329
      %v3331 = vpop.f32.mrf.mxu0
      %v3332 = vadd.f32 %v3225, %v3331
      %3333 = vmatprep.mubr.f32.mxu0 0.0
      %v3334 = vand.u32 %v850, 4294901760
      %v3335 = vsub.f32 %v850, %v3334
      %v3336 = vand.u32 %v3335, 4294901760
      %3337 = vmatmul.mubr.f32.gmra.mxu0 %v3336
      %v3338 = vpop.f32.mrf.mxu0
      %v3339 = vadd.f32 %v3231, %v3338
      %v3340 = vpop.f32.mrf.mxu0
      %v3341 = vadd.f32 %v3233, %v3340
      %3342 = vmatprep.mubr.f32.mxu0 0.0
      %v3343 = vand.u32 %v852, 4294901760
      %v3344 = vsub.f32 %v852, %v3343
      %v3345 = vand.u32 %v3344, 4294901760
      %3346 = vmatmul.mubr.f32.gmra.mxu0 %v3345
      %v3347 = vpop.f32.mrf.mxu0
      %v3348 = vadd.f32 %v3239, %v3347
      %v3349 = vpop.f32.mrf.mxu0
      %v3350 = vadd.f32 %v3241, %v3349
      %3351 = vdwg.mxu0
      %3352 = vmatprep.subr.mxu0 0.0
      %3353 = vmatpush1.msra.mxu0 0.0
      %3354 = vmatprep.subr.mxu0 0.0
      %3355 = vmatpush1.msra.mxu0 0.0
      %3356 = vmatprep.subr.mxu0 0.0
      %3357 = vmatpush1.msra.mxu0 0.0
      %3358 = vmatprep.subr.mxu0 0.0
      %3359 = vmatpush1.msra.mxu0 0.0
      %3360 = vmatprep.subr.mxu0 0.0
      %3361 = vmatpush1.msra.mxu0 0.0
      %3362 = vmatprep.subr.mxu0 0.0
      %3363 = vmatpush1.msra.mxu0 0.0
      %3364 = vmatprep.subr.mxu0 0.0
      %3365 = vmatpush1.msra.mxu0 0.0
      %3366 = vmatprep.subr.mxu0 0.0
      %3367 = vmatpush1.msra.mxu0 0.0
      %3368 = vmatprep.subr.mxu0 0.0
      %3369 = vmatpush1.msra.mxu0 0.0
      %3370 = vmatprep.subr.mxu0 0.0
      %3371 = vmatpush1.msra.mxu0 0.0
      %3372 = vmatprep.subr.mxu0 0.0
      %3373 = vmatpush1.msra.mxu0 0.0
      %3374 = vmatprep.subr.mxu0 0.0
      %3375 = vmatpush1.msra.mxu0 0.0
      %v3376 = vand.u32 %v2879, 4294901760
      %v3377 = vsub.f32 %v2879, %v3376
      %v3378 = vand.u32 %v3377, 4294901760
      %3379 = vmatprep.subr.mxu0 %v3378
      %v3380 = vand.u32 %v2878, 4294901760
      %v3381 = vsub.f32 %v2878, %v3380
      %v3382 = vand.u32 %v3381, 4294901760
      %3383 = vmatpush1.msra.mxu0 %v3382
      %v3384 = vand.u32 %v2877, 4294901760
      %v3385 = vsub.f32 %v2877, %v3384
      %v3386 = vand.u32 %v3385, 4294901760
      %3387 = vmatprep.subr.mxu0 %v3386
      %v3388 = vand.u32 %v2876, 4294901760
      %v3389 = vsub.f32 %v2876, %v3388
      %v3390 = vand.u32 %v3389, 4294901760
      %3391 = vmatpush1.msra.mxu0 %v3390
      %v3392 = vand.u32 %v2875, 4294901760
      %v3393 = vsub.f32 %v2875, %v3392
      %v3394 = vand.u32 %v3393, 4294901760
      %3395 = vmatprep.subr.mxu0 %v3394
      %v3396 = vand.u32 %v2874, 4294901760
      %v3397 = vsub.f32 %v2874, %v3396
      %v3398 = vand.u32 %v3397, 4294901760
      %3399 = vmatpush1.msra.mxu0 %v3398
      %v3400 = vand.u32 %v2873, 4294901760
      %v3401 = vsub.f32 %v2873, %v3400
      %v3402 = vand.u32 %v3401, 4294901760
      %3403 = vmatprep.subr.mxu0 %v3402
      %v3404 = vand.u32 %v2872, 4294901760
      %v3405 = vsub.f32 %v2872, %v3404
      %v3406 = vand.u32 %v3405, 4294901760
      %3407 = vmatpush1.msra.mxu0 %v3406
      %3408 = vmatprep.subr.mxu0 0.0
      %3409 = vmatpush2.msra.mxu0 0.0
      %3410 = vmatprep.subr.mxu0 0.0
      %3411 = vmatpush2.msra.mxu0 0.0
      %3412 = vmatprep.subr.mxu0 0.0
      %3413 = vmatpush2.msra.mxu0 0.0
      %3414 = vmatprep.subr.mxu0 0.0
      %3415 = vmatpush2.msra.mxu0 0.0
      %3416 = vmatprep.subr.mxu0 0.0
      %3417 = vmatpush2.msra.mxu0 0.0
      %3418 = vmatprep.subr.mxu0 0.0
      %3419 = vmatpush2.msra.mxu0 0.0
      %3420 = vmatprep.subr.mxu0 0.0
      %3421 = vmatpush2.msra.mxu0 0.0
      %3422 = vmatprep.subr.mxu0 0.0
      %3423 = vmatpush2.msra.mxu0 0.0
      %3424 = vmatprep.subr.mxu0 0.0
      %3425 = vmatpush2.msra.mxu0 0.0
      %3426 = vmatprep.subr.mxu0 0.0
      %3427 = vmatpush2.msra.mxu0 0.0
      %3428 = vmatprep.subr.mxu0 0.0
      %3429 = vmatpush2.msra.mxu0 0.0
      %3430 = vmatprep.subr.mxu0 0.0
      %3431 = vmatpush2.msra.mxu0 0.0
      %3432 = vmatprep.subr.mxu0 0.0
      %3433 = vmatpush2.msra.mxu0 0.0
      %3434 = vmatprep.subr.mxu0 0.0
      %3435 = vmatpush2.msra.mxu0 0.0
      %3436 = vmatprep.subr.mxu0 0.0
      %3437 = vmatpush2.msra.mxu0 0.0
      %3438 = vmatprep.subr.mxu0 0.0
      %3439 = vmatpush2.msra.mxu0 0.0
      %3440 = vmatprep.mubr.f32.mxu0 0.0
      %v3441 = vand.u32 %v846, 4294901760
      %3442 = vmatmul.mubr.f32.gmra.mxu0 %v3441
      %v3443 = vpop.f32.mrf.mxu0
      %v3444 = vadd.f32 %v3321, %v3443
      %v3445 = vpop.f32.mrf.mxu0
      %v3446 = vadd.f32 %v3323, %v3445
      %3447 = vmatprep.mubr.f32.mxu0 0.0
      %v3448 = vand.u32 %v848, 4294901760
      %3449 = vmatmul.mubr.f32.gmra.mxu0 %v3448
      %v3450 = vpop.f32.mrf.mxu0
      %v3451 = vadd.f32 %v3330, %v3450
      %v3452 = vpop.f32.mrf.mxu0
      %v3453 = vadd.f32 %v3332, %v3452
      %3454 = vmatprep.mubr.f32.mxu0 0.0
      %v3455 = vand.u32 %v850, 4294901760
      %3456 = vmatmul.mubr.f32.gmra.mxu0 %v3455
      %v3457 = vpop.f32.mrf.mxu0
      %v3458 = vadd.f32 %v3339, %v3457
      %v3459 = vpop.f32.mrf.mxu0
      %v3460 = vadd.f32 %v3341, %v3459
      %3461 = vmatprep.mubr.f32.mxu0 0.0
      %v3462 = vand.u32 %v852, 4294901760
      %3463 = vmatmul.mubr.f32.gmra.mxu0 %v3462
      %v3464 = vpop.f32.mrf.mxu0
      %v3465 = vadd.f32 %v3348, %v3464
      %v3466 = vpop.f32.mrf.mxu0
      %v3467 = vadd.f32 %v3350, %v3466
      %3468 = vdwg.mxu0
      %3469 = vmatprep.subr.mxu0 0.0
      %3470 = vmatpush1.msra.mxu0 0.0
      %3471 = vmatprep.subr.mxu0 0.0
      %3472 = vmatpush1.msra.mxu0 0.0
      %3473 = vmatprep.subr.mxu0 0.0
      %3474 = vmatpush1.msra.mxu0 0.0
      %3475 = vmatprep.subr.mxu0 0.0
      %3476 = vmatpush1.msra.mxu0 0.0
      %3477 = vmatprep.subr.mxu0 0.0
      %3478 = vmatpush1.msra.mxu0 0.0
      %3479 = vmatprep.subr.mxu0 0.0
      %3480 = vmatpush1.msra.mxu0 0.0
      %3481 = vmatprep.subr.mxu0 0.0
      %3482 = vmatpush1.msra.mxu0 0.0
      %3483 = vmatprep.subr.mxu0 0.0
      %3484 = vmatpush1.msra.mxu0 0.0
      %3485 = vmatprep.subr.mxu0 0.0
      %3486 = vmatpush1.msra.mxu0 0.0
      %3487 = vmatprep.subr.mxu0 0.0
      %3488 = vmatpush1.msra.mxu0 0.0
      %3489 = vmatprep.subr.mxu0 0.0
      %3490 = vmatpush1.msra.mxu0 0.0
      %3491 = vmatprep.subr.mxu0 0.0
      %3492 = vmatpush1.msra.mxu0 0.0
      %v3493 = vand.u32 %v2879, 4294901760
      %3494 = vmatprep.subr.mxu0 %v3493
      %v3495 = vand.u32 %v2878, 4294901760
      %3496 = vmatpush1.msra.mxu0 %v3495
      %v3497 = vand.u32 %v2877, 4294901760
      %3498 = vmatprep.subr.mxu0 %v3497
      %v3499 = vand.u32 %v2876, 4294901760
      %3500 = vmatpush1.msra.mxu0 %v3499
      %v3501 = vand.u32 %v2875, 4294901760
      %3502 = vmatprep.subr.mxu0 %v3501
      %v3503 = vand.u32 %v2874, 4294901760
      %3504 = vmatpush1.msra.mxu0 %v3503
      %v3505 = vand.u32 %v2873, 4294901760
      %3506 = vmatprep.subr.mxu0 %v3505
      %v3507 = vand.u32 %v2872, 4294901760
      %3508 = vmatpush1.msra.mxu0 %v3507
      %3509 = vmatprep.subr.mxu0 0.0
      %3510 = vmatpush2.msra.mxu0 0.0
      %3511 = vmatprep.subr.mxu0 0.0
      %3512 = vmatpush2.msra.mxu0 0.0
      %3513 = vmatprep.subr.mxu0 0.0
      %3514 = vmatpush2.msra.mxu0 0.0
      %3515 = vmatprep.subr.mxu0 0.0
      %3516 = vmatpush2.msra.mxu0 0.0
      %3517 = vmatprep.subr.mxu0 0.0
      %3518 = vmatpush2.msra.mxu0 0.0
      %3519 = vmatprep.subr.mxu0 0.0
      %3520 = vmatpush2.msra.mxu0 0.0
      %3521 = vmatprep.subr.mxu0 0.0
      %3522 = vmatpush2.msra.mxu0 0.0
      %3523 = vmatprep.subr.mxu0 0.0
      %3524 = vmatpush2.msra.mxu0 0.0
      %3525 = vmatprep.subr.mxu0 0.0
      %3526 = vmatpush2.msra.mxu0 0.0
      %3527 = vmatprep.subr.mxu0 0.0
      %3528 = vmatpush2.msra.mxu0 0.0
      %3529 = vmatprep.subr.mxu0 0.0
      %3530 = vmatpush2.msra.mxu0 0.0
      %3531 = vmatprep.subr.mxu0 0.0
      %3532 = vmatpush2.msra.mxu0 0.0
      %3533 = vmatprep.subr.mxu0 0.0
      %3534 = vmatpush2.msra.mxu0 0.0
      %3535 = vmatprep.subr.mxu0 0.0
      %3536 = vmatpush2.msra.mxu0 0.0
      %3537 = vmatprep.subr.mxu0 0.0
      %3538 = vmatpush2.msra.mxu0 0.0
      %3539 = vmatprep.subr.mxu0 0.0
      %3540 = vmatpush2.msra.mxu0 0.0
      %3541 = vmatprep.mubr.f32.mxu0 0.0
      %v3542 = vand.u32 %v846, 4294901760
      %3543 = vmatmul.mubr.f32.gmra.mxu0 %v3542
      %v3544 = vpop.f32.mrf.mxu0
      %v3545 = vadd.f32 %v3444, %v3544
      %v3546 = vpop.f32.mrf.mxu0
      %v3547 = vadd.f32 %v3446, %v3546
      %3548 = vmatprep.mubr.f32.mxu0 0.0
      %v3549 = vand.u32 %v848, 4294901760
      %3550 = vmatmul.mubr.f32.gmra.mxu0 %v3549
      %v3551 = vpop.f32.mrf.mxu0
      %v3552 = vadd.f32 %v3451, %v3551
      %v3553 = vpop.f32.mrf.mxu0
      %v3554 = vadd.f32 %v3453, %v3553
      %3555 = vmatprep.mubr.f32.mxu0 0.0
      %v3556 = vand.u32 %v850, 4294901760
      %3557 = vmatmul.mubr.f32.gmra.mxu0 %v3556
      %v3558 = vpop.f32.mrf.mxu0
      %v3559 = vadd.f32 %v3458, %v3558
      %v3560 = vpop.f32.mrf.mxu0
      %v3561 = vadd.f32 %v3460, %v3560
      %3562 = vmatprep.mubr.f32.mxu0 0.0
      %v3563 = vand.u32 %v852, 4294901760
      %3564 = vmatmul.mubr.f32.gmra.mxu0 %v3563
      %v3565 = vpop.f32.mrf.mxu0
      %v3566 = vadd.f32 %v3465, %v3565
      %v3567 = vpop.f32.mrf.mxu0
      %v3568 = vadd.f32 %v3467, %v3567
      %3569 = vdwg.mxu0
      %v3570 = vadd.f32 %v3545, %v3547
      %3571 = vadd.xlane.f32.xlu0 %v3570
      %v3572 = vpop.xlane.xlu0 %3571
      %v3573 = vadd.f32 %v3552, %v3554
      %3574 = vadd.xlane.f32.xlu0 %v3573
      %v3575 = vpop.xlane.xlu0 %3574
      %v3576 = vadd.f32 %v3559, %v3561
      %3577 = vadd.xlane.f32.xlu0 %v3576
      %v3578 = vpop.xlane.xlu0 %3577
      %v3579 = vadd.f32 %v3566, %v3568
      %3580 = vadd.xlane.f32.xlu0 %v3579
      %v3581 = vpop.xlane.xlu0 %3580
      %v3582 = vsub.f32 %v2872, %v3572
      %v3583 = vsub.f32 %v2873, %v3572
      %v3584 = vsub.f32 %v2874, %v3575
      %v3585 = vsub.f32 %v2875, %v3575
      %v3586 = vsub.f32 %v2876, %v3578
      %v3587 = vsub.f32 %v2877, %v3578
      %v3588 = vsub.f32 %v2878, %v3581
      %v3589 = vsub.f32 %v2879, %v3581
      %v3590 = vmul.f32 %v3582, %v3582
      %v3591 = vmul.f32 %v3583, %v3583
      %v3592 = vmul.f32 %v3584, %v3584
      %v3593 = vmul.f32 %v3585, %v3585
      %v3594 = vmul.f32 %v3586, %v3586
      %v3595 = vmul.f32 %v3587, %v3587
      %v3596 = vmul.f32 %v3588, %v3588
      %v3597 = vmul.f32 %v3589, %v3589
      %3598 = vmatprep.subr.mxu0 0.0
      %3599 = vmatpush1.msra.mxu0 0.0
      %3600 = vmatprep.subr.mxu0 0.0
      %3601 = vmatpush1.msra.mxu0 0.0
      %3602 = vmatprep.subr.mxu0 0.0
      %3603 = vmatpush1.msra.mxu0 0.0
      %3604 = vmatprep.subr.mxu0 0.0
      %3605 = vmatpush1.msra.mxu0 0.0
      %3606 = vmatprep.subr.mxu0 0.0
      %3607 = vmatpush1.msra.mxu0 0.0
      %3608 = vmatprep.subr.mxu0 0.0
      %3609 = vmatpush1.msra.mxu0 0.0
      %3610 = vmatprep.subr.mxu0 0.0
      %3611 = vmatpush1.msra.mxu0 0.0
      %3612 = vmatprep.subr.mxu0 0.0
      %3613 = vmatpush1.msra.mxu0 0.0
      %3614 = vmatprep.subr.mxu0 0.0
      %3615 = vmatpush1.msra.mxu0 0.0
      %3616 = vmatprep.subr.mxu0 0.0
      %3617 = vmatpush1.msra.mxu0 0.0
      %3618 = vmatprep.subr.mxu0 0.0
      %3619 = vmatpush1.msra.mxu0 0.0
      %3620 = vmatprep.subr.mxu0 0.0
      %3621 = vmatpush1.msra.mxu0 0.0
      %v3622 = vand.u32 %v3597, 4294901760
      %3623 = vmatprep.subr.mxu0 %v3622
      %v3624 = vand.u32 %v3596, 4294901760
      %3625 = vmatpush1.msra.mxu0 %v3624
      %v3626 = vand.u32 %v3595, 4294901760
      %3627 = vmatprep.subr.mxu0 %v3626
      %v3628 = vand.u32 %v3594, 4294901760
      %3629 = vmatpush1.msra.mxu0 %v3628
      %v3630 = vand.u32 %v3593, 4294901760
      %3631 = vmatprep.subr.mxu0 %v3630
      %v3632 = vand.u32 %v3592, 4294901760
      %3633 = vmatpush1.msra.mxu0 %v3632
      %v3634 = vand.u32 %v3591, 4294901760
      %3635 = vmatprep.subr.mxu0 %v3634
      %v3636 = vand.u32 %v3590, 4294901760
      %3637 = vmatpush1.msra.mxu0 %v3636
      %3638 = vmatprep.subr.mxu0 0.0
      %3639 = vmatpush2.msra.mxu0 0.0
      %3640 = vmatprep.subr.mxu0 0.0
      %3641 = vmatpush2.msra.mxu0 0.0
      %3642 = vmatprep.subr.mxu0 0.0
      %3643 = vmatpush2.msra.mxu0 0.0
      %3644 = vmatprep.subr.mxu0 0.0
      %3645 = vmatpush2.msra.mxu0 0.0
      %3646 = vmatprep.subr.mxu0 0.0
      %3647 = vmatpush2.msra.mxu0 0.0
      %3648 = vmatprep.subr.mxu0 0.0
      %3649 = vmatpush2.msra.mxu0 0.0
      %3650 = vmatprep.subr.mxu0 0.0
      %3651 = vmatpush2.msra.mxu0 0.0
      %3652 = vmatprep.subr.mxu0 0.0
      %3653 = vmatpush2.msra.mxu0 0.0
      %3654 = vmatprep.subr.mxu0 0.0
      %3655 = vmatpush2.msra.mxu0 0.0
      %3656 = vmatprep.subr.mxu0 0.0
      %3657 = vmatpush2.msra.mxu0 0.0
      %3658 = vmatprep.subr.mxu0 0.0
      %3659 = vmatpush2.msra.mxu0 0.0
      %3660 = vmatprep.subr.mxu0 0.0
      %3661 = vmatpush2.msra.mxu0 0.0
      %3662 = vmatprep.subr.mxu0 0.0
      %3663 = vmatpush2.msra.mxu0 0.0
      %3664 = vmatprep.subr.mxu0 0.0
      %3665 = vmatpush2.msra.mxu0 0.0
      %3666 = vmatprep.subr.mxu0 0.0
      %3667 = vmatpush2.msra.mxu0 0.0
      %3668 = vmatprep.subr.mxu0 0.0
      %3669 = vmatpush2.msra.mxu0 0.0
      %3670 = vmatprep.mubr.f32.mxu0 0.0
      %v3671 = vand.u32 %v846, 4294901760
      %v3672 = vsub.f32 %v846, %v3671
      %v3673 = vand.u32 %v3672, 4294901760
      %v3674 = vsub.f32 %v3672, %v3673
      %v3675 = vand.u32 %v3674, 4294901760
      %3676 = vmatmul.mubr.f32.gmra.mxu0 %v3675
      %v3677 = vpop.f32.mrf.mxu0
      %v3678 = vadd.f32 0.0, %v3677
      %v3679 = vpop.f32.mrf.mxu0
      %v3680 = vadd.f32 0.0, %v3679
      %3681 = vmatprep.mubr.f32.mxu0 0.0
      %v3682 = vand.u32 %v848, 4294901760
      %v3683 = vsub.f32 %v848, %v3682
      %v3684 = vand.u32 %v3683, 4294901760
      %v3685 = vsub.f32 %v3683, %v3684
      %v3686 = vand.u32 %v3685, 4294901760
      %3687 = vmatmul.mubr.f32.gmra.mxu0 %v3686
      %v3688 = vpop.f32.mrf.mxu0
      %v3689 = vadd.f32 0.0, %v3688
      %v3690 = vpop.f32.mrf.mxu0
      %v3691 = vadd.f32 0.0, %v3690
      %3692 = vmatprep.mubr.f32.mxu0 0.0
      %v3693 = vand.u32 %v850, 4294901760
      %v3694 = vsub.f32 %v850, %v3693
      %v3695 = vand.u32 %v3694, 4294901760
      %v3696 = vsub.f32 %v3694, %v3695
      %v3697 = vand.u32 %v3696, 4294901760
      %3698 = vmatmul.mubr.f32.gmra.mxu0 %v3697
      %v3699 = vpop.f32.mrf.mxu0
      %v3700 = vadd.f32 0.0, %v3699
      %v3701 = vpop.f32.mrf.mxu0
      %v3702 = vadd.f32 0.0, %v3701
      %3703 = vmatprep.mubr.f32.mxu0 0.0
      %v3704 = vand.u32 %v852, 4294901760
      %v3705 = vsub.f32 %v852, %v3704
      %v3706 = vand.u32 %v3705, 4294901760
      %v3707 = vsub.f32 %v3705, %v3706
      %v3708 = vand.u32 %v3707, 4294901760
      %3709 = vmatmul.mubr.f32.gmra.mxu0 %v3708
      %v3710 = vpop.f32.mrf.mxu0
      %v3711 = vadd.f32 0.0, %v3710
      %v3712 = vpop.f32.mrf.mxu0
      %v3713 = vadd.f32 0.0, %v3712
      %3714 = vdwg.mxu0
      %3715 = vmatprep.subr.mxu0 0.0
      %3716 = vmatpush1.msra.mxu0 0.0
      %3717 = vmatprep.subr.mxu0 0.0
      %3718 = vmatpush1.msra.mxu0 0.0
      %3719 = vmatprep.subr.mxu0 0.0
      %3720 = vmatpush1.msra.mxu0 0.0
      %3721 = vmatprep.subr.mxu0 0.0
      %3722 = vmatpush1.msra.mxu0 0.0
      %3723 = vmatprep.subr.mxu0 0.0
      %3724 = vmatpush1.msra.mxu0 0.0
      %3725 = vmatprep.subr.mxu0 0.0
      %3726 = vmatpush1.msra.mxu0 0.0
      %3727 = vmatprep.subr.mxu0 0.0
      %3728 = vmatpush1.msra.mxu0 0.0
      %3729 = vmatprep.subr.mxu0 0.0
      %3730 = vmatpush1.msra.mxu0 0.0
      %3731 = vmatprep.subr.mxu0 0.0
      %3732 = vmatpush1.msra.mxu0 0.0
      %3733 = vmatprep.subr.mxu0 0.0
      %3734 = vmatpush1.msra.mxu0 0.0
      %3735 = vmatprep.subr.mxu0 0.0
      %3736 = vmatpush1.msra.mxu0 0.0
      %3737 = vmatprep.subr.mxu0 0.0
      %3738 = vmatpush1.msra.mxu0 0.0
      %v3739 = vand.u32 %v3597, 4294901760
      %v3740 = vsub.f32 %v3597, %v3739
      %v3741 = vand.u32 %v3740, 4294901760
      %v3742 = vsub.f32 %v3740, %v3741
      %v3743 = vand.u32 %v3742, 4294901760
      %3744 = vmatprep.subr.mxu0 %v3743
      %v3745 = vand.u32 %v3596, 4294901760
      %v3746 = vsub.f32 %v3596, %v3745
      %v3747 = vand.u32 %v3746, 4294901760
      %v3748 = vsub.f32 %v3746, %v3747
      %v3749 = vand.u32 %v3748, 4294901760
      %3750 = vmatpush1.msra.mxu0 %v3749
      %v3751 = vand.u32 %v3595, 4294901760
      %v3752 = vsub.f32 %v3595, %v3751
      %v3753 = vand.u32 %v3752, 4294901760
      %v3754 = vsub.f32 %v3752, %v3753
      %v3755 = vand.u32 %v3754, 4294901760
      %3756 = vmatprep.subr.mxu0 %v3755
      %v3757 = vand.u32 %v3594, 4294901760
      %v3758 = vsub.f32 %v3594, %v3757
      %v3759 = vand.u32 %v3758, 4294901760
      %v3760 = vsub.f32 %v3758, %v3759
      %v3761 = vand.u32 %v3760, 4294901760
      %3762 = vmatpush1.msra.mxu0 %v3761
      %v3763 = vand.u32 %v3593, 4294901760
      %v3764 = vsub.f32 %v3593, %v3763
      %v3765 = vand.u32 %v3764, 4294901760
      %v3766 = vsub.f32 %v3764, %v3765
      %v3767 = vand.u32 %v3766, 4294901760
      %3768 = vmatprep.subr.mxu0 %v3767
      %v3769 = vand.u32 %v3592, 4294901760
      %v3770 = vsub.f32 %v3592, %v3769
      %v3771 = vand.u32 %v3770, 4294901760
      %v3772 = vsub.f32 %v3770, %v3771
      %v3773 = vand.u32 %v3772, 4294901760
      %3774 = vmatpush1.msra.mxu0 %v3773
      %v3775 = vand.u32 %v3591, 4294901760
      %v3776 = vsub.f32 %v3591, %v3775
      %v3777 = vand.u32 %v3776, 4294901760
      %v3778 = vsub.f32 %v3776, %v3777
      %v3779 = vand.u32 %v3778, 4294901760
      %3780 = vmatprep.subr.mxu0 %v3779
      %v3781 = vand.u32 %v3590, 4294901760
      %v3782 = vsub.f32 %v3590, %v3781
      %v3783 = vand.u32 %v3782, 4294901760
      %v3784 = vsub.f32 %v3782, %v3783
      %v3785 = vand.u32 %v3784, 4294901760
      %3786 = vmatpush1.msra.mxu0 %v3785
      %3787 = vmatprep.subr.mxu0 0.0
      %3788 = vmatpush2.msra.mxu0 0.0
      %3789 = vmatprep.subr.mxu0 0.0
      %3790 = vmatpush2.msra.mxu0 0.0
      %3791 = vmatprep.subr.mxu0 0.0
      %3792 = vmatpush2.msra.mxu0 0.0
      %3793 = vmatprep.subr.mxu0 0.0
      %3794 = vmatpush2.msra.mxu0 0.0
      %3795 = vmatprep.subr.mxu0 0.0
      %3796 = vmatpush2.msra.mxu0 0.0
      %3797 = vmatprep.subr.mxu0 0.0
      %3798 = vmatpush2.msra.mxu0 0.0
      %3799 = vmatprep.subr.mxu0 0.0
      %3800 = vmatpush2.msra.mxu0 0.0
      %3801 = vmatprep.subr.mxu0 0.0
      %3802 = vmatpush2.msra.mxu0 0.0
      %3803 = vmatprep.subr.mxu0 0.0
      %3804 = vmatpush2.msra.mxu0 0.0
      %3805 = vmatprep.subr.mxu0 0.0
      %3806 = vmatpush2.msra.mxu0 0.0
      %3807 = vmatprep.subr.mxu0 0.0
      %3808 = vmatpush2.msra.mxu0 0.0
      %3809 = vmatprep.subr.mxu0 0.0
      %3810 = vmatpush2.msra.mxu0 0.0
      %3811 = vmatprep.subr.mxu0 0.0
      %3812 = vmatpush2.msra.mxu0 0.0
      %3813 = vmatprep.subr.mxu0 0.0
      %3814 = vmatpush2.msra.mxu0 0.0
      %3815 = vmatprep.subr.mxu0 0.0
      %3816 = vmatpush2.msra.mxu0 0.0
      %3817 = vmatprep.subr.mxu0 0.0
      %3818 = vmatpush2.msra.mxu0 0.0
      %3819 = vmatprep.mubr.f32.mxu0 0.0
      %v3820 = vand.u32 %v846, 4294901760
      %3821 = vmatmul.mubr.f32.gmra.mxu0 %v3820
      %v3822 = vpop.f32.mrf.mxu0
      %v3823 = vadd.f32 %v3678, %v3822
      %v3824 = vpop.f32.mrf.mxu0
      %v3825 = vadd.f32 %v3680, %v3824
      %3826 = vmatprep.mubr.f32.mxu0 0.0
      %v3827 = vand.u32 %v848, 4294901760
      %3828 = vmatmul.mubr.f32.gmra.mxu0 %v3827
      %v3829 = vpop.f32.mrf.mxu0
      %v3830 = vadd.f32 %v3689, %v3829
      %v3831 = vpop.f32.mrf.mxu0
      %v3832 = vadd.f32 %v3691, %v3831
      %3833 = vmatprep.mubr.f32.mxu0 0.0
      %v3834 = vand.u32 %v850, 4294901760
      %3835 = vmatmul.mubr.f32.gmra.mxu0 %v3834
      %v3836 = vpop.f32.mrf.mxu0
      %v3837 = vadd.f32 %v3700, %v3836
      %v3838 = vpop.f32.mrf.mxu0
      %v3839 = vadd.f32 %v3702, %v3838
      %3840 = vmatprep.mubr.f32.mxu0 0.0
      %v3841 = vand.u32 %v852, 4294901760
      %3842 = vmatmul.mubr.f32.gmra.mxu0 %v3841
      %v3843 = vpop.f32.mrf.mxu0
      %v3844 = vadd.f32 %v3711, %v3843
      %v3845 = vpop.f32.mrf.mxu0
      %v3846 = vadd.f32 %v3713, %v3845
      %3847 = vdwg.mxu0
      %3848 = vmatprep.subr.mxu0 0.0
      %3849 = vmatpush1.msra.mxu0 0.0
      %3850 = vmatprep.subr.mxu0 0.0
      %3851 = vmatpush1.msra.mxu0 0.0
      %3852 = vmatprep.subr.mxu0 0.0
      %3853 = vmatpush1.msra.mxu0 0.0
      %3854 = vmatprep.subr.mxu0 0.0
      %3855 = vmatpush1.msra.mxu0 0.0
      %3856 = vmatprep.subr.mxu0 0.0
      %3857 = vmatpush1.msra.mxu0 0.0
      %3858 = vmatprep.subr.mxu0 0.0
      %3859 = vmatpush1.msra.mxu0 0.0
      %3860 = vmatprep.subr.mxu0 0.0
      %3861 = vmatpush1.msra.mxu0 0.0
      %3862 = vmatprep.subr.mxu0 0.0
      %3863 = vmatpush1.msra.mxu0 0.0
      %3864 = vmatprep.subr.mxu0 0.0
      %3865 = vmatpush1.msra.mxu0 0.0
      %3866 = vmatprep.subr.mxu0 0.0
      %3867 = vmatpush1.msra.mxu0 0.0
      %3868 = vmatprep.subr.mxu0 0.0
      %3869 = vmatpush1.msra.mxu0 0.0
      %3870 = vmatprep.subr.mxu0 0.0
      %3871 = vmatpush1.msra.mxu0 0.0
      %v3872 = vand.u32 %v3597, 4294901760
      %v3873 = vsub.f32 %v3597, %v3872
      %3874 = vmatprep.subr.mxu0 %v3873
      %v3875 = vand.u32 %v3596, 4294901760
      %v3876 = vsub.f32 %v3596, %v3875
      %3877 = vmatpush1.msra.mxu0 %v3876
      %v3878 = vand.u32 %v3595, 4294901760
      %v3879 = vsub.f32 %v3595, %v3878
      %3880 = vmatprep.subr.mxu0 %v3879
      %v3881 = vand.u32 %v3594, 4294901760
      %v3882 = vsub.f32 %v3594, %v3881
      %3883 = vmatpush1.msra.mxu0 %v3882
      %v3884 = vand.u32 %v3593, 4294901760
      %v3885 = vsub.f32 %v3593, %v3884
      %3886 = vmatprep.subr.mxu0 %v3885
      %v3887 = vand.u32 %v3592, 4294901760
      %v3888 = vsub.f32 %v3592, %v3887
      %3889 = vmatpush1.msra.mxu0 %v3888
      %v3890 = vand.u32 %v3591, 4294901760
      %v3891 = vsub.f32 %v3591, %v3890
      %3892 = vmatprep.subr.mxu0 %v3891
      %v3893 = vand.u32 %v3590, 4294901760
      %v3894 = vsub.f32 %v3590, %v3893
      %3895 = vmatpush1.msra.mxu0 %v3894
      %3896 = vmatprep.subr.mxu0 0.0
      %3897 = vmatpush2.msra.mxu0 0.0
      %3898 = vmatprep.subr.mxu0 0.0
      %3899 = vmatpush2.msra.mxu0 0.0
      %3900 = vmatprep.subr.mxu0 0.0
      %3901 = vmatpush2.msra.mxu0 0.0
      %3902 = vmatprep.subr.mxu0 0.0
      %3903 = vmatpush2.msra.mxu0 0.0
      %3904 = vmatprep.subr.mxu0 0.0
      %3905 = vmatpush2.msra.mxu0 0.0
      %3906 = vmatprep.subr.mxu0 0.0
      %3907 = vmatpush2.msra.mxu0 0.0
      %3908 = vmatprep.subr.mxu0 0.0
      %3909 = vmatpush2.msra.mxu0 0.0
      %3910 = vmatprep.subr.mxu0 0.0
      %3911 = vmatpush2.msra.mxu0 0.0
      %3912 = vmatprep.subr.mxu0 0.0
      %3913 = vmatpush2.msra.mxu0 0.0
      %3914 = vmatprep.subr.mxu0 0.0
      %3915 = vmatpush2.msra.mxu0 0.0
      %3916 = vmatprep.subr.mxu0 0.0
      %3917 = vmatpush2.msra.mxu0 0.0
      %3918 = vmatprep.subr.mxu0 0.0
      %3919 = vmatpush2.msra.mxu0 0.0
      %3920 = vmatprep.subr.mxu0 0.0
      %3921 = vmatpush2.msra.mxu0 0.0
      %3922 = vmatprep.subr.mxu0 0.0
      %3923 = vmatpush2.msra.mxu0 0.0
      %3924 = vmatprep.subr.mxu0 0.0
      %3925 = vmatpush2.msra.mxu0 0.0
      %3926 = vmatprep.subr.mxu0 0.0
      %3927 = vmatpush2.msra.mxu0 0.0
      %3928 = vmatprep.mubr.f32.mxu0 0.0
      %v3929 = vand.u32 %v846, 4294901760
      %v3930 = vsub.f32 %v846, %v3929
      %3931 = vmatmul.mubr.f32.gmra.mxu0 %v3930
      %v3932 = vpop.f32.mrf.mxu0
      %v3933 = vadd.f32 %v3823, %v3932
      %v3934 = vpop.f32.mrf.mxu0
      %v3935 = vadd.f32 %v3825, %v3934
      %3936 = vmatprep.mubr.f32.mxu0 0.0
      %v3937 = vand.u32 %v848, 4294901760
      %v3938 = vsub.f32 %v848, %v3937
      %3939 = vmatmul.mubr.f32.gmra.mxu0 %v3938
      %v3940 = vpop.f32.mrf.mxu0
      %v3941 = vadd.f32 %v3830, %v3940
      %v3942 = vpop.f32.mrf.mxu0
      %v3943 = vadd.f32 %v3832, %v3942
      %3944 = vmatprep.mubr.f32.mxu0 0.0
      %v3945 = vand.u32 %v850, 4294901760
      %v3946 = vsub.f32 %v850, %v3945
      %3947 = vmatmul.mubr.f32.gmra.mxu0 %v3946
      %v3948 = vpop.f32.mrf.mxu0
      %v3949 = vadd.f32 %v3837, %v3948
      %v3950 = vpop.f32.mrf.mxu0
      %v3951 = vadd.f32 %v3839, %v3950
      %3952 = vmatprep.mubr.f32.mxu0 0.0
      %v3953 = vand.u32 %v852, 4294901760
      %v3954 = vsub.f32 %v852, %v3953
      %3955 = vmatmul.mubr.f32.gmra.mxu0 %v3954
      %v3956 = vpop.f32.mrf.mxu0
      %v3957 = vadd.f32 %v3844, %v3956
      %v3958 = vpop.f32.mrf.mxu0
      %v3959 = vadd.f32 %v3846, %v3958
      %3960 = vdwg.mxu0
      %3961 = vmatprep.subr.mxu0 0.0
      %3962 = vmatpush1.msra.mxu0 0.0
      %3963 = vmatprep.subr.mxu0 0.0
      %3964 = vmatpush1.msra.mxu0 0.0
      %3965 = vmatprep.subr.mxu0 0.0
      %3966 = vmatpush1.msra.mxu0 0.0
      %3967 = vmatprep.subr.mxu0 0.0
      %3968 = vmatpush1.msra.mxu0 0.0
      %3969 = vmatprep.subr.mxu0 0.0
      %3970 = vmatpush1.msra.mxu0 0.0
      %3971 = vmatprep.subr.mxu0 0.0
      %3972 = vmatpush1.msra.mxu0 0.0
      %3973 = vmatprep.subr.mxu0 0.0
      %3974 = vmatpush1.msra.mxu0 0.0
      %3975 = vmatprep.subr.mxu0 0.0
      %3976 = vmatpush1.msra.mxu0 0.0
      %3977 = vmatprep.subr.mxu0 0.0
      %3978 = vmatpush1.msra.mxu0 0.0
      %3979 = vmatprep.subr.mxu0 0.0
      %3980 = vmatpush1.msra.mxu0 0.0
      %3981 = vmatprep.subr.mxu0 0.0
      %3982 = vmatpush1.msra.mxu0 0.0
      %3983 = vmatprep.subr.mxu0 0.0
      %3984 = vmatpush1.msra.mxu0 0.0
      %v3985 = vand.u32 %v3597, 4294901760
      %3986 = vmatprep.subr.mxu0 %v3985
      %v3987 = vand.u32 %v3596, 4294901760
      %3988 = vmatpush1.msra.mxu0 %v3987
      %v3989 = vand.u32 %v3595, 4294901760
      %3990 = vmatprep.subr.mxu0 %v3989
      %v3991 = vand.u32 %v3594, 4294901760
      %3992 = vmatpush1.msra.mxu0 %v3991
      %v3993 = vand.u32 %v3593, 4294901760
      %3994 = vmatprep.subr.mxu0 %v3993
      %v3995 = vand.u32 %v3592, 4294901760
      %3996 = vmatpush1.msra.mxu0 %v3995
      %v3997 = vand.u32 %v3591, 4294901760
      %3998 = vmatprep.subr.mxu0 %v3997
      %v3999 = vand.u32 %v3590, 4294901760
      %4000 = vmatpush1.msra.mxu0 %v3999
      %4001 = vmatprep.subr.mxu0 0.0
      %4002 = vmatpush2.msra.mxu0 0.0
      %4003 = vmatprep.subr.mxu0 0.0
      %4004 = vmatpush2.msra.mxu0 0.0
      %4005 = vmatprep.subr.mxu0 0.0
      %4006 = vmatpush2.msra.mxu0 0.0
      %4007 = vmatprep.subr.mxu0 0.0
      %4008 = vmatpush2.msra.mxu0 0.0
      %4009 = vmatprep.subr.mxu0 0.0
      %4010 = vmatpush2.msra.mxu0 0.0
      %4011 = vmatprep.subr.mxu0 0.0
      %4012 = vmatpush2.msra.mxu0 0.0
      %4013 = vmatprep.subr.mxu0 0.0
      %4014 = vmatpush2.msra.mxu0 0.0
      %4015 = vmatprep.subr.mxu0 0.0
      %4016 = vmatpush2.msra.mxu0 0.0
      %4017 = vmatprep.subr.mxu0 0.0
      %4018 = vmatpush2.msra.mxu0 0.0
      %4019 = vmatprep.subr.mxu0 0.0
      %4020 = vmatpush2.msra.mxu0 0.0
      %4021 = vmatprep.subr.mxu0 0.0
      %4022 = vmatpush2.msra.mxu0 0.0
      %4023 = vmatprep.subr.mxu0 0.0
      %4024 = vmatpush2.msra.mxu0 0.0
      %4025 = vmatprep.subr.mxu0 0.0
      %4026 = vmatpush2.msra.mxu0 0.0
      %4027 = vmatprep.subr.mxu0 0.0
      %4028 = vmatpush2.msra.mxu0 0.0
      %4029 = vmatprep.subr.mxu0 0.0
      %4030 = vmatpush2.msra.mxu0 0.0
      %4031 = vmatprep.subr.mxu0 0.0
      %4032 = vmatpush2.msra.mxu0 0.0
      %4033 = vmatprep.mubr.f32.mxu0 0.0
      %v4034 = vand.u32 %v846, 4294901760
      %v4035 = vsub.f32 %v846, %v4034
      %v4036 = vand.u32 %v4035, 4294901760
      %4037 = vmatmul.mubr.f32.gmra.mxu0 %v4036
      %v4038 = vpop.f32.mrf.mxu0
      %v4039 = vadd.f32 %v3933, %v4038
      %v4040 = vpop.f32.mrf.mxu0
      %v4041 = vadd.f32 %v3935, %v4040
      %4042 = vmatprep.mubr.f32.mxu0 0.0
      %v4043 = vand.u32 %v848, 4294901760
      %v4044 = vsub.f32 %v848, %v4043
      %v4045 = vand.u32 %v4044, 4294901760
      %4046 = vmatmul.mubr.f32.gmra.mxu0 %v4045
      %v4047 = vpop.f32.mrf.mxu0
      %v4048 = vadd.f32 %v3941, %v4047
      %v4049 = vpop.f32.mrf.mxu0
      %v4050 = vadd.f32 %v3943, %v4049
      %4051 = vmatprep.mubr.f32.mxu0 0.0
      %v4052 = vand.u32 %v850, 4294901760
      %v4053 = vsub.f32 %v850, %v4052
      %v4054 = vand.u32 %v4053, 4294901760
      %4055 = vmatmul.mubr.f32.gmra.mxu0 %v4054
      %v4056 = vpop.f32.mrf.mxu0
      %v4057 = vadd.f32 %v3949, %v4056
      %v4058 = vpop.f32.mrf.mxu0
      %v4059 = vadd.f32 %v3951, %v4058
      %4060 = vmatprep.mubr.f32.mxu0 0.0
      %v4061 = vand.u32 %v852, 4294901760
      %v4062 = vsub.f32 %v852, %v4061
      %v4063 = vand.u32 %v4062, 4294901760
      %4064 = vmatmul.mubr.f32.gmra.mxu0 %v4063
      %v4065 = vpop.f32.mrf.mxu0
      %v4066 = vadd.f32 %v3957, %v4065
      %v4067 = vpop.f32.mrf.mxu0
      %v4068 = vadd.f32 %v3959, %v4067
      %4069 = vdwg.mxu0
      %4070 = vmatprep.subr.mxu0 0.0
      %4071 = vmatpush1.msra.mxu0 0.0
      %4072 = vmatprep.subr.mxu0 0.0
      %4073 = vmatpush1.msra.mxu0 0.0
      %4074 = vmatprep.subr.mxu0 0.0
      %4075 = vmatpush1.msra.mxu0 0.0
      %4076 = vmatprep.subr.mxu0 0.0
      %4077 = vmatpush1.msra.mxu0 0.0
      %4078 = vmatprep.subr.mxu0 0.0
      %4079 = vmatpush1.msra.mxu0 0.0
      %4080 = vmatprep.subr.mxu0 0.0
      %4081 = vmatpush1.msra.mxu0 0.0
      %4082 = vmatprep.subr.mxu0 0.0
      %4083 = vmatpush1.msra.mxu0 0.0
      %4084 = vmatprep.subr.mxu0 0.0
      %4085 = vmatpush1.msra.mxu0 0.0
      %4086 = vmatprep.subr.mxu0 0.0
      %4087 = vmatpush1.msra.mxu0 0.0
      %4088 = vmatprep.subr.mxu0 0.0
      %4089 = vmatpush1.msra.mxu0 0.0
      %4090 = vmatprep.subr.mxu0 0.0
      %4091 = vmatpush1.msra.mxu0 0.0
      %4092 = vmatprep.subr.mxu0 0.0
      %4093 = vmatpush1.msra.mxu0 0.0
      %v4094 = vand.u32 %v3597, 4294901760
      %v4095 = vsub.f32 %v3597, %v4094
      %v4096 = vand.u32 %v4095, 4294901760
      %4097 = vmatprep.subr.mxu0 %v4096
      %v4098 = vand.u32 %v3596, 4294901760
      %v4099 = vsub.f32 %v3596, %v4098
      %v4100 = vand.u32 %v4099, 4294901760
      %4101 = vmatpush1.msra.mxu0 %v4100
      %v4102 = vand.u32 %v3595, 4294901760
      %v4103 = vsub.f32 %v3595, %v4102
      %v4104 = vand.u32 %v4103, 4294901760
      %4105 = vmatprep.subr.mxu0 %v4104
      %v4106 = vand.u32 %v3594, 4294901760
      %v4107 = vsub.f32 %v3594, %v4106
      %v4108 = vand.u32 %v4107, 4294901760
      %4109 = vmatpush1.msra.mxu0 %v4108
      %v4110 = vand.u32 %v3593, 4294901760
      %v4111 = vsub.f32 %v3593, %v4110
      %v4112 = vand.u32 %v4111, 4294901760
      %4113 = vmatprep.subr.mxu0 %v4112
      %v4114 = vand.u32 %v3592, 4294901760
      %v4115 = vsub.f32 %v3592, %v4114
      %v4116 = vand.u32 %v4115, 4294901760
      %4117 = vmatpush1.msra.mxu0 %v4116
      %v4118 = vand.u32 %v3591, 4294901760
      %v4119 = vsub.f32 %v3591, %v4118
      %v4120 = vand.u32 %v4119, 4294901760
      %4121 = vmatprep.subr.mxu0 %v4120
      %v4122 = vand.u32 %v3590, 4294901760
      %v4123 = vsub.f32 %v3590, %v4122
      %v4124 = vand.u32 %v4123, 4294901760
      %4125 = vmatpush1.msra.mxu0 %v4124
      %4126 = vmatprep.subr.mxu0 0.0
      %4127 = vmatpush2.msra.mxu0 0.0
      %4128 = vmatprep.subr.mxu0 0.0
      %4129 = vmatpush2.msra.mxu0 0.0
      %4130 = vmatprep.subr.mxu0 0.0
      %4131 = vmatpush2.msra.mxu0 0.0
      %4132 = vmatprep.subr.mxu0 0.0
      %4133 = vmatpush2.msra.mxu0 0.0
      %4134 = vmatprep.subr.mxu0 0.0
      %4135 = vmatpush2.msra.mxu0 0.0
      %4136 = vmatprep.subr.mxu0 0.0
      %4137 = vmatpush2.msra.mxu0 0.0
      %4138 = vmatprep.subr.mxu0 0.0
      %4139 = vmatpush2.msra.mxu0 0.0
      %4140 = vmatprep.subr.mxu0 0.0
      %4141 = vmatpush2.msra.mxu0 0.0
      %4142 = vmatprep.subr.mxu0 0.0
      %4143 = vmatpush2.msra.mxu0 0.0
      %4144 = vmatprep.subr.mxu0 0.0
      %4145 = vmatpush2.msra.mxu0 0.0
      %4146 = vmatprep.subr.mxu0 0.0
      %4147 = vmatpush2.msra.mxu0 0.0
      %4148 = vmatprep.subr.mxu0 0.0
      %4149 = vmatpush2.msra.mxu0 0.0
      %4150 = vmatprep.subr.mxu0 0.0
      %4151 = vmatpush2.msra.mxu0 0.0
      %4152 = vmatprep.subr.mxu0 0.0
      %4153 = vmatpush2.msra.mxu0 0.0
      %4154 = vmatprep.subr.mxu0 0.0
      %4155 = vmatpush2.msra.mxu0 0.0
      %4156 = vmatprep.subr.mxu0 0.0
      %4157 = vmatpush2.msra.mxu0 0.0
      %4158 = vmatprep.mubr.f32.mxu0 0.0
      %v4159 = vand.u32 %v846, 4294901760
      %4160 = vmatmul.mubr.f32.gmra.mxu0 %v4159
      %v4161 = vpop.f32.mrf.mxu0
      %v4162 = vadd.f32 %v4039, %v4161
      %v4163 = vpop.f32.mrf.mxu0
      %v4164 = vadd.f32 %v4041, %v4163
      %4165 = vmatprep.mubr.f32.mxu0 0.0
      %v4166 = vand.u32 %v848, 4294901760
      %4167 = vmatmul.mubr.f32.gmra.mxu0 %v4166
      %v4168 = vpop.f32.mrf.mxu0
      %v4169 = vadd.f32 %v4048, %v4168
      %v4170 = vpop.f32.mrf.mxu0
      %v4171 = vadd.f32 %v4050, %v4170
      %4172 = vmatprep.mubr.f32.mxu0 0.0
      %v4173 = vand.u32 %v850, 4294901760
      %4174 = vmatmul.mubr.f32.gmra.mxu0 %v4173
      %v4175 = vpop.f32.mrf.mxu0
      %v4176 = vadd.f32 %v4057, %v4175
      %v4177 = vpop.f32.mrf.mxu0
      %v4178 = vadd.f32 %v4059, %v4177
      %4179 = vmatprep.mubr.f32.mxu0 0.0
      %v4180 = vand.u32 %v852, 4294901760
      %4181 = vmatmul.mubr.f32.gmra.mxu0 %v4180
      %v4182 = vpop.f32.mrf.mxu0
      %v4183 = vadd.f32 %v4066, %v4182
      %v4184 = vpop.f32.mrf.mxu0
      %v4185 = vadd.f32 %v4068, %v4184
      %4186 = vdwg.mxu0
      %4187 = vmatprep.subr.mxu0 0.0
      %4188 = vmatpush1.msra.mxu0 0.0
      %4189 = vmatprep.subr.mxu0 0.0
      %4190 = vmatpush1.msra.mxu0 0.0
      %4191 = vmatprep.subr.mxu0 0.0
      %4192 = vmatpush1.msra.mxu0 0.0
      %4193 = vmatprep.subr.mxu0 0.0
      %4194 = vmatpush1.msra.mxu0 0.0
      %4195 = vmatprep.subr.mxu0 0.0
      %4196 = vmatpush1.msra.mxu0 0.0
      %4197 = vmatprep.subr.mxu0 0.0
      %4198 = vmatpush1.msra.mxu0 0.0
      %4199 = vmatprep.subr.mxu0 0.0
      %4200 = vmatpush1.msra.mxu0 0.0
      %4201 = vmatprep.subr.mxu0 0.0
      %4202 = vmatpush1.msra.mxu0 0.0
      %4203 = vmatprep.subr.mxu0 0.0
      %4204 = vmatpush1.msra.mxu0 0.0
      %4205 = vmatprep.subr.mxu0 0.0
      %4206 = vmatpush1.msra.mxu0 0.0
      %4207 = vmatprep.subr.mxu0 0.0
      %4208 = vmatpush1.msra.mxu0 0.0
      %4209 = vmatprep.subr.mxu0 0.0
      %4210 = vmatpush1.msra.mxu0 0.0
      %v4211 = vand.u32 %v3597, 4294901760
      %4212 = vmatprep.subr.mxu0 %v4211
      %v4213 = vand.u32 %v3596, 4294901760
      %4214 = vmatpush1.msra.mxu0 %v4213
      %v4215 = vand.u32 %v3595, 4294901760
      %4216 = vmatprep.subr.mxu0 %v4215
      %v4217 = vand.u32 %v3594, 4294901760
      %4218 = vmatpush1.msra.mxu0 %v4217
      %v4219 = vand.u32 %v3593, 4294901760
      %4220 = vmatprep.subr.mxu0 %v4219
      %v4221 = vand.u32 %v3592, 4294901760
      %4222 = vmatpush1.msra.mxu0 %v4221
      %v4223 = vand.u32 %v3591, 4294901760
      %4224 = vmatprep.subr.mxu0 %v4223
      %v4225 = vand.u32 %v3590, 4294901760
      %4226 = vmatpush1.msra.mxu0 %v4225
      %4227 = vmatprep.subr.mxu0 0.0
      %4228 = vmatpush2.msra.mxu0 0.0
      %4229 = vmatprep.subr.mxu0 0.0
      %4230 = vmatpush2.msra.mxu0 0.0
      %4231 = vmatprep.subr.mxu0 0.0
      %4232 = vmatpush2.msra.mxu0 0.0
      %4233 = vmatprep.subr.mxu0 0.0
      %4234 = vmatpush2.msra.mxu0 0.0
      %4235 = vmatprep.subr.mxu0 0.0
      %4236 = vmatpush2.msra.mxu0 0.0
      %4237 = vmatprep.subr.mxu0 0.0
      %4238 = vmatpush2.msra.mxu0 0.0
      %4239 = vmatprep.subr.mxu0 0.0
      %4240 = vmatpush2.msra.mxu0 0.0
      %4241 = vmatprep.subr.mxu0 0.0
      %4242 = vmatpush2.msra.mxu0 0.0
      %4243 = vmatprep.subr.mxu0 0.0
      %4244 = vmatpush2.msra.mxu0 0.0
      %4245 = vmatprep.subr.mxu0 0.0
      %4246 = vmatpush2.msra.mxu0 0.0
      %4247 = vmatprep.subr.mxu0 0.0
      %4248 = vmatpush2.msra.mxu0 0.0
      %4249 = vmatprep.subr.mxu0 0.0
      %4250 = vmatpush2.msra.mxu0 0.0
      %4251 = vmatprep.subr.mxu0 0.0
      %4252 = vmatpush2.msra.mxu0 0.0
      %4253 = vmatprep.subr.mxu0 0.0
      %4254 = vmatpush2.msra.mxu0 0.0
      %4255 = vmatprep.subr.mxu0 0.0
      %4256 = vmatpush2.msra.mxu0 0.0
      %4257 = vmatprep.subr.mxu0 0.0
      %4258 = vmatpush2.msra.mxu0 0.0
      %4259 = vmatprep.mubr.f32.mxu0 0.0
      %v4260 = vand.u32 %v846, 4294901760
      %4261 = vmatmul.mubr.f32.gmra.mxu0 %v4260
      %v4262 = vpop.f32.mrf.mxu0
      %v4263 = vadd.f32 %v4162, %v4262
      %v4264 = vpop.f32.mrf.mxu0
      %v4265 = vadd.f32 %v4164, %v4264
      %4266 = vmatprep.mubr.f32.mxu0 0.0
      %v4267 = vand.u32 %v848, 4294901760
      %4268 = vmatmul.mubr.f32.gmra.mxu0 %v4267
      %v4269 = vpop.f32.mrf.mxu0
      %v4270 = vadd.f32 %v4169, %v4269
      %v4271 = vpop.f32.mrf.mxu0
      %v4272 = vadd.f32 %v4171, %v4271
      %4273 = vmatprep.mubr.f32.mxu0 0.0
      %v4274 = vand.u32 %v850, 4294901760
      %4275 = vmatmul.mubr.f32.gmra.mxu0 %v4274
      %v4276 = vpop.f32.mrf.mxu0
      %v4277 = vadd.f32 %v4176, %v4276
      %v4278 = vpop.f32.mrf.mxu0
      %v4279 = vadd.f32 %v4178, %v4278
      %4280 = vmatprep.mubr.f32.mxu0 0.0
      %v4281 = vand.u32 %v852, 4294901760
      %4282 = vmatmul.mubr.f32.gmra.mxu0 %v4281
      %v4283 = vpop.f32.mrf.mxu0
      %v4284 = vadd.f32 %v4183, %v4283
      %v4285 = vpop.f32.mrf.mxu0
      %v4286 = vadd.f32 %v4185, %v4285
      %4287 = vdwg.mxu0
      %v4288 = vadd.f32 %v4263, %v4265
      %4289 = vadd.xlane.f32.xlu0 %v4288
      %v4290 = vpop.xlane.xlu0 %4289
      %v4291 = vadd.f32 %v4270, %v4272
      %4292 = vadd.xlane.f32.xlu0 %v4291
      %v4293 = vpop.xlane.xlu0 %4292
      %v4294 = vadd.f32 %v4277, %v4279
      %4295 = vadd.xlane.f32.xlu0 %v4294
      %v4296 = vpop.xlane.xlu0 %4295
      %v4297 = vadd.f32 %v4284, %v4286
      %4298 = vadd.xlane.f32.xlu0 %v4297
      %v4299 = vpop.xlane.xlu0 %4298
      %v4300 = vadd.f32 %v4290, 1e-05
      %v4301 = vadd.f32 %v4293, 1e-05
      %v4302 = vadd.f32 %v4296, 1e-05
      %v4303 = vadd.f32 %v4299, 1e-05
      %v4304 = vrsqrt.pop %v4300
      %v4305 = vrsqrt.pop %v4301
      %v4306 = vrsqrt.pop %v4302
      %v4307 = vrsqrt.pop %v4303
      %v4308 = vmul.f32 %v3582, %v4304
      %v4309 = vmul.f32 %v3583, %v4304
      %v4310 = vmul.f32 %v3584, %v4305
      %v4311 = vmul.f32 %v3585, %v4305
      %v4312 = vmul.f32 %v3586, %v4306
      %v4313 = vmul.f32 %v3587, %v4306
      %v4314 = vmul.f32 %v3588, %v4307
      %v4315 = vmul.f32 %v3589, %v4307
      %4316 = vset.pattern.permute.xlu0 6
      %4317 = vperm.xlu0 %4316, %v246
      %v4318 = vpop.permute.xlu0 %4317
      %4320 = vset.pattern.permute.xlu0 6
      %4321 = vperm.xlu0 %4320, %v247
      %v4322 = vpop.permute.xlu0 %4321
      %4324 = vset.pattern.permute.xlu0 6
      %4325 = vperm.xlu0 %4324, %v248
      %v4326 = vpop.permute.xlu0 %4325
      %4328 = vset.pattern.permute.xlu0 6
      %4329 = vperm.xlu0 %4328, %v249
      %v4330 = vpop.permute.xlu0 %4329
      %v4332 = vmul.f32 %v4308, %v4318
      %v4333 = vmul.f32 %v4309, %v4318
      %v4334 = vmul.f32 %v4310, %v4322
      %v4335 = vmul.f32 %v4311, %v4322
      %v4336 = vmul.f32 %v4312, %v4326
      %v4337 = vmul.f32 %v4313, %v4326
      %v4338 = vmul.f32 %v4314, %v4330
      %v4339 = vmul.f32 %v4315, %v4330
      %4340 = vset.pattern.permute.xlu0 7
      %4341 = vperm.xlu0 %4340, %v246
      %v4342 = vpop.permute.xlu0 %4341
      %4344 = vset.pattern.permute.xlu0 7
      %4345 = vperm.xlu0 %4344, %v247
      %v4346 = vpop.permute.xlu0 %4345
      %4348 = vset.pattern.permute.xlu0 7
      %4349 = vperm.xlu0 %4348, %v248
      %v4350 = vpop.permute.xlu0 %4349
      %4352 = vset.pattern.permute.xlu0 7
      %4353 = vperm.xlu0 %4352, %v249
      %v4354 = vpop.permute.xlu0 %4353
      %v4356 = vadd.f32 %v4332, %v4342
      %v4357 = vadd.f32 %v4333, %v4342
      %v4358 = vadd.f32 %v4334, %v4346
      %v4359 = vadd.f32 %v4335, %v4346
      %v4360 = vadd.f32 %v4336, %v4350
      %v4361 = vadd.f32 %v4337, %v4350
      %v4362 = vadd.f32 %v4338, %v4354
      %v4363 = vadd.f32 %v4339, %v4354
      %v4364 = vxor.u32 %v4356, 2147483648
      %v4365 = vxor.u32 %v4357, 2147483648
      %v4366 = vxor.u32 %v4358, 2147483648
      %v4367 = vxor.u32 %v4359, 2147483648
      %v4368 = vxor.u32 %v4360, 2147483648
      %v4369 = vxor.u32 %v4361, 2147483648
      %v4370 = vxor.u32 %v4362, 2147483648
      %v4371 = vxor.u32 %v4363, 2147483648
      %v4372 = vmul.f32 %v4364, 1.442695
      %v4373 = vpow.pop %v4372
      %v4374 = vmul.f32 %v4365, 1.442695
      %v4375 = vpow.pop %v4374
      %v4376 = vmul.f32 %v4366, 1.442695
      %v4377 = vpow.pop %v4376
      %v4378 = vmul.f32 %v4367, 1.442695
      %v4379 = vpow.pop %v4378
      %v4380 = vmul.f32 %v4368, 1.442695
      %v4381 = vpow.pop %v4380
      %v4382 = vmul.f32 %v4369, 1.442695
      %v4383 = vpow.pop %v4382
      %v4384 = vmul.f32 %v4370, 1.442695
      %v4385 = vpow.pop %v4384
      %v4386 = vmul.f32 %v4371, 1.442695
      %v4387 = vpow.pop %v4386
      %v4388 = vadd.f32 %v4373, 1.0
      %v4389 = vadd.f32 %v4375, 1.0
      %v4390 = vadd.f32 %v4377, 1.0
      %v4391 = vadd.f32 %v4379, 1.0
      %v4392 = vadd.f32 %v4381, 1.0
      %v4393 = vadd.f32 %v4383, 1.0
      %v4394 = vadd.f32 %v4385, 1.0
      %v4395 = vadd.f32 %v4387, 1.0
      %v4396 = vrcp.pop %v4388
      %v4397 = vmul.f32 1.0, %v4396
      %v4398 = vrcp.pop %v4389
      %v4399 = vmul.f32 1.0, %v4398
      %v4400 = vrcp.pop %v4390
      %v4401 = vmul.f32 1.0, %v4400
      %v4402 = vrcp.pop %v4391
      %v4403 = vmul.f32 1.0, %v4402
      %v4404 = vrcp.pop %v4392
      %v4405 = vmul.f32 1.0, %v4404
      %v4406 = vrcp.pop %v4393
      %v4407 = vmul.f32 1.0, %v4406
      %v4408 = vrcp.pop %v4394
      %v4409 = vmul.f32 1.0, %v4408
      %v4410 = vrcp.pop %v4395
      %v4411 = vmul.f32 1.0, %v4410
      %v4412 = vmul.f32 %v4356, %v4397
      %v4413 = vmul.f32 %v4357, %v4399
      %v4414 = vmul.f32 %v4358, %v4401
      %v4415 = vmul.f32 %v4359, %v4403
      %v4416 = vmul.f32 %v4360, %v4405
      %v4417 = vmul.f32 %v4361, %v4407
      %v4418 = vmul.f32 %v4362, %v4409
      %v4419 = vmul.f32 %v4363, %v4411
      %4420 = vrot.lane.b32.xlu0 %v4412, 17
      %v4421 = vpop.permute.xlu0 %4420
      %4422 = vrot.lane.b32.xlu0 %v4414, 17
      %v4423 = vpop.permute.xlu0 %4422
      %4424 = vrot.lane.b32.xlu0 %v4416, 17
      %v4425 = vpop.permute.xlu0 %4424
      %4426 = vrot.lane.b32.xlu0 %v4418, 17
      %v4427 = vpop.permute.xlu0 %4426
      %4428 = vrot.lane.b32.xlu0 %v4413, 17
      %v4429 = vpop.permute.xlu0 %4428
      %4430 = vrot.lane.b32.xlu0 %v4415, 17
      %v4431 = vpop.permute.xlu0 %4430
      %4432 = vrot.lane.b32.xlu0 %v4417, 17
      %v4433 = vpop.permute.xlu0 %4432
      %4434 = vrot.lane.b32.xlu0 %v4419, 17
      %v4435 = vpop.permute.xlu0 %4434
      %v4436 = vsel %vm280, %v4421, %v4429
      %v4437 = vsel %vm280, %v4423, %v4431
      %v4438 = vsel %vm280, %v4425, %v4433
      %v4439 = vsel %vm280, %v4427, %v4435
      %v4440 = vsel %vm280, %v4429, %v4421
      %v4441 = vsel %vm280, %v4431, %v4423
      %v4442 = vsel %vm280, %v4433, %v4425
      %v4443 = vsel %vm280, %v4435, %v4427
      %v4444 = vmul.f32 %v4440, %v294
      %v4445 = vmul.f32 %v4436, %v298
      %v4446 = vmul.f32 %v4441, %v294
      %v4447 = vmul.f32 %v4437, %v298
      %v4448 = vmul.f32 %v4442, %v294
      %v4449 = vmul.f32 %v4438, %v298
      %v4450 = vmul.f32 %v4443, %v294
      %v4451 = vmul.f32 %v4439, %v298
      %4452 = vrot.lane.b32.xlu0 %v4412, 16
      %v4453 = vpop.permute.xlu0 %4452
      %4454 = vrot.lane.b32.xlu0 %v4414, 16
      %v4455 = vpop.permute.xlu0 %4454
      %4456 = vrot.lane.b32.xlu0 %v4416, 16
      %v4457 = vpop.permute.xlu0 %4456
      %4458 = vrot.lane.b32.xlu0 %v4418, 16
      %v4459 = vpop.permute.xlu0 %4458
      %4460 = vrot.lane.b32.xlu0 %v4413, 16
      %v4461 = vpop.permute.xlu0 %4460
      %4462 = vrot.lane.b32.xlu0 %v4415, 16
      %v4463 = vpop.permute.xlu0 %4462
      %4464 = vrot.lane.b32.xlu0 %v4417, 16
      %v4465 = vpop.permute.xlu0 %4464
      %4466 = vrot.lane.b32.xlu0 %v4419, 16
      %v4467 = vpop.permute.xlu0 %4466
      %v4468 = vsel %vm325, %v4453, %v4461
      %v4469 = vsel %vm325, %v4455, %v4463
      %v4470 = vsel %vm325, %v4457, %v4465
      %v4471 = vsel %vm325, %v4459, %v4467
      %v4472 = vsel %vm325, %v4461, %v4453
      %v4473 = vsel %vm325, %v4463, %v4455
      %v4474 = vsel %vm325, %v4465, %v4457
      %v4475 = vsel %vm325, %v4467, %v4459
      %v4476 = vmul.f32 %v4472, %v340
      %v4477 = vmul.f32 %v4468, %v344
      %v4478 = vmul.f32 %v4473, %v340
      %v4479 = vmul.f32 %v4469, %v344
      %v4480 = vmul.f32 %v4474, %v340
      %v4481 = vmul.f32 %v4470, %v344
      %v4482 = vmul.f32 %v4475, %v340
      %v4483 = vmul.f32 %v4471, %v344
      %4484 = vrot.lane.b32.xlu0 %v4412, 15
      %v4485 = vpop.permute.xlu0 %4484
      %4486 = vrot.lane.b32.xlu0 %v4414, 15
      %v4487 = vpop.permute.xlu0 %4486
      %4488 = vrot.lane.b32.xlu0 %v4416, 15
      %v4489 = vpop.permute.xlu0 %4488
      %4490 = vrot.lane.b32.xlu0 %v4418, 15
      %v4491 = vpop.permute.xlu0 %4490
      %4492 = vrot.lane.b32.xlu0 %v4413, 15
      %v4493 = vpop.permute.xlu0 %4492
      %4494 = vrot.lane.b32.xlu0 %v4415, 15
      %v4495 = vpop.permute.xlu0 %4494
      %4496 = vrot.lane.b32.xlu0 %v4417, 15
      %v4497 = vpop.permute.xlu0 %4496
      %4498 = vrot.lane.b32.xlu0 %v4419, 15
      %v4499 = vpop.permute.xlu0 %4498
      %v4500 = vsel %vm371, %v4485, %v4493
      %v4501 = vsel %vm371, %v4487, %v4495
      %v4502 = vsel %vm371, %v4489, %v4497
      %v4503 = vsel %vm371, %v4491, %v4499
      %v4504 = vsel %vm371, %v4493, %v4485
      %v4505 = vsel %vm371, %v4495, %v4487
      %v4506 = vsel %vm371, %v4497, %v4489
      %v4507 = vsel %vm371, %v4499, %v4491
      %v4508 = vmul.f32 %v4504, %v386
      %v4509 = vmul.f32 %v4500, %v390
      %v4510 = vmul.f32 %v4505, %v386
      %v4511 = vmul.f32 %v4501, %v390
      %v4512 = vmul.f32 %v4506, %v386
      %v4513 = vmul.f32 %v4502, %v390
      %v4514 = vmul.f32 %v4507, %v386
      %v4515 = vmul.f32 %v4503, %v390
      %4516 = vrot.lane.b32.xlu0 %v4412, 1
      %v4517 = vpop.permute.xlu0 %4516
      %4518 = vrot.lane.b32.xlu0 %v4414, 1
      %v4519 = vpop.permute.xlu0 %4518
      %4520 = vrot.lane.b32.xlu0 %v4416, 1
      %v4521 = vpop.permute.xlu0 %4520
      %4522 = vrot.lane.b32.xlu0 %v4418, 1
      %v4523 = vpop.permute.xlu0 %4522
      %4524 = vrot.lane.b32.xlu0 %v4413, 1
      %v4525 = vpop.permute.xlu0 %4524
      %4526 = vrot.lane.b32.xlu0 %v4415, 1
      %v4527 = vpop.permute.xlu0 %4526
      %4528 = vrot.lane.b32.xlu0 %v4417, 1
      %v4529 = vpop.permute.xlu0 %4528
      %4530 = vrot.lane.b32.xlu0 %v4419, 1
      %v4531 = vpop.permute.xlu0 %4530
      %v4532 = vsel %vm417, %v4517, %v4525
      %v4533 = vsel %vm417, %v4519, %v4527
      %v4534 = vsel %vm417, %v4521, %v4529
      %v4535 = vsel %vm417, %v4523, %v4531
      %v4536 = vsel %vm417, %v4525, %v4517
      %v4537 = vsel %vm417, %v4527, %v4519
      %v4538 = vsel %vm417, %v4529, %v4521
      %v4539 = vsel %vm417, %v4531, %v4523
      %v4540 = vmul.f32 %v4536, %v432
      %v4541 = vmul.f32 %v4532, %v436
      %v4542 = vmul.f32 %v4537, %v432
      %v4543 = vmul.f32 %v4533, %v436
      %v4544 = vmul.f32 %v4538, %v432
      %v4545 = vmul.f32 %v4534, %v436
      %v4546 = vmul.f32 %v4539, %v432
      %v4547 = vmul.f32 %v4535, %v436
      %4548 = vrot.lane.b32.xlu0 %v4412, 127
      %v4549 = vpop.permute.xlu0 %4548
      %4550 = vrot.lane.b32.xlu0 %v4414, 127
      %v4551 = vpop.permute.xlu0 %4550
      %4552 = vrot.lane.b32.xlu0 %v4416, 127
      %v4553 = vpop.permute.xlu0 %4552
      %4554 = vrot.lane.b32.xlu0 %v4418, 127
      %v4555 = vpop.permute.xlu0 %4554
      %4556 = vrot.lane.b32.xlu0 %v4413, 127
      %v4557 = vpop.permute.xlu0 %4556
      %4558 = vrot.lane.b32.xlu0 %v4415, 127
      %v4559 = vpop.permute.xlu0 %4558
      %4560 = vrot.lane.b32.xlu0 %v4417, 127
      %v4561 = vpop.permute.xlu0 %4560
      %4562 = vrot.lane.b32.xlu0 %v4419, 127
      %v4563 = vpop.permute.xlu0 %4562
      %v4564 = vsel %vm463, %v4549, %v4557
      %v4565 = vsel %vm463, %v4551, %v4559
      %v4566 = vsel %vm463, %v4553, %v4561
      %v4567 = vsel %vm463, %v4555, %v4563
      %v4568 = vsel %vm463, %v4557, %v4549
      %v4569 = vsel %vm463, %v4559, %v4551
      %v4570 = vsel %vm463, %v4561, %v4553
      %v4571 = vsel %vm463, %v4563, %v4555
      %v4572 = vmul.f32 %v4564, %v478
      %v4573 = vmul.f32 %v4568, %v482
      %v4574 = vmul.f32 %v4565, %v478
      %v4575 = vmul.f32 %v4569, %v482
      %v4576 = vmul.f32 %v4566, %v478
      %v4577 = vmul.f32 %v4570, %v482
      %v4578 = vmul.f32 %v4567, %v478
      %v4579 = vmul.f32 %v4571, %v482
      %4580 = vrot.lane.b32.xlu0 %v4412, 113
      %v4581 = vpop.permute.xlu0 %4580
      %4582 = vrot.lane.b32.xlu0 %v4414, 113
      %v4583 = vpop.permute.xlu0 %4582
      %4584 = vrot.lane.b32.xlu0 %v4416, 113
      %v4585 = vpop.permute.xlu0 %4584
      %4586 = vrot.lane.b32.xlu0 %v4418, 113
      %v4587 = vpop.permute.xlu0 %4586
      %4588 = vrot.lane.b32.xlu0 %v4413, 113
      %v4589 = vpop.permute.xlu0 %4588
      %4590 = vrot.lane.b32.xlu0 %v4415, 113
      %v4591 = vpop.permute.xlu0 %4590
      %4592 = vrot.lane.b32.xlu0 %v4417, 113
      %v4593 = vpop.permute.xlu0 %4592
      %4594 = vrot.lane.b32.xlu0 %v4419, 113
      %v4595 = vpop.permute.xlu0 %4594
      %v4596 = vsel %vm509, %v4581, %v4589
      %v4597 = vsel %vm509, %v4583, %v4591
      %v4598 = vsel %vm509, %v4585, %v4593
      %v4599 = vsel %vm509, %v4587, %v4595
      %v4600 = vsel %vm509, %v4589, %v4581
      %v4601 = vsel %vm509, %v4591, %v4583
      %v4602 = vsel %vm509, %v4593, %v4585
      %v4603 = vsel %vm509, %v4595, %v4587
      %v4604 = vmul.f32 %v4596, %v524
      %v4605 = vmul.f32 %v4600, %v528
      %v4606 = vmul.f32 %v4597, %v524
      %v4607 = vmul.f32 %v4601, %v528
      %v4608 = vmul.f32 %v4598, %v524
      %v4609 = vmul.f32 %v4602, %v528
      %v4610 = vmul.f32 %v4599, %v524
      %v4611 = vmul.f32 %v4603, %v528
      %4612 = vrot.lane.b32.xlu0 %v4412, 112
      %v4613 = vpop.permute.xlu0 %4612
      %4614 = vrot.lane.b32.xlu0 %v4414, 112
      %v4615 = vpop.permute.xlu0 %4614
      %4616 = vrot.lane.b32.xlu0 %v4416, 112
      %v4617 = vpop.permute.xlu0 %4616
      %4618 = vrot.lane.b32.xlu0 %v4418, 112
      %v4619 = vpop.permute.xlu0 %4618
      %4620 = vrot.lane.b32.xlu0 %v4413, 112
      %v4621 = vpop.permute.xlu0 %4620
      %4622 = vrot.lane.b32.xlu0 %v4415, 112
      %v4623 = vpop.permute.xlu0 %4622
      %4624 = vrot.lane.b32.xlu0 %v4417, 112
      %v4625 = vpop.permute.xlu0 %4624
      %4626 = vrot.lane.b32.xlu0 %v4419, 112
      %v4627 = vpop.permute.xlu0 %4626
      %v4628 = vsel %vm555, %v4613, %v4621
      %v4629 = vsel %vm555, %v4615, %v4623
      %v4630 = vsel %vm555, %v4617, %v4625
      %v4631 = vsel %vm555, %v4619, %v4627
      %v4632 = vsel %vm555, %v4621, %v4613
      %v4633 = vsel %vm555, %v4623, %v4615
      %v4634 = vsel %vm555, %v4625, %v4617
      %v4635 = vsel %vm555, %v4627, %v4619
      %v4636 = vmul.f32 %v4628, %v570
      %v4637 = vmul.f32 %v4632, %v574
      %v4638 = vmul.f32 %v4629, %v570
      %v4639 = vmul.f32 %v4633, %v574
      %v4640 = vmul.f32 %v4630, %v570
      %v4641 = vmul.f32 %v4634, %v574
      %v4642 = vmul.f32 %v4631, %v570
      %v4643 = vmul.f32 %v4635, %v574
      %4644 = vrot.lane.b32.xlu0 %v4412, 111
      %v4645 = vpop.permute.xlu0 %4644
      %4646 = vrot.lane.b32.xlu0 %v4414, 111
      %v4647 = vpop.permute.xlu0 %4646
      %4648 = vrot.lane.b32.xlu0 %v4416, 111
      %v4649 = vpop.permute.xlu0 %4648
      %4650 = vrot.lane.b32.xlu0 %v4418, 111
      %v4651 = vpop.permute.xlu0 %4650
      %4652 = vrot.lane.b32.xlu0 %v4413, 111
      %v4653 = vpop.permute.xlu0 %4652
      %4654 = vrot.lane.b32.xlu0 %v4415, 111
      %v4655 = vpop.permute.xlu0 %4654
      %4656 = vrot.lane.b32.xlu0 %v4417, 111
      %v4657 = vpop.permute.xlu0 %4656
      %4658 = vrot.lane.b32.xlu0 %v4419, 111
      %v4659 = vpop.permute.xlu0 %4658
      %v4660 = vsel %vm601, %v4645, %v4653
      %v4661 = vsel %vm601, %v4647, %v4655
      %v4662 = vsel %vm601, %v4649, %v4657
      %v4663 = vsel %vm601, %v4651, %v4659
      %v4664 = vsel %vm601, %v4653, %v4645
      %v4665 = vsel %vm601, %v4655, %v4647
      %v4666 = vsel %vm601, %v4657, %v4649
      %v4667 = vsel %vm601, %v4659, %v4651
      %v4668 = vmul.f32 %v4660, %v616
      %v4669 = vmul.f32 %v4664, %v620
      %v4670 = vmul.f32 %v4661, %v616
      %v4671 = vmul.f32 %v4665, %v620
      %v4672 = vmul.f32 %v4662, %v616
      %v4673 = vmul.f32 %v4666, %v620
      %v4674 = vmul.f32 %v4663, %v616
      %v4675 = vmul.f32 %v4667, %v620
      %v4676 = vpack.c.bf16 %v4446, %v4444
      %v4677 = vpack.c.bf16 %v4447, %v4445
      %v4678 = vpack.c.bf16 %v4450, %v4448
      %v4679 = vpack.c.bf16 %v4451, %v4449
      %v4680 = vpack.c.bf16 %v4478, %v4476
      %v4681 = vpack.c.bf16 %v4479, %v4477
      %v4682 = vpack.c.bf16 %v4482, %v4480
      %v4683 = vpack.c.bf16 %v4483, %v4481
      %v4684 = vpack.c.bf16 %v4510, %v4508
      %v4685 = vpack.c.bf16 %v4511, %v4509
      %v4686 = vpack.c.bf16 %v4514, %v4512
      %v4687 = vpack.c.bf16 %v4515, %v4513
      %v4688 = vpack.c.bf16 %v4542, %v4540
      %v4689 = vpack.c.bf16 %v4543, %v4541
      %v4690 = vpack.c.bf16 %v4546, %v4544
      %v4691 = vpack.c.bf16 %v4547, %v4545
      %v4692 = vpack.c.bf16 %v4414, %v4412
      %v4693 = vpack.c.bf16 %v4415, %v4413
      %v4694 = vpack.c.bf16 %v4418, %v4416
      %v4695 = vpack.c.bf16 %v4419, %v4417
      %v4696 = vpack.c.bf16 %v4574, %v4572
      %v4697 = vpack.c.bf16 %v4575, %v4573
      %v4698 = vpack.c.bf16 %v4578, %v4576
      %v4699 = vpack.c.bf16 %v4579, %v4577
      %v4700 = vpack.c.bf16 %v4606, %v4604
      %v4701 = vpack.c.bf16 %v4607, %v4605
      %v4702 = vpack.c.bf16 %v4610, %v4608
      %v4703 = vpack.c.bf16 %v4611, %v4609
      %v4704 = vpack.c.bf16 %v4638, %v4636
      %v4705 = vpack.c.bf16 %v4639, %v4637
      %v4706 = vpack.c.bf16 %v4642, %v4640
      %v4707 = vpack.c.bf16 %v4643, %v4641
      %v4708 = vpack.c.bf16 %v4670, %v4668
      %v4709 = vpack.c.bf16 %v4671, %v4669
      %v4710 = vpack.c.bf16 %v4674, %v4672
      %v4711 = vpack.c.bf16 %v4675, %v4673
      %v4712 = vld [vmem:[%s2 + $0x60] sm:$0xff]
      %v4713 = vld [vmem:[%s2 + $0x68] sm:$0xf]
      %v4714 = vld [vmem:[%s2 + $0x6c] sm:$0xff]
      %v4715 = vld [vmem:[%s2 + $0x74] sm:$0xf]
      %v4716 = vld [vmem:[%s2 + $0x78] sm:$0xff]
      %v4717 = vld [vmem:[%s2 + $0x80] sm:$0xf]
      %v4718 = vld [vmem:[%s2 + $0x84] sm:$0xff]
      %v4719 = vld [vmem:[%s2 + $0x8c] sm:$0xf]
      %4720 = vset.pattern.permute.xlu0 2
      %4721 = vperm.xlu0 %4720, %v246
      %v4722 = vpop.permute.xlu0 %4721
      %4724 = vset.pattern.permute.xlu0 2
      %4725 = vperm.xlu0 %4724, %v247
      %v4726 = vpop.permute.xlu0 %4725
      %4728 = vset.pattern.permute.xlu0 2
      %4729 = vperm.xlu0 %4728, %v248
      %v4730 = vpop.permute.xlu0 %4729
      %4732 = vset.pattern.permute.xlu0 2
      %4733 = vperm.xlu0 %4732, %v249
      %v4734 = vpop.permute.xlu0 %4733
      %v4744 = vunpack.c.l.b16 %v4712
      %v4745 = vunpack.c.h.b16 %v4712
      %v4746 = vunpack.c.l.b16 %v4713
      %v4747 = vunpack.c.l.b16 %v4714
      %v4748 = vunpack.c.h.b16 %v4714
      %v4749 = vunpack.c.l.b16 %v4715
      %v4750 = vunpack.c.l.b16 %v4716
      %v4751 = vunpack.c.h.b16 %v4716
      %v4752 = vunpack.c.l.b16 %v4717
      %v4753 = vunpack.c.l.b16 %v4718
      %v4754 = vunpack.c.h.b16 %v4718
      %v4755 = vunpack.c.l.b16 %v4719
      %v4756 = vpack.c.b16 %v4747, %v4744
      %v4757 = vpack.c.b16 %v4748, %v4745
      %v4758 = vpack.c.b16 %v4749, %v4746
      %v4759 = vpack.c.b16 %v4753, %v4750
      %v4760 = vpack.c.b16 %v4754, %v4751
      %v4761 = vpack.c.b16 %v4755, %v4752
      %v4767 = vsel %vm725, %v4758, 0
      %v4770 = vsel %vm725, %v4761, 0
      %4772 = vmatprep.subr.bf16.mxu0 %v4691
      %4773 = vmatpush1.bf16.msra.mxu0 %v4690
      %4774 = vmatprep.subr.bf16.mxu0 %v4689
      %4775 = vmatpush1.bf16.msra.mxu0 %v4688
      %4776 = vmatprep.subr.bf16.mxu0 %v4687
      %4777 = vmatpush1.bf16.msra.mxu0 %v4686
      %4778 = vmatprep.subr.bf16.mxu0 %v4685
      %4779 = vmatpush1.bf16.msra.mxu0 %v4684
      %4780 = vmatprep.subr.bf16.mxu0 %v4683
      %4781 = vmatpush1.bf16.msra.mxu0 %v4682
      %4782 = vmatprep.subr.bf16.mxu0 %v4681
      %4783 = vmatpush1.bf16.msra.mxu0 %v4680
      %4784 = vmatprep.subr.bf16.mxu0 %v4679
      %4785 = vmatpush1.bf16.msra.mxu0 %v4678
      %4786 = vmatprep.subr.bf16.mxu0 %v4677
      %4787 = vmatpush1.bf16.msra.mxu0 %v4676
      %4788 = vmatprep.subr.bf16.mxu0 %v4707
      %4789 = vmatpush2.bf16.msra.mxu0 %v4706
      %4790 = vmatprep.subr.bf16.mxu0 %v4705
      %4791 = vmatpush2.bf16.msra.mxu0 %v4704
      %4792 = vmatprep.subr.bf16.mxu0 %v4703
      %4793 = vmatpush2.bf16.msra.mxu0 %v4702
      %4794 = vmatprep.subr.bf16.mxu0 %v4701
      %4795 = vmatpush2.bf16.msra.mxu0 %v4700
      %4796 = vmatprep.subr.bf16.mxu0 %v4699
      %4797 = vmatpush2.bf16.msra.mxu0 %v4698
      %4798 = vmatprep.subr.bf16.mxu0 %v4697
      %4799 = vmatpush2.bf16.msra.mxu0 %v4696
      %4800 = vmatprep.subr.bf16.mxu0 %v4695
      %4801 = vmatpush2.bf16.msra.mxu0 %v4694
      %4802 = vmatprep.subr.bf16.mxu0 %v4693
      %4803 = vmatpush2.bf16.msra.mxu0 %v4692
      %4804 = vmatprep.mubr.bf16.mxu0 %v4757
      %4805 = vmatmul.mubr.bf16.gmra.mxu0 %v4756
      %v4806 = vpop.f32.mrf.mxu0
      %v4807 = vadd.f32 %v4722, %v4806
      %v4808 = vpop.f32.mrf.mxu0
      %v4809 = vadd.f32 %v4722, %v4808
      %v4810 = vpop.f32.mrf.mxu0
      %v4811 = vadd.f32 %v4726, %v4810
      %v4812 = vpop.f32.mrf.mxu0
      %v4813 = vadd.f32 %v4726, %v4812
      %4814 = vmatprep.mubr.bf16.mxu0 %v4760
      %4815 = vmatmul.mubr.bf16.gmra.mxu0 %v4759
      %v4816 = vpop.f32.mrf.mxu0
      %v4817 = vadd.f32 %v4730, %v4816
      %v4818 = vpop.f32.mrf.mxu0
      %v4819 = vadd.f32 %v4730, %v4818
      %v4820 = vpop.f32.mrf.mxu0
      %v4821 = vadd.f32 %v4734, %v4820
      %v4822 = vpop.f32.mrf.mxu0
      %v4823 = vadd.f32 %v4734, %v4822
      %4824 = vdwg.mxu0
      %4825 = vmatprep.subr.bf16.mxu0 0
      %4826 = vmatpush1.bf16.msra.mxu0 0
      %4827 = vmatprep.subr.bf16.mxu0 0
      %4828 = vmatpush1.bf16.msra.mxu0 0
      %4829 = vmatprep.subr.bf16.mxu0 0
      %4830 = vmatpush1.bf16.msra.mxu0 0
      %4831 = vmatprep.subr.bf16.mxu0 0
      %4832 = vmatpush1.bf16.msra.mxu0 0
      %4833 = vmatprep.subr.bf16.mxu0 0
      %4834 = vmatpush1.bf16.msra.mxu0 0
      %4835 = vmatprep.subr.bf16.mxu0 0
      %4836 = vmatpush1.bf16.msra.mxu0 0
      %4837 = vmatprep.subr.bf16.mxu0 %v4711
      %4838 = vmatpush1.bf16.msra.mxu0 %v4710
      %4839 = vmatprep.subr.bf16.mxu0 %v4709
      %4840 = vmatpush1.bf16.msra.mxu0 %v4708
      %4841 = vmatprep.subr.bf16.mxu0 0
      %4842 = vmatpush2.bf16.msra.mxu0 0
      %4843 = vmatprep.subr.bf16.mxu0 0
      %4844 = vmatpush2.bf16.msra.mxu0 0
      %4845 = vmatprep.subr.bf16.mxu0 0
      %4846 = vmatpush2.bf16.msra.mxu0 0
      %4847 = vmatprep.subr.bf16.mxu0 0
      %4848 = vmatpush2.bf16.msra.mxu0 0
      %4849 = vmatprep.subr.bf16.mxu0 0
      %4850 = vmatpush2.bf16.msra.mxu0 0
      %4851 = vmatprep.subr.bf16.mxu0 0
      %4852 = vmatpush2.bf16.msra.mxu0 0
      %4853 = vmatprep.subr.bf16.mxu0 0
      %4854 = vmatpush2.bf16.msra.mxu0 0
      %4855 = vmatprep.subr.bf16.mxu0 0
      %4856 = vmatpush2.bf16.msra.mxu0 0
      %4857 = vmatprep.mubr.bf16.mxu0 0
      %4858 = vmatmul.mubr.bf16.gmra.mxu0 %v4767
      %v4859 = vpop.f32.mrf.mxu0
      %v4860 = vadd.f32 %v4807, %v4859
      %v4861 = vpop.f32.mrf.mxu0
      %v4862 = vadd.f32 %v4809, %v4861
      %v4863 = vpop.f32.mrf.mxu0
      %v4864 = vadd.f32 %v4811, %v4863
      %v4865 = vpop.f32.mrf.mxu0
      %v4866 = vadd.f32 %v4813, %v4865
      %4867 = vmatprep.mubr.bf16.mxu0 0
      %4868 = vmatmul.mubr.bf16.gmra.mxu0 %v4770
      %v4869 = vpop.f32.mrf.mxu0
      %v4870 = vadd.f32 %v4817, %v4869
      %v4871 = vpop.f32.mrf.mxu0
      %v4872 = vadd.f32 %v4819, %v4871
      %v4873 = vpop.f32.mrf.mxu0
      %v4874 = vadd.f32 %v4821, %v4873
      %v4875 = vpop.f32.mrf.mxu0
      %v4876 = vadd.f32 %v4823, %v4875
      %4877 = vdwg.mxu0
      %v4878 = vadd.f32 %v4860, %v820
      %v4879 = vadd.f32 %v4862, %v822
      %v4880 = vadd.f32 %v4864, %v824
      %v4881 = vadd.f32 %v4866, %v826
      %v4882 = vadd.f32 %v4870, %v830
      %v4883 = vadd.f32 %v4872, %v832
      %v4884 = vadd.f32 %v4874, %v834
      %v4885 = vadd.f32 %v4876, %v836
      %4886 = vset.pattern.permute.xlu0 1
      %4887 = vperm.xlu0 %4886, %v258
      %v4888 = vpop.permute.xlu0 %4887
      %4890 = vset.pattern.permute.xlu0 1
      %4891 = vperm.xlu0 %4890, %v259
      %v4892 = vpop.permute.xlu0 %4891
      %4894 = vset.pattern.permute.xlu0 1
      %4895 = vperm.xlu0 %4894, %v260
      %v4896 = vpop.permute.xlu0 %4895
      %4898 = vset.pattern.permute.xlu0 1
      %4899 = vperm.xlu0 %4898, %v261
      %v4900 = vpop.permute.xlu0 %4899
      %v4902 = vadd.f32 %v4878, %v4888
      %v4903 = vadd.f32 %v4879, %v4888
      %v4904 = vadd.f32 %v4880, %v4892
      %v4905 = vadd.f32 %v4881, %v4892
      %v4906 = vadd.f32 %v4882, %v4896
      %v4907 = vadd.f32 %v4883, %v4896
      %v4908 = vadd.f32 %v4884, %v4900
      %v4909 = vadd.f32 %v4885, %v4900
      %4910 = vmatprep.subr.mxu0 0.0
      %4911 = vmatpush1.msra.mxu0 0.0
      %4912 = vmatprep.subr.mxu0 0.0
      %4913 = vmatpush1.msra.mxu0 0.0
      %4914 = vmatprep.subr.mxu0 0.0
      %4915 = vmatpush1.msra.mxu0 0.0
      %4916 = vmatprep.subr.mxu0 0.0
      %4917 = vmatpush1.msra.mxu0 0.0
      %4918 = vmatprep.subr.mxu0 0.0
      %4919 = vmatpush1.msra.mxu0 0.0
      %4920 = vmatprep.subr.mxu0 0.0
      %4921 = vmatpush1.msra.mxu0 0.0
      %4922 = vmatprep.subr.mxu0 0.0
      %4923 = vmatpush1.msra.mxu0 0.0
      %4924 = vmatprep.subr.mxu0 0.0
      %4925 = vmatpush1.msra.mxu0 0.0
      %4926 = vmatprep.subr.mxu0 0.0
      %4927 = vmatpush1.msra.mxu0 0.0
      %4928 = vmatprep.subr.mxu0 0.0
      %4929 = vmatpush1.msra.mxu0 0.0
      %4930 = vmatprep.subr.mxu0 0.0
      %4931 = vmatpush1.msra.mxu0 0.0
      %4932 = vmatprep.subr.mxu0 0.0
      %4933 = vmatpush1.msra.mxu0 0.0
      %v4934 = vand.u32 %v4909, 4294901760
      %4935 = vmatprep.subr.mxu0 %v4934
      %v4936 = vand.u32 %v4908, 4294901760
      %4937 = vmatpush1.msra.mxu0 %v4936
      %v4938 = vand.u32 %v4907, 4294901760
      %4939 = vmatprep.subr.mxu0 %v4938
      %v4940 = vand.u32 %v4906, 4294901760
      %4941 = vmatpush1.msra.mxu0 %v4940
      %v4942 = vand.u32 %v4905, 4294901760
      %4943 = vmatprep.subr.mxu0 %v4942
      %v4944 = vand.u32 %v4904, 4294901760
      %4945 = vmatpush1.msra.mxu0 %v4944
      %v4946 = vand.u32 %v4903, 4294901760
      %4947 = vmatprep.subr.mxu0 %v4946
      %v4948 = vand.u32 %v4902, 4294901760
      %4949 = vmatpush1.msra.mxu0 %v4948
      %4950 = vmatprep.subr.mxu0 0.0
      %4951 = vmatpush2.msra.mxu0 0.0
      %4952 = vmatprep.subr.mxu0 0.0
      %4953 = vmatpush2.msra.mxu0 0.0
      %4954 = vmatprep.subr.mxu0 0.0
      %4955 = vmatpush2.msra.mxu0 0.0
      %4956 = vmatprep.subr.mxu0 0.0
      %4957 = vmatpush2.msra.mxu0 0.0
      %4958 = vmatprep.subr.mxu0 0.0
      %4959 = vmatpush2.msra.mxu0 0.0
      %4960 = vmatprep.subr.mxu0 0.0
      %4961 = vmatpush2.msra.mxu0 0.0
      %4962 = vmatprep.subr.mxu0 0.0
      %4963 = vmatpush2.msra.mxu0 0.0
      %4964 = vmatprep.subr.mxu0 0.0
      %4965 = vmatpush2.msra.mxu0 0.0
      %4966 = vmatprep.subr.mxu0 0.0
      %4967 = vmatpush2.msra.mxu0 0.0
      %4968 = vmatprep.subr.mxu0 0.0
      %4969 = vmatpush2.msra.mxu0 0.0
      %4970 = vmatprep.subr.mxu0 0.0
      %4971 = vmatpush2.msra.mxu0 0.0
      %4972 = vmatprep.subr.mxu0 0.0
      %4973 = vmatpush2.msra.mxu0 0.0
      %4974 = vmatprep.subr.mxu0 0.0
      %4975 = vmatpush2.msra.mxu0 0.0
      %4976 = vmatprep.subr.mxu0 0.0
      %4977 = vmatpush2.msra.mxu0 0.0
      %4978 = vmatprep.subr.mxu0 0.0
      %4979 = vmatpush2.msra.mxu0 0.0
      %4980 = vmatprep.subr.mxu0 0.0
      %4981 = vmatpush2.msra.mxu0 0.0
      %4982 = vmatprep.mubr.f32.mxu0 0.0
      %v4983 = vand.u32 %v846, 4294901760
      %v4984 = vsub.f32 %v846, %v4983
      %v4985 = vand.u32 %v4984, 4294901760
      %v4986 = vsub.f32 %v4984, %v4985
      %v4987 = vand.u32 %v4986, 4294901760
      %4988 = vmatmul.mubr.f32.gmra.mxu0 %v4987
      %v4989 = vpop.f32.mrf.mxu0
      %v4990 = vadd.f32 0.0, %v4989
      %v4991 = vpop.f32.mrf.mxu0
      %v4992 = vadd.f32 0.0, %v4991
      %4993 = vmatprep.mubr.f32.mxu0 0.0
      %v4994 = vand.u32 %v848, 4294901760
      %v4995 = vsub.f32 %v848, %v4994
      %v4996 = vand.u32 %v4995, 4294901760
      %v4997 = vsub.f32 %v4995, %v4996
      %v4998 = vand.u32 %v4997, 4294901760
      %4999 = vmatmul.mubr.f32.gmra.mxu0 %v4998
      %v5000 = vpop.f32.mrf.mxu0
      %v5001 = vadd.f32 0.0, %v5000
      %v5002 = vpop.f32.mrf.mxu0
      %v5003 = vadd.f32 0.0, %v5002
      %5004 = vmatprep.mubr.f32.mxu0 0.0
      %v5005 = vand.u32 %v850, 4294901760
      %v5006 = vsub.f32 %v850, %v5005
      %v5007 = vand.u32 %v5006, 4294901760
      %v5008 = vsub.f32 %v5006, %v5007
      %v5009 = vand.u32 %v5008, 4294901760
      %5010 = vmatmul.mubr.f32.gmra.mxu0 %v5009
      %v5011 = vpop.f32.mrf.mxu0
      %v5012 = vadd.f32 0.0, %v5011
      %v5013 = vpop.f32.mrf.mxu0
      %v5014 = vadd.f32 0.0, %v5013
      %5015 = vmatprep.mubr.f32.mxu0 0.0
      %v5016 = vand.u32 %v852, 4294901760
      %v5017 = vsub.f32 %v852, %v5016
      %v5018 = vand.u32 %v5017, 4294901760
      %v5019 = vsub.f32 %v5017, %v5018
      %v5020 = vand.u32 %v5019, 4294901760
      %5021 = vmatmul.mubr.f32.gmra.mxu0 %v5020
      %v5022 = vpop.f32.mrf.mxu0
      %v5023 = vadd.f32 0.0, %v5022
      %v5024 = vpop.f32.mrf.mxu0
      %v5025 = vadd.f32 0.0, %v5024
      %5026 = vdwg.mxu0
      %5027 = vmatprep.subr.mxu0 0.0
      %5028 = vmatpush1.msra.mxu0 0.0
      %5029 = vmatprep.subr.mxu0 0.0
      %5030 = vmatpush1.msra.mxu0 0.0
      %5031 = vmatprep.subr.mxu0 0.0
      %5032 = vmatpush1.msra.mxu0 0.0
      %5033 = vmatprep.subr.mxu0 0.0
      %5034 = vmatpush1.msra.mxu0 0.0
      %5035 = vmatprep.subr.mxu0 0.0
      %5036 = vmatpush1.msra.mxu0 0.0
      %5037 = vmatprep.subr.mxu0 0.0
      %5038 = vmatpush1.msra.mxu0 0.0
      %5039 = vmatprep.subr.mxu0 0.0
      %5040 = vmatpush1.msra.mxu0 0.0
      %5041 = vmatprep.subr.mxu0 0.0
      %5042 = vmatpush1.msra.mxu0 0.0
      %5043 = vmatprep.subr.mxu0 0.0
      %5044 = vmatpush1.msra.mxu0 0.0
      %5045 = vmatprep.subr.mxu0 0.0
      %5046 = vmatpush1.msra.mxu0 0.0
      %5047 = vmatprep.subr.mxu0 0.0
      %5048 = vmatpush1.msra.mxu0 0.0
      %5049 = vmatprep.subr.mxu0 0.0
      %5050 = vmatpush1.msra.mxu0 0.0
      %v5051 = vand.u32 %v4909, 4294901760
      %v5052 = vsub.f32 %v4909, %v5051
      %v5053 = vand.u32 %v5052, 4294901760
      %v5054 = vsub.f32 %v5052, %v5053
      %v5055 = vand.u32 %v5054, 4294901760
      %5056 = vmatprep.subr.mxu0 %v5055
      %v5057 = vand.u32 %v4908, 4294901760
      %v5058 = vsub.f32 %v4908, %v5057
      %v5059 = vand.u32 %v5058, 4294901760
      %v5060 = vsub.f32 %v5058, %v5059
      %v5061 = vand.u32 %v5060, 4294901760
      %5062 = vmatpush1.msra.mxu0 %v5061
      %v5063 = vand.u32 %v4907, 4294901760
      %v5064 = vsub.f32 %v4907, %v5063
      %v5065 = vand.u32 %v5064, 4294901760
      %v5066 = vsub.f32 %v5064, %v5065
      %v5067 = vand.u32 %v5066, 4294901760
      %5068 = vmatprep.subr.mxu0 %v5067
      %v5069 = vand.u32 %v4906, 4294901760
      %v5070 = vsub.f32 %v4906, %v5069
      %v5071 = vand.u32 %v5070, 4294901760
      %v5072 = vsub.f32 %v5070, %v5071
      %v5073 = vand.u32 %v5072, 4294901760
      %5074 = vmatpush1.msra.mxu0 %v5073
      %v5075 = vand.u32 %v4905, 4294901760
      %v5076 = vsub.f32 %v4905, %v5075
      %v5077 = vand.u32 %v5076, 4294901760
      %v5078 = vsub.f32 %v5076, %v5077
      %v5079 = vand.u32 %v5078, 4294901760
      %5080 = vmatprep.subr.mxu0 %v5079
      %v5081 = vand.u32 %v4904, 4294901760
      %v5082 = vsub.f32 %v4904, %v5081
      %v5083 = vand.u32 %v5082, 4294901760
      %v5084 = vsub.f32 %v5082, %v5083
      %v5085 = vand.u32 %v5084, 4294901760
      %5086 = vmatpush1.msra.mxu0 %v5085
      %v5087 = vand.u32 %v4903, 4294901760
      %v5088 = vsub.f32 %v4903, %v5087
      %v5089 = vand.u32 %v5088, 4294901760
      %v5090 = vsub.f32 %v5088, %v5089
      %v5091 = vand.u32 %v5090, 4294901760
      %5092 = vmatprep.subr.mxu0 %v5091
      %v5093 = vand.u32 %v4902, 4294901760
      %v5094 = vsub.f32 %v4902, %v5093
      %v5095 = vand.u32 %v5094, 4294901760
      %v5096 = vsub.f32 %v5094, %v5095
      %v5097 = vand.u32 %v5096, 4294901760
      %5098 = vmatpush1.msra.mxu0 %v5097
      %5099 = vmatprep.subr.mxu0 0.0
      %5100 = vmatpush2.msra.mxu0 0.0
      %5101 = vmatprep.subr.mxu0 0.0
      %5102 = vmatpush2.msra.mxu0 0.0
      %5103 = vmatprep.subr.mxu0 0.0
      %5104 = vmatpush2.msra.mxu0 0.0
      %5105 = vmatprep.subr.mxu0 0.0
      %5106 = vmatpush2.msra.mxu0 0.0
      %5107 = vmatprep.subr.mxu0 0.0
      %5108 = vmatpush2.msra.mxu0 0.0
      %5109 = vmatprep.subr.mxu0 0.0
      %5110 = vmatpush2.msra.mxu0 0.0
      %5111 = vmatprep.subr.mxu0 0.0
      %5112 = vmatpush2.msra.mxu0 0.0
      %5113 = vmatprep.subr.mxu0 0.0
      %5114 = vmatpush2.msra.mxu0 0.0
      %5115 = vmatprep.subr.mxu0 0.0
      %5116 = vmatpush2.msra.mxu0 0.0
      %5117 = vmatprep.subr.mxu0 0.0
      %5118 = vmatpush2.msra.mxu0 0.0
      %5119 = vmatprep.subr.mxu0 0.0
      %5120 = vmatpush2.msra.mxu0 0.0
      %5121 = vmatprep.subr.mxu0 0.0
      %5122 = vmatpush2.msra.mxu0 0.0
      %5123 = vmatprep.subr.mxu0 0.0
      %5124 = vmatpush2.msra.mxu0 0.0
      %5125 = vmatprep.subr.mxu0 0.0
      %5126 = vmatpush2.msra.mxu0 0.0
      %5127 = vmatprep.subr.mxu0 0.0
      %5128 = vmatpush2.msra.mxu0 0.0
      %5129 = vmatprep.subr.mxu0 0.0
      %5130 = vmatpush2.msra.mxu0 0.0
      %5131 = vmatprep.mubr.f32.mxu0 0.0
      %v5132 = vand.u32 %v846, 4294901760
      %5133 = vmatmul.mubr.f32.gmra.mxu0 %v5132
      %v5134 = vpop.f32.mrf.mxu0
      %v5135 = vadd.f32 %v4990, %v5134
      %v5136 = vpop.f32.mrf.mxu0
      %v5137 = vadd.f32 %v4992, %v5136
      %5138 = vmatprep.mubr.f32.mxu0 0.0
      %v5139 = vand.u32 %v848, 4294901760
      %5140 = vmatmul.mubr.f32.gmra.mxu0 %v5139
      %v5141 = vpop.f32.mrf.mxu0
      %v5142 = vadd.f32 %v5001, %v5141
      %v5143 = vpop.f32.mrf.mxu0
      %v5144 = vadd.f32 %v5003, %v5143
      %5145 = vmatprep.mubr.f32.mxu0 0.0
      %v5146 = vand.u32 %v850, 4294901760
      %5147 = vmatmul.mubr.f32.gmra.mxu0 %v5146
      %v5148 = vpop.f32.mrf.mxu0
      %v5149 = vadd.f32 %v5012, %v5148
      %v5150 = vpop.f32.mrf.mxu0
      %v5151 = vadd.f32 %v5014, %v5150
      %5152 = vmatprep.mubr.f32.mxu0 0.0
      %v5153 = vand.u32 %v852, 4294901760
      %5154 = vmatmul.mubr.f32.gmra.mxu0 %v5153
      %v5155 = vpop.f32.mrf.mxu0
      %v5156 = vadd.f32 %v5023, %v5155
      %v5157 = vpop.f32.mrf.mxu0
      %v5158 = vadd.f32 %v5025, %v5157
      %5159 = vdwg.mxu0
      %5160 = vmatprep.subr.mxu0 0.0
      %5161 = vmatpush1.msra.mxu0 0.0
      %5162 = vmatprep.subr.mxu0 0.0
      %5163 = vmatpush1.msra.mxu0 0.0
      %5164 = vmatprep.subr.mxu0 0.0
      %5165 = vmatpush1.msra.mxu0 0.0
      %5166 = vmatprep.subr.mxu0 0.0
      %5167 = vmatpush1.msra.mxu0 0.0
      %5168 = vmatprep.subr.mxu0 0.0
      %5169 = vmatpush1.msra.mxu0 0.0
      %5170 = vmatprep.subr.mxu0 0.0
      %5171 = vmatpush1.msra.mxu0 0.0
      %5172 = vmatprep.subr.mxu0 0.0
      %5173 = vmatpush1.msra.mxu0 0.0
      %5174 = vmatprep.subr.mxu0 0.0
      %5175 = vmatpush1.msra.mxu0 0.0
      %5176 = vmatprep.subr.mxu0 0.0
      %5177 = vmatpush1.msra.mxu0 0.0
      %5178 = vmatprep.subr.mxu0 0.0
      %5179 = vmatpush1.msra.mxu0 0.0
      %5180 = vmatprep.subr.mxu0 0.0
      %5181 = vmatpush1.msra.mxu0 0.0
      %5182 = vmatprep.subr.mxu0 0.0
      %5183 = vmatpush1.msra.mxu0 0.0
      %v5184 = vand.u32 %v4909, 4294901760
      %v5185 = vsub.f32 %v4909, %v5184
      %5186 = vmatprep.subr.mxu0 %v5185
      %v5187 = vand.u32 %v4908, 4294901760
      %v5188 = vsub.f32 %v4908, %v5187
      %5189 = vmatpush1.msra.mxu0 %v5188
      %v5190 = vand.u32 %v4907, 4294901760
      %v5191 = vsub.f32 %v4907, %v5190
      %5192 = vmatprep.subr.mxu0 %v5191
      %v5193 = vand.u32 %v4906, 4294901760
      %v5194 = vsub.f32 %v4906, %v5193
      %5195 = vmatpush1.msra.mxu0 %v5194
      %v5196 = vand.u32 %v4905, 4294901760
      %v5197 = vsub.f32 %v4905, %v5196
      %5198 = vmatprep.subr.mxu0 %v5197
      %v5199 = vand.u32 %v4904, 4294901760
      %v5200 = vsub.f32 %v4904, %v5199
      %5201 = vmatpush1.msra.mxu0 %v5200
      %v5202 = vand.u32 %v4903, 4294901760
      %v5203 = vsub.f32 %v4903, %v5202
      %5204 = vmatprep.subr.mxu0 %v5203
      %v5205 = vand.u32 %v4902, 4294901760
      %v5206 = vsub.f32 %v4902, %v5205
      %5207 = vmatpush1.msra.mxu0 %v5206
      %5208 = vmatprep.subr.mxu0 0.0
      %5209 = vmatpush2.msra.mxu0 0.0
      %5210 = vmatprep.subr.mxu0 0.0
      %5211 = vmatpush2.msra.mxu0 0.0
      %5212 = vmatprep.subr.mxu0 0.0
      %5213 = vmatpush2.msra.mxu0 0.0
      %5214 = vmatprep.subr.mxu0 0.0
      %5215 = vmatpush2.msra.mxu0 0.0
      %5216 = vmatprep.subr.mxu0 0.0
      %5217 = vmatpush2.msra.mxu0 0.0
      %5218 = vmatprep.subr.mxu0 0.0
      %5219 = vmatpush2.msra.mxu0 0.0
      %5220 = vmatprep.subr.mxu0 0.0
      %5221 = vmatpush2.msra.mxu0 0.0
      %5222 = vmatprep.subr.mxu0 0.0
      %5223 = vmatpush2.msra.mxu0 0.0
      %5224 = vmatprep.subr.mxu0 0.0
      %5225 = vmatpush2.msra.mxu0 0.0
      %5226 = vmatprep.subr.mxu0 0.0
      %5227 = vmatpush2.msra.mxu0 0.0
      %5228 = vmatprep.subr.mxu0 0.0
      %5229 = vmatpush2.msra.mxu0 0.0
      %5230 = vmatprep.subr.mxu0 0.0
      %5231 = vmatpush2.msra.mxu0 0.0
      %5232 = vmatprep.subr.mxu0 0.0
      %5233 = vmatpush2.msra.mxu0 0.0
      %5234 = vmatprep.subr.mxu0 0.0
      %5235 = vmatpush2.msra.mxu0 0.0
      %5236 = vmatprep.subr.mxu0 0.0
      %5237 = vmatpush2.msra.mxu0 0.0
      %5238 = vmatprep.subr.mxu0 0.0
      %5239 = vmatpush2.msra.mxu0 0.0
      %5240 = vmatprep.mubr.f32.mxu0 0.0
      %v5241 = vand.u32 %v846, 4294901760
      %v5242 = vsub.f32 %v846, %v5241
      %5243 = vmatmul.mubr.f32.gmra.mxu0 %v5242
      %v5244 = vpop.f32.mrf.mxu0
      %v5245 = vadd.f32 %v5135, %v5244
      %v5246 = vpop.f32.mrf.mxu0
      %v5247 = vadd.f32 %v5137, %v5246
      %5248 = vmatprep.mubr.f32.mxu0 0.0
      %v5249 = vand.u32 %v848, 4294901760
      %v5250 = vsub.f32 %v848, %v5249
      %5251 = vmatmul.mubr.f32.gmra.mxu0 %v5250
      %v5252 = vpop.f32.mrf.mxu0
      %v5253 = vadd.f32 %v5142, %v5252
      %v5254 = vpop.f32.mrf.mxu0
      %v5255 = vadd.f32 %v5144, %v5254
      %5256 = vmatprep.mubr.f32.mxu0 0.0
      %v5257 = vand.u32 %v850, 4294901760
      %v5258 = vsub.f32 %v850, %v5257
      %5259 = vmatmul.mubr.f32.gmra.mxu0 %v5258
      %v5260 = vpop.f32.mrf.mxu0
      %v5261 = vadd.f32 %v5149, %v5260
      %v5262 = vpop.f32.mrf.mxu0
      %v5263 = vadd.f32 %v5151, %v5262
      %5264 = vmatprep.mubr.f32.mxu0 0.0
      %v5265 = vand.u32 %v852, 4294901760
      %v5266 = vsub.f32 %v852, %v5265
      %5267 = vmatmul.mubr.f32.gmra.mxu0 %v5266
      %v5268 = vpop.f32.mrf.mxu0
      %v5269 = vadd.f32 %v5156, %v5268
      %v5270 = vpop.f32.mrf.mxu0
      %v5271 = vadd.f32 %v5158, %v5270
      %5272 = vdwg.mxu0
      %5273 = vmatprep.subr.mxu0 0.0
      %5274 = vmatpush1.msra.mxu0 0.0
      %5275 = vmatprep.subr.mxu0 0.0
      %5276 = vmatpush1.msra.mxu0 0.0
      %5277 = vmatprep.subr.mxu0 0.0
      %5278 = vmatpush1.msra.mxu0 0.0
      %5279 = vmatprep.subr.mxu0 0.0
      %5280 = vmatpush1.msra.mxu0 0.0
      %5281 = vmatprep.subr.mxu0 0.0
      %5282 = vmatpush1.msra.mxu0 0.0
      %5283 = vmatprep.subr.mxu0 0.0
      %5284 = vmatpush1.msra.mxu0 0.0
      %5285 = vmatprep.subr.mxu0 0.0
      %5286 = vmatpush1.msra.mxu0 0.0
      %5287 = vmatprep.subr.mxu0 0.0
      %5288 = vmatpush1.msra.mxu0 0.0
      %5289 = vmatprep.subr.mxu0 0.0
      %5290 = vmatpush1.msra.mxu0 0.0
      %5291 = vmatprep.subr.mxu0 0.0
      %5292 = vmatpush1.msra.mxu0 0.0
      %5293 = vmatprep.subr.mxu0 0.0
      %5294 = vmatpush1.msra.mxu0 0.0
      %5295 = vmatprep.subr.mxu0 0.0
      %5296 = vmatpush1.msra.mxu0 0.0
      %v5297 = vand.u32 %v4909, 4294901760
      %5298 = vmatprep.subr.mxu0 %v5297
      %v5299 = vand.u32 %v4908, 4294901760
      %5300 = vmatpush1.msra.mxu0 %v5299
      %v5301 = vand.u32 %v4907, 4294901760
      %5302 = vmatprep.subr.mxu0 %v5301
      %v5303 = vand.u32 %v4906, 4294901760
      %5304 = vmatpush1.msra.mxu0 %v5303
      %v5305 = vand.u32 %v4905, 4294901760
      %5306 = vmatprep.subr.mxu0 %v5305
      %v5307 = vand.u32 %v4904, 4294901760
      %5308 = vmatpush1.msra.mxu0 %v5307
      %v5309 = vand.u32 %v4903, 4294901760
      %5310 = vmatprep.subr.mxu0 %v5309
      %v5311 = vand.u32 %v4902, 4294901760
      %5312 = vmatpush1.msra.mxu0 %v5311
      %5313 = vmatprep.subr.mxu0 0.0
      %5314 = vmatpush2.msra.mxu0 0.0
      %5315 = vmatprep.subr.mxu0 0.0
      %5316 = vmatpush2.msra.mxu0 0.0
      %5317 = vmatprep.subr.mxu0 0.0
      %5318 = vmatpush2.msra.mxu0 0.0
      %5319 = vmatprep.subr.mxu0 0.0
      %5320 = vmatpush2.msra.mxu0 0.0
      %5321 = vmatprep.subr.mxu0 0.0
      %5322 = vmatpush2.msra.mxu0 0.0
      %5323 = vmatprep.subr.mxu0 0.0
      %5324 = vmatpush2.msra.mxu0 0.0
      %5325 = vmatprep.subr.mxu0 0.0
      %5326 = vmatpush2.msra.mxu0 0.0
      %5327 = vmatprep.subr.mxu0 0.0
      %5328 = vmatpush2.msra.mxu0 0.0
      %5329 = vmatprep.subr.mxu0 0.0
      %5330 = vmatpush2.msra.mxu0 0.0
      %5331 = vmatprep.subr.mxu0 0.0
      %5332 = vmatpush2.msra.mxu0 0.0
      %5333 = vmatprep.subr.mxu0 0.0
      %5334 = vmatpush2.msra.mxu0 0.0
      %5335 = vmatprep.subr.mxu0 0.0
      %5336 = vmatpush2.msra.mxu0 0.0
      %5337 = vmatprep.subr.mxu0 0.0
      %5338 = vmatpush2.msra.mxu0 0.0
      %5339 = vmatprep.subr.mxu0 0.0
      %5340 = vmatpush2.msra.mxu0 0.0
      %5341 = vmatprep.subr.mxu0 0.0
      %5342 = vmatpush2.msra.mxu0 0.0
      %5343 = vmatprep.subr.mxu0 0.0
      %5344 = vmatpush2.msra.mxu0 0.0
      %5345 = vmatprep.mubr.f32.mxu0 0.0
      %v5346 = vand.u32 %v846, 4294901760
      %v5347 = vsub.f32 %v846, %v5346
      %v5348 = vand.u32 %v5347, 4294901760
      %5349 = vmatmul.mubr.f32.gmra.mxu0 %v5348
      %v5350 = vpop.f32.mrf.mxu0
      %v5351 = vadd.f32 %v5245, %v5350
      %v5352 = vpop.f32.mrf.mxu0
      %v5353 = vadd.f32 %v5247, %v5352
      %5354 = vmatprep.mubr.f32.mxu0 0.0
      %v5355 = vand.u32 %v848, 4294901760
      %v5356 = vsub.f32 %v848, %v5355
      %v5357 = vand.u32 %v5356, 4294901760
      %5358 = vmatmul.mubr.f32.gmra.mxu0 %v5357
      %v5359 = vpop.f32.mrf.mxu0
      %v5360 = vadd.f32 %v5253, %v5359
      %v5361 = vpop.f32.mrf.mxu0
      %v5362 = vadd.f32 %v5255, %v5361
      %5363 = vmatprep.mubr.f32.mxu0 0.0
      %v5364 = vand.u32 %v850, 4294901760
      %v5365 = vsub.f32 %v850, %v5364
      %v5366 = vand.u32 %v5365, 4294901760
      %5367 = vmatmul.mubr.f32.gmra.mxu0 %v5366
      %v5368 = vpop.f32.mrf.mxu0
      %v5369 = vadd.f32 %v5261, %v5368
      %v5370 = vpop.f32.mrf.mxu0
      %v5371 = vadd.f32 %v5263, %v5370
      %5372 = vmatprep.mubr.f32.mxu0 0.0
      %v5373 = vand.u32 %v852, 4294901760
      %v5374 = vsub.f32 %v852, %v5373
      %v5375 = vand.u32 %v5374, 4294901760
      %5376 = vmatmul.mubr.f32.gmra.mxu0 %v5375
      %v5377 = vpop.f32.mrf.mxu0
      %v5378 = vadd.f32 %v5269, %v5377
      %v5379 = vpop.f32.mrf.mxu0
      %v5380 = vadd.f32 %v5271, %v5379
      %5381 = vdwg.mxu0
      %5382 = vmatprep.subr.mxu0 0.0
      %5383 = vmatpush1.msra.mxu0 0.0
      %5384 = vmatprep.subr.mxu0 0.0
      %5385 = vmatpush1.msra.mxu0 0.0
      %5386 = vmatprep.subr.mxu0 0.0
      %5387 = vmatpush1.msra.mxu0 0.0
      %5388 = vmatprep.subr.mxu0 0.0
      %5389 = vmatpush1.msra.mxu0 0.0
      %5390 = vmatprep.subr.mxu0 0.0
      %5391 = vmatpush1.msra.mxu0 0.0
      %5392 = vmatprep.subr.mxu0 0.0
      %5393 = vmatpush1.msra.mxu0 0.0
      %5394 = vmatprep.subr.mxu0 0.0
      %5395 = vmatpush1.msra.mxu0 0.0
      %5396 = vmatprep.subr.mxu0 0.0
      %5397 = vmatpush1.msra.mxu0 0.0
      %5398 = vmatprep.subr.mxu0 0.0
      %5399 = vmatpush1.msra.mxu0 0.0
      %5400 = vmatprep.subr.mxu0 0.0
      %5401 = vmatpush1.msra.mxu0 0.0
      %5402 = vmatprep.subr.mxu0 0.0
      %5403 = vmatpush1.msra.mxu0 0.0
      %5404 = vmatprep.subr.mxu0 0.0
      %5405 = vmatpush1.msra.mxu0 0.0
      %v5406 = vand.u32 %v4909, 4294901760
      %v5407 = vsub.f32 %v4909, %v5406
      %v5408 = vand.u32 %v5407, 4294901760
      %5409 = vmatprep.subr.mxu0 %v5408
      %v5410 = vand.u32 %v4908, 4294901760
      %v5411 = vsub.f32 %v4908, %v5410
      %v5412 = vand.u32 %v5411, 4294901760
      %5413 = vmatpush1.msra.mxu0 %v5412
      %v5414 = vand.u32 %v4907, 4294901760
      %v5415 = vsub.f32 %v4907, %v5414
      %v5416 = vand.u32 %v5415, 4294901760
      %5417 = vmatprep.subr.mxu0 %v5416
      %v5418 = vand.u32 %v4906, 4294901760
      %v5419 = vsub.f32 %v4906, %v5418
      %v5420 = vand.u32 %v5419, 4294901760
      %5421 = vmatpush1.msra.mxu0 %v5420
      %v5422 = vand.u32 %v4905, 4294901760
      %v5423 = vsub.f32 %v4905, %v5422
      %v5424 = vand.u32 %v5423, 4294901760
      %5425 = vmatprep.subr.mxu0 %v5424
      %v5426 = vand.u32 %v4904, 4294901760
      %v5427 = vsub.f32 %v4904, %v5426
      %v5428 = vand.u32 %v5427, 4294901760
      %5429 = vmatpush1.msra.mxu0 %v5428
      %v5430 = vand.u32 %v4903, 4294901760
      %v5431 = vsub.f32 %v4903, %v5430
      %v5432 = vand.u32 %v5431, 4294901760
      %5433 = vmatprep.subr.mxu0 %v5432
      %v5434 = vand.u32 %v4902, 4294901760
      %v5435 = vsub.f32 %v4902, %v5434
      %v5436 = vand.u32 %v5435, 4294901760
      %5437 = vmatpush1.msra.mxu0 %v5436
      %5438 = vmatprep.subr.mxu0 0.0
      %5439 = vmatpush2.msra.mxu0 0.0
      %5440 = vmatprep.subr.mxu0 0.0
      %5441 = vmatpush2.msra.mxu0 0.0
      %5442 = vmatprep.subr.mxu0 0.0
      %5443 = vmatpush2.msra.mxu0 0.0
      %5444 = vmatprep.subr.mxu0 0.0
      %5445 = vmatpush2.msra.mxu0 0.0
      %5446 = vmatprep.subr.mxu0 0.0
      %5447 = vmatpush2.msra.mxu0 0.0
      %5448 = vmatprep.subr.mxu0 0.0
      %5449 = vmatpush2.msra.mxu0 0.0
      %5450 = vmatprep.subr.mxu0 0.0
      %5451 = vmatpush2.msra.mxu0 0.0
      %5452 = vmatprep.subr.mxu0 0.0
      %5453 = vmatpush2.msra.mxu0 0.0
      %5454 = vmatprep.subr.mxu0 0.0
      %5455 = vmatpush2.msra.mxu0 0.0
      %5456 = vmatprep.subr.mxu0 0.0
      %5457 = vmatpush2.msra.mxu0 0.0
      %5458 = vmatprep.subr.mxu0 0.0
      %5459 = vmatpush2.msra.mxu0 0.0
      %5460 = vmatprep.subr.mxu0 0.0
      %5461 = vmatpush2.msra.mxu0 0.0
      %5462 = vmatprep.subr.mxu0 0.0
      %5463 = vmatpush2.msra.mxu0 0.0
      %5464 = vmatprep.subr.mxu0 0.0
      %5465 = vmatpush2.msra.mxu0 0.0
      %5466 = vmatprep.subr.mxu0 0.0
      %5467 = vmatpush2.msra.mxu0 0.0
      %5468 = vmatprep.subr.mxu0 0.0
      %5469 = vmatpush2.msra.mxu0 0.0
      %5470 = vmatprep.mubr.f32.mxu0 0.0
      %v5471 = vand.u32 %v846, 4294901760
      %5472 = vmatmul.mubr.f32.gmra.mxu0 %v5471
      %v5473 = vpop.f32.mrf.mxu0
      %v5474 = vadd.f32 %v5351, %v5473
      %v5475 = vpop.f32.mrf.mxu0
      %v5476 = vadd.f32 %v5353, %v5475
      %5477 = vmatprep.mubr.f32.mxu0 0.0
      %v5478 = vand.u32 %v848, 4294901760
      %5479 = vmatmul.mubr.f32.gmra.mxu0 %v5478
      %v5480 = vpop.f32.mrf.mxu0
      %v5481 = vadd.f32 %v5360, %v5480
      %v5482 = vpop.f32.mrf.mxu0
      %v5483 = vadd.f32 %v5362, %v5482
      %5484 = vmatprep.mubr.f32.mxu0 0.0
      %v5485 = vand.u32 %v850, 4294901760
      %5486 = vmatmul.mubr.f32.gmra.mxu0 %v5485
      %v5487 = vpop.f32.mrf.mxu0
      %v5488 = vadd.f32 %v5369, %v5487
      %v5489 = vpop.f32.mrf.mxu0
      %v5490 = vadd.f32 %v5371, %v5489
      %5491 = vmatprep.mubr.f32.mxu0 0.0
      %v5492 = vand.u32 %v852, 4294901760
      %5493 = vmatmul.mubr.f32.gmra.mxu0 %v5492
      %v5494 = vpop.f32.mrf.mxu0
      %v5495 = vadd.f32 %v5378, %v5494
      %v5496 = vpop.f32.mrf.mxu0
      %v5497 = vadd.f32 %v5380, %v5496
      %5498 = vdwg.mxu0
      %5499 = vmatprep.subr.mxu0 0.0
      %5500 = vmatpush1.msra.mxu0 0.0
      %5501 = vmatprep.subr.mxu0 0.0
      %5502 = vmatpush1.msra.mxu0 0.0
      %5503 = vmatprep.subr.mxu0 0.0
      %5504 = vmatpush1.msra.mxu0 0.0
      %5505 = vmatprep.subr.mxu0 0.0
      %5506 = vmatpush1.msra.mxu0 0.0
      %5507 = vmatprep.subr.mxu0 0.0
      %5508 = vmatpush1.msra.mxu0 0.0
      %5509 = vmatprep.subr.mxu0 0.0
      %5510 = vmatpush1.msra.mxu0 0.0
      %5511 = vmatprep.subr.mxu0 0.0
      %5512 = vmatpush1.msra.mxu0 0.0
      %5513 = vmatprep.subr.mxu0 0.0
      %5514 = vmatpush1.msra.mxu0 0.0
      %5515 = vmatprep.subr.mxu0 0.0
      %5516 = vmatpush1.msra.mxu0 0.0
      %5517 = vmatprep.subr.mxu0 0.0
      %5518 = vmatpush1.msra.mxu0 0.0
      %5519 = vmatprep.subr.mxu0 0.0
      %5520 = vmatpush1.msra.mxu0 0.0
      %5521 = vmatprep.subr.mxu0 0.0
      %5522 = vmatpush1.msra.mxu0 0.0
      %v5523 = vand.u32 %v4909, 4294901760
      %5524 = vmatprep.subr.mxu0 %v5523
      %v5525 = vand.u32 %v4908, 4294901760
      %5526 = vmatpush1.msra.mxu0 %v5525
      %v5527 = vand.u32 %v4907, 4294901760
      %5528 = vmatprep.subr.mxu0 %v5527
      %v5529 = vand.u32 %v4906, 4294901760
      %5530 = vmatpush1.msra.mxu0 %v5529
      %v5531 = vand.u32 %v4905, 4294901760
      %5532 = vmatprep.subr.mxu0 %v5531
      %v5533 = vand.u32 %v4904, 4294901760
      %5534 = vmatpush1.msra.mxu0 %v5533
      %v5535 = vand.u32 %v4903, 4294901760
      %5536 = vmatprep.subr.mxu0 %v5535
      %v5537 = vand.u32 %v4902, 4294901760
      %5538 = vmatpush1.msra.mxu0 %v5537
      %5539 = vmatprep.subr.mxu0 0.0
      %5540 = vmatpush2.msra.mxu0 0.0
      %5541 = vmatprep.subr.mxu0 0.0
      %5542 = vmatpush2.msra.mxu0 0.0
      %5543 = vmatprep.subr.mxu0 0.0
      %5544 = vmatpush2.msra.mxu0 0.0
      %5545 = vmatprep.subr.mxu0 0.0
      %5546 = vmatpush2.msra.mxu0 0.0
      %5547 = vmatprep.subr.mxu0 0.0
      %5548 = vmatpush2.msra.mxu0 0.0
      %5549 = vmatprep.subr.mxu0 0.0
      %5550 = vmatpush2.msra.mxu0 0.0
      %5551 = vmatprep.subr.mxu0 0.0
      %5552 = vmatpush2.msra.mxu0 0.0
      %5553 = vmatprep.subr.mxu0 0.0
      %5554 = vmatpush2.msra.mxu0 0.0
      %5555 = vmatprep.subr.mxu0 0.0
      %5556 = vmatpush2.msra.mxu0 0.0
      %5557 = vmatprep.subr.mxu0 0.0
      %5558 = vmatpush2.msra.mxu0 0.0
      %5559 = vmatprep.subr.mxu0 0.0
      %5560 = vmatpush2.msra.mxu0 0.0
      %5561 = vmatprep.subr.mxu0 0.0
      %5562 = vmatpush2.msra.mxu0 0.0
      %5563 = vmatprep.subr.mxu0 0.0
      %5564 = vmatpush2.msra.mxu0 0.0
      %5565 = vmatprep.subr.mxu0 0.0
      %5566 = vmatpush2.msra.mxu0 0.0
      %5567 = vmatprep.subr.mxu0 0.0
      %5568 = vmatpush2.msra.mxu0 0.0
      %5569 = vmatprep.subr.mxu0 0.0
      %5570 = vmatpush2.msra.mxu0 0.0
      %5571 = vmatprep.mubr.f32.mxu0 0.0
      %v5572 = vand.u32 %v846, 4294901760
      %5573 = vmatmul.mubr.f32.gmra.mxu0 %v5572
      %v5574 = vpop.f32.mrf.mxu0
      %v5575 = vadd.f32 %v5474, %v5574
      %v5576 = vpop.f32.mrf.mxu0
      %v5577 = vadd.f32 %v5476, %v5576
      %5578 = vmatprep.mubr.f32.mxu0 0.0
      %v5579 = vand.u32 %v848, 4294901760
      %5580 = vmatmul.mubr.f32.gmra.mxu0 %v5579
      %v5581 = vpop.f32.mrf.mxu0
      %v5582 = vadd.f32 %v5481, %v5581
      %v5583 = vpop.f32.mrf.mxu0
      %v5584 = vadd.f32 %v5483, %v5583
      %5585 = vmatprep.mubr.f32.mxu0 0.0
      %v5586 = vand.u32 %v850, 4294901760
      %5587 = vmatmul.mubr.f32.gmra.mxu0 %v5586
      %v5588 = vpop.f32.mrf.mxu0
      %v5589 = vadd.f32 %v5488, %v5588
      %v5590 = vpop.f32.mrf.mxu0
      %v5591 = vadd.f32 %v5490, %v5590
      %5592 = vmatprep.mubr.f32.mxu0 0.0
      %v5593 = vand.u32 %v852, 4294901760
      %5594 = vmatmul.mubr.f32.gmra.mxu0 %v5593
      %v5595 = vpop.f32.mrf.mxu0
      %v5596 = vadd.f32 %v5495, %v5595
      %v5597 = vpop.f32.mrf.mxu0
      %v5598 = vadd.f32 %v5497, %v5597
      %5599 = vdwg.mxu0
      %v5600 = vadd.f32 %v5575, %v5577
      %5601 = vadd.xlane.f32.xlu0 %v5600
      %v5602 = vpop.xlane.xlu0 %5601
      %v5603 = vadd.f32 %v5582, %v5584
      %5604 = vadd.xlane.f32.xlu0 %v5603
      %v5605 = vpop.xlane.xlu0 %5604
      %v5606 = vadd.f32 %v5589, %v5591
      %5607 = vadd.xlane.f32.xlu0 %v5606
      %v5608 = vpop.xlane.xlu0 %5607
      %v5609 = vadd.f32 %v5596, %v5598
      %5610 = vadd.xlane.f32.xlu0 %v5609
      %v5611 = vpop.xlane.xlu0 %5610
      %v5612 = vsub.f32 %v4902, %v5602
      %v5613 = vsub.f32 %v4903, %v5602
      %v5614 = vsub.f32 %v4904, %v5605
      %v5615 = vsub.f32 %v4905, %v5605
      %v5616 = vsub.f32 %v4906, %v5608
      %v5617 = vsub.f32 %v4907, %v5608
      %v5618 = vsub.f32 %v4908, %v5611
      %v5619 = vsub.f32 %v4909, %v5611
      %v5620 = vmul.f32 %v5612, %v5612
      %v5621 = vmul.f32 %v5613, %v5613
      %v5622 = vmul.f32 %v5614, %v5614
      %v5623 = vmul.f32 %v5615, %v5615
      %v5624 = vmul.f32 %v5616, %v5616
      %v5625 = vmul.f32 %v5617, %v5617
      %v5626 = vmul.f32 %v5618, %v5618
      %v5627 = vmul.f32 %v5619, %v5619
      %5628 = vmatprep.subr.mxu0 0.0
      %5629 = vmatpush1.msra.mxu0 0.0
      %5630 = vmatprep.subr.mxu0 0.0
      %5631 = vmatpush1.msra.mxu0 0.0
      %5632 = vmatprep.subr.mxu0 0.0
      %5633 = vmatpush1.msra.mxu0 0.0
      %5634 = vmatprep.subr.mxu0 0.0
      %5635 = vmatpush1.msra.mxu0 0.0
      %5636 = vmatprep.subr.mxu0 0.0
      %5637 = vmatpush1.msra.mxu0 0.0
      %5638 = vmatprep.subr.mxu0 0.0
      %5639 = vmatpush1.msra.mxu0 0.0
      %5640 = vmatprep.subr.mxu0 0.0
      %5641 = vmatpush1.msra.mxu0 0.0
      %5642 = vmatprep.subr.mxu0 0.0
      %5643 = vmatpush1.msra.mxu0 0.0
      %5644 = vmatprep.subr.mxu0 0.0
      %5645 = vmatpush1.msra.mxu0 0.0
      %5646 = vmatprep.subr.mxu0 0.0
      %5647 = vmatpush1.msra.mxu0 0.0
      %5648 = vmatprep.subr.mxu0 0.0
      %5649 = vmatpush1.msra.mxu0 0.0
      %5650 = vmatprep.subr.mxu0 0.0
      %5651 = vmatpush1.msra.mxu0 0.0
      %v5652 = vand.u32 %v5627, 4294901760
      %5653 = vmatprep.subr.mxu0 %v5652
      %v5654 = vand.u32 %v5626, 4294901760
      %5655 = vmatpush1.msra.mxu0 %v5654
      %v5656 = vand.u32 %v5625, 4294901760
      %5657 = vmatprep.subr.mxu0 %v5656
      %v5658 = vand.u32 %v5624, 4294901760
      %5659 = vmatpush1.msra.mxu0 %v5658
      %v5660 = vand.u32 %v5623, 4294901760
      %5661 = vmatprep.subr.mxu0 %v5660
      %v5662 = vand.u32 %v5622, 4294901760
      %5663 = vmatpush1.msra.mxu0 %v5662
      %v5664 = vand.u32 %v5621, 4294901760
      %5665 = vmatprep.subr.mxu0 %v5664
      %v5666 = vand.u32 %v5620, 4294901760
      %5667 = vmatpush1.msra.mxu0 %v5666
      %5668 = vmatprep.subr.mxu0 0.0
      %5669 = vmatpush2.msra.mxu0 0.0
      %5670 = vmatprep.subr.mxu0 0.0
      %5671 = vmatpush2.msra.mxu0 0.0
      %5672 = vmatprep.subr.mxu0 0.0
      %5673 = vmatpush2.msra.mxu0 0.0
      %5674 = vmatprep.subr.mxu0 0.0
      %5675 = vmatpush2.msra.mxu0 0.0
      %5676 = vmatprep.subr.mxu0 0.0
      %5677 = vmatpush2.msra.mxu0 0.0
      %5678 = vmatprep.subr.mxu0 0.0
      %5679 = vmatpush2.msra.mxu0 0.0
      %5680 = vmatprep.subr.mxu0 0.0
      %5681 = vmatpush2.msra.mxu0 0.0
      %5682 = vmatprep.subr.mxu0 0.0
      %5683 = vmatpush2.msra.mxu0 0.0
      %5684 = vmatprep.subr.mxu0 0.0
      %5685 = vmatpush2.msra.mxu0 0.0
      %5686 = vmatprep.subr.mxu0 0.0
      %5687 = vmatpush2.msra.mxu0 0.0
      %5688 = vmatprep.subr.mxu0 0.0
      %5689 = vmatpush2.msra.mxu0 0.0
      %5690 = vmatprep.subr.mxu0 0.0
      %5691 = vmatpush2.msra.mxu0 0.0
      %5692 = vmatprep.subr.mxu0 0.0
      %5693 = vmatpush2.msra.mxu0 0.0
      %5694 = vmatprep.subr.mxu0 0.0
      %5695 = vmatpush2.msra.mxu0 0.0
      %5696 = vmatprep.subr.mxu0 0.0
      %5697 = vmatpush2.msra.mxu0 0.0
      %5698 = vmatprep.subr.mxu0 0.0
      %5699 = vmatpush2.msra.mxu0 0.0
      %5700 = vmatprep.mubr.f32.mxu0 0.0
      %v5701 = vand.u32 %v846, 4294901760
      %v5702 = vsub.f32 %v846, %v5701
      %v5703 = vand.u32 %v5702, 4294901760
      %v5704 = vsub.f32 %v5702, %v5703
      %v5705 = vand.u32 %v5704, 4294901760
      %5706 = vmatmul.mubr.f32.gmra.mxu0 %v5705
      %v5707 = vpop.f32.mrf.mxu0
      %v5708 = vadd.f32 0.0, %v5707
      %v5709 = vpop.f32.mrf.mxu0
      %v5710 = vadd.f32 0.0, %v5709
      %5711 = vmatprep.mubr.f32.mxu0 0.0
      %v5712 = vand.u32 %v848, 4294901760
      %v5713 = vsub.f32 %v848, %v5712
      %v5714 = vand.u32 %v5713, 4294901760
      %v5715 = vsub.f32 %v5713, %v5714
      %v5716 = vand.u32 %v5715, 4294901760
      %5717 = vmatmul.mubr.f32.gmra.mxu0 %v5716
      %v5718 = vpop.f32.mrf.mxu0
      %v5719 = vadd.f32 0.0, %v5718
      %v5720 = vpop.f32.mrf.mxu0
      %v5721 = vadd.f32 0.0, %v5720
      %5722 = vmatprep.mubr.f32.mxu0 0.0
      %v5723 = vand.u32 %v850, 4294901760
      %v5724 = vsub.f32 %v850, %v5723
      %v5725 = vand.u32 %v5724, 4294901760
      %v5726 = vsub.f32 %v5724, %v5725
      %v5727 = vand.u32 %v5726, 4294901760
      %5728 = vmatmul.mubr.f32.gmra.mxu0 %v5727
      %v5729 = vpop.f32.mrf.mxu0
      %v5730 = vadd.f32 0.0, %v5729
      %v5731 = vpop.f32.mrf.mxu0
      %v5732 = vadd.f32 0.0, %v5731
      %5733 = vmatprep.mubr.f32.mxu0 0.0
      %v5734 = vand.u32 %v852, 4294901760
      %v5735 = vsub.f32 %v852, %v5734
      %v5736 = vand.u32 %v5735, 4294901760
      %v5737 = vsub.f32 %v5735, %v5736
      %v5738 = vand.u32 %v5737, 4294901760
      %5739 = vmatmul.mubr.f32.gmra.mxu0 %v5738
      %v5740 = vpop.f32.mrf.mxu0
      %v5741 = vadd.f32 0.0, %v5740
      %v5742 = vpop.f32.mrf.mxu0
      %v5743 = vadd.f32 0.0, %v5742
      %5744 = vdwg.mxu0
      %5745 = vmatprep.subr.mxu0 0.0
      %5746 = vmatpush1.msra.mxu0 0.0
      %5747 = vmatprep.subr.mxu0 0.0
      %5748 = vmatpush1.msra.mxu0 0.0
      %5749 = vmatprep.subr.mxu0 0.0
      %5750 = vmatpush1.msra.mxu0 0.0
      %5751 = vmatprep.subr.mxu0 0.0
      %5752 = vmatpush1.msra.mxu0 0.0
      %5753 = vmatprep.subr.mxu0 0.0
      %5754 = vmatpush1.msra.mxu0 0.0
      %5755 = vmatprep.subr.mxu0 0.0
      %5756 = vmatpush1.msra.mxu0 0.0
      %5757 = vmatprep.subr.mxu0 0.0
      %5758 = vmatpush1.msra.mxu0 0.0
      %5759 = vmatprep.subr.mxu0 0.0
      %5760 = vmatpush1.msra.mxu0 0.0
      %5761 = vmatprep.subr.mxu0 0.0
      %5762 = vmatpush1.msra.mxu0 0.0
      %5763 = vmatprep.subr.mxu0 0.0
      %5764 = vmatpush1.msra.mxu0 0.0
      %5765 = vmatprep.subr.mxu0 0.0
      %5766 = vmatpush1.msra.mxu0 0.0
      %5767 = vmatprep.subr.mxu0 0.0
      %5768 = vmatpush1.msra.mxu0 0.0
      %v5769 = vand.u32 %v5627, 4294901760
      %v5770 = vsub.f32 %v5627, %v5769
      %v5771 = vand.u32 %v5770, 4294901760
      %v5772 = vsub.f32 %v5770, %v5771
      %v5773 = vand.u32 %v5772, 4294901760
      %5774 = vmatprep.subr.mxu0 %v5773
      %v5775 = vand.u32 %v5626, 4294901760
      %v5776 = vsub.f32 %v5626, %v5775
      %v5777 = vand.u32 %v5776, 4294901760
      %v5778 = vsub.f32 %v5776, %v5777
      %v5779 = vand.u32 %v5778, 4294901760
      %5780 = vmatpush1.msra.mxu0 %v5779
      %v5781 = vand.u32 %v5625, 4294901760
      %v5782 = vsub.f32 %v5625, %v5781
      %v5783 = vand.u32 %v5782, 4294901760
      %v5784 = vsub.f32 %v5782, %v5783
      %v5785 = vand.u32 %v5784, 4294901760
      %5786 = vmatprep.subr.mxu0 %v5785
      %v5787 = vand.u32 %v5624, 4294901760
      %v5788 = vsub.f32 %v5624, %v5787
      %v5789 = vand.u32 %v5788, 4294901760
      %v5790 = vsub.f32 %v5788, %v5789
      %v5791 = vand.u32 %v5790, 4294901760
      %5792 = vmatpush1.msra.mxu0 %v5791
      %v5793 = vand.u32 %v5623, 4294901760
      %v5794 = vsub.f32 %v5623, %v5793
      %v5795 = vand.u32 %v5794, 4294901760
      %v5796 = vsub.f32 %v5794, %v5795
      %v5797 = vand.u32 %v5796, 4294901760
      %5798 = vmatprep.subr.mxu0 %v5797
      %v5799 = vand.u32 %v5622, 4294901760
      %v5800 = vsub.f32 %v5622, %v5799
      %v5801 = vand.u32 %v5800, 4294901760
      %v5802 = vsub.f32 %v5800, %v5801
      %v5803 = vand.u32 %v5802, 4294901760
      %5804 = vmatpush1.msra.mxu0 %v5803
      %v5805 = vand.u32 %v5621, 4294901760
      %v5806 = vsub.f32 %v5621, %v5805
      %v5807 = vand.u32 %v5806, 4294901760
      %v5808 = vsub.f32 %v5806, %v5807
      %v5809 = vand.u32 %v5808, 4294901760
      %5810 = vmatprep.subr.mxu0 %v5809
      %v5811 = vand.u32 %v5620, 4294901760
      %v5812 = vsub.f32 %v5620, %v5811
      %v5813 = vand.u32 %v5812, 4294901760
      %v5814 = vsub.f32 %v5812, %v5813
      %v5815 = vand.u32 %v5814, 4294901760
      %5816 = vmatpush1.msra.mxu0 %v5815
      %5817 = vmatprep.subr.mxu0 0.0
      %5818 = vmatpush2.msra.mxu0 0.0
      %5819 = vmatprep.subr.mxu0 0.0
      %5820 = vmatpush2.msra.mxu0 0.0
      %5821 = vmatprep.subr.mxu0 0.0
      %5822 = vmatpush2.msra.mxu0 0.0
      %5823 = vmatprep.subr.mxu0 0.0
      %5824 = vmatpush2.msra.mxu0 0.0
      %5825 = vmatprep.subr.mxu0 0.0
      %5826 = vmatpush2.msra.mxu0 0.0
      %5827 = vmatprep.subr.mxu0 0.0
      %5828 = vmatpush2.msra.mxu0 0.0
      %5829 = vmatprep.subr.mxu0 0.0
      %5830 = vmatpush2.msra.mxu0 0.0
      %5831 = vmatprep.subr.mxu0 0.0
      %5832 = vmatpush2.msra.mxu0 0.0
      %5833 = vmatprep.subr.mxu0 0.0
      %5834 = vmatpush2.msra.mxu0 0.0
      %5835 = vmatprep.subr.mxu0 0.0
      %5836 = vmatpush2.msra.mxu0 0.0
      %5837 = vmatprep.subr.mxu0 0.0
      %5838 = vmatpush2.msra.mxu0 0.0
      %5839 = vmatprep.subr.mxu0 0.0
      %5840 = vmatpush2.msra.mxu0 0.0
      %5841 = vmatprep.subr.mxu0 0.0
      %5842 = vmatpush2.msra.mxu0 0.0
      %5843 = vmatprep.subr.mxu0 0.0
      %5844 = vmatpush2.msra.mxu0 0.0
      %5845 = vmatprep.subr.mxu0 0.0
      %5846 = vmatpush2.msra.mxu0 0.0
      %5847 = vmatprep.subr.mxu0 0.0
      %5848 = vmatpush2.msra.mxu0 0.0
      %5849 = vmatprep.mubr.f32.mxu0 0.0
      %v5850 = vand.u32 %v846, 4294901760
      %5851 = vmatmul.mubr.f32.gmra.mxu0 %v5850
      %v5852 = vpop.f32.mrf.mxu0
      %v5853 = vadd.f32 %v5708, %v5852
      %v5854 = vpop.f32.mrf.mxu0
      %v5855 = vadd.f32 %v5710, %v5854
      %5856 = vmatprep.mubr.f32.mxu0 0.0
      %v5857 = vand.u32 %v848, 4294901760
      %5858 = vmatmul.mubr.f32.gmra.mxu0 %v5857
      %v5859 = vpop.f32.mrf.mxu0
      %v5860 = vadd.f32 %v5719, %v5859
      %v5861 = vpop.f32.mrf.mxu0
      %v5862 = vadd.f32 %v5721, %v5861
      %5863 = vmatprep.mubr.f32.mxu0 0.0
      %v5864 = vand.u32 %v850, 4294901760
      %5865 = vmatmul.mubr.f32.gmra.mxu0 %v5864
      %v5866 = vpop.f32.mrf.mxu0
      %v5867 = vadd.f32 %v5730, %v5866
      %v5868 = vpop.f32.mrf.mxu0
      %v5869 = vadd.f32 %v5732, %v5868
      %5870 = vmatprep.mubr.f32.mxu0 0.0
      %v5871 = vand.u32 %v852, 4294901760
      %5872 = vmatmul.mubr.f32.gmra.mxu0 %v5871
      %v5873 = vpop.f32.mrf.mxu0
      %v5874 = vadd.f32 %v5741, %v5873
      %v5875 = vpop.f32.mrf.mxu0
      %v5876 = vadd.f32 %v5743, %v5875
      %5877 = vdwg.mxu0
      %5878 = vmatprep.subr.mxu0 0.0
      %5879 = vmatpush1.msra.mxu0 0.0
      %5880 = vmatprep.subr.mxu0 0.0
      %5881 = vmatpush1.msra.mxu0 0.0
      %5882 = vmatprep.subr.mxu0 0.0
      %5883 = vmatpush1.msra.mxu0 0.0
      %5884 = vmatprep.subr.mxu0 0.0
      %5885 = vmatpush1.msra.mxu0 0.0
      %5886 = vmatprep.subr.mxu0 0.0
      %5887 = vmatpush1.msra.mxu0 0.0
      %5888 = vmatprep.subr.mxu0 0.0
      %5889 = vmatpush1.msra.mxu0 0.0
      %5890 = vmatprep.subr.mxu0 0.0
      %5891 = vmatpush1.msra.mxu0 0.0
      %5892 = vmatprep.subr.mxu0 0.0
      %5893 = vmatpush1.msra.mxu0 0.0
      %5894 = vmatprep.subr.mxu0 0.0
      %5895 = vmatpush1.msra.mxu0 0.0
      %5896 = vmatprep.subr.mxu0 0.0
      %5897 = vmatpush1.msra.mxu0 0.0
      %5898 = vmatprep.subr.mxu0 0.0
      %5899 = vmatpush1.msra.mxu0 0.0
      %5900 = vmatprep.subr.mxu0 0.0
      %5901 = vmatpush1.msra.mxu0 0.0
      %v5902 = vand.u32 %v5627, 4294901760
      %v5903 = vsub.f32 %v5627, %v5902
      %5904 = vmatprep.subr.mxu0 %v5903
      %v5905 = vand.u32 %v5626, 4294901760
      %v5906 = vsub.f32 %v5626, %v5905
      %5907 = vmatpush1.msra.mxu0 %v5906
      %v5908 = vand.u32 %v5625, 4294901760
      %v5909 = vsub.f32 %v5625, %v5908
      %5910 = vmatprep.subr.mxu0 %v5909
      %v5911 = vand.u32 %v5624, 4294901760
      %v5912 = vsub.f32 %v5624, %v5911
      %5913 = vmatpush1.msra.mxu0 %v5912
      %v5914 = vand.u32 %v5623, 4294901760
      %v5915 = vsub.f32 %v5623, %v5914
      %5916 = vmatprep.subr.mxu0 %v5915
      %v5917 = vand.u32 %v5622, 4294901760
      %v5918 = vsub.f32 %v5622, %v5917
      %5919 = vmatpush1.msra.mxu0 %v5918
      %v5920 = vand.u32 %v5621, 4294901760
      %v5921 = vsub.f32 %v5621, %v5920
      %5922 = vmatprep.subr.mxu0 %v5921
      %v5923 = vand.u32 %v5620, 4294901760
      %v5924 = vsub.f32 %v5620, %v5923
      %5925 = vmatpush1.msra.mxu0 %v5924
      %5926 = vmatprep.subr.mxu0 0.0
      %5927 = vmatpush2.msra.mxu0 0.0
      %5928 = vmatprep.subr.mxu0 0.0
      %5929 = vmatpush2.msra.mxu0 0.0
      %5930 = vmatprep.subr.mxu0 0.0
      %5931 = vmatpush2.msra.mxu0 0.0
      %5932 = vmatprep.subr.mxu0 0.0
      %5933 = vmatpush2.msra.mxu0 0.0
      %5934 = vmatprep.subr.mxu0 0.0
      %5935 = vmatpush2.msra.mxu0 0.0
      %5936 = vmatprep.subr.mxu0 0.0
      %5937 = vmatpush2.msra.mxu0 0.0
      %5938 = vmatprep.subr.mxu0 0.0
      %5939 = vmatpush2.msra.mxu0 0.0
      %5940 = vmatprep.subr.mxu0 0.0
      %5941 = vmatpush2.msra.mxu0 0.0
      %5942 = vmatprep.subr.mxu0 0.0
      %5943 = vmatpush2.msra.mxu0 0.0
      %5944 = vmatprep.subr.mxu0 0.0
      %5945 = vmatpush2.msra.mxu0 0.0
      %5946 = vmatprep.subr.mxu0 0.0
      %5947 = vmatpush2.msra.mxu0 0.0
      %5948 = vmatprep.subr.mxu0 0.0
      %5949 = vmatpush2.msra.mxu0 0.0
      %5950 = vmatprep.subr.mxu0 0.0
      %5951 = vmatpush2.msra.mxu0 0.0
      %5952 = vmatprep.subr.mxu0 0.0
      %5953 = vmatpush2.msra.mxu0 0.0
      %5954 = vmatprep.subr.mxu0 0.0
      %5955 = vmatpush2.msra.mxu0 0.0
      %5956 = vmatprep.subr.mxu0 0.0
      %5957 = vmatpush2.msra.mxu0 0.0
      %5958 = vmatprep.mubr.f32.mxu0 0.0
      %v5959 = vand.u32 %v846, 4294901760
      %v5960 = vsub.f32 %v846, %v5959
      %5961 = vmatmul.mubr.f32.gmra.mxu0 %v5960
      %v5962 = vpop.f32.mrf.mxu0
      %v5963 = vadd.f32 %v5853, %v5962
      %v5964 = vpop.f32.mrf.mxu0
      %v5965 = vadd.f32 %v5855, %v5964
      %5966 = vmatprep.mubr.f32.mxu0 0.0
      %v5967 = vand.u32 %v848, 4294901760
      %v5968 = vsub.f32 %v848, %v5967
      %5969 = vmatmul.mubr.f32.gmra.mxu0 %v5968
      %v5970 = vpop.f32.mrf.mxu0
      %v5971 = vadd.f32 %v5860, %v5970
      %v5972 = vpop.f32.mrf.mxu0
      %v5973 = vadd.f32 %v5862, %v5972
      %5974 = vmatprep.mubr.f32.mxu0 0.0
      %v5975 = vand.u32 %v850, 4294901760
      %v5976 = vsub.f32 %v850, %v5975
      %5977 = vmatmul.mubr.f32.gmra.mxu0 %v5976
      %v5978 = vpop.f32.mrf.mxu0
      %v5979 = vadd.f32 %v5867, %v5978
      %v5980 = vpop.f32.mrf.mxu0
      %v5981 = vadd.f32 %v5869, %v5980
      %5982 = vmatprep.mubr.f32.mxu0 0.0
      %v5983 = vand.u32 %v852, 4294901760
      %v5984 = vsub.f32 %v852, %v5983
      %5985 = vmatmul.mubr.f32.gmra.mxu0 %v5984
      %v5986 = vpop.f32.mrf.mxu0
      %v5987 = vadd.f32 %v5874, %v5986
      %v5988 = vpop.f32.mrf.mxu0
      %v5989 = vadd.f32 %v5876, %v5988
      %5990 = vdwg.mxu0
      %5991 = vmatprep.subr.mxu0 0.0
      %5992 = vmatpush1.msra.mxu0 0.0
      %5993 = vmatprep.subr.mxu0 0.0
      %5994 = vmatpush1.msra.mxu0 0.0
      %5995 = vmatprep.subr.mxu0 0.0
      %5996 = vmatpush1.msra.mxu0 0.0
      %5997 = vmatprep.subr.mxu0 0.0
      %5998 = vmatpush1.msra.mxu0 0.0
      %5999 = vmatprep.subr.mxu0 0.0
      %6000 = vmatpush1.msra.mxu0 0.0
      %6001 = vmatprep.subr.mxu0 0.0
      %6002 = vmatpush1.msra.mxu0 0.0
      %6003 = vmatprep.subr.mxu0 0.0
      %6004 = vmatpush1.msra.mxu0 0.0
      %6005 = vmatprep.subr.mxu0 0.0
      %6006 = vmatpush1.msra.mxu0 0.0
      %6007 = vmatprep.subr.mxu0 0.0
      %6008 = vmatpush1.msra.mxu0 0.0
      %6009 = vmatprep.subr.mxu0 0.0
      %6010 = vmatpush1.msra.mxu0 0.0
      %6011 = vmatprep.subr.mxu0 0.0
      %6012 = vmatpush1.msra.mxu0 0.0
      %6013 = vmatprep.subr.mxu0 0.0
      %6014 = vmatpush1.msra.mxu0 0.0
      %v6015 = vand.u32 %v5627, 4294901760
      %6016 = vmatprep.subr.mxu0 %v6015
      %v6017 = vand.u32 %v5626, 4294901760
      %6018 = vmatpush1.msra.mxu0 %v6017
      %v6019 = vand.u32 %v5625, 4294901760
      %6020 = vmatprep.subr.mxu0 %v6019
      %v6021 = vand.u32 %v5624, 4294901760
      %6022 = vmatpush1.msra.mxu0 %v6021
      %v6023 = vand.u32 %v5623, 4294901760
      %6024 = vmatprep.subr.mxu0 %v6023
      %v6025 = vand.u32 %v5622, 4294901760
      %6026 = vmatpush1.msra.mxu0 %v6025
      %v6027 = vand.u32 %v5621, 4294901760
      %6028 = vmatprep.subr.mxu0 %v6027
      %v6029 = vand.u32 %v5620, 4294901760
      %6030 = vmatpush1.msra.mxu0 %v6029
      %6031 = vmatprep.subr.mxu0 0.0
      %6032 = vmatpush2.msra.mxu0 0.0
      %6033 = vmatprep.subr.mxu0 0.0
      %6034 = vmatpush2.msra.mxu0 0.0
      %6035 = vmatprep.subr.mxu0 0.0
      %6036 = vmatpush2.msra.mxu0 0.0
      %6037 = vmatprep.subr.mxu0 0.0
      %6038 = vmatpush2.msra.mxu0 0.0
      %6039 = vmatprep.subr.mxu0 0.0
      %6040 = vmatpush2.msra.mxu0 0.0
      %6041 = vmatprep.subr.mxu0 0.0
      %6042 = vmatpush2.msra.mxu0 0.0
      %6043 = vmatprep.subr.mxu0 0.0
      %6044 = vmatpush2.msra.mxu0 0.0
      %6045 = vmatprep.subr.mxu0 0.0
      %6046 = vmatpush2.msra.mxu0 0.0
      %6047 = vmatprep.subr.mxu0 0.0
      %6048 = vmatpush2.msra.mxu0 0.0
      %6049 = vmatprep.subr.mxu0 0.0
      %6050 = vmatpush2.msra.mxu0 0.0
      %6051 = vmatprep.subr.mxu0 0.0
      %6052 = vmatpush2.msra.mxu0 0.0
      %6053 = vmatprep.subr.mxu0 0.0
      %6054 = vmatpush2.msra.mxu0 0.0
      %6055 = vmatprep.subr.mxu0 0.0
      %6056 = vmatpush2.msra.mxu0 0.0
      %6057 = vmatprep.subr.mxu0 0.0
      %6058 = vmatpush2.msra.mxu0 0.0
      %6059 = vmatprep.subr.mxu0 0.0
      %6060 = vmatpush2.msra.mxu0 0.0
      %6061 = vmatprep.subr.mxu0 0.0
      %6062 = vmatpush2.msra.mxu0 0.0
      %6063 = vmatprep.mubr.f32.mxu0 0.0
      %v6064 = vand.u32 %v846, 4294901760
      %v6065 = vsub.f32 %v846, %v6064
      %v6066 = vand.u32 %v6065, 4294901760
      %6067 = vmatmul.mubr.f32.gmra.mxu0 %v6066
      %v6068 = vpop.f32.mrf.mxu0
      %v6069 = vadd.f32 %v5963, %v6068
      %v6070 = vpop.f32.mrf.mxu0
      %v6071 = vadd.f32 %v5965, %v6070
      %6072 = vmatprep.mubr.f32.mxu0 0.0
      %v6073 = vand.u32 %v848, 4294901760
      %v6074 = vsub.f32 %v848, %v6073
      %v6075 = vand.u32 %v6074, 4294901760
      %6076 = vmatmul.mubr.f32.gmra.mxu0 %v6075
      %v6077 = vpop.f32.mrf.mxu0
      %v6078 = vadd.f32 %v5971, %v6077
      %v6079 = vpop.f32.mrf.mxu0
      %v6080 = vadd.f32 %v5973, %v6079
      %6081 = vmatprep.mubr.f32.mxu0 0.0
      %v6082 = vand.u32 %v850, 4294901760
      %v6083 = vsub.f32 %v850, %v6082
      %v6084 = vand.u32 %v6083, 4294901760
      %6085 = vmatmul.mubr.f32.gmra.mxu0 %v6084
      %v6086 = vpop.f32.mrf.mxu0
      %v6087 = vadd.f32 %v5979, %v6086
      %v6088 = vpop.f32.mrf.mxu0
      %v6089 = vadd.f32 %v5981, %v6088
      %6090 = vmatprep.mubr.f32.mxu0 0.0
      %v6091 = vand.u32 %v852, 4294901760
      %v6092 = vsub.f32 %v852, %v6091
      %v6093 = vand.u32 %v6092, 4294901760
      %6094 = vmatmul.mubr.f32.gmra.mxu0 %v6093
      %v6095 = vpop.f32.mrf.mxu0
      %v6096 = vadd.f32 %v5987, %v6095
      %v6097 = vpop.f32.mrf.mxu0
      %v6098 = vadd.f32 %v5989, %v6097
      %6099 = vdwg.mxu0
      %6100 = vmatprep.subr.mxu0 0.0
      %6101 = vmatpush1.msra.mxu0 0.0
      %6102 = vmatprep.subr.mxu0 0.0
      %6103 = vmatpush1.msra.mxu0 0.0
      %6104 = vmatprep.subr.mxu0 0.0
      %6105 = vmatpush1.msra.mxu0 0.0
      %6106 = vmatprep.subr.mxu0 0.0
      %6107 = vmatpush1.msra.mxu0 0.0
      %6108 = vmatprep.subr.mxu0 0.0
      %6109 = vmatpush1.msra.mxu0 0.0
      %6110 = vmatprep.subr.mxu0 0.0
      %6111 = vmatpush1.msra.mxu0 0.0
      %6112 = vmatprep.subr.mxu0 0.0
      %6113 = vmatpush1.msra.mxu0 0.0
      %6114 = vmatprep.subr.mxu0 0.0
      %6115 = vmatpush1.msra.mxu0 0.0
      %6116 = vmatprep.subr.mxu0 0.0
      %6117 = vmatpush1.msra.mxu0 0.0
      %6118 = vmatprep.subr.mxu0 0.0
      %6119 = vmatpush1.msra.mxu0 0.0
      %6120 = vmatprep.subr.mxu0 0.0
      %6121 = vmatpush1.msra.mxu0 0.0
      %6122 = vmatprep.subr.mxu0 0.0
      %6123 = vmatpush1.msra.mxu0 0.0
      %v6124 = vand.u32 %v5627, 4294901760
      %v6125 = vsub.f32 %v5627, %v6124
      %v6126 = vand.u32 %v6125, 4294901760
      %6127 = vmatprep.subr.mxu0 %v6126
      %v6128 = vand.u32 %v5626, 4294901760
      %v6129 = vsub.f32 %v5626, %v6128
      %v6130 = vand.u32 %v6129, 4294901760
      %6131 = vmatpush1.msra.mxu0 %v6130
      %v6132 = vand.u32 %v5625, 4294901760
      %v6133 = vsub.f32 %v5625, %v6132
      %v6134 = vand.u32 %v6133, 4294901760
      %6135 = vmatprep.subr.mxu0 %v6134
      %v6136 = vand.u32 %v5624, 4294901760
      %v6137 = vsub.f32 %v5624, %v6136
      %v6138 = vand.u32 %v6137, 4294901760
      %6139 = vmatpush1.msra.mxu0 %v6138
      %v6140 = vand.u32 %v5623, 4294901760
      %v6141 = vsub.f32 %v5623, %v6140
      %v6142 = vand.u32 %v6141, 4294901760
      %6143 = vmatprep.subr.mxu0 %v6142
      %v6144 = vand.u32 %v5622, 4294901760
      %v6145 = vsub.f32 %v5622, %v6144
      %v6146 = vand.u32 %v6145, 4294901760
      %6147 = vmatpush1.msra.mxu0 %v6146
      %v6148 = vand.u32 %v5621, 4294901760
      %v6149 = vsub.f32 %v5621, %v6148
      %v6150 = vand.u32 %v6149, 4294901760
      %6151 = vmatprep.subr.mxu0 %v6150
      %v6152 = vand.u32 %v5620, 4294901760
      %v6153 = vsub.f32 %v5620, %v6152
      %v6154 = vand.u32 %v6153, 4294901760
      %6155 = vmatpush1.msra.mxu0 %v6154
      %6156 = vmatprep.subr.mxu0 0.0
      %6157 = vmatpush2.msra.mxu0 0.0
      %6158 = vmatprep.subr.mxu0 0.0
      %6159 = vmatpush2.msra.mxu0 0.0
      %6160 = vmatprep.subr.mxu0 0.0
      %6161 = vmatpush2.msra.mxu0 0.0
      %6162 = vmatprep.subr.mxu0 0.0
      %6163 = vmatpush2.msra.mxu0 0.0
      %6164 = vmatprep.subr.mxu0 0.0
      %6165 = vmatpush2.msra.mxu0 0.0
      %6166 = vmatprep.subr.mxu0 0.0
      %6167 = vmatpush2.msra.mxu0 0.0
      %6168 = vmatprep.subr.mxu0 0.0
      %6169 = vmatpush2.msra.mxu0 0.0
      %6170 = vmatprep.subr.mxu0 0.0
      %6171 = vmatpush2.msra.mxu0 0.0
      %6172 = vmatprep.subr.mxu0 0.0
      %6173 = vmatpush2.msra.mxu0 0.0
      %6174 = vmatprep.subr.mxu0 0.0
      %6175 = vmatpush2.msra.mxu0 0.0
      %6176 = vmatprep.subr.mxu0 0.0
      %6177 = vmatpush2.msra.mxu0 0.0
      %6178 = vmatprep.subr.mxu0 0.0
      %6179 = vmatpush2.msra.mxu0 0.0
      %6180 = vmatprep.subr.mxu0 0.0
      %6181 = vmatpush2.msra.mxu0 0.0
      %6182 = vmatprep.subr.mxu0 0.0
      %6183 = vmatpush2.msra.mxu0 0.0
      %6184 = vmatprep.subr.mxu0 0.0
      %6185 = vmatpush2.msra.mxu0 0.0
      %6186 = vmatprep.subr.mxu0 0.0
      %6187 = vmatpush2.msra.mxu0 0.0
      %6188 = vmatprep.mubr.f32.mxu0 0.0
      %v6189 = vand.u32 %v846, 4294901760
      %6190 = vmatmul.mubr.f32.gmra.mxu0 %v6189
      %v6191 = vpop.f32.mrf.mxu0
      %v6192 = vadd.f32 %v6069, %v6191
      %v6193 = vpop.f32.mrf.mxu0
      %v6194 = vadd.f32 %v6071, %v6193
      %6195 = vmatprep.mubr.f32.mxu0 0.0
      %v6196 = vand.u32 %v848, 4294901760
      %6197 = vmatmul.mubr.f32.gmra.mxu0 %v6196
      %v6198 = vpop.f32.mrf.mxu0
      %v6199 = vadd.f32 %v6078, %v6198
      %v6200 = vpop.f32.mrf.mxu0
      %v6201 = vadd.f32 %v6080, %v6200
      %6202 = vmatprep.mubr.f32.mxu0 0.0
      %v6203 = vand.u32 %v850, 4294901760
      %6204 = vmatmul.mubr.f32.gmra.mxu0 %v6203
      %v6205 = vpop.f32.mrf.mxu0
      %v6206 = vadd.f32 %v6087, %v6205
      %v6207 = vpop.f32.mrf.mxu0
      %v6208 = vadd.f32 %v6089, %v6207
      %6209 = vmatprep.mubr.f32.mxu0 0.0
      %v6210 = vand.u32 %v852, 4294901760
      %6211 = vmatmul.mubr.f32.gmra.mxu0 %v6210
      %v6212 = vpop.f32.mrf.mxu0
      %v6213 = vadd.f32 %v6096, %v6212
      %v6214 = vpop.f32.mrf.mxu0
      %v6215 = vadd.f32 %v6098, %v6214
      %6216 = vdwg.mxu0
      %6217 = vmatprep.subr.mxu0 0.0
      %6218 = vmatpush1.msra.mxu0 0.0
      %6219 = vmatprep.subr.mxu0 0.0
      %6220 = vmatpush1.msra.mxu0 0.0
      %6221 = vmatprep.subr.mxu0 0.0
      %6222 = vmatpush1.msra.mxu0 0.0
      %6223 = vmatprep.subr.mxu0 0.0
      %6224 = vmatpush1.msra.mxu0 0.0
      %6225 = vmatprep.subr.mxu0 0.0
      %6226 = vmatpush1.msra.mxu0 0.0
      %6227 = vmatprep.subr.mxu0 0.0
      %6228 = vmatpush1.msra.mxu0 0.0
      %6229 = vmatprep.subr.mxu0 0.0
      %6230 = vmatpush1.msra.mxu0 0.0
      %6231 = vmatprep.subr.mxu0 0.0
      %6232 = vmatpush1.msra.mxu0 0.0
      %6233 = vmatprep.subr.mxu0 0.0
      %6234 = vmatpush1.msra.mxu0 0.0
      %6235 = vmatprep.subr.mxu0 0.0
      %6236 = vmatpush1.msra.mxu0 0.0
      %6237 = vmatprep.subr.mxu0 0.0
      %6238 = vmatpush1.msra.mxu0 0.0
      %6239 = vmatprep.subr.mxu0 0.0
      %6240 = vmatpush1.msra.mxu0 0.0
      %v6241 = vand.u32 %v5627, 4294901760
      %6242 = vmatprep.subr.mxu0 %v6241
      %v6243 = vand.u32 %v5626, 4294901760
      %6244 = vmatpush1.msra.mxu0 %v6243
      %v6245 = vand.u32 %v5625, 4294901760
      %6246 = vmatprep.subr.mxu0 %v6245
      %v6247 = vand.u32 %v5624, 4294901760
      %6248 = vmatpush1.msra.mxu0 %v6247
      %v6249 = vand.u32 %v5623, 4294901760
      %6250 = vmatprep.subr.mxu0 %v6249
      %v6251 = vand.u32 %v5622, 4294901760
      %6252 = vmatpush1.msra.mxu0 %v6251
      %v6253 = vand.u32 %v5621, 4294901760
      %6254 = vmatprep.subr.mxu0 %v6253
      %v6255 = vand.u32 %v5620, 4294901760
      %6256 = vmatpush1.msra.mxu0 %v6255
      %6257 = vmatprep.subr.mxu0 0.0
      %6258 = vmatpush2.msra.mxu0 0.0
      %6259 = vmatprep.subr.mxu0 0.0
      %6260 = vmatpush2.msra.mxu0 0.0
      %6261 = vmatprep.subr.mxu0 0.0
      %6262 = vmatpush2.msra.mxu0 0.0
      %6263 = vmatprep.subr.mxu0 0.0
      %6264 = vmatpush2.msra.mxu0 0.0
      %6265 = vmatprep.subr.mxu0 0.0
      %6266 = vmatpush2.msra.mxu0 0.0
      %6267 = vmatprep.subr.mxu0 0.0
      %6268 = vmatpush2.msra.mxu0 0.0
      %6269 = vmatprep.subr.mxu0 0.0
      %6270 = vmatpush2.msra.mxu0 0.0
      %6271 = vmatprep.subr.mxu0 0.0
      %6272 = vmatpush2.msra.mxu0 0.0
      %6273 = vmatprep.subr.mxu0 0.0
      %6274 = vmatpush2.msra.mxu0 0.0
      %6275 = vmatprep.subr.mxu0 0.0
      %6276 = vmatpush2.msra.mxu0 0.0
      %6277 = vmatprep.subr.mxu0 0.0
      %6278 = vmatpush2.msra.mxu0 0.0
      %6279 = vmatprep.subr.mxu0 0.0
      %6280 = vmatpush2.msra.mxu0 0.0
      %6281 = vmatprep.subr.mxu0 0.0
      %6282 = vmatpush2.msra.mxu0 0.0
      %6283 = vmatprep.subr.mxu0 0.0
      %6284 = vmatpush2.msra.mxu0 0.0
      %6285 = vmatprep.subr.mxu0 0.0
      %6286 = vmatpush2.msra.mxu0 0.0
      %6287 = vmatprep.subr.mxu0 0.0
      %6288 = vmatpush2.msra.mxu0 0.0
      %6289 = vmatprep.mubr.f32.mxu0 0.0
      %v6290 = vand.u32 %v846, 4294901760
      %6291 = vmatmul.mubr.f32.gmra.mxu0 %v6290
      %v6292 = vpop.f32.mrf.mxu0
      %v6293 = vadd.f32 %v6192, %v6292
      %v6294 = vpop.f32.mrf.mxu0
      %v6295 = vadd.f32 %v6194, %v6294
      %6296 = vmatprep.mubr.f32.mxu0 0.0
      %v6297 = vand.u32 %v848, 4294901760
      %6298 = vmatmul.mubr.f32.gmra.mxu0 %v6297
      %v6299 = vpop.f32.mrf.mxu0
      %v6300 = vadd.f32 %v6199, %v6299
      %v6301 = vpop.f32.mrf.mxu0
      %v6302 = vadd.f32 %v6201, %v6301
      %6303 = vmatprep.mubr.f32.mxu0 0.0
      %v6304 = vand.u32 %v850, 4294901760
      %6305 = vmatmul.mubr.f32.gmra.mxu0 %v6304
      %v6306 = vpop.f32.mrf.mxu0
      %v6307 = vadd.f32 %v6206, %v6306
      %v6308 = vpop.f32.mrf.mxu0
      %v6309 = vadd.f32 %v6208, %v6308
      %6310 = vmatprep.mubr.f32.mxu0 0.0
      %v6311 = vand.u32 %v852, 4294901760
      %6312 = vmatmul.mubr.f32.gmra.mxu0 %v6311
      %v6313 = vpop.f32.mrf.mxu0
      %v6314 = vadd.f32 %v6213, %v6313
      %v6315 = vpop.f32.mrf.mxu0
      %v6316 = vadd.f32 %v6215, %v6315
      %6317 = vdwg.mxu0
      %v6318 = vadd.f32 %v6293, %v6295
      %6319 = vadd.xlane.f32.xlu0 %v6318
      %v6320 = vpop.xlane.xlu0 %6319
      %v6321 = vadd.f32 %v6300, %v6302
      %6322 = vadd.xlane.f32.xlu0 %v6321
      %v6323 = vpop.xlane.xlu0 %6322
      %v6324 = vadd.f32 %v6307, %v6309
      %6325 = vadd.xlane.f32.xlu0 %v6324
      %v6326 = vpop.xlane.xlu0 %6325
      %v6327 = vadd.f32 %v6314, %v6316
      %6328 = vadd.xlane.f32.xlu0 %v6327
      %v6329 = vpop.xlane.xlu0 %6328
      %v6330 = vadd.f32 %v6320, 1e-05
      %v6331 = vadd.f32 %v6323, 1e-05
      %v6332 = vadd.f32 %v6326, 1e-05
      %v6333 = vadd.f32 %v6329, 1e-05
      %v6334 = vrsqrt.pop %v6330
      %v6335 = vrsqrt.pop %v6331
      %v6336 = vrsqrt.pop %v6332
      %v6337 = vrsqrt.pop %v6333
      %v6338 = vmul.f32 %v5612, %v6334
      %v6339 = vmul.f32 %v5613, %v6334
      %v6340 = vmul.f32 %v5614, %v6335
      %v6341 = vmul.f32 %v5615, %v6335
      %v6342 = vmul.f32 %v5616, %v6336
      %v6343 = vmul.f32 %v5617, %v6336
      %v6344 = vmul.f32 %v5618, %v6337
      %v6345 = vmul.f32 %v5619, %v6337
      %6346 = vset.pattern.permute.xlu0 8
      %6347 = vperm.xlu0 %6346, %v246
      %v6348 = vpop.permute.xlu0 %6347
      %6350 = vset.pattern.permute.xlu0 8
      %6351 = vperm.xlu0 %6350, %v247
      %v6352 = vpop.permute.xlu0 %6351
      %6354 = vset.pattern.permute.xlu0 8
      %6355 = vperm.xlu0 %6354, %v248
      %v6356 = vpop.permute.xlu0 %6355
      %6358 = vset.pattern.permute.xlu0 8
      %6359 = vperm.xlu0 %6358, %v249
      %v6360 = vpop.permute.xlu0 %6359
      %v6362 = vmul.f32 %v6338, %v6348
      %v6363 = vmul.f32 %v6339, %v6348
      %v6364 = vmul.f32 %v6340, %v6352
      %v6365 = vmul.f32 %v6341, %v6352
      %v6366 = vmul.f32 %v6342, %v6356
      %v6367 = vmul.f32 %v6343, %v6356
      %v6368 = vmul.f32 %v6344, %v6360
      %v6369 = vmul.f32 %v6345, %v6360
      %6370 = vset.pattern.permute.xlu0 9
      %6371 = vperm.xlu0 %6370, %v246
      %v6372 = vpop.permute.xlu0 %6371
      %6374 = vset.pattern.permute.xlu0 9
      %6375 = vperm.xlu0 %6374, %v247
      %v6376 = vpop.permute.xlu0 %6375
      %6378 = vset.pattern.permute.xlu0 9
      %6379 = vperm.xlu0 %6378, %v248
      %v6380 = vpop.permute.xlu0 %6379
      %6382 = vset.pattern.permute.xlu0 9
      %6383 = vperm.xlu0 %6382, %v249
      %v6384 = vpop.permute.xlu0 %6383
      %v6386 = vadd.f32 %v6362, %v6372
      %v6387 = vadd.f32 %v6363, %v6372
      %v6388 = vadd.f32 %v6364, %v6376
      %v6389 = vadd.f32 %v6365, %v6376
      %v6390 = vadd.f32 %v6366, %v6380
      %v6391 = vadd.f32 %v6367, %v6380
      %v6392 = vadd.f32 %v6368, %v6384
      %v6393 = vadd.f32 %v6369, %v6384
      %v6394 = vxor.u32 %v6386, 2147483648
      %v6395 = vxor.u32 %v6387, 2147483648
      %v6396 = vxor.u32 %v6388, 2147483648
      %v6397 = vxor.u32 %v6389, 2147483648
      %v6398 = vxor.u32 %v6390, 2147483648
      %v6399 = vxor.u32 %v6391, 2147483648
      %v6400 = vxor.u32 %v6392, 2147483648
      %v6401 = vxor.u32 %v6393, 2147483648
      %v6402 = vmul.f32 %v6394, 1.442695
      %v6403 = vpow.pop %v6402
      %v6404 = vmul.f32 %v6395, 1.442695
      %v6405 = vpow.pop %v6404
      %v6406 = vmul.f32 %v6396, 1.442695
      %v6407 = vpow.pop %v6406
      %v6408 = vmul.f32 %v6397, 1.442695
      %v6409 = vpow.pop %v6408
      %v6410 = vmul.f32 %v6398, 1.442695
      %v6411 = vpow.pop %v6410
      %v6412 = vmul.f32 %v6399, 1.442695
      %v6413 = vpow.pop %v6412
      %v6414 = vmul.f32 %v6400, 1.442695
      %v6415 = vpow.pop %v6414
      %v6416 = vmul.f32 %v6401, 1.442695
      %v6417 = vpow.pop %v6416
      %v6418 = vadd.f32 %v6403, 1.0
      %v6419 = vadd.f32 %v6405, 1.0
      %v6420 = vadd.f32 %v6407, 1.0
      %v6421 = vadd.f32 %v6409, 1.0
      %v6422 = vadd.f32 %v6411, 1.0
      %v6423 = vadd.f32 %v6413, 1.0
      %v6424 = vadd.f32 %v6415, 1.0
      %v6425 = vadd.f32 %v6417, 1.0
      %v6426 = vrcp.pop %v6418
      %v6427 = vmul.f32 1.0, %v6426
      %v6428 = vrcp.pop %v6419
      %v6429 = vmul.f32 1.0, %v6428
      %v6430 = vrcp.pop %v6420
      %v6431 = vmul.f32 1.0, %v6430
      %v6432 = vrcp.pop %v6421
      %v6433 = vmul.f32 1.0, %v6432
      %v6434 = vrcp.pop %v6422
      %v6435 = vmul.f32 1.0, %v6434
      %v6436 = vrcp.pop %v6423
      %v6437 = vmul.f32 1.0, %v6436
      %v6438 = vrcp.pop %v6424
      %v6439 = vmul.f32 1.0, %v6438
      %v6440 = vrcp.pop %v6425
      %v6441 = vmul.f32 1.0, %v6440
      %v6442 = vmul.f32 %v6386, %v6427
      %v6443 = vmul.f32 %v6387, %v6429
      %v6444 = vmul.f32 %v6388, %v6431
      %v6445 = vmul.f32 %v6389, %v6433
      %v6446 = vmul.f32 %v6390, %v6435
      %v6447 = vmul.f32 %v6391, %v6437
      %v6448 = vmul.f32 %v6392, %v6439
      %v6449 = vmul.f32 %v6393, %v6441
      %6450 = vrot.lane.b32.xlu0 %v6442, 17
      %v6451 = vpop.permute.xlu0 %6450
      %6452 = vrot.lane.b32.xlu0 %v6444, 17
      %v6453 = vpop.permute.xlu0 %6452
      %6454 = vrot.lane.b32.xlu0 %v6446, 17
      %v6455 = vpop.permute.xlu0 %6454
      %6456 = vrot.lane.b32.xlu0 %v6448, 17
      %v6457 = vpop.permute.xlu0 %6456
      %6458 = vrot.lane.b32.xlu0 %v6443, 17
      %v6459 = vpop.permute.xlu0 %6458
      %6460 = vrot.lane.b32.xlu0 %v6445, 17
      %v6461 = vpop.permute.xlu0 %6460
      %6462 = vrot.lane.b32.xlu0 %v6447, 17
      %v6463 = vpop.permute.xlu0 %6462
      %6464 = vrot.lane.b32.xlu0 %v6449, 17
      %v6465 = vpop.permute.xlu0 %6464
      %v6466 = vsel %vm280, %v6451, %v6459
      %v6467 = vsel %vm280, %v6453, %v6461
      %v6468 = vsel %vm280, %v6455, %v6463
      %v6469 = vsel %vm280, %v6457, %v6465
      %v6470 = vsel %vm280, %v6459, %v6451
      %v6471 = vsel %vm280, %v6461, %v6453
      %v6472 = vsel %vm280, %v6463, %v6455
      %v6473 = vsel %vm280, %v6465, %v6457
      %v6474 = vmul.f32 %v6470, %v294
      %v6475 = vmul.f32 %v6466, %v298
      %v6476 = vmul.f32 %v6471, %v294
      %v6477 = vmul.f32 %v6467, %v298
      %v6478 = vmul.f32 %v6472, %v294
      %v6479 = vmul.f32 %v6468, %v298
      %v6480 = vmul.f32 %v6473, %v294
      %v6481 = vmul.f32 %v6469, %v298
      %6482 = vrot.lane.b32.xlu0 %v6442, 16
      %v6483 = vpop.permute.xlu0 %6482
      %6484 = vrot.lane.b32.xlu0 %v6444, 16
      %v6485 = vpop.permute.xlu0 %6484
      %6486 = vrot.lane.b32.xlu0 %v6446, 16
      %v6487 = vpop.permute.xlu0 %6486
      %6488 = vrot.lane.b32.xlu0 %v6448, 16
      %v6489 = vpop.permute.xlu0 %6488
      %6490 = vrot.lane.b32.xlu0 %v6443, 16
      %v6491 = vpop.permute.xlu0 %6490
      %6492 = vrot.lane.b32.xlu0 %v6445, 16
      %v6493 = vpop.permute.xlu0 %6492
      %6494 = vrot.lane.b32.xlu0 %v6447, 16
      %v6495 = vpop.permute.xlu0 %6494
      %6496 = vrot.lane.b32.xlu0 %v6449, 16
      %v6497 = vpop.permute.xlu0 %6496
      %v6498 = vsel %vm325, %v6483, %v6491
      %v6499 = vsel %vm325, %v6485, %v6493
      %v6500 = vsel %vm325, %v6487, %v6495
      %v6501 = vsel %vm325, %v6489, %v6497
      %v6502 = vsel %vm325, %v6491, %v6483
      %v6503 = vsel %vm325, %v6493, %v6485
      %v6504 = vsel %vm325, %v6495, %v6487
      %v6505 = vsel %vm325, %v6497, %v6489
      %v6506 = vmul.f32 %v6502, %v340
      %v6507 = vmul.f32 %v6498, %v344
      %v6508 = vmul.f32 %v6503, %v340
      %v6509 = vmul.f32 %v6499, %v344
      %v6510 = vmul.f32 %v6504, %v340
      %v6511 = vmul.f32 %v6500, %v344
      %v6512 = vmul.f32 %v6505, %v340
      %v6513 = vmul.f32 %v6501, %v344
      %6514 = vrot.lane.b32.xlu0 %v6442, 15
      %v6515 = vpop.permute.xlu0 %6514
      %6516 = vrot.lane.b32.xlu0 %v6444, 15
      %v6517 = vpop.permute.xlu0 %6516
      %6518 = vrot.lane.b32.xlu0 %v6446, 15
      %v6519 = vpop.permute.xlu0 %6518
      %6520 = vrot.lane.b32.xlu0 %v6448, 15
      %v6521 = vpop.permute.xlu0 %6520
      %6522 = vrot.lane.b32.xlu0 %v6443, 15
      %v6523 = vpop.permute.xlu0 %6522
      %6524 = vrot.lane.b32.xlu0 %v6445, 15
      %v6525 = vpop.permute.xlu0 %6524
      %6526 = vrot.lane.b32.xlu0 %v6447, 15
      %v6527 = vpop.permute.xlu0 %6526
      %6528 = vrot.lane.b32.xlu0 %v6449, 15
      %v6529 = vpop.permute.xlu0 %6528
      %v6530 = vsel %vm371, %v6515, %v6523
      %v6531 = vsel %vm371, %v6517, %v6525
      %v6532 = vsel %vm371, %v6519, %v6527
      %v6533 = vsel %vm371, %v6521, %v6529
      %v6534 = vsel %vm371, %v6523, %v6515
      %v6535 = vsel %vm371, %v6525, %v6517
      %v6536 = vsel %vm371, %v6527, %v6519
      %v6537 = vsel %vm371, %v6529, %v6521
      %v6538 = vmul.f32 %v6534, %v386
      %v6539 = vmul.f32 %v6530, %v390
      %v6540 = vmul.f32 %v6535, %v386
      %v6541 = vmul.f32 %v6531, %v390
      %v6542 = vmul.f32 %v6536, %v386
      %v6543 = vmul.f32 %v6532, %v390
      %v6544 = vmul.f32 %v6537, %v386
      %v6545 = vmul.f32 %v6533, %v390
      %6546 = vrot.lane.b32.xlu0 %v6442, 1
      %v6547 = vpop.permute.xlu0 %6546
      %6548 = vrot.lane.b32.xlu0 %v6444, 1
      %v6549 = vpop.permute.xlu0 %6548
      %6550 = vrot.lane.b32.xlu0 %v6446, 1
      %v6551 = vpop.permute.xlu0 %6550
      %6552 = vrot.lane.b32.xlu0 %v6448, 1
      %v6553 = vpop.permute.xlu0 %6552
      %6554 = vrot.lane.b32.xlu0 %v6443, 1
      %v6555 = vpop.permute.xlu0 %6554
      %6556 = vrot.lane.b32.xlu0 %v6445, 1
      %v6557 = vpop.permute.xlu0 %6556
      %6558 = vrot.lane.b32.xlu0 %v6447, 1
      %v6559 = vpop.permute.xlu0 %6558
      %6560 = vrot.lane.b32.xlu0 %v6449, 1
      %v6561 = vpop.permute.xlu0 %6560
      %v6562 = vsel %vm417, %v6547, %v6555
      %v6563 = vsel %vm417, %v6549, %v6557
      %v6564 = vsel %vm417, %v6551, %v6559
      %v6565 = vsel %vm417, %v6553, %v6561
      %v6566 = vsel %vm417, %v6555, %v6547
      %v6567 = vsel %vm417, %v6557, %v6549
      %v6568 = vsel %vm417, %v6559, %v6551
      %v6569 = vsel %vm417, %v6561, %v6553
      %v6570 = vmul.f32 %v6566, %v432
      %v6571 = vmul.f32 %v6562, %v436
      %v6572 = vmul.f32 %v6567, %v432
      %v6573 = vmul.f32 %v6563, %v436
      %v6574 = vmul.f32 %v6568, %v432
      %v6575 = vmul.f32 %v6564, %v436
      %v6576 = vmul.f32 %v6569, %v432
      %v6577 = vmul.f32 %v6565, %v436
      %6578 = vrot.lane.b32.xlu0 %v6442, 127
      %v6579 = vpop.permute.xlu0 %6578
      %6580 = vrot.lane.b32.xlu0 %v6444, 127
      %v6581 = vpop.permute.xlu0 %6580
      %6582 = vrot.lane.b32.xlu0 %v6446, 127
      %v6583 = vpop.permute.xlu0 %6582
      %6584 = vrot.lane.b32.xlu0 %v6448, 127
      %v6585 = vpop.permute.xlu0 %6584
      %6586 = vrot.lane.b32.xlu0 %v6443, 127
      %v6587 = vpop.permute.xlu0 %6586
      %6588 = vrot.lane.b32.xlu0 %v6445, 127
      %v6589 = vpop.permute.xlu0 %6588
      %6590 = vrot.lane.b32.xlu0 %v6447, 127
      %v6591 = vpop.permute.xlu0 %6590
      %6592 = vrot.lane.b32.xlu0 %v6449, 127
      %v6593 = vpop.permute.xlu0 %6592
      %v6594 = vsel %vm463, %v6579, %v6587
      %v6595 = vsel %vm463, %v6581, %v6589
      %v6596 = vsel %vm463, %v6583, %v6591
      %v6597 = vsel %vm463, %v6585, %v6593
      %v6598 = vsel %vm463, %v6587, %v6579
      %v6599 = vsel %vm463, %v6589, %v6581
      %v6600 = vsel %vm463, %v6591, %v6583
      %v6601 = vsel %vm463, %v6593, %v6585
      %v6602 = vmul.f32 %v6594, %v478
      %v6603 = vmul.f32 %v6598, %v482
      %v6604 = vmul.f32 %v6595, %v478
      %v6605 = vmul.f32 %v6599, %v482
      %v6606 = vmul.f32 %v6596, %v478
      %v6607 = vmul.f32 %v6600, %v482
      %v6608 = vmul.f32 %v6597, %v478
      %v6609 = vmul.f32 %v6601, %v482
      %6610 = vrot.lane.b32.xlu0 %v6442, 113
      %v6611 = vpop.permute.xlu0 %6610
      %6612 = vrot.lane.b32.xlu0 %v6444, 113
      %v6613 = vpop.permute.xlu0 %6612
      %6614 = vrot.lane.b32.xlu0 %v6446, 113
      %v6615 = vpop.permute.xlu0 %6614
      %6616 = vrot.lane.b32.xlu0 %v6448, 113
      %v6617 = vpop.permute.xlu0 %6616
      %6618 = vrot.lane.b32.xlu0 %v6443, 113
      %v6619 = vpop.permute.xlu0 %6618
      %6620 = vrot.lane.b32.xlu0 %v6445, 113
      %v6621 = vpop.permute.xlu0 %6620
      %6622 = vrot.lane.b32.xlu0 %v6447, 113
      %v6623 = vpop.permute.xlu0 %6622
      %6624 = vrot.lane.b32.xlu0 %v6449, 113
      %v6625 = vpop.permute.xlu0 %6624
      %v6626 = vsel %vm509, %v6611, %v6619
      %v6627 = vsel %vm509, %v6613, %v6621
      %v6628 = vsel %vm509, %v6615, %v6623
      %v6629 = vsel %vm509, %v6617, %v6625
      %v6630 = vsel %vm509, %v6619, %v6611
      %v6631 = vsel %vm509, %v6621, %v6613
      %v6632 = vsel %vm509, %v6623, %v6615
      %v6633 = vsel %vm509, %v6625, %v6617
      %v6634 = vmul.f32 %v6626, %v524
      %v6635 = vmul.f32 %v6630, %v528
      %v6636 = vmul.f32 %v6627, %v524
      %v6637 = vmul.f32 %v6631, %v528
      %v6638 = vmul.f32 %v6628, %v524
      %v6639 = vmul.f32 %v6632, %v528
      %v6640 = vmul.f32 %v6629, %v524
      %v6641 = vmul.f32 %v6633, %v528
      %6642 = vrot.lane.b32.xlu0 %v6442, 112
      %v6643 = vpop.permute.xlu0 %6642
      %6644 = vrot.lane.b32.xlu0 %v6444, 112
      %v6645 = vpop.permute.xlu0 %6644
      %6646 = vrot.lane.b32.xlu0 %v6446, 112
      %v6647 = vpop.permute.xlu0 %6646
      %6648 = vrot.lane.b32.xlu0 %v6448, 112
      %v6649 = vpop.permute.xlu0 %6648
      %6650 = vrot.lane.b32.xlu0 %v6443, 112
      %v6651 = vpop.permute.xlu0 %6650
      %6652 = vrot.lane.b32.xlu0 %v6445, 112
      %v6653 = vpop.permute.xlu0 %6652
      %6654 = vrot.lane.b32.xlu0 %v6447, 112
      %v6655 = vpop.permute.xlu0 %6654
      %6656 = vrot.lane.b32.xlu0 %v6449, 112
      %v6657 = vpop.permute.xlu0 %6656
      %v6658 = vsel %vm555, %v6643, %v6651
      %v6659 = vsel %vm555, %v6645, %v6653
      %v6660 = vsel %vm555, %v6647, %v6655
      %v6661 = vsel %vm555, %v6649, %v6657
      %v6662 = vsel %vm555, %v6651, %v6643
      %v6663 = vsel %vm555, %v6653, %v6645
      %v6664 = vsel %vm555, %v6655, %v6647
      %v6665 = vsel %vm555, %v6657, %v6649
      %v6666 = vmul.f32 %v6658, %v570
      %v6667 = vmul.f32 %v6662, %v574
      %v6668 = vmul.f32 %v6659, %v570
      %v6669 = vmul.f32 %v6663, %v574
      %v6670 = vmul.f32 %v6660, %v570
      %v6671 = vmul.f32 %v6664, %v574
      %v6672 = vmul.f32 %v6661, %v570
      %v6673 = vmul.f32 %v6665, %v574
      %6674 = vrot.lane.b32.xlu0 %v6442, 111
      %v6675 = vpop.permute.xlu0 %6674
      %6676 = vrot.lane.b32.xlu0 %v6444, 111
      %v6677 = vpop.permute.xlu0 %6676
      %6678 = vrot.lane.b32.xlu0 %v6446, 111
      %v6679 = vpop.permute.xlu0 %6678
      %6680 = vrot.lane.b32.xlu0 %v6448, 111
      %v6681 = vpop.permute.xlu0 %6680
      %6682 = vrot.lane.b32.xlu0 %v6443, 111
      %v6683 = vpop.permute.xlu0 %6682
      %6684 = vrot.lane.b32.xlu0 %v6445, 111
      %v6685 = vpop.permute.xlu0 %6684
      %6686 = vrot.lane.b32.xlu0 %v6447, 111
      %v6687 = vpop.permute.xlu0 %6686
      %6688 = vrot.lane.b32.xlu0 %v6449, 111
      %v6689 = vpop.permute.xlu0 %6688
      %v6690 = vsel %vm601, %v6675, %v6683
      %v6691 = vsel %vm601, %v6677, %v6685
      %v6692 = vsel %vm601, %v6679, %v6687
      %v6693 = vsel %vm601, %v6681, %v6689
      %v6694 = vsel %vm601, %v6683, %v6675
      %v6695 = vsel %vm601, %v6685, %v6677
      %v6696 = vsel %vm601, %v6687, %v6679
      %v6697 = vsel %vm601, %v6689, %v6681
      %v6698 = vmul.f32 %v6690, %v616
      %v6699 = vmul.f32 %v6694, %v620
      %v6700 = vmul.f32 %v6691, %v616
      %v6701 = vmul.f32 %v6695, %v620
      %v6702 = vmul.f32 %v6692, %v616
      %v6703 = vmul.f32 %v6696, %v620
      %v6704 = vmul.f32 %v6693, %v616
      %v6705 = vmul.f32 %v6697, %v620
      %v6706 = vpack.c.bf16 %v6476, %v6474
      %v6707 = vpack.c.bf16 %v6477, %v6475
      %v6708 = vpack.c.bf16 %v6480, %v6478
      %v6709 = vpack.c.bf16 %v6481, %v6479
      %v6710 = vpack.c.bf16 %v6508, %v6506
      %v6711 = vpack.c.bf16 %v6509, %v6507
      %v6712 = vpack.c.bf16 %v6512, %v6510
      %v6713 = vpack.c.bf16 %v6513, %v6511
      %v6714 = vpack.c.bf16 %v6540, %v6538
      %v6715 = vpack.c.bf16 %v6541, %v6539
      %v6716 = vpack.c.bf16 %v6544, %v6542
      %v6717 = vpack.c.bf16 %v6545, %v6543
      %v6718 = vpack.c.bf16 %v6572, %v6570
      %v6719 = vpack.c.bf16 %v6573, %v6571
      %v6720 = vpack.c.bf16 %v6576, %v6574
      %v6721 = vpack.c.bf16 %v6577, %v6575
      %v6722 = vpack.c.bf16 %v6444, %v6442
      %v6723 = vpack.c.bf16 %v6445, %v6443
      %v6724 = vpack.c.bf16 %v6448, %v6446
      %v6725 = vpack.c.bf16 %v6449, %v6447
      %v6726 = vpack.c.bf16 %v6604, %v6602
      %v6727 = vpack.c.bf16 %v6605, %v6603
      %v6728 = vpack.c.bf16 %v6608, %v6606
      %v6729 = vpack.c.bf16 %v6609, %v6607
      %v6730 = vpack.c.bf16 %v6636, %v6634
      %v6731 = vpack.c.bf16 %v6637, %v6635
      %v6732 = vpack.c.bf16 %v6640, %v6638
      %v6733 = vpack.c.bf16 %v6641, %v6639
      %v6734 = vpack.c.bf16 %v6668, %v6666
      %v6735 = vpack.c.bf16 %v6669, %v6667
      %v6736 = vpack.c.bf16 %v6672, %v6670
      %v6737 = vpack.c.bf16 %v6673, %v6671
      %v6738 = vpack.c.bf16 %v6700, %v6698
      %v6739 = vpack.c.bf16 %v6701, %v6699
      %v6740 = vpack.c.bf16 %v6704, %v6702
      %v6741 = vpack.c.bf16 %v6705, %v6703
      %v6742 = vld [vmem:[%s2 + $0x90] sm:$0xff]
      %v6743 = vld [vmem:[%s2 + $0x98] sm:$0xf]
      %v6744 = vld [vmem:[%s3] sm:$0xff]
      %6746 = vset.pattern.permute.xlu0 3
      %6747 = vperm.xlu0 %6746, %v6744
      %v6748 = vpop.permute.xlu0 %6747
      %v6752 = vunpack.c.l.b16 %v6742
      %v6753 = vunpack.c.h.b16 %v6742
      %v6754 = vunpack.c.l.b16 %v6743
      %v6755 = vpack.c.b16 %v6752, %v6752
      %v6756 = vpack.c.b16 %v6753, %v6753
      %v6757 = vpack.c.b16 %v6754, %v6754
      %v6761 = vsel %vm725, %v6757, 0
      %6763 = vmatprep.subr.bf16.mxu0 %v6721
      %6764 = vmatpush1.bf16.msra.mxu0 %v6720
      %6765 = vmatprep.subr.bf16.mxu0 %v6719
      %6766 = vmatpush1.bf16.msra.mxu0 %v6718
      %6767 = vmatprep.subr.bf16.mxu0 %v6717
      %6768 = vmatpush1.bf16.msra.mxu0 %v6716
      %6769 = vmatprep.subr.bf16.mxu0 %v6715
      %6770 = vmatpush1.bf16.msra.mxu0 %v6714
      %6771 = vmatprep.subr.bf16.mxu0 %v6713
      %6772 = vmatpush1.bf16.msra.mxu0 %v6712
      %6773 = vmatprep.subr.bf16.mxu0 %v6711
      %6774 = vmatpush1.bf16.msra.mxu0 %v6710
      %6775 = vmatprep.subr.bf16.mxu0 %v6709
      %6776 = vmatpush1.bf16.msra.mxu0 %v6708
      %6777 = vmatprep.subr.bf16.mxu0 %v6707
      %6778 = vmatpush1.bf16.msra.mxu0 %v6706
      %6779 = vmatprep.subr.bf16.mxu0 %v6737
      %6780 = vmatpush2.bf16.msra.mxu0 %v6736
      %6781 = vmatprep.subr.bf16.mxu0 %v6735
      %6782 = vmatpush2.bf16.msra.mxu0 %v6734
      %6783 = vmatprep.subr.bf16.mxu0 %v6733
      %6784 = vmatpush2.bf16.msra.mxu0 %v6732
      %6785 = vmatprep.subr.bf16.mxu0 %v6731
      %6786 = vmatpush2.bf16.msra.mxu0 %v6730
      %6787 = vmatprep.subr.bf16.mxu0 %v6729
      %6788 = vmatpush2.bf16.msra.mxu0 %v6728
      %6789 = vmatprep.subr.bf16.mxu0 %v6727
      %6790 = vmatpush2.bf16.msra.mxu0 %v6726
      %6791 = vmatprep.subr.bf16.mxu0 %v6725
      %6792 = vmatpush2.bf16.msra.mxu0 %v6724
      %6793 = vmatprep.subr.bf16.mxu0 %v6723
      %6794 = vmatpush2.bf16.msra.mxu0 %v6722
      %6795 = vmatprep.mubr.bf16.mxu0 %v6756
      %6796 = vmatmul.mubr.bf16.gmra.mxu0 %v6755
      %v6797 = vpop.f32.mrf.mxu0
      %v6798 = vadd.f32 %v6748, %v6797
      %v6799 = vpop.f32.mrf.mxu0
      %v6800 = vadd.f32 %v6748, %v6799
      %v6801 = vpop.f32.mrf.mxu0
      %v6802 = vpop.f32.mrf.mxu0
      %6803 = vdwg.mxu0
      %6804 = vmatprep.subr.bf16.mxu0 0
      %6805 = vmatpush1.bf16.msra.mxu0 0
      %6806 = vmatprep.subr.bf16.mxu0 0
      %6807 = vmatpush1.bf16.msra.mxu0 0
      %6808 = vmatprep.subr.bf16.mxu0 0
      %6809 = vmatpush1.bf16.msra.mxu0 0
      %6810 = vmatprep.subr.bf16.mxu0 0
      %6811 = vmatpush1.bf16.msra.mxu0 0
      %6812 = vmatprep.subr.bf16.mxu0 0
      %6813 = vmatpush1.bf16.msra.mxu0 0
      %6814 = vmatprep.subr.bf16.mxu0 0
      %6815 = vmatpush1.bf16.msra.mxu0 0
      %6816 = vmatprep.subr.bf16.mxu0 %v6741
      %6817 = vmatpush1.bf16.msra.mxu0 %v6740
      %6818 = vmatprep.subr.bf16.mxu0 %v6739
      %6819 = vmatpush1.bf16.msra.mxu0 %v6738
      %6820 = vmatprep.subr.bf16.mxu0 0
      %6821 = vmatpush2.bf16.msra.mxu0 0
      %6822 = vmatprep.subr.bf16.mxu0 0
      %6823 = vmatpush2.bf16.msra.mxu0 0
      %6824 = vmatprep.subr.bf16.mxu0 0
      %6825 = vmatpush2.bf16.msra.mxu0 0
      %6826 = vmatprep.subr.bf16.mxu0 0
      %6827 = vmatpush2.bf16.msra.mxu0 0
      %6828 = vmatprep.subr.bf16.mxu0 0
      %6829 = vmatpush2.bf16.msra.mxu0 0
      %6830 = vmatprep.subr.bf16.mxu0 0
      %6831 = vmatpush2.bf16.msra.mxu0 0
      %6832 = vmatprep.subr.bf16.mxu0 0
      %6833 = vmatpush2.bf16.msra.mxu0 0
      %6834 = vmatprep.subr.bf16.mxu0 0
      %6835 = vmatpush2.bf16.msra.mxu0 0
      %6836 = vmatprep.mubr.bf16.mxu0 0
      %6837 = vmatmul.mubr.bf16.gmra.mxu0 %v6761
      %v6838 = vpop.f32.mrf.mxu0
      %v6839 = vadd.f32 %v6798, %v6838
      %v6840 = vpop.f32.mrf.mxu0
      %v6841 = vadd.f32 %v6800, %v6840
      %v6842 = vpop.f32.mrf.mxu0
      %v6843 = vpop.f32.mrf.mxu0
      %6844 = vdwg.mxu0
      %6845 = vst [vmem:[%s244] sm:$0xff] %v6839
      %6846 = vst [vmem:[%s244 + $0x8] sm:$0xff] %v6841
      %p6847 = scmp.lt.s32.totalorder %s16, 1
      %s6848 = scalar_select %p6847, %s16, 1
      %s6849 = smul.addr %s6848, 2
      %s6850 = smul.addr %s6849, 8
      %s6851 = scalar_lea.vmem %s5, %s6850
      // Predicated region
      $region41: #{custom_conditioned_unet_forward.1} parent=39 // pred_check
        %p6852 = pneg %p149
      $region42: #{custom_conditioned_unet_forward.1} parent=39 // pred_check_branch
        %6854 = sbr.rel (%p6852) target = $region44
      $region43: #{custom_conditioned_unet_forward.1} parent=39 // pred_region
        _
      $region44: #{custom_conditioned_unet_forward.1} parent=39 // pred_fallthru
        _
    $region40: #{custom_conditioned_unet_forward.1} parent=5 // pred_fallthru
      _
    %p6855 = scmp.le.s32.totalorder 2, %s11
    // Predicated region
    $region45: #{custom_conditioned_unet_forward.1} parent=5 // pred_check
      %p6856 = pneg %p6855
    $region46: #{custom_conditioned_unet_forward.1} parent=5 // pred_check_branch
      %6858 = sbr.rel (%p6856) target = $region48
    $region47: #{custom_conditioned_unet_forward.1} parent=5 // pred_region
      %s6859 = ssub.s32 %s11, 2
      // Predicated region
      $region49: #{custom_conditioned_unet_forward.1} parent=47 // pred_check
        %p6860 = pneg %p155
      $region50: #{custom_conditioned_unet_forward.1} parent=47 // pred_check_branch
        %6862 = sbr.rel (%p6860) target = $region52
      $region51: #{custom_conditioned_unet_forward.1} parent=47 // pred_region
        %p6863 = scmp.lt.s32.totalorder %s17, 1
        %s6864 = scalar_select %p6863, %s17, 1
        %s6865 = smul.addr %s6864, 2
        %s6866 = smul.addr %s6865, 8
        %s6867 = scalar_lea.vmem %s5, %s6866
      $region52: #{custom_conditioned_unet_forward.1} parent=47 // pred_fallthru
        _
    $region48: #{custom_conditioned_unet_forward.1} parent=5 // pred_fallthru
      _
  $region6: #{custom_conditioned_unet_forward.1} parent=0 // loop_footer
    %s15 = sadd.s32 1, %s11
  $region7: #{custom_conditioned_unet_forward.1} parent=0 // loop_footer_branch
    %10 = sbr.rel target = $region3
  $region8: #{custom_conditioned_unet_forward.1} parent=0 // loop_exit
    _

</llo_original>
